<compile_context>
chip_gen: v6e
topology: v6e:2x2x1
jax: 0.10.0
libtpu: 0.0.40
codegen_flags: <defaults>
</compile_context>

<pallas_src>
import math

import jax
import jax.numpy as jnp
from jax.experimental import pallas as pl
from jax.experimental.pallas import tpu as pltpu


# ----------------------------------------------------------------------------
# Fused kernel: embed -> L encoder layers -> output head.  Grid = (L,).
# ----------------------------------------------------------------------------
def fused_transformer_kernel(
    # layer-invariant inputs
    src_ref,        # (B, S, Ni)
    w_emb_ref,      # (Ni, D)      pre-transposed
    b_emb_ref,      # (1, D)
    pos_ref,        # (1, S, D)
    # per-layer weights (leading dim = 1 block of the stacked L axis)
    wq_ref,         # (1, H, D, dh)  (1/sqrt(dh) folded in)
    bq_ref,         # (1, H, 1, dh)  (1/sqrt(dh) folded in)
    wk_ref,         # (1, H, D, dh)
    bk_ref,         # (1, H, 1, dh)
    wv_ref,         # (1, H, D, dh)
    bv_ref,         # (1, H, 1, dh)
    wo_ref,         # (1, H, dh, D)
    bo_ref,         # (1, 1, D)
    ln1w_ref,       # (1, 1, D)
    ln1b_ref,       # (1, 1, D)
    w1_ref,         # (1, D, dff)   pre-transposed
    b1_ref,         # (1, 1, dff)
    w2_ref,         # (1, dff, D)   pre-transposed
    b2_ref,         # (1, 1, D)
    ln2w_ref,       # (1, 1, D)
    ln2b_ref,       # (1, 1, D)
    # output head (layer-invariant)
    w_out_ref,      # (D, 1)        pre-transposed
    b_out_ref,      # (1, 1)
    # output
    out_ref,        # (B, 1)
    # scratch
    x_scratch,      # (B*S, D) f32, persists across grid steps
):
    eps = 1e-5
    B, S, Ni = src_ref.shape
    D = w_emb_ref.shape[1]
    H = wq_ref.shape[1]
    dh = wq_ref.shape[3]
    BS = B * S

    l = pl.program_id(0)

    # --- grid step 0: input embedding + positional encoding (fused) ---------
    @pl.when(l == 0)
    def _embed():
        x0 = jnp.dot(src_ref[...].reshape(BS, Ni), w_emb_ref[...],
                     preferred_element_type=jnp.float32) + b_emb_ref[...]
        x0 = x0.reshape(B, S, D) + pos_ref[0][None, :, :]
        x_scratch[...] = x0.reshape(BS, D)

    # --- encoder layer l (post-LN, ReLU FFN) ---------------------------------
    x = x_scratch[...]                                          # (BS, D)

    # Multi-head self-attention.  Per-head weights are pre-split host-side so
    # there is no lane-crossing slicing and no concatenate in the kernel; the
    # output projection is accumulated head-by-head:
    #   attn = sum_h softmax(q_h k_h^T) v_h @ Wo_h + bo
    attn = None
    for h in range(H):
        qh = (jnp.dot(x, wq_ref[0, h], preferred_element_type=jnp.float32)
              + bq_ref[0, h]).reshape(B, S, dh)                 # scale folded in
        kh = (jnp.dot(x, wk_ref[0, h], preferred_element_type=jnp.float32)
              + bk_ref[0, h]).reshape(B, S, dh)
        vh = (jnp.dot(x, wv_ref[0, h], preferred_element_type=jnp.float32)
              + bv_ref[0, h]).reshape(B, S, dh)
        s = jnp.einsum('bqd,bkd->bqk', qh, kh,
                       preferred_element_type=jnp.float32)      # (B, S, S)
        s = s - jnp.max(s, axis=-1, keepdims=True)
        p = jnp.exp(s)
        p = p * pl.reciprocal(jnp.sum(p, axis=-1, keepdims=True), approx=True)
        ctx = jnp.einsum('bqk,bkd->bqd', p, vh,
                         preferred_element_type=jnp.float32)    # (B, S, dh)
        contrib = jnp.dot(ctx.reshape(BS, dh), wo_ref[0, h],
                          preferred_element_type=jnp.float32)   # (BS, D)
        attn = contrib if attn is None else attn + contrib
    attn = attn + bo_ref[0]

    # residual + LayerNorm1 (one-pass stats)
    y = x + attn
    mu = jnp.mean(y, axis=-1, keepdims=True)
    var = jnp.mean(y * y, axis=-1, keepdims=True) - mu * mu
    y = (y - mu) * jax.lax.rsqrt(var + eps) * ln1w_ref[0] + ln1b_ref[0]

    # feed-forward (ReLU)
    h1 = jnp.maximum(
        jnp.dot(y, w1_ref[0], preferred_element_type=jnp.float32) + b1_ref[0],
        0.0)
    h2 = jnp.dot(h1, w2_ref[0], preferred_element_type=jnp.float32) + b2_ref[0]

    # residual + LayerNorm2 (one-pass stats)
    z = y + h2
    mu2 = jnp.mean(z, axis=-1, keepdims=True)
    var2 = jnp.mean(z * z, axis=-1, keepdims=True) - mu2 * mu2
    z = (z - mu2) * jax.lax.rsqrt(var2 + eps) * ln2w_ref[0] + ln2b_ref[0]

    x_scratch[...] = z

    # --- last grid step: output head on the final time step -----------------
    @pl.when(l == pl.num_programs(0) - 1)
    def _head():
        x_last = z.reshape(B, S, D)[:, S - 1, :]                # (B, D)
        out_ref[...] = (jnp.dot(x_last, w_out_ref[...],
                                preferred_element_type=jnp.float32)
                        + b_out_ref[...])


# ----------------------------------------------------------------------------
# Wrapper
# ----------------------------------------------------------------------------
def time_series_transformer_forward(src, packed):
    B, S, Ni = src.shape
    D = packed["w_emb_t"].shape[1]
    L, H = packed["wq"].shape[0], packed["wq"].shape[1]
    dh = packed["wq"].shape[3]
    dff = packed["w1t"].shape[2]
    pos = packed["pos"][:, :S, :]

    const2 = lambda shape: pl.BlockSpec(shape, lambda l: (0, 0))
    const3 = lambda shape: pl.BlockSpec(shape, lambda l: (0, 0, 0))
    lyr3 = lambda shape: pl.BlockSpec(shape, lambda l: (l, 0, 0))
    lyr4 = lambda shape: pl.BlockSpec(shape, lambda l: (l, 0, 0, 0))

    return pl.pallas_call(
        fused_transformer_kernel,
        out_shape=jax.ShapeDtypeStruct((B, 1), jnp.float32),
        grid=(L,),
        in_specs=[
            const3((B, S, Ni)),           # src
            const2((Ni, D)),              # w_emb_t
            const2((1, D)),               # b_emb
            const3((1, S, D)),            # pos
            lyr4((1, H, D, dh)),          # wq (scaled)
            lyr4((1, H, 1, dh)),          # bq (scaled)
            lyr4((1, H, D, dh)),          # wk
            lyr4((1, H, 1, dh)),          # bk
            lyr4((1, H, D, dh)),          # wv
            lyr4((1, H, 1, dh)),          # bv
            lyr4((1, H, dh, D)),          # wo (per-head)
            lyr3((1, 1, D)),              # bo
            lyr3((1, 1, D)),              # ln1 weight
            lyr3((1, 1, D)),              # ln1 bias
            lyr3((1, D, dff)),            # w1t
            lyr3((1, 1, dff)),            # b1
            lyr3((1, dff, D)),            # w2t
            lyr3((1, 1, D)),              # b2
            lyr3((1, 1, D)),              # ln2 weight
            lyr3((1, 1, D)),              # ln2 bias
            const2((D, 1)),               # w_out_t
            const2((1, 1)),               # b_out
        ],
        out_specs=pl.BlockSpec((B, 1), lambda l: (0, 0)),
        scratch_shapes=[pltpu.VMEM((B * S, D), jnp.float32)],
        compiler_params=pltpu.CompilerParams(
            dimension_semantics=("arbitrary",),
            vmem_limit_bytes=32 * 1024 * 1024,
        ),
    )(
        src, packed["w_emb_t"], packed["b_emb"], pos,
        packed["wq"], packed["bq"], packed["wk"], packed["bk"],
        packed["wv"], packed["bv"], packed["wo"], packed["bo"],
        packed["ln1w"], packed["ln1b"], packed["w1t"], packed["b1"],
        packed["w2t"], packed["b2"], packed["ln2w"], packed["ln2b"],
        packed["w_out_t"], packed["b_out"],
    )


# ----------------------------------------------------------------------------
# Parameter construction (PyTorch layout) and host-side packing
# ----------------------------------------------------------------------------
def xavier_normal(key, shape):
    fan_out, fan_in = shape
    std = math.sqrt(2.0 / (fan_in + fan_out))
    return std * jax.random.normal(key, shape, dtype=jnp.float32)


def init_params(key, num_inputs, d_model, num_heads, num_layers, dff=2048):
    scale = 0.67 * num_layers ** (-0.25)
    keys = jax.random.split(key, 4 + num_layers)
    p = {}
    p["w_emb"] = (d_model ** -0.5) * jax.random.normal(
        keys[0], (d_model, num_inputs), dtype=jnp.float32)
    p["b_emb"] = jnp.zeros((d_model,), jnp.float32)
    # Positional encoding parameter is zero-initialized in the reference
    # __init__ (nn.Parameter(torch.zeros(1, 1000, d_model))).
    p["pos"] = jnp.zeros((1, 1000, d_model), jnp.float32)
    p["w_out"] = scale * xavier_normal(keys[1], (1, d_model))
    p["b_out"] = jnp.zeros((1,), jnp.float32)

    layers = []
    for li in range(num_layers):
        k = jax.random.split(keys[4 + li], 4)
        layers.append({
            "wqkv": xavier_normal(k[0], (3 * d_model, d_model)),
            "bqkv": jnp.zeros((3 * d_model,), jnp.float32),
            "wo": scale * xavier_normal(k[1], (d_model, d_model)),
            "bo": jnp.zeros((d_model,), jnp.float32),
            "ln1w": jnp.ones((d_model,), jnp.float32),
            "ln1b": jnp.zeros((d_model,), jnp.float32),
            "w1": scale * xavier_normal(k[2], (dff, d_model)),
            "b1": jnp.zeros((dff,), jnp.float32),
            "w2": scale * xavier_normal(k[3], (d_model, dff)),
            "b2": jnp.zeros((d_model,), jnp.float32),
            "ln2w": jnp.ones((d_model,), jnp.float32),
            "ln2b": jnp.zeros((d_model,), jnp.float32),
        })
    p["layers"] = layers
    return p


def pack_params(params, num_heads):
    """Pre-transpose, split attention heads, fold the 1/sqrt(dh) scale and
    stack per-layer weights along a leading L axis (all done once host-side)."""
    D = params["w_emb"].shape[0]
    H = num_heads
    dh = D // H
    scale = 1.0 / math.sqrt(dh)

    def per_layer(lp):
        wqkv, bqkv = lp["wqkv"], lp["bqkv"]          # (3D, D), (3D,)

        def heads(wblk, bblk, fold):
            # wblk: (D, D) torch (out, in) layout -> (H, D, dh) for x @ w
            wh = jnp.transpose(wblk.reshape(H, dh, D), (0, 2, 1))
            bh = bblk.reshape(H, 1, dh)
            if fold:
                wh = wh * scale
                bh = bh * scale
            return wh, bh

        wq, bq = heads(wqkv[:D], bqkv[:D], True)
        wk, bk = heads(wqkv[D:2 * D], bqkv[D:2 * D], False)
        wv, bv = heads(wqkv[2 * D:], bqkv[2 * D:], False)
        wo = lp["wo"].T.reshape(H, dh, D)            # per-head (dh, D)
        return {
            "wq": wq, "bq": bq, "wk": wk, "bk": bk, "wv": wv, "bv": bv,
            "wo": wo, "bo": lp["bo"].reshape(1, D),
            "ln1w": lp["ln1w"].reshape(1, D), "ln1b": lp["ln1b"].reshape(1, D),
            "w1t": lp["w1"].T, "b1": lp["b1"].reshape(1, -1),
            "w2t": lp["w2"].T, "b2": lp["b2"].reshape(1, D),
            "ln2w": lp["ln2w"].reshape(1, D), "ln2b": lp["ln2b"].reshape(1, D),
        }

    per = [per_layer(lp) for lp in params["layers"]]
    packed = {k: jnp.stack([p[k] for p in per], axis=0) for k in per[0]}
    packed["w_emb_t"] = params["w_emb"].T
    packed["b_emb"] = params["b_emb"].reshape(1, -1)
    packed["pos"] = params["pos"]
    packed["w_out_t"] = params["w_out"].T
    packed["b_out"] = params["b_out"].reshape(1, 1)
    return packed


# ----------------------------------------------------------------------------
if __name__ == "__main__":
    num_inputs, d_model, num_heads, num_layers = 4, 32, 4, 2
    B, S = 2, 8
    dff = 2048  # nn.TransformerEncoderLayer default dim_feedforward

    key = jax.random.PRNGKey(0)
    k_params, k_x = jax.random.split(key)
    params = init_params(k_params, num_inputs, d_model, num_heads, num_layers, dff)
    packed = pack_params(params, num_heads)
    src = jax.random.normal(k_x, (B, S, num_inputs), dtype=jnp.float32)

    out = time_series_transformer_forward(src, packed)
    out = jax.block_until_ready(out)
    assert out.shape == (B, 1), out.shape
    assert bool(jnp.all(jnp.isfinite(out)))
    print("KERNEL_OK")
</pallas_src>

<mosaic_0001>
module attributes {stable_mosaic.version = 11 : i64} {
  func.func @fused_transformer_kernel(%arg0: i32, %arg1: memref<2x8x4xf32, #tpu.memory_space<vmem>>, %arg2: memref<4x32xf32, #tpu.memory_space<vmem>>, %arg3: memref<1x32xf32, #tpu.memory_space<vmem>>, %arg4: memref<1x8x32xf32, #tpu.memory_space<vmem>>, %arg5: memref<1x4x32x8xf32, #tpu.memory_space<vmem>>, %arg6: memref<1x4x1x8xf32, #tpu.memory_space<vmem>>, %arg7: memref<1x4x32x8xf32, #tpu.memory_space<vmem>>, %arg8: memref<1x4x1x8xf32, #tpu.memory_space<vmem>>, %arg9: memref<1x4x32x8xf32, #tpu.memory_space<vmem>>, %arg10: memref<1x4x1x8xf32, #tpu.memory_space<vmem>>, %arg11: memref<1x4x8x32xf32, #tpu.memory_space<vmem>>, %arg12: memref<1x1x32xf32, #tpu.memory_space<vmem>>, %arg13: memref<1x1x32xf32, #tpu.memory_space<vmem>>, %arg14: memref<1x1x32xf32, #tpu.memory_space<vmem>>, %arg15: memref<1x32x2048xf32, #tpu.memory_space<vmem>>, %arg16: memref<1x1x2048xf32, #tpu.memory_space<vmem>>, %arg17: memref<1x2048x32xf32, #tpu.memory_space<vmem>>, %arg18: memref<1x1x32xf32, #tpu.memory_space<vmem>>, %arg19: memref<1x1x32xf32, #tpu.memory_space<vmem>>, %arg20: memref<1x1x32xf32, #tpu.memory_space<vmem>>, %arg21: memref<32x1xf32, #tpu.memory_space<vmem>>, %arg22: memref<1x1xf32, #tpu.memory_space<vmem>>, %arg23: memref<2x1xf32, #tpu.memory_space<vmem>>, %arg24: memref<16x32xf32, #tpu.memory_space<vmem>>) attributes {dimension_semantics = [#tpu.dimension_semantics<arbitrary>], iteration_bounds = array<i64: 2>, scalar_prefetch = 0 : i64, scratch_operands = 1 : i64, tpu.core_type = #tpu.core_type<tc>, window_params = [{pipeline_mode = #tpu.pipeline_mode<synchronous>, transform_indices = @transform_0, window_bounds = array<i64: 2, 8, 4>}, {pipeline_mode = #tpu.pipeline_mode<synchronous>, transform_indices = @transform_1, window_bounds = array<i64: 4, 32>}, {pipeline_mode = #tpu.pipeline_mode<synchronous>, transform_indices = @transform_2, window_bounds = array<i64: 1, 32>}, {pipeline_mode = #tpu.pipeline_mode<synchronous>, transform_indices = @transform_3, window_bounds = array<i64: 1, 8, 32>}, {transform_indices = @transform_4, window_bounds = array<i64: 1, 4, 32, 8>}, {transform_indices = @transform_5, window_bounds = array<i64: 1, 4, 1, 8>}, {transform_indices = @transform_6, window_bounds = array<i64: 1, 4, 32, 8>}, {transform_indices = @transform_7, window_bounds = array<i64: 1, 4, 1, 8>}, {transform_indices = @transform_8, window_bounds = array<i64: 1, 4, 32, 8>}, {transform_indices = @transform_9, window_bounds = array<i64: 1, 4, 1, 8>}, {transform_indices = @transform_10, window_bounds = array<i64: 1, 4, 8, 32>}, {transform_indices = @transform_11, window_bounds = array<i64: 1, 1, 32>}, {transform_indices = @transform_12, window_bounds = array<i64: 1, 1, 32>}, {transform_indices = @transform_13, window_bounds = array<i64: 1, 1, 32>}, {transform_indices = @transform_14, window_bounds = array<i64: 1, 32, 2048>}, {transform_indices = @transform_15, window_bounds = array<i64: 1, 1, 2048>}, {transform_indices = @transform_16, window_bounds = array<i64: 1, 2048, 32>}, {transform_indices = @transform_17, window_bounds = array<i64: 1, 1, 32>}, {transform_indices = @transform_18, window_bounds = array<i64: 1, 1, 32>}, {transform_indices = @transform_19, window_bounds = array<i64: 1, 1, 32>}, {pipeline_mode = #tpu.pipeline_mode<synchronous>, transform_indices = @transform_20, window_bounds = array<i64: 32, 1>}, {pipeline_mode = #tpu.pipeline_mode<synchronous>, transform_indices = @transform_21, window_bounds = array<i64: 1, 1>}, {pipeline_mode = #tpu.pipeline_mode<synchronous>, transform_indices = @transform_22, window_bounds = array<i64: 2, 1>}]} {
    %c0_i32 = arith.constant 0 : i32
    %0 = arith.cmpi eq, %arg0, %c0_i32 : i32
    %1 = arith.extui %0 : i1 to i32
    %c0_i32_0 = arith.constant 0 : i32
    %2 = arith.cmpi ne, %1, %c0_i32_0 : i32
    scf.if %2 {
      %c0_185 = arith.constant 0 : index
      %c0_186 = arith.constant 0 : index
      %c0_187 = arith.constant 0 : index
      %245 = vector.load %arg1[%c0_185, %c0_186, %c0_187] : memref<2x8x4xf32, #tpu.memory_space<vmem>>, vector<2x8x4xf32>
      %246 = vector.shape_cast %245 : vector<2x8x4xf32> to vector<16x4xf32>
      %c0_188 = arith.constant 0 : index
      %c0_189 = arith.constant 0 : index
      %247 = vector.load %arg2[%c0_188, %c0_189] : memref<4x32xf32, #tpu.memory_space<vmem>>, vector<4x32xf32>
      %cst_190 = arith.constant dense<0.000000e+00> : vector<16x32xf32>
      %248 = tpu.matmul %246, %247, %cst_190 {dimension_numbers = #tpu.dot_dimension_numbers<[1], [0], [0], [1], [0, 0, 1, 1], [], []>} : vector<16x4xf32>, vector<4x32xf32>, vector<16x32xf32> -> vector<16x32xf32>
      %c0_191 = arith.constant 0 : index
      %c0_192 = arith.constant 0 : index
      %249 = vector.load %arg3[%c0_191, %c0_192] : memref<1x32xf32, #tpu.memory_space<vmem>>, vector<1x32xf32>
      %250 = vector.broadcast %249 : vector<1x32xf32> to vector<16x32xf32>
      %251 = arith.addf %248, %250 : vector<16x32xf32>
      %252 = vector.shape_cast %251 : vector<16x32xf32> to vector<2x8x32xf32>
      %c0_193 = arith.constant 0 : index
      %c0_194 = arith.constant 0 : index
      %c0_195 = arith.constant 0 : index
      %253 = vector.load %arg4[%c0_193, %c0_194, %c0_195] : memref<1x8x32xf32, #tpu.memory_space<vmem>>, vector<1x8x32xf32>
      %254 = vector.shape_cast %253 : vector<1x8x32xf32> to vector<8x32xf32>
      %255 = vector.shape_cast %254 : vector<8x32xf32> to vector<1x8x32xf32>
      %256 = vector.broadcast %255 : vector<1x8x32xf32> to vector<2x8x32xf32>
      %257 = arith.addf %252, %256 : vector<2x8x32xf32>
      %258 = vector.shape_cast %257 : vector<2x8x32xf32> to vector<16x32xf32>
      %c0_196 = arith.constant 0 : index
      %c0_197 = arith.constant 0 : index
      %259 = vector.load %arg24[%c0_196, %c0_197] : memref<16x32xf32, #tpu.memory_space<vmem>>, vector<16x32xf32>
      tpu.vector_store %arg24[%c0_196, %c0_197], %258 {strides = array<i32>} : memref<16x32xf32, #tpu.memory_space<vmem>>, vector<16x32xf32>,
    } else {
    }
    %c0 = arith.constant 0 : index
    %c0_1 = arith.constant 0 : index
    %3 = vector.load %arg24[%c0, %c0_1] : memref<16x32xf32, #tpu.memory_space<vmem>>, vector<16x32xf32>
    %c0_2 = arith.constant 0 : index
    %c0_3 = arith.constant 0 : index
    %c0_4 = arith.constant 0 : index
    %c0_5 = arith.constant 0 : index
    %4 = vector.load %arg5[%c0_2, %c0_3, %c0_4, %c0_5] : memref<1x4x32x8xf32, #tpu.memory_space<vmem>>, vector<1x1x32x8xf32>
    %5 = vector.shape_cast %4 : vector<1x1x32x8xf32> to vector<32x8xf32>
    %cst = arith.constant dense<0.000000e+00> : vector<16x8xf32>
    %6 = tpu.matmul %3, %5, %cst {dimension_numbers = #tpu.dot_dimension_numbers<[1], [0], [0], [1], [0, 0, 1, 1], [], []>} : vector<16x32xf32>, vector<32x8xf32>, vector<16x8xf32> -> vector<16x8xf32>
    %c0_6 = arith.constant 0 : index
    %c0_7 = arith.constant 0 : index
    %c0_8 = arith.constant 0 : index
    %c0_9 = arith.constant 0 : index
    %7 = vector.load %arg6[%c0_6, %c0_7, %c0_8, %c0_9] : memref<1x4x1x8xf32, #tpu.memory_space<vmem>>, vector<1x1x1x8xf32>
    %8 = vector.shape_cast %7 : vector<1x1x1x8xf32> to vector<1x8xf32>
    %9 = vector.broadcast %8 : vector<1x8xf32> to vector<16x8xf32>
    %10 = arith.addf %6, %9 : vector<16x8xf32>
    %11 = vector.shape_cast %10 : vector<16x8xf32> to vector<2x8x8xf32>
    %c0_10 = arith.constant 0 : index
    %c0_11 = arith.constant 0 : index
    %c0_12 = arith.constant 0 : index
    %c0_13 = arith.constant 0 : index
    %12 = vector.load %arg7[%c0_10, %c0_11, %c0_12, %c0_13] : memref<1x4x32x8xf32, #tpu.memory_space<vmem>>, vector<1x1x32x8xf32>
    %13 = vector.shape_cast %12 : vector<1x1x32x8xf32> to vector<32x8xf32>
    %cst_14 = arith.constant dense<0.000000e+00> : vector<16x8xf32>
    %14 = tpu.matmul %3, %13, %cst_14 {dimension_numbers = #tpu.dot_dimension_numbers<[1], [0], [0], [1], [0, 0, 1, 1], [], []>} : vector<16x32xf32>, vector<32x8xf32>, vector<16x8xf32> -> vector<16x8xf32>
    %c0_15 = arith.constant 0 : index
    %c0_16 = arith.constant 0 : index
    %c0_17 = arith.constant 0 : index
    %c0_18 = arith.constant 0 : index
    %15 = vector.load %arg8[%c0_15, %c0_16, %c0_17, %c0_18] : memref<1x4x1x8xf32, #tpu.memory_space<vmem>>, vector<1x1x1x8xf32>
    %16 = vector.shape_cast %15 : vector<1x1x1x8xf32> to vector<1x8xf32>
    %17 = vector.broadcast %16 : vector<1x8xf32> to vector<16x8xf32>
    %18 = arith.addf %14, %17 : vector<16x8xf32>
    %19 = vector.shape_cast %18 : vector<16x8xf32> to vector<2x8x8xf32>
    %c0_19 = arith.constant 0 : index
    %c0_20 = arith.constant 0 : index
    %c0_21 = arith.constant 0 : index
    %c0_22 = arith.constant 0 : index
    %20 = vector.load %arg9[%c0_19, %c0_20, %c0_21, %c0_22] : memref<1x4x32x8xf32, #tpu.memory_space<vmem>>, vector<1x1x32x8xf32>
    %21 = vector.shape_cast %20 : vector<1x1x32x8xf32> to vector<32x8xf32>
    %cst_23 = arith.constant dense<0.000000e+00> : vector<16x8xf32>
    %22 = tpu.matmul %3, %21, %cst_23 {dimension_numbers = #tpu.dot_dimension_numbers<[1], [0], [0], [1], [0, 0, 1, 1], [], []>} : vector<16x32xf32>, vector<32x8xf32>, vector<16x8xf32> -> vector<16x8xf32>
    %c0_24 = arith.constant 0 : index
    %c0_25 = arith.constant 0 : index
    %c0_26 = arith.constant 0 : index
    %c0_27 = arith.constant 0 : index
    %23 = vector.load %arg10[%c0_24, %c0_25, %c0_26, %c0_27] : memref<1x4x1x8xf32, #tpu.memory_space<vmem>>, vector<1x1x1x8xf32>
    %24 = vector.shape_cast %23 : vector<1x1x1x8xf32> to vector<1x8xf32>
    %25 = vector.broadcast %24 : vector<1x8xf32> to vector<16x8xf32>
    %26 = arith.addf %22, %25 : vector<16x8xf32>
    %27 = vector.shape_cast %26 : vector<16x8xf32> to vector<2x8x8xf32>
    "tpu.trace_start"() <{level = 10 : i32, message = "bqd,bkd->bqk"}> : () -> ()
    %cst_28 = arith.constant dense<0.000000e+00> : vector<2x8x8xf32>
    %28 = tpu.matmul %11, %19, %cst_28 {dimension_numbers = #tpu.dot_dimension_numbers<[2], [2], [1], [1], [0, 0, 0, 1, 1, 1], [0], [0]>} : vector<2x8x8xf32>, vector<2x8x8xf32>, vector<2x8x8xf32> -> vector<2x8x8xf32>
    "tpu.trace_stop"() : () -> ()
    %cst_29 = arith.constant dense<0xFF800000> : vector<2x8xf32>
    %29 = vector.multi_reduction <maximumf>, %28, %cst_29 [2] : vector<2x8x8xf32> to vector<2x8xf32>
    %30 = vector.shape_cast %29 : vector<2x8xf32> to vector<2x8x1xf32>
    %31 = vector.broadcast %30 : vector<2x8x1xf32> to vector<2x8x8xf32>
    %32 = arith.subf %28, %31 : vector<2x8x8xf32>
    %33 = math.exp %32 : vector<2x8x8xf32>
    %cst_30 = arith.constant dense<0.000000e+00> : vector<2x8xf32>
    %34 = vector.multi_reduction <add>, %33, %cst_30 [2] : vector<2x8x8xf32> to vector<2x8xf32>
    %35 = vector.shape_cast %34 : vector<2x8xf32> to vector<2x8x1xf32>
    %36 = tpu.reciprocal %35 {approx = true} : vector<2x8x1xf32> -> vector<2x8x1xf32>
    %37 = vector.broadcast %36 : vector<2x8x1xf32> to vector<2x8x8xf32>
    %38 = arith.mulf %33, %37 : vector<2x8x8xf32>
    "tpu.trace_start"() <{level = 10 : i32, message = "bqk,bkd->bqd"}> : () -> ()
    %cst_31 = arith.constant dense<0.000000e+00> : vector<2x8x8xf32>
    %39 = tpu.matmul %38, %27, %cst_31 {dimension_numbers = #tpu.dot_dimension_numbers<[2], [1], [1], [2], [0, 0, 0, 1, 1, 2], [0], [0]>} : vector<2x8x8xf32>, vector<2x8x8xf32>, vector<2x8x8xf32> -> vector<2x8x8xf32>
    "tpu.trace_stop"() : () -> ()
    %40 = vector.shape_cast %39 : vector<2x8x8xf32> to vector<16x8xf32>
    %c0_32 = arith.constant 0 : index
    %c0_33 = arith.constant 0 : index
    %c0_34 = arith.constant 0 : index
    %c0_35 = arith.constant 0 : index
    %41 = vector.load %arg11[%c0_32, %c0_33, %c0_34, %c0_35] : memref<1x4x8x32xf32, #tpu.memory_space<vmem>>, vector<1x1x8x32xf32>
    %42 = vector.shape_cast %41 : vector<1x1x8x32xf32> to vector<8x32xf32>
    %cst_36 = arith.constant dense<0.000000e+00> : vector<16x32xf32>
    %43 = tpu.matmul %40, %42, %cst_36 {dimension_numbers = #tpu.dot_dimension_numbers<[1], [0], [0], [1], [0, 0, 1, 1], [], []>} : vector<16x8xf32>, vector<8x32xf32>, vector<16x32xf32> -> vector<16x32xf32>
    %c0_37 = arith.constant 0 : index
    %c1 = arith.constant 1 : index
    %c0_38 = arith.constant 0 : index
    %c0_39 = arith.constant 0 : index
    %44 = vector.load %arg5[%c0_37, %c1, %c0_38, %c0_39] : memref<1x4x32x8xf32, #tpu.memory_space<vmem>>, vector<1x1x32x8xf32>
    %45 = vector.shape_cast %44 : vector<1x1x32x8xf32> to vector<32x8xf32>
    %cst_40 = arith.constant dense<0.000000e+00> : vector<16x8xf32>
    %46 = tpu.matmul %3, %45, %cst_40 {dimension_numbers = #tpu.dot_dimension_numbers<[1], [0], [0], [1], [0, 0, 1, 1], [], []>} : vector<16x32xf32>, vector<32x8xf32>, vector<16x8xf32> -> vector<16x8xf32>
    %c0_41 = arith.constant 0 : index
    %c1_42 = arith.constant 1 : index
    %c0_43 = arith.constant 0 : index
    %c0_44 = arith.constant 0 : index
    %47 = vector.load %arg6[%c0_41, %c1_42, %c0_43, %c0_44] : memref<1x4x1x8xf32, #tpu.memory_space<vmem>>, vector<1x1x1x8xf32>
    %48 = vector.shape_cast %47 : vector<1x1x1x8xf32> to vector<1x8xf32>
    %49 = vector.broadcast %48 : vector<1x8xf32> to vector<16x8xf32>
    %50 = arith.addf %46, %49 : vector<16x8xf32>
    %51 = vector.shape_cast %50 : vector<16x8xf32> to vector<2x8x8xf32>
    %c0_45 = arith.constant 0 : index
    %c1_46 = arith.constant 1 : index
    %c0_47 = arith.constant 0 : index
    %c0_48 = arith.constant 0 : index
    %52 = vector.load %arg7[%c0_45, %c1_46, %c0_47, %c0_48] : memref<1x4x32x8xf32, #tpu.memory_space<vmem>>, vector<1x1x32x8xf32>
    %53 = vector.shape_cast %52 : vector<1x1x32x8xf32> to vector<32x8xf32>
    %cst_49 = arith.constant dense<0.000000e+00> : vector<16x8xf32>
    %54 = tpu.matmul %3, %53, %cst_49 {dimension_numbers = #tpu.dot_dimension_numbers<[1], [0], [0], [1], [0, 0, 1, 1], [], []>} : vector<16x32xf32>, vector<32x8xf32>, vector<16x8xf32> -> vector<16x8xf32>
    %c0_50 = arith.constant 0 : index
    %c1_51 = arith.constant 1 : index
    %c0_52 = arith.constant 0 : index
    %c0_53 = arith.constant 0 : index
    %55 = vector.load %arg8[%c0_50, %c1_51, %c0_52, %c0_53] : memref<1x4x1x8xf32, #tpu.memory_space<vmem>>, vector<1x1x1x8xf32>
    %56 = vector.shape_cast %55 : vector<1x1x1x8xf32> to vector<1x8xf32>
    %57 = vector.broadcast %56 : vector<1x8xf32> to vector<16x8xf32>
    %58 = arith.addf %54, %57 : vector<16x8xf32>
    %59 = vector.shape_cast %58 : vector<16x8xf32> to vector<2x8x8xf32>
    %c0_54 = arith.constant 0 : index
    %c1_55 = arith.constant 1 : index
    %c0_56 = arith.constant 0 : index
    %c0_57 = arith.constant 0 : index
    %60 = vector.load %arg9[%c0_54, %c1_55, %c0_56, %c0_57] : memref<1x4x32x8xf32, #tpu.memory_space<vmem>>, vector<1x1x32x8xf32>
    %61 = vector.shape_cast %60 : vector<1x1x32x8xf32> to vector<32x8xf32>
    %cst_58 = arith.constant dense<0.000000e+00> : vector<16x8xf32>
    %62 = tpu.matmul %3, %61, %cst_58 {dimension_numbers = #tpu.dot_dimension_numbers<[1], [0], [0], [1], [0, 0, 1, 1], [], []>} : vector<16x32xf32>, vector<32x8xf32>, vector<16x8xf32> -> vector<16x8xf32>
    %c0_59 = arith.constant 0 : index
    %c1_60 = arith.constant 1 : index
    %c0_61 = arith.constant 0 : index
    %c0_62 = arith.constant 0 : index
    %63 = vector.load %arg10[%c0_59, %c1_60, %c0_61, %c0_62] : memref<1x4x1x8xf32, #tpu.memory_space<vmem>>, vector<1x1x1x8xf32>
    %64 = vector.shape_cast %63 : vector<1x1x1x8xf32> to vector<1x8xf32>
    %65 = vector.broadcast %64 : vector<1x8xf32> to vector<16x8xf32>
    %66 = arith.addf %62, %65 : vector<16x8xf32>
    %67 = vector.shape_cast %66 : vector<16x8xf32> to vector<2x8x8xf32>
    "tpu.trace_start"() <{level = 10 : i32, message = "bqd,bkd->bqk"}> : () -> ()
    %cst_63 = arith.constant dense<0.000000e+00> : vector<2x8x8xf32>
    %68 = tpu.matmul %51, %59, %cst_63 {dimension_numbers = #tpu.dot_dimension_numbers<[2], [2], [1], [1], [0, 0, 0, 1, 1, 1], [0], [0]>} : vector<2x8x8xf32>, vector<2x8x8xf32>, vector<2x8x8xf32> -> vector<2x8x8xf32>
    "tpu.trace_stop"() : () -> ()
    %cst_64 = arith.constant dense<0xFF800000> : vector<2x8xf32>
    %69 = vector.multi_reduction <maximumf>, %68, %cst_64 [2] : vector<2x8x8xf32> to vector<2x8xf32>
    %70 = vector.shape_cast %69 : vector<2x8xf32> to vector<2x8x1xf32>
    %71 = vector.broadcast %70 : vector<2x8x1xf32> to vector<2x8x8xf32>
    %72 = arith.subf %68, %71 : vector<2x8x8xf32>
    %73 = math.exp %72 : vector<2x8x8xf32>
    %cst_65 = arith.constant dense<0.000000e+00> : vector<2x8xf32>
    %74 = vector.multi_reduction <add>, %73, %cst_65 [2] : vector<2x8x8xf32> to vector<2x8xf32>
    %75 = vector.shape_cast %74 : vector<2x8xf32> to vector<2x8x1xf32>
    %76 = tpu.reciprocal %75 {approx = true} : vector<2x8x1xf32> -> vector<2x8x1xf32>
    %77 = vector.broadcast %76 : vector<2x8x1xf32> to vector<2x8x8xf32>
    %78 = arith.mulf %73, %77 : vector<2x8x8xf32>
    "tpu.trace_start"() <{level = 10 : i32, message = "bqk,bkd->bqd"}> : () -> ()
    %cst_66 = arith.constant dense<0.000000e+00> : vector<2x8x8xf32>
    %79 = tpu.matmul %78, %67, %cst_66 {dimension_numbers = #tpu.dot_dimension_numbers<[2], [1], [1], [2], [0, 0, 0, 1, 1, 2], [0], [0]>} : vector<2x8x8xf32>, vector<2x8x8xf32>, vector<2x8x8xf32> -> vector<2x8x8xf32>
    "tpu.trace_stop"() : () -> ()
    %80 = vector.shape_cast %79 : vector<2x8x8xf32> to vector<16x8xf32>
    %c0_67 = arith.constant 0 : index
    %c1_68 = arith.constant 1 : index
    %c0_69 = arith.constant 0 : index
    %c0_70 = arith.constant 0 : index
    %81 = vector.load %arg11[%c0_67, %c1_68, %c0_69, %c0_70] : memref<1x4x8x32xf32, #tpu.memory_space<vmem>>, vector<1x1x8x32xf32>
    %82 = vector.shape_cast %81 : vector<1x1x8x32xf32> to vector<8x32xf32>
    %cst_71 = arith.constant dense<0.000000e+00> : vector<16x32xf32>
    %83 = tpu.matmul %80, %82, %cst_71 {dimension_numbers = #tpu.dot_dimension_numbers<[1], [0], [0], [1], [0, 0, 1, 1], [], []>} : vector<16x8xf32>, vector<8x32xf32>, vector<16x32xf32> -> vector<16x32xf32>
    %84 = arith.addf %43, %83 : vector<16x32xf32>
    %c0_72 = arith.constant 0 : index
    %c2 = arith.constant 2 : index
    %c0_73 = arith.constant 0 : index
    %c0_74 = arith.constant 0 : index
    %85 = vector.load %arg5[%c0_72, %c2, %c0_73, %c0_74] : memref<1x4x32x8xf32, #tpu.memory_space<vmem>>, vector<1x1x32x8xf32>
    %86 = vector.shape_cast %85 : vector<1x1x32x8xf32> to vector<32x8xf32>
    %cst_75 = arith.constant dense<0.000000e+00> : vector<16x8xf32>
    %87 = tpu.matmul %3, %86, %cst_75 {dimension_numbers = #tpu.dot_dimension_numbers<[1], [0], [0], [1], [0, 0, 1, 1], [], []>} : vector<16x32xf32>, vector<32x8xf32>, vector<16x8xf32> -> vector<16x8xf32>
    %c0_76 = arith.constant 0 : index
    %c2_77 = arith.constant 2 : index
    %c0_78 = arith.constant 0 : index
    %c0_79 = arith.constant 0 : index
    %88 = vector.load %arg6[%c0_76, %c2_77, %c0_78, %c0_79] : memref<1x4x1x8xf32, #tpu.memory_space<vmem>>, vector<1x1x1x8xf32>
    %89 = vector.shape_cast %88 : vector<1x1x1x8xf32> to vector<1x8xf32>
    %90 = vector.broadcast %89 : vector<1x8xf32> to vector<16x8xf32>
    %91 = arith.addf %87, %90 : vector<16x8xf32>
    %92 = vector.shape_cast %91 : vector<16x8xf32> to vector<2x8x8xf32>
    %c0_80 = arith.constant 0 : index
    %c2_81 = arith.constant 2 : index
    %c0_82 = arith.constant 0 : index
    %c0_83 = arith.constant 0 : index
    %93 = vector.load %arg7[%c0_80, %c2_81, %c0_82, %c0_83] : memref<1x4x32x8xf32, #tpu.memory_space<vmem>>, vector<1x1x32x8xf32>
    %94 = vector.shape_cast %93 : vector<1x1x32x8xf32> to vector<32x8xf32>
    %cst_84 = arith.constant dense<0.000000e+00> : vector<16x8xf32>
    %95 = tpu.matmul %3, %94, %cst_84 {dimension_numbers = #tpu.dot_dimension_numbers<[1], [0], [0], [1], [0, 0, 1, 1], [], []>} : vector<16x32xf32>, vector<32x8xf32>, vector<16x8xf32> -> vector<16x8xf32>
    %c0_85 = arith.constant 0 : index
    %c2_86 = arith.constant 2 : index
    %c0_87 = arith.constant 0 : index
    %c0_88 = arith.constant 0 : index
    %96 = vector.load %arg8[%c0_85, %c2_86, %c0_87, %c0_88] : memref<1x4x1x8xf32, #tpu.memory_space<vmem>>, vector<1x1x1x8xf32>
    %97 = vector.shape_cast %96 : vector<1x1x1x8xf32> to vector<1x8xf32>
    %98 = vector.broadcast %97 : vector<1x8xf32> to vector<16x8xf32>
    %99 = arith.addf %95, %98 : vector<16x8xf32>
    %100 = vector.shape_cast %99 : vector<16x8xf32> to vector<2x8x8xf32>
    %c0_89 = arith.constant 0 : index
    %c2_90 = arith.constant 2 : index
    %c0_91 = arith.constant 0 : index
    %c0_92 = arith.constant 0 : index
    %101 = vector.load %arg9[%c0_89, %c2_90, %c0_91, %c0_92] : memref<1x4x32x8xf32, #tpu.memory_space<vmem>>, vector<1x1x32x8xf32>
    %102 = vector.shape_cast %101 : vector<1x1x32x8xf32> to vector<32x8xf32>
    %cst_93 = arith.constant dense<0.000000e+00> : vector<16x8xf32>
    %103 = tpu.matmul %3, %102, %cst_93 {dimension_numbers = #tpu.dot_dimension_numbers<[1], [0], [0], [1], [0, 0, 1, 1], [], []>} : vector<16x32xf32>, vector<32x8xf32>, vector<16x8xf32> -> vector<16x8xf32>
    %c0_94 = arith.constant 0 : index
    %c2_95 = arith.constant 2 : index
    %c0_96 = arith.constant 0 : index
    %c0_97 = arith.constant 0 : index
    %104 = vector.load %arg10[%c0_94, %c2_95, %c0_96, %c0_97] : memref<1x4x1x8xf32, #tpu.memory_space<vmem>>, vector<1x1x1x8xf32>
    %105 = vector.shape_cast %104 : vector<1x1x1x8xf32> to vector<1x8xf32>
    %106 = vector.broadcast %105 : vector<1x8xf32> to vector<16x8xf32>
    %107 = arith.addf %103, %106 : vector<16x8xf32>
    %108 = vector.shape_cast %107 : vector<16x8xf32> to vector<2x8x8xf32>
    "tpu.trace_start"() <{level = 10 : i32, message = "bqd,bkd->bqk"}> : () -> ()
    %cst_98 = arith.constant dense<0.000000e+00> : vector<2x8x8xf32>
    %109 = tpu.matmul %92, %100, %cst_98 {dimension_numbers = #tpu.dot_dimension_numbers<[2], [2], [1], [1], [0, 0, 0, 1, 1, 1], [0], [0]>} : vector<2x8x8xf32>, vector<2x8x8xf32>, vector<2x8x8xf32> -> vector<2x8x8xf32>
    "tpu.trace_stop"() : () -> ()
    %cst_99 = arith.constant dense<0xFF800000> : vector<2x8xf32>
    %110 = vector.multi_reduction <maximumf>, %109, %cst_99 [2] : vector<2x8x8xf32> to vector<2x8xf32>
    %111 = vector.shape_cast %110 : vector<2x8xf32> to vector<2x8x1xf32>
    %112 = vector.broadcast %111 : vector<2x8x1xf32> to vector<2x8x8xf32>
    %113 = arith.subf %109, %112 : vector<2x8x8xf32>
    %114 = math.exp %113 : vector<2x8x8xf32>
    %cst_100 = arith.constant dense<0.000000e+00> : vector<2x8xf32>
    %115 = vector.multi_reduction <add>, %114, %cst_100 [2] : vector<2x8x8xf32> to vector<2x8xf32>
    %116 = vector.shape_cast %115 : vector<2x8xf32> to vector<2x8x1xf32>
    %117 = tpu.reciprocal %116 {approx = true} : vector<2x8x1xf32> -> vector<2x8x1xf32>
    %118 = vector.broadcast %117 : vector<2x8x1xf32> to vector<2x8x8xf32>
    %119 = arith.mulf %114, %118 : vector<2x8x8xf32>
    "tpu.trace_start"() <{level = 10 : i32, message = "bqk,bkd->bqd"}> : () -> ()
    %cst_101 = arith.constant dense<0.000000e+00> : vector<2x8x8xf32>
    %120 = tpu.matmul %119, %108, %cst_101 {dimension_numbers = #tpu.dot_dimension_numbers<[2], [1], [1], [2], [0, 0, 0, 1, 1, 2], [0], [0]>} : vector<2x8x8xf32>, vector<2x8x8xf32>, vector<2x8x8xf32> -> vector<2x8x8xf32>
    "tpu.trace_stop"() : () -> ()
    %121 = vector.shape_cast %120 : vector<2x8x8xf32> to vector<16x8xf32>
    %c0_102 = arith.constant 0 : index
    %c2_103 = arith.constant 2 : index
    %c0_104 = arith.constant 0 : index
    %c0_105 = arith.constant 0 : index
    %122 = vector.load %arg11[%c0_102, %c2_103, %c0_104, %c0_105] : memref<1x4x8x32xf32, #tpu.memory_space<vmem>>, vector<1x1x8x32xf32>
    %123 = vector.shape_cast %122 : vector<1x1x8x32xf32> to vector<8x32xf32>
    %cst_106 = arith.constant dense<0.000000e+00> : vector<16x32xf32>
    %124 = tpu.matmul %121, %123, %cst_106 {dimension_numbers = #tpu.dot_dimension_numbers<[1], [0], [0], [1], [0, 0, 1, 1], [], []>} : vector<16x8xf32>, vector<8x32xf32>, vector<16x32xf32> -> vector<16x32xf32>
    %125 = arith.addf %84, %124 : vector<16x32xf32>
    %c0_107 = arith.constant 0 : index
    %c3 = arith.constant 3 : index
    %c0_108 = arith.constant 0 : index
    %c0_109 = arith.constant 0 : index
    %126 = vector.load %arg5[%c0_107, %c3, %c0_108, %c0_109] : memref<1x4x32x8xf32, #tpu.memory_space<vmem>>, vector<1x1x32x8xf32>
    %127 = vector.shape_cast %126 : vector<1x1x32x8xf32> to vector<32x8xf32>
    %cst_110 = arith.constant dense<0.000000e+00> : vector<16x8xf32>
    %128 = tpu.matmul %3, %127, %cst_110 {dimension_numbers = #tpu.dot_dimension_numbers<[1], [0], [0], [1], [0, 0, 1, 1], [], []>} : vector<16x32xf32>, vector<32x8xf32>, vector<16x8xf32> -> vector<16x8xf32>
    %c0_111 = arith.constant 0 : index
    %c3_112 = arith.constant 3 : index
    %c0_113 = arith.constant 0 : index
    %c0_114 = arith.constant 0 : index
    %129 = vector.load %arg6[%c0_111, %c3_112, %c0_113, %c0_114] : memref<1x4x1x8xf32, #tpu.memory_space<vmem>>, vector<1x1x1x8xf32>
    %130 = vector.shape_cast %129 : vector<1x1x1x8xf32> to vector<1x8xf32>
    %131 = vector.broadcast %130 : vector<1x8xf32> to vector<16x8xf32>
    %132 = arith.addf %128, %131 : vector<16x8xf32>
    %133 = vector.shape_cast %132 : vector<16x8xf32> to vector<2x8x8xf32>
    %c0_115 = arith.constant 0 : index
    %c3_116 = arith.constant 3 : index
    %c0_117 = arith.constant 0 : index
    %c0_118 = arith.constant 0 : index
    %134 = vector.load %arg7[%c0_115, %c3_116, %c0_117, %c0_118] : memref<1x4x32x8xf32, #tpu.memory_space<vmem>>, vector<1x1x32x8xf32>
    %135 = vector.shape_cast %134 : vector<1x1x32x8xf32> to vector<32x8xf32>
    %cst_119 = arith.constant dense<0.000000e+00> : vector<16x8xf32>
    %136 = tpu.matmul %3, %135, %cst_119 {dimension_numbers = #tpu.dot_dimension_numbers<[1], [0], [0], [1], [0, 0, 1, 1], [], []>} : vector<16x32xf32>, vector<32x8xf32>, vector<16x8xf32> -> vector<16x8xf32>
    %c0_120 = arith.constant 0 : index
    %c3_121 = arith.constant 3 : index
    %c0_122 = arith.constant 0 : index
    %c0_123 = arith.constant 0 : index
    %137 = vector.load %arg8[%c0_120, %c3_121, %c0_122, %c0_123] : memref<1x4x1x8xf32, #tpu.memory_space<vmem>>, vector<1x1x1x8xf32>
    %138 = vector.shape_cast %137 : vector<1x1x1x8xf32> to vector<1x8xf32>
    %139 = vector.broadcast %138 : vector<1x8xf32> to vector<16x8xf32>
    %140 = arith.addf %136, %139 : vector<16x8xf32>
    %141 = vector.shape_cast %140 : vector<16x8xf32> to vector<2x8x8xf32>
    %c0_124 = arith.constant 0 : index
    %c3_125 = arith.constant 3 : index
    %c0_126 = arith.constant 0 : index
    %c0_127 = arith.constant 0 : index
    %142 = vector.load %arg9[%c0_124, %c3_125, %c0_126, %c0_127] : memref<1x4x32x8xf32, #tpu.memory_space<vmem>>, vector<1x1x32x8xf32>
    %143 = vector.shape_cast %142 : vector<1x1x32x8xf32> to vector<32x8xf32>
    %cst_128 = arith.constant dense<0.000000e+00> : vector<16x8xf32>
    %144 = tpu.matmul %3, %143, %cst_128 {dimension_numbers = #tpu.dot_dimension_numbers<[1], [0], [0], [1], [0, 0, 1, 1], [], []>} : vector<16x32xf32>, vector<32x8xf32>, vector<16x8xf32> -> vector<16x8xf32>
    %c0_129 = arith.constant 0 : index
    %c3_130 = arith.constant 3 : index
    %c0_131 = arith.constant 0 : index
    %c0_132 = arith.constant 0 : index
    %145 = vector.load %arg10[%c0_129, %c3_130, %c0_131, %c0_132] : memref<1x4x1x8xf32, #tpu.memory_space<vmem>>, vector<1x1x1x8xf32>
    %146 = vector.shape_cast %145 : vector<1x1x1x8xf32> to vector<1x8xf32>
    %147 = vector.broadcast %146 : vector<1x8xf32> to vector<16x8xf32>
    %148 = arith.addf %144, %147 : vector<16x8xf32>
    %149 = vector.shape_cast %148 : vector<16x8xf32> to vector<2x8x8xf32>
    "tpu.trace_start"() <{level = 10 : i32, message = "bqd,bkd->bqk"}> : () -> ()
    %cst_133 = arith.constant dense<0.000000e+00> : vector<2x8x8xf32>
    %150 = tpu.matmul %133, %141, %cst_133 {dimension_numbers = #tpu.dot_dimension_numbers<[2], [2], [1], [1], [0, 0, 0, 1, 1, 1], [0], [0]>} : vector<2x8x8xf32>, vector<2x8x8xf32>, vector<2x8x8xf32> -> vector<2x8x8xf32>
    "tpu.trace_stop"() : () -> ()
    %cst_134 = arith.constant dense<0xFF800000> : vector<2x8xf32>
    %151 = vector.multi_reduction <maximumf>, %150, %cst_134 [2] : vector<2x8x8xf32> to vector<2x8xf32>
    %152 = vector.shape_cast %151 : vector<2x8xf32> to vector<2x8x1xf32>
    %153 = vector.broadcast %152 : vector<2x8x1xf32> to vector<2x8x8xf32>
    %154 = arith.subf %150, %153 : vector<2x8x8xf32>
    %155 = math.exp %154 : vector<2x8x8xf32>
    %cst_135 = arith.constant dense<0.000000e+00> : vector<2x8xf32>
    %156 = vector.multi_reduction <add>, %155, %cst_135 [2] : vector<2x8x8xf32> to vector<2x8xf32>
    %157 = vector.shape_cast %156 : vector<2x8xf32> to vector<2x8x1xf32>
    %158 = tpu.reciprocal %157 {approx = true} : vector<2x8x1xf32> -> vector<2x8x1xf32>
    %159 = vector.broadcast %158 : vector<2x8x1xf32> to vector<2x8x8xf32>
    %160 = arith.mulf %155, %159 : vector<2x8x8xf32>
    "tpu.trace_start"() <{level = 10 : i32, message = "bqk,bkd->bqd"}> : () -> ()
    %cst_136 = arith.constant dense<0.000000e+00> : vector<2x8x8xf32>
    %161 = tpu.matmul %160, %149, %cst_136 {dimension_numbers = #tpu.dot_dimension_numbers<[2], [1], [1], [2], [0, 0, 0, 1, 1, 2], [0], [0]>} : vector<2x8x8xf32>, vector<2x8x8xf32>, vector<2x8x8xf32> -> vector<2x8x8xf32>
    "tpu.trace_stop"() : () -> ()
    %162 = vector.shape_cast %161 : vector<2x8x8xf32> to vector<16x8xf32>
    %c0_137 = arith.constant 0 : index
    %c3_138 = arith.constant 3 : index
    %c0_139 = arith.constant 0 : index
    %c0_140 = arith.constant 0 : index
    %163 = vector.load %arg11[%c0_137, %c3_138, %c0_139, %c0_140] : memref<1x4x8x32xf32, #tpu.memory_space<vmem>>, vector<1x1x8x32xf32>
    %164 = vector.shape_cast %163 : vector<1x1x8x32xf32> to vector<8x32xf32>
    %cst_141 = arith.constant dense<0.000000e+00> : vector<16x32xf32>
    %165 = tpu.matmul %162, %164, %cst_141 {dimension_numbers = #tpu.dot_dimension_numbers<[1], [0], [0], [1], [0, 0, 1, 1], [], []>} : vector<16x8xf32>, vector<8x32xf32>, vector<16x32xf32> -> vector<16x32xf32>
    %166 = arith.addf %125, %165 : vector<16x32xf32>
    %c0_142 = arith.constant 0 : index
    %c0_143 = arith.constant 0 : index
    %c0_144 = arith.constant 0 : index
    %167 = vector.load %arg12[%c0_142, %c0_143, %c0_144] : memref<1x1x32xf32, #tpu.memory_space<vmem>>, vector<1x1x32xf32>
    %168 = vector.shape_cast %167 : vector<1x1x32xf32> to vector<1x32xf32>
    %169 = vector.broadcast %168 : vector<1x32xf32> to vector<16x32xf32>
    %170 = arith.addf %166, %169 : vector<16x32xf32>
    %171 = arith.addf %3, %170 : vector<16x32xf32>
    %cst_145 = arith.constant dense<0.000000e+00> : vector<16xf32>
    %172 = vector.multi_reduction <add>, %171, %cst_145 [1] : vector<16x32xf32> to vector<16xf32>
    %173 = vector.shape_cast %172 : vector<16xf32> to vector<16x1xf32>
    %cst_146 = arith.constant 3.200000e+01 : f32
    %174 = vector.broadcast %cst_146 : f32 to vector<16x1xf32>
    %175 = arith.divf %173, %174 : vector<16x1xf32>
    %176 = arith.mulf %171, %171 : vector<16x32xf32>
    %cst_147 = arith.constant dense<0.000000e+00> : vector<16xf32>
    %177 = vector.multi_reduction <add>, %176, %cst_147 [1] : vector<16x32xf32> to vector<16xf32>
    %178 = vector.shape_cast %177 : vector<16xf32> to vector<16x1xf32>
    %cst_148 = arith.constant 3.200000e+01 : f32
    %179 = vector.broadcast %cst_148 : f32 to vector<16x1xf32>
    %180 = arith.divf %178, %179 : vector<16x1xf32>
    %181 = arith.mulf %175, %175 : vector<16x1xf32>
    %182 = arith.subf %180, %181 : vector<16x1xf32>
    %183 = vector.broadcast %175 : vector<16x1xf32> to vector<16x32xf32>
    %184 = arith.subf %171, %183 : vector<16x32xf32>
    %cst_149 = arith.constant 9.99999974E-6 : f32
    %185 = vector.broadcast %cst_149 : f32 to vector<16x1xf32>
    %186 = arith.addf %182, %185 : vector<16x1xf32>
    %187 = math.rsqrt %186 : vector<16x1xf32>
    %188 = vector.broadcast %187 : vector<16x1xf32> to vector<16x32xf32>
    %189 = arith.mulf %184, %188 : vector<16x32xf32>
    %c0_150 = arith.constant 0 : index
    %c0_151 = arith.constant 0 : index
    %c0_152 = arith.constant 0 : index
    %190 = vector.load %arg13[%c0_150, %c0_151, %c0_152] : memref<1x1x32xf32, #tpu.memory_space<vmem>>, vector<1x1x32xf32>
    %191 = vector.shape_cast %190 : vector<1x1x32xf32> to vector<1x32xf32>
    %192 = vector.broadcast %191 : vector<1x32xf32> to vector<16x32xf32>
    %193 = arith.mulf %189, %192 : vector<16x32xf32>
    %c0_153 = arith.constant 0 : index
    %c0_154 = arith.constant 0 : index
    %c0_155 = arith.constant 0 : index
    %194 = vector.load %arg14[%c0_153, %c0_154, %c0_155] : memref<1x1x32xf32, #tpu.memory_space<vmem>>, vector<1x1x32xf32>
    %195 = vector.shape_cast %194 : vector<1x1x32xf32> to vector<1x32xf32>
    %196 = vector.broadcast %195 : vector<1x32xf32> to vector<16x32xf32>
    %197 = arith.addf %193, %196 : vector<16x32xf32>
    %c0_156 = arith.constant 0 : index
    %c0_157 = arith.constant 0 : index
    %c0_158 = arith.constant 0 : index
    %198 = vector.load %arg15[%c0_156, %c0_157, %c0_158] : memref<1x32x2048xf32, #tpu.memory_space<vmem>>, vector<1x32x2048xf32>
    %199 = vector.shape_cast %198 : vector<1x32x2048xf32> to vector<32x2048xf32>
    %cst_159 = arith.constant dense<0.000000e+00> : vector<16x2048xf32>
    %200 = tpu.matmul %197, %199, %cst_159 {dimension_numbers = #tpu.dot_dimension_numbers<[1], [0], [0], [1], [0, 0, 1, 1], [], []>} : vector<16x32xf32>, vector<32x2048xf32>, vector<16x2048xf32> -> vector<16x2048xf32>
    %c0_160 = arith.constant 0 : index
    %c0_161 = arith.constant 0 : index
    %c0_162 = arith.constant 0 : index
    %201 = vector.load %arg16[%c0_160, %c0_161, %c0_162] : memref<1x1x2048xf32, #tpu.memory_space<vmem>>, vector<1x1x2048xf32>
    %202 = vector.shape_cast %201 : vector<1x1x2048xf32> to vector<1x2048xf32>
    %203 = vector.broadcast %202 : vector<1x2048xf32> to vector<16x2048xf32>
    %204 = arith.addf %200, %203 : vector<16x2048xf32>
    %cst_163 = arith.constant 0.000000e+00 : f32
    %205 = vector.broadcast %cst_163 : f32 to vector<16x2048xf32>
    %206 = arith.maximumf %204, %205 : vector<16x2048xf32>
    %c0_164 = arith.constant 0 : index
    %c0_165 = arith.constant 0 : index
    %c0_166 = arith.constant 0 : index
    %207 = vector.load %arg17[%c0_164, %c0_165, %c0_166] : memref<1x2048x32xf32, #tpu.memory_space<vmem>>, vector<1x2048x32xf32>
    %208 = vector.shape_cast %207 : vector<1x2048x32xf32> to vector<2048x32xf32>
    %cst_167 = arith.constant dense<0.000000e+00> : vector<16x32xf32>
    %209 = tpu.matmul %206, %208, %cst_167 {dimension_numbers = #tpu.dot_dimension_numbers<[1], [0], [0], [1], [0, 0, 1, 1], [], []>} : vector<16x2048xf32>, vector<2048x32xf32>, vector<16x32xf32> -> vector<16x32xf32>
    %c0_168 = arith.constant 0 : index
    %c0_169 = arith.constant 0 : index
    %c0_170 = arith.constant 0 : index
    %210 = vector.load %arg18[%c0_168, %c0_169, %c0_170] : memref<1x1x32xf32, #tpu.memory_space<vmem>>, vector<1x1x32xf32>
    %211 = vector.shape_cast %210 : vector<1x1x32xf32> to vector<1x32xf32>
    %212 = vector.broadcast %211 : vector<1x32xf32> to vector<16x32xf32>
    %213 = arith.addf %209, %212 : vector<16x32xf32>
    %214 = arith.addf %197, %213 : vector<16x32xf32>
    %cst_171 = arith.constant dense<0.000000e+00> : vector<16xf32>
    %215 = vector.multi_reduction <add>, %214, %cst_171 [1] : vector<16x32xf32> to vector<16xf32>
    %216 = vector.shape_cast %215 : vector<16xf32> to vector<16x1xf32>
    %cst_172 = arith.constant 3.200000e+01 : f32
    %217 = vector.broadcast %cst_172 : f32 to vector<16x1xf32>
    %218 = arith.divf %216, %217 : vector<16x1xf32>
    %219 = arith.mulf %214, %214 : vector<16x32xf32>
    %cst_173 = arith.constant dense<0.000000e+00> : vector<16xf32>
    %220 = vector.multi_reduction <add>, %219, %cst_173 [1] : vector<16x32xf32> to vector<16xf32>
    %221 = vector.shape_cast %220 : vector<16xf32> to vector<16x1xf32>
    %cst_174 = arith.constant 3.200000e+01 : f32
    %222 = vector.broadcast %cst_174 : f32 to vector<16x1xf32>
    %223 = arith.divf %221, %222 : vector<16x1xf32>
    %224 = arith.mulf %218, %218 : vector<16x1xf32>
    %225 = arith.subf %223, %224 : vector<16x1xf32>
    %226 = vector.broadcast %218 : vector<16x1xf32> to vector<16x32xf32>
    %227 = arith.subf %214, %226 : vector<16x32xf32>
    %cst_175 = arith.constant 9.99999974E-6 : f32
    %228 = vector.broadcast %cst_175 : f32 to vector<16x1xf32>
    %229 = arith.addf %225, %228 : vector<16x1xf32>
    %230 = math.rsqrt %229 : vector<16x1xf32>
    %231 = vector.broadcast %230 : vector<16x1xf32> to vector<16x32xf32>
    %232 = arith.mulf %227, %231 : vector<16x32xf32>
    %c0_176 = arith.constant 0 : index
    %c0_177 = arith.constant 0 : index
    %c0_178 = arith.constant 0 : index
    %233 = vector.load %arg19[%c0_176, %c0_177, %c0_178] : memref<1x1x32xf32, #tpu.memory_space<vmem>>, vector<1x1x32xf32>
    %234 = vector.shape_cast %233 : vector<1x1x32xf32> to vector<1x32xf32>
    %235 = vector.broadcast %234 : vector<1x32xf32> to vector<16x32xf32>
    %236 = arith.mulf %232, %235 : vector<16x32xf32>
    %c0_179 = arith.constant 0 : index
    %c0_180 = arith.constant 0 : index
    %c0_181 = arith.constant 0 : index
    %237 = vector.load %arg20[%c0_179, %c0_180, %c0_181] : memref<1x1x32xf32, #tpu.memory_space<vmem>>, vector<1x1x32xf32>
    %238 = vector.shape_cast %237 : vector<1x1x32xf32> to vector<1x32xf32>
    %239 = vector.broadcast %238 : vector<1x32xf32> to vector<16x32xf32>
    %240 = arith.addf %236, %239 : vector<16x32xf32>
    %c0_182 = arith.constant 0 : index
    %c0_183 = arith.constant 0 : index
    %241 = vector.load %arg24[%c0_182, %c0_183] : memref<16x32xf32, #tpu.memory_space<vmem>>, vector<16x32xf32>
    tpu.vector_store %arg24[%c0_182, %c0_183], %240 {strides = array<i32>} : memref<16x32xf32, #tpu.memory_space<vmem>>, vector<16x32xf32>,
    %c1_i32 = arith.constant 1 : i32
    %242 = arith.cmpi eq, %arg0, %c1_i32 : i32
    %243 = arith.extui %242 : i1 to i32
    %c0_i32_184 = arith.constant 0 : i32
    %244 = arith.cmpi ne, %243, %c0_i32_184 : i32
    scf.if %244 {
      %245 = vector.shape_cast %240 : vector<16x32xf32> to vector<2x8x32xf32>
      %246 = vector.extract_strided_slice %245 {offsets = [0, 7, 0], sizes = [2, 1, 32], strides = [1, 1, 1]} : vector<2x8x32xf32> to vector<2x1x32xf32>
      %247 = vector.shape_cast %246 : vector<2x1x32xf32> to vector<2x32xf32>
      %c0_185 = arith.constant 0 : index
      %c0_186 = arith.constant 0 : index
      %248 = vector.load %arg21[%c0_185, %c0_186] : memref<32x1xf32, #tpu.memory_space<vmem>>, vector<32x1xf32>
      %cst_187 = arith.constant dense<0.000000e+00> : vector<2x1xf32>
      %249 = tpu.matmul %247, %248, %cst_187 {dimension_numbers = #tpu.dot_dimension_numbers<[1], [0], [0], [1], [0, 0, 1, 1], [], []>} : vector<2x32xf32>, vector<32x1xf32>, vector<2x1xf32> -> vector<2x1xf32>
      %c0_188 = arith.constant 0 : index
      %c0_189 = arith.constant 0 : index
      %250 = vector.load %arg22[%c0_188, %c0_189] : memref<1x1xf32, #tpu.memory_space<vmem>>, vector<1x1xf32>
      %251 = vector.broadcast %250 : vector<1x1xf32> to vector<2x1xf32>
      %252 = arith.addf %249, %251 : vector<2x1xf32>
      %c0_190 = arith.constant 0 : index
      %c0_191 = arith.constant 0 : index
      %253 = vector.load %arg23[%c0_190, %c0_191] : memref<2x1xf32, #tpu.memory_space<vmem>>, vector<2x1xf32>
      tpu.vector_store %arg23[%c0_190, %c0_191], %252 {strides = array<i32>} : memref<2x1xf32, #tpu.memory_space<vmem>>, vector<2x1xf32>,
    } else {
    }
    return
  }
  func.func @transform_0(%arg0: i32) -> (i32, i32, i32) {
    %c0_i32 = arith.constant 0 : i32
    %c0_i32_0 = arith.constant 0 : i32
    %c0_i32_1 = arith.constant 0 : i32
    %c0_i32_2 = arith.constant 0 : i32
    return %c0_i32, %c0_i32_0, %c0_i32_1 : i32, i32, i32
  }
  func.func @transform_1(%arg0: i32) -> (i32, i32) {
    %c0_i32 = arith.constant 0 : i32
    %c0_i32_0 = arith.constant 0 : i32
    %c0_i32_1 = arith.constant 0 : i32
    return %c0_i32, %c0_i32_0 : i32, i32
  }
  func.func @transform_2(%arg0: i32) -> (i32, i32) {
    %c0_i32 = arith.constant 0 : i32
    %c0_i32_0 = arith.constant 0 : i32
    %c0_i32_1 = arith.constant 0 : i32
    return %c0_i32, %c0_i32_0 : i32, i32
  }
  func.func @transform_3(%arg0: i32) -> (i32, i32, i32) {
    %c0_i32 = arith.constant 0 : i32
    %c0_i32_0 = arith.constant 0 : i32
    %c0_i32_1 = arith.constant 0 : i32
    %c0_i32_2 = arith.constant 0 : i32
    return %c0_i32, %c0_i32_0, %c0_i32_1 : i32, i32, i32
  }
  func.func @transform_4(%arg0: i32) -> (i32, i32, i32, i32) {
    %c0_i32 = arith.constant 0 : i32
    %c0_i32_0 = arith.constant 0 : i32
    %c0_i32_1 = arith.constant 0 : i32
    %c0_i32_2 = arith.constant 0 : i32
    return %arg0, %c0_i32, %c0_i32_0, %c0_i32_1 : i32, i32, i32, i32
  }
  func.func @transform_5(%arg0: i32) -> (i32, i32, i32, i32) {
    %c0_i32 = arith.constant 0 : i32
    %c0_i32_0 = arith.constant 0 : i32
    %c0_i32_1 = arith.constant 0 : i32
    %c0_i32_2 = arith.constant 0 : i32
    return %arg0, %c0_i32, %c0_i32_0, %c0_i32_1 : i32, i32, i32, i32
  }
  func.func @transform_6(%arg0: i32) -> (i32, i32, i32, i32) {
    %c0_i32 = arith.constant 0 : i32
    %c0_i32_0 = arith.constant 0 : i32
    %c0_i32_1 = arith.constant 0 : i32
    %c0_i32_2 = arith.constant 0 : i32
    return %arg0, %c0_i32, %c0_i32_0, %c0_i32_1 : i32, i32, i32, i32
  }
  func.func @transform_7(%arg0: i32) -> (i32, i32, i32, i32) {
    %c0_i32 = arith.constant 0 : i32
    %c0_i32_0 = arith.constant 0 : i32
    %c0_i32_1 = arith.constant 0 : i32
    %c0_i32_2 = arith.constant 0 : i32
    return %arg0, %c0_i32, %c0_i32_0, %c0_i32_1 : i32, i32, i32, i32
  }
  func.func @transform_8(%arg0: i32) -> (i32, i32, i32, i32) {
    %c0_i32 = arith.constant 0 : i32
    %c0_i32_0 = arith.constant 0 : i32
    %c0_i32_1 = arith.constant 0 : i32
    %c0_i32_2 = arith.constant 0 : i32
    return %arg0, %c0_i32, %c0_i32_0, %c0_i32_1 : i32, i32, i32, i32
  }
  func.func @transform_9(%arg0: i32) -> (i32, i32, i32, i32) {
    %c0_i32 = arith.constant 0 : i32
    %c0_i32_0 = arith.constant 0 : i32
    %c0_i32_1 = arith.constant 0 : i32
    %c0_i32_2 = arith.constant 0 : i32
    return %arg0, %c0_i32, %c0_i32_0, %c0_i32_1 : i32, i32, i32, i32
  }
  func.func @transform_10(%arg0: i32) -> (i32, i32, i32, i32) {
    %c0_i32 = arith.constant 0 : i32
    %c0_i32_0 = arith.constant 0 : i32
    %c0_i32_1 = arith.constant 0 : i32
    %c0_i32_2 = arith.constant 0 : i32
    return %arg0, %c0_i32, %c0_i32_0, %c0_i32_1 : i32, i32, i32, i32
  }
  func.func @transform_11(%arg0: i32) -> (i32, i32, i32) {
    %c0_i32 = arith.constant 0 : i32
    %c0_i32_0 = arith.constant 0 : i32
    %c0_i32_1 = arith.constant 0 : i32
    return %arg0, %c0_i32, %c0_i32_0 : i32, i32, i32
  }
  func.func @transform_12(%arg0: i32) -> (i32, i32, i32) {
    %c0_i32 = arith.constant 0 : i32
    %c0_i32_0 = arith.constant 0 : i32
    %c0_i32_1 = arith.constant 0 : i32
    return %arg0, %c0_i32, %c0_i32_0 : i32, i32, i32
  }
  func.func @transform_13(%arg0: i32) -> (i32, i32, i32) {
    %c0_i32 = arith.constant 0 : i32
    %c0_i32_0 = arith.constant 0 : i32
    %c0_i32_1 = arith.constant 0 : i32
    return %arg0, %c0_i32, %c0_i32_0 : i32, i32, i32
  }
  func.func @transform_14(%arg0: i32) -> (i32, i32, i32) {
    %c0_i32 = arith.constant 0 : i32
    %c0_i32_0 = arith.constant 0 : i32
    %c0_i32_1 = arith.constant 0 : i32
    return %arg0, %c0_i32, %c0_i32_0 : i32, i32, i32
  }
  func.func @transform_15(%arg0: i32) -> (i32, i32, i32) {
    %c0_i32 = arith.constant 0 : i32
    %c0_i32_0 = arith.constant 0 : i32
    %c0_i32_1 = arith.constant 0 : i32
    return %arg0, %c0_i32, %c0_i32_0 : i32, i32, i32
  }
  func.func @transform_16(%arg0: i32) -> (i32, i32, i32) {
    %c0_i32 = arith.constant 0 : i32
    %c0_i32_0 = arith.constant 0 : i32
    %c0_i32_1 = arith.constant 0 : i32
    return %arg0, %c0_i32, %c0_i32_0 : i32, i32, i32
  }
  func.func @transform_17(%arg0: i32) -> (i32, i32, i32) {
    %c0_i32 = arith.constant 0 : i32
    %c0_i32_0 = arith.constant 0 : i32
    %c0_i32_1 = arith.constant 0 : i32
    return %arg0, %c0_i32, %c0_i32_0 : i32, i32, i32
  }
  func.func @transform_18(%arg0: i32) -> (i32, i32, i32) {
    %c0_i32 = arith.constant 0 : i32
    %c0_i32_0 = arith.constant 0 : i32
    %c0_i32_1 = arith.constant 0 : i32
    return %arg0, %c0_i32, %c0_i32_0 : i32, i32, i32
  }
  func.func @transform_19(%arg0: i32) -> (i32, i32, i32) {
    %c0_i32 = arith.constant 0 : i32
    %c0_i32_0 = arith.constant 0 : i32
    %c0_i32_1 = arith.constant 0 : i32
    return %arg0, %c0_i32, %c0_i32_0 : i32, i32, i32
  }
  func.func @transform_20(%arg0: i32) -> (i32, i32) {
    %c0_i32 = arith.constant 0 : i32
    %c0_i32_0 = arith.constant 0 : i32
    %c0_i32_1 = arith.constant 0 : i32
    return %c0_i32, %c0_i32_0 : i32, i32
  }
  func.func @transform_21(%arg0: i32) -> (i32, i32) {
    %c0_i32 = arith.constant 0 : i32
    %c0_i32_0 = arith.constant 0 : i32
    %c0_i32_1 = arith.constant 0 : i32
    return %c0_i32, %c0_i32_0 : i32, i32
  }
  func.func @transform_22(%arg0: i32) -> (i32, i32) {
    %c0_i32 = arith.constant 0 : i32
    %c0_i32_0 = arith.constant 0 : i32
    %c0_i32_1 = arith.constant 0 : i32
    return %c0_i32, %c0_i32_0 : i32, i32
  }
}

</mosaic_0001>

<llo_original>
// kernel: tpu_custom_call.1
$region0: #{tpu_custom_call.1}
  #allocation0 [shape = 'u32[]', space=smem, size = 0x4, offset = 0x4, fixed_abs, tag = 'smem constant byte address 0x4 - core index']
  #allocation1 [shape = 'u32[144,128]{1,0:T(1,128)}', space=vmem, size = 0x12000, scoped, tag = 'internal scratch']
  #allocation2 [shape = 'f32[16,32]{1,0:T(8,128)}', space=vmem, size = 0x2000, scoped, tag = 'scratch operand']
  #allocation3 [shape = 'f32[1,1]{1,0:T(1,128)S(1)}', space=vmem, size = 0x200, scoped, tag = 'scoped memory for tpu_custom_call.1']
  %s0 = inlined_call_operand.vmem [shape: f32[2,8,4], index: 0, kind: input, shape index: {}]
  %s1 = inlined_call_operand.vmem [shape: f32[4,32], index: 1, kind: input, shape index: {}]
  %s2 = inlined_call_operand.vmem [shape: f32[1,32], index: 2, kind: input, shape index: {}]
  %s3 = inlined_call_operand.vmem [shape: f32[1,8,32], index: 3, kind: input, shape index: {}]
  %s4 = inlined_call_operand.vmem [shape: f32[2,4,32,8], index: 4, kind: input, shape index: {}]
  %s5 = inlined_call_operand.vmem [shape: f32[2,4,1,8], index: 5, kind: input, shape index: {}]
  %s6 = inlined_call_operand.vmem [shape: f32[2,4,32,8], index: 6, kind: input, shape index: {}]
  %s7 = inlined_call_operand.vmem [shape: f32[2,4,1,8], index: 7, kind: input, shape index: {}]
  %s8 = inlined_call_operand.vmem [shape: f32[2,4,32,8], index: 8, kind: input, shape index: {}]
  %s9 = inlined_call_operand.vmem [shape: f32[2,4,1,8], index: 9, kind: input, shape index: {}]
  %s10 = inlined_call_operand.vmem [shape: f32[2,4,8,32], index: 10, kind: input, shape index: {}]
  %s11 = inlined_call_operand.vmem [shape: f32[2,1,32], index: 11, kind: input, shape index: {}]
  %s12 = inlined_call_operand.vmem [shape: f32[2,1,32], index: 12, kind: input, shape index: {}]
  %s13 = inlined_call_operand.vmem [shape: f32[2,1,32], index: 13, kind: input, shape index: {}]
  %s14 = inlined_call_operand.vmem [shape: f32[2,32,2048], index: 14, kind: input, shape index: {}]
  %s15 = inlined_call_operand.vmem [shape: f32[2,1,2048], index: 15, kind: input, shape index: {}]
  %s16 = inlined_call_operand.vmem [shape: f32[2,2048,32], index: 16, kind: input, shape index: {}]
  %s17 = inlined_call_operand.vmem [shape: f32[2,1,32], index: 17, kind: input, shape index: {}]
  %s18 = inlined_call_operand.vmem [shape: f32[2,1,32], index: 18, kind: input, shape index: {}]
  %s19 = inlined_call_operand.vmem [shape: f32[2,1,32], index: 19, kind: input, shape index: {}]
  %s20 = inlined_call_operand.vmem [shape: f32[32,1], index: 20, kind: input, shape index: {}]
  %s21 = inlined_call_operand.<no memory space> [shape: f32[1,1], index: 21, kind: input, shape index: {}]
  %s22 = inlined_call_operand.vmem [shape: f32[2,1], index: 22, kind: output, shape index: {}]
  %s23 = sld [smem:[#allocation0]]
  $region129: #{tpu_custom_call.1} parent=0
    _
  %s25 = ssub.s32 1, %s23
  %s26 = scalar_select 0, %s25, %s23
  %v27 = vstv %s21
  %28 = vst [vmem:[#allocation3] sm:$0x1] %v27
  loop: start=0, step=1, limit=4
  $region2: #{tpu_custom_call.1} parent=0 // loop_pre_header
    _
  $region3: #{tpu_custom_call.1} parent=0 // loop_header
    %s30 = sphi 0, %s34
    %p31 = scmp.ge.s32.totalorder %s30, 4
    %s38 = sphi 0, %s38
    %s40 = sphi 0, %s38
    %s41 = sphi 0, %s40
    %s55 = sphi 0, %s41
    %s59 = sphi 0, %s59
    %s61 = sphi 0, %s59
    %s62 = sphi 0, %s61
    %s76 = sphi 0, %s62
    %s80 = sphi 0, %s80
    %s82 = sphi 0, %s80
    %s83 = sphi 0, %s82
    %s97 = sphi 0, %s83
    %s101 = sphi 0, %s101
    %s103 = sphi 0, %s101
    %s104 = sphi 0, %s103
    %s118 = sphi 0, %s104
    %s124 = sphi 0, %s126
    %s127 = sphi 0, %s124
    %s128 = sphi 0, %s127
    %s144 = sphi 0, %s128
    %s150 = sphi 0, %s152
    %s153 = sphi 0, %s150
    %s154 = sphi 0, %s153
    %s170 = sphi 0, %s154
    %s176 = sphi 0, %s178
    %s179 = sphi 0, %s176
    %s180 = sphi 0, %s179
    %s196 = sphi 0, %s180
    %s202 = sphi 0, %s204
    %s205 = sphi 0, %s202
    %s206 = sphi 0, %s205
    %s222 = sphi 0, %s206
    %s228 = sphi 0, %s230
    %s231 = sphi 0, %s228
    %s232 = sphi 0, %s231
    %s248 = sphi 0, %s232
    %s254 = sphi 0, %s256
    %s257 = sphi 0, %s254
    %s258 = sphi 0, %s257
    %s274 = sphi 0, %s258
    %s280 = sphi 0, %s282
    %s283 = sphi 0, %s280
    %s284 = sphi 0, %s283
    %s300 = sphi 0, %s284
    %s306 = sphi 0, %s308
    %s309 = sphi 0, %s306
    %s310 = sphi 0, %s309
    %s326 = sphi 0, %s310
    %s332 = sphi 0, %s334
    %s335 = sphi 0, %s332
    %s336 = sphi 0, %s335
    %s352 = sphi 0, %s336
    %s358 = sphi 0, %s360
    %s361 = sphi 0, %s358
    %s362 = sphi 0, %s361
    %s378 = sphi 0, %s362
    %s384 = sphi 0, %s386
    %s387 = sphi 0, %s384
    %s388 = sphi 0, %s387
    %s404 = sphi 0, %s388
    %s410 = sphi 0, %s412
    %s413 = sphi 0, %s410
    %s414 = sphi 0, %s413
    %s430 = sphi 0, %s414
    %s436 = sphi 0, %s438
    %s439 = sphi 0, %s436
    %s440 = sphi 0, %s439
    %s456 = sphi 0, %s440
    %s462 = sphi 0, %s464
    %s465 = sphi 0, %s462
    %s466 = sphi 0, %s465
    %s482 = sphi 0, %s466
    %s488 = sphi 0, %s490
    %s491 = sphi 0, %s488
    %s492 = sphi 0, %s491
    %s508 = sphi 0, %s492
    %s514 = sphi 0, %s516
    %s517 = sphi 0, %s514
    %s518 = sphi 0, %s517
    %s534 = sphi 0, %s518
    %s538 = sphi 0, %s538
    %s540 = sphi 0, %s538
    %s541 = sphi 0, %s540
    %s555 = sphi 0, %s541
    %s559 = sphi 0, %s559
    %s561 = sphi 0, %s559
    %s562 = sphi 0, %s561
    %s576 = sphi 0, %s562
    %s580 = sphi 0, %s580
    %s582 = sphi 0, %s580
    %s583 = sphi 0, %s582
    %s597 = sphi 0, %s583
  $region4: #{tpu_custom_call.1} parent=0 // loop_header_branch
    %33 = sbr.rel (%p31) target = $region8
  $region5: #{tpu_custom_call.1} parent=0 // loop_body
    %s35 = ssub.s32 %s30, 1
    %s36 = ssub.s32 %s30, 2
    %s37 = sadd.s32 %s30, 1
    %s39 = sadd.s32 %s38, 1
    %p42 = scmp.eq.s32.totalorder %s30, 1
    %p43 = scmp.ne.s32.totalorder %s38, %s40
    %p44 = scmp.eq.s32.totalorder %s30, 0
    %p45 = por %p43, %p44
    %p46 = scmp.ne.s32.totalorder %s38, %s40
    %p47 = scmp.eq.s32.totalorder %s35, 1
    %p48 = por %p46, %p47
    %p49 = scmp.ne.s32.totalorder %s40, %s41
    %p50 = scmp.eq.s32.totalorder %s35, 0
    %p51 = por %p49, %p50
    %p52 = scmp.ne.s32.totalorder %s40, %s41
    %p53 = scmp.eq.s32.totalorder %s36, 1
    %p54 = por %p52, %p53
    %p56 = scmp.ne.s32.totalorder %s41, %s55
    %p57 = scmp.eq.s32.totalorder %s36, 0
    %p58 = por %p56, %p57
    %s60 = sadd.s32 %s59, 1
    %p63 = scmp.eq.s32.totalorder %s30, 1
    %p64 = scmp.ne.s32.totalorder %s59, %s61
    %p65 = scmp.eq.s32.totalorder %s30, 0
    %p66 = por %p64, %p65
    %p67 = scmp.ne.s32.totalorder %s59, %s61
    %p68 = scmp.eq.s32.totalorder %s35, 1
    %p69 = por %p67, %p68
    %p70 = scmp.ne.s32.totalorder %s61, %s62
    %p71 = scmp.eq.s32.totalorder %s35, 0
    %p72 = por %p70, %p71
    %p73 = scmp.ne.s32.totalorder %s61, %s62
    %p74 = scmp.eq.s32.totalorder %s36, 1
    %p75 = por %p73, %p74
    %p77 = scmp.ne.s32.totalorder %s62, %s76
    %p78 = scmp.eq.s32.totalorder %s36, 0
    %p79 = por %p77, %p78
    %s81 = sadd.s32 %s80, 1
    %p84 = scmp.eq.s32.totalorder %s30, 1
    %p85 = scmp.ne.s32.totalorder %s80, %s82
    %p86 = scmp.eq.s32.totalorder %s30, 0
    %p87 = por %p85, %p86
    %p88 = scmp.ne.s32.totalorder %s80, %s82
    %p89 = scmp.eq.s32.totalorder %s35, 1
    %p90 = por %p88, %p89
    %p91 = scmp.ne.s32.totalorder %s82, %s83
    %p92 = scmp.eq.s32.totalorder %s35, 0
    %p93 = por %p91, %p92
    %p94 = scmp.ne.s32.totalorder %s82, %s83
    %p95 = scmp.eq.s32.totalorder %s36, 1
    %p96 = por %p94, %p95
    %p98 = scmp.ne.s32.totalorder %s83, %s97
    %p99 = scmp.eq.s32.totalorder %s36, 0
    %p100 = por %p98, %p99
    %s102 = sadd.s32 %s101, 1
    %p105 = scmp.eq.s32.totalorder %s30, 1
    %p106 = scmp.ne.s32.totalorder %s101, %s103
    %p107 = scmp.eq.s32.totalorder %s30, 0
    %p108 = por %p106, %p107
    %p109 = scmp.ne.s32.totalorder %s101, %s103
    %p110 = scmp.eq.s32.totalorder %s35, 1
    %p111 = por %p109, %p110
    %p112 = scmp.ne.s32.totalorder %s103, %s104
    %p113 = scmp.eq.s32.totalorder %s35, 0
    %p114 = por %p112, %p113
    %p115 = scmp.ne.s32.totalorder %s103, %s104
    %p116 = scmp.eq.s32.totalorder %s36, 1
    %p117 = por %p115, %p116
    %p119 = scmp.ne.s32.totalorder %s104, %s118
    %p120 = scmp.eq.s32.totalorder %s36, 0
    %p121 = por %p119, %p120
    %s122 = ssub.s32 %s30, %s37
    %p123 = scmp.eq.s32.totalorder %s122, 0
    %s125 = sadd.s32 %s124, 1
    %s126 = scalar_select %p123, %s124, %s125
    %p129 = pneg %p123
    %p130 = scmp.eq.s32.totalorder %s30, 1
    %p131 = por %p129, %p130
    %p132 = scmp.ne.s32.totalorder %s124, %s127
    %p133 = scmp.eq.s32.totalorder %s30, 0
    %p134 = por %p132, %p133
    %p135 = scmp.ne.s32.totalorder %s124, %s127
    %p136 = scmp.eq.s32.totalorder %s35, 1
    %p137 = por %p135, %p136
    %p138 = scmp.ne.s32.totalorder %s127, %s128
    %p139 = scmp.eq.s32.totalorder %s35, 0
    %p140 = por %p138, %p139
    %p141 = scmp.ne.s32.totalorder %s127, %s128
    %p142 = scmp.eq.s32.totalorder %s36, 1
    %p143 = por %p141, %p142
    %p145 = scmp.ne.s32.totalorder %s128, %s144
    %p146 = scmp.eq.s32.totalorder %s36, 0
    %p147 = por %p145, %p146
    %s148 = ssub.s32 %s30, %s37
    %p149 = scmp.eq.s32.totalorder %s148, 0
    %s151 = sadd.s32 %s150, 1
    %s152 = scalar_select %p149, %s150, %s151
    %p155 = pneg %p149
    %p156 = scmp.eq.s32.totalorder %s30, 1
    %p157 = por %p155, %p156
    %p158 = scmp.ne.s32.totalorder %s150, %s153
    %p159 = scmp.eq.s32.totalorder %s30, 0
    %p160 = por %p158, %p159
    %p161 = scmp.ne.s32.totalorder %s150, %s153
    %p162 = scmp.eq.s32.totalorder %s35, 1
    %p163 = por %p161, %p162
    %p164 = scmp.ne.s32.totalorder %s153, %s154
    %p165 = scmp.eq.s32.totalorder %s35, 0
    %p166 = por %p164, %p165
    %p167 = scmp.ne.s32.totalorder %s153, %s154
    %p168 = scmp.eq.s32.totalorder %s36, 1
    %p169 = por %p167, %p168
    %p171 = scmp.ne.s32.totalorder %s154, %s170
    %p172 = scmp.eq.s32.totalorder %s36, 0
    %p173 = por %p171, %p172
    %s174 = ssub.s32 %s30, %s37
    %p175 = scmp.eq.s32.totalorder %s174, 0
    %s177 = sadd.s32 %s176, 1
    %s178 = scalar_select %p175, %s176, %s177
    %p181 = pneg %p175
    %p182 = scmp.eq.s32.totalorder %s30, 1
    %p183 = por %p181, %p182
    %p184 = scmp.ne.s32.totalorder %s176, %s179
    %p185 = scmp.eq.s32.totalorder %s30, 0
    %p186 = por %p184, %p185
    %p187 = scmp.ne.s32.totalorder %s176, %s179
    %p188 = scmp.eq.s32.totalorder %s35, 1
    %p189 = por %p187, %p188
    %p190 = scmp.ne.s32.totalorder %s179, %s180
    %p191 = scmp.eq.s32.totalorder %s35, 0
    %p192 = por %p190, %p191
    %p193 = scmp.ne.s32.totalorder %s179, %s180
    %p194 = scmp.eq.s32.totalorder %s36, 1
    %p195 = por %p193, %p194
    %p197 = scmp.ne.s32.totalorder %s180, %s196
    %p198 = scmp.eq.s32.totalorder %s36, 0
    %p199 = por %p197, %p198
    %s200 = ssub.s32 %s30, %s37
    %p201 = scmp.eq.s32.totalorder %s200, 0
    %s203 = sadd.s32 %s202, 1
    %s204 = scalar_select %p201, %s202, %s203
    %p207 = pneg %p201
    %p208 = scmp.eq.s32.totalorder %s30, 1
    %p209 = por %p207, %p208
    %p210 = scmp.ne.s32.totalorder %s202, %s205
    %p211 = scmp.eq.s32.totalorder %s30, 0
    %p212 = por %p210, %p211
    %p213 = scmp.ne.s32.totalorder %s202, %s205
    %p214 = scmp.eq.s32.totalorder %s35, 1
    %p215 = por %p213, %p214
    %p216 = scmp.ne.s32.totalorder %s205, %s206
    %p217 = scmp.eq.s32.totalorder %s35, 0
    %p218 = por %p216, %p217
    %p219 = scmp.ne.s32.totalorder %s205, %s206
    %p220 = scmp.eq.s32.totalorder %s36, 1
    %p221 = por %p219, %p220
    %p223 = scmp.ne.s32.totalorder %s206, %s222
    %p224 = scmp.eq.s32.totalorder %s36, 0
    %p225 = por %p223, %p224
    %s226 = ssub.s32 %s30, %s37
    %p227 = scmp.eq.s32.totalorder %s226, 0
    %s229 = sadd.s32 %s228, 1
    %s230 = scalar_select %p227, %s228, %s229
    %p233 = pneg %p227
    %p234 = scmp.eq.s32.totalorder %s30, 1
    %p235 = por %p233, %p234
    %p236 = scmp.ne.s32.totalorder %s228, %s231
    %p237 = scmp.eq.s32.totalorder %s30, 0
    %p238 = por %p236, %p237
    %p239 = scmp.ne.s32.totalorder %s228, %s231
    %p240 = scmp.eq.s32.totalorder %s35, 1
    %p241 = por %p239, %p240
    %p242 = scmp.ne.s32.totalorder %s231, %s232
    %p243 = scmp.eq.s32.totalorder %s35, 0
    %p244 = por %p242, %p243
    %p245 = scmp.ne.s32.totalorder %s231, %s232
    %p246 = scmp.eq.s32.totalorder %s36, 1
    %p247 = por %p245, %p246
    %p249 = scmp.ne.s32.totalorder %s232, %s248
    %p250 = scmp.eq.s32.totalorder %s36, 0
    %p251 = por %p249, %p250
    %s252 = ssub.s32 %s30, %s37
    %p253 = scmp.eq.s32.totalorder %s252, 0
    %s255 = sadd.s32 %s254, 1
    %s256 = scalar_select %p253, %s254, %s255
    %p259 = pneg %p253
    %p260 = scmp.eq.s32.totalorder %s30, 1
    %p261 = por %p259, %p260
    %p262 = scmp.ne.s32.totalorder %s254, %s257
    %p263 = scmp.eq.s32.totalorder %s30, 0
    %p264 = por %p262, %p263
    %p265 = scmp.ne.s32.totalorder %s254, %s257
    %p266 = scmp.eq.s32.totalorder %s35, 1
    %p267 = por %p265, %p266
    %p268 = scmp.ne.s32.totalorder %s257, %s258
    %p269 = scmp.eq.s32.totalorder %s35, 0
    %p270 = por %p268, %p269
    %p271 = scmp.ne.s32.totalorder %s257, %s258
    %p272 = scmp.eq.s32.totalorder %s36, 1
    %p273 = por %p271, %p272
    %p275 = scmp.ne.s32.totalorder %s258, %s274
    %p276 = scmp.eq.s32.totalorder %s36, 0
    %p277 = por %p275, %p276
    %s278 = ssub.s32 %s30, %s37
    %p279 = scmp.eq.s32.totalorder %s278, 0
    %s281 = sadd.s32 %s280, 1
    %s282 = scalar_select %p279, %s280, %s281
    %p285 = pneg %p279
    %p286 = scmp.eq.s32.totalorder %s30, 1
    %p287 = por %p285, %p286
    %p288 = scmp.ne.s32.totalorder %s280, %s283
    %p289 = scmp.eq.s32.totalorder %s30, 0
    %p290 = por %p288, %p289
    %p291 = scmp.ne.s32.totalorder %s280, %s283
    %p292 = scmp.eq.s32.totalorder %s35, 1
    %p293 = por %p291, %p292
    %p294 = scmp.ne.s32.totalorder %s283, %s284
    %p295 = scmp.eq.s32.totalorder %s35, 0
    %p296 = por %p294, %p295
    %p297 = scmp.ne.s32.totalorder %s283, %s284
    %p298 = scmp.eq.s32.totalorder %s36, 1
    %p299 = por %p297, %p298
    %p301 = scmp.ne.s32.totalorder %s284, %s300
    %p302 = scmp.eq.s32.totalorder %s36, 0
    %p303 = por %p301, %p302
    %s304 = ssub.s32 %s30, %s37
    %p305 = scmp.eq.s32.totalorder %s304, 0
    %s307 = sadd.s32 %s306, 1
    %s308 = scalar_select %p305, %s306, %s307
    %p311 = pneg %p305
    %p312 = scmp.eq.s32.totalorder %s30, 1
    %p313 = por %p311, %p312
    %p314 = scmp.ne.s32.totalorder %s306, %s309
    %p315 = scmp.eq.s32.totalorder %s30, 0
    %p316 = por %p314, %p315
    %p317 = scmp.ne.s32.totalorder %s306, %s309
    %p318 = scmp.eq.s32.totalorder %s35, 1
    %p319 = por %p317, %p318
    %p320 = scmp.ne.s32.totalorder %s309, %s310
    %p321 = scmp.eq.s32.totalorder %s35, 0
    %p322 = por %p320, %p321
    %p323 = scmp.ne.s32.totalorder %s309, %s310
    %p324 = scmp.eq.s32.totalorder %s36, 1
    %p325 = por %p323, %p324
    %p327 = scmp.ne.s32.totalorder %s310, %s326
    %p328 = scmp.eq.s32.totalorder %s36, 0
    %p329 = por %p327, %p328
    %s330 = ssub.s32 %s30, %s37
    %p331 = scmp.eq.s32.totalorder %s330, 0
    %s333 = sadd.s32 %s332, 1
    %s334 = scalar_select %p331, %s332, %s333
    %p337 = pneg %p331
    %p338 = scmp.eq.s32.totalorder %s30, 1
    %p339 = por %p337, %p338
    %p340 = scmp.ne.s32.totalorder %s332, %s335
    %p341 = scmp.eq.s32.totalorder %s30, 0
    %p342 = por %p340, %p341
    %p343 = scmp.ne.s32.totalorder %s332, %s335
    %p344 = scmp.eq.s32.totalorder %s35, 1
    %p345 = por %p343, %p344
    %p346 = scmp.ne.s32.totalorder %s335, %s336
    %p347 = scmp.eq.s32.totalorder %s35, 0
    %p348 = por %p346, %p347
    %p349 = scmp.ne.s32.totalorder %s335, %s336
    %p350 = scmp.eq.s32.totalorder %s36, 1
    %p351 = por %p349, %p350
    %p353 = scmp.ne.s32.totalorder %s336, %s352
    %p354 = scmp.eq.s32.totalorder %s36, 0
    %p355 = por %p353, %p354
    %s356 = ssub.s32 %s30, %s37
    %p357 = scmp.eq.s32.totalorder %s356, 0
    %s359 = sadd.s32 %s358, 1
    %s360 = scalar_select %p357, %s358, %s359
    %p363 = pneg %p357
    %p364 = scmp.eq.s32.totalorder %s30, 1
    %p365 = por %p363, %p364
    %p366 = scmp.ne.s32.totalorder %s358, %s361
    %p367 = scmp.eq.s32.totalorder %s30, 0
    %p368 = por %p366, %p367
    %p369 = scmp.ne.s32.totalorder %s358, %s361
    %p370 = scmp.eq.s32.totalorder %s35, 1
    %p371 = por %p369, %p370
    %p372 = scmp.ne.s32.totalorder %s361, %s362
    %p373 = scmp.eq.s32.totalorder %s35, 0
    %p374 = por %p372, %p373
    %p375 = scmp.ne.s32.totalorder %s361, %s362
    %p376 = scmp.eq.s32.totalorder %s36, 1
    %p377 = por %p375, %p376
    %p379 = scmp.ne.s32.totalorder %s362, %s378
    %p380 = scmp.eq.s32.totalorder %s36, 0
    %p381 = por %p379, %p380
    %s382 = ssub.s32 %s30, %s37
    %p383 = scmp.eq.s32.totalorder %s382, 0
    %s385 = sadd.s32 %s384, 1
    %s386 = scalar_select %p383, %s384, %s385
    %p389 = pneg %p383
    %p390 = scmp.eq.s32.totalorder %s30, 1
    %p391 = por %p389, %p390
    %p392 = scmp.ne.s32.totalorder %s384, %s387
    %p393 = scmp.eq.s32.totalorder %s30, 0
    %p394 = por %p392, %p393
    %p395 = scmp.ne.s32.totalorder %s384, %s387
    %p396 = scmp.eq.s32.totalorder %s35, 1
    %p397 = por %p395, %p396
    %p398 = scmp.ne.s32.totalorder %s387, %s388
    %p399 = scmp.eq.s32.totalorder %s35, 0
    %p400 = por %p398, %p399
    %p401 = scmp.ne.s32.totalorder %s387, %s388
    %p402 = scmp.eq.s32.totalorder %s36, 1
    %p403 = por %p401, %p402
    %p405 = scmp.ne.s32.totalorder %s388, %s404
    %p406 = scmp.eq.s32.totalorder %s36, 0
    %p407 = por %p405, %p406
    %s408 = ssub.s32 %s30, %s37
    %p409 = scmp.eq.s32.totalorder %s408, 0
    %s411 = sadd.s32 %s410, 1
    %s412 = scalar_select %p409, %s410, %s411
    %p415 = pneg %p409
    %p416 = scmp.eq.s32.totalorder %s30, 1
    %p417 = por %p415, %p416
    %p418 = scmp.ne.s32.totalorder %s410, %s413
    %p419 = scmp.eq.s32.totalorder %s30, 0
    %p420 = por %p418, %p419
    %p421 = scmp.ne.s32.totalorder %s410, %s413
    %p422 = scmp.eq.s32.totalorder %s35, 1
    %p423 = por %p421, %p422
    %p424 = scmp.ne.s32.totalorder %s413, %s414
    %p425 = scmp.eq.s32.totalorder %s35, 0
    %p426 = por %p424, %p425
    %p427 = scmp.ne.s32.totalorder %s413, %s414
    %p428 = scmp.eq.s32.totalorder %s36, 1
    %p429 = por %p427, %p428
    %p431 = scmp.ne.s32.totalorder %s414, %s430
    %p432 = scmp.eq.s32.totalorder %s36, 0
    %p433 = por %p431, %p432
    %s434 = ssub.s32 %s30, %s37
    %p435 = scmp.eq.s32.totalorder %s434, 0
    %s437 = sadd.s32 %s436, 1
    %s438 = scalar_select %p435, %s436, %s437
    %p441 = pneg %p435
    %p442 = scmp.eq.s32.totalorder %s30, 1
    %p443 = por %p441, %p442
    %p444 = scmp.ne.s32.totalorder %s436, %s439
    %p445 = scmp.eq.s32.totalorder %s30, 0
    %p446 = por %p444, %p445
    %p447 = scmp.ne.s32.totalorder %s436, %s439
    %p448 = scmp.eq.s32.totalorder %s35, 1
    %p449 = por %p447, %p448
    %p450 = scmp.ne.s32.totalorder %s439, %s440
    %p451 = scmp.eq.s32.totalorder %s35, 0
    %p452 = por %p450, %p451
    %p453 = scmp.ne.s32.totalorder %s439, %s440
    %p454 = scmp.eq.s32.totalorder %s36, 1
    %p455 = por %p453, %p454
    %p457 = scmp.ne.s32.totalorder %s440, %s456
    %p458 = scmp.eq.s32.totalorder %s36, 0
    %p459 = por %p457, %p458
    %s460 = ssub.s32 %s30, %s37
    %p461 = scmp.eq.s32.totalorder %s460, 0
    %s463 = sadd.s32 %s462, 1
    %s464 = scalar_select %p461, %s462, %s463
    %p467 = pneg %p461
    %p468 = scmp.eq.s32.totalorder %s30, 1
    %p469 = por %p467, %p468
    %p470 = scmp.ne.s32.totalorder %s462, %s465
    %p471 = scmp.eq.s32.totalorder %s30, 0
    %p472 = por %p470, %p471
    %p473 = scmp.ne.s32.totalorder %s462, %s465
    %p474 = scmp.eq.s32.totalorder %s35, 1
    %p475 = por %p473, %p474
    %p476 = scmp.ne.s32.totalorder %s465, %s466
    %p477 = scmp.eq.s32.totalorder %s35, 0
    %p478 = por %p476, %p477
    %p479 = scmp.ne.s32.totalorder %s465, %s466
    %p480 = scmp.eq.s32.totalorder %s36, 1
    %p481 = por %p479, %p480
    %p483 = scmp.ne.s32.totalorder %s466, %s482
    %p484 = scmp.eq.s32.totalorder %s36, 0
    %p485 = por %p483, %p484
    %s486 = ssub.s32 %s30, %s37
    %p487 = scmp.eq.s32.totalorder %s486, 0
    %s489 = sadd.s32 %s488, 1
    %s490 = scalar_select %p487, %s488, %s489
    %p493 = pneg %p487
    %p494 = scmp.eq.s32.totalorder %s30, 1
    %p495 = por %p493, %p494
    %p496 = scmp.ne.s32.totalorder %s488, %s491
    %p497 = scmp.eq.s32.totalorder %s30, 0
    %p498 = por %p496, %p497
    %p499 = scmp.ne.s32.totalorder %s488, %s491
    %p500 = scmp.eq.s32.totalorder %s35, 1
    %p501 = por %p499, %p500
    %p502 = scmp.ne.s32.totalorder %s491, %s492
    %p503 = scmp.eq.s32.totalorder %s35, 0
    %p504 = por %p502, %p503
    %p505 = scmp.ne.s32.totalorder %s491, %s492
    %p506 = scmp.eq.s32.totalorder %s36, 1
    %p507 = por %p505, %p506
    %p509 = scmp.ne.s32.totalorder %s492, %s508
    %p510 = scmp.eq.s32.totalorder %s36, 0
    %p511 = por %p509, %p510
    %s512 = ssub.s32 %s30, %s37
    %p513 = scmp.eq.s32.totalorder %s512, 0
    %s515 = sadd.s32 %s514, 1
    %s516 = scalar_select %p513, %s514, %s515
    %p519 = pneg %p513
    %p520 = scmp.eq.s32.totalorder %s30, 1
    %p521 = por %p519, %p520
    %p522 = scmp.ne.s32.totalorder %s514, %s517
    %p523 = scmp.eq.s32.totalorder %s30, 0
    %p524 = por %p522, %p523
    %p525 = scmp.ne.s32.totalorder %s514, %s517
    %p526 = scmp.eq.s32.totalorder %s35, 1
    %p527 = por %p525, %p526
    %p528 = scmp.ne.s32.totalorder %s517, %s518
    %p529 = scmp.eq.s32.totalorder %s35, 0
    %p530 = por %p528, %p529
    %p531 = scmp.ne.s32.totalorder %s517, %s518
    %p532 = scmp.eq.s32.totalorder %s36, 1
    %p533 = por %p531, %p532
    %p535 = scmp.ne.s32.totalorder %s518, %s534
    %p536 = scmp.eq.s32.totalorder %s36, 0
    %p537 = por %p535, %p536
    %s539 = sadd.s32 %s538, 1
    %p542 = scmp.eq.s32.totalorder %s30, 1
    %p543 = scmp.ne.s32.totalorder %s538, %s540
    %p544 = scmp.eq.s32.totalorder %s30, 0
    %p545 = por %p543, %p544
    %p546 = scmp.ne.s32.totalorder %s538, %s540
    %p547 = scmp.eq.s32.totalorder %s35, 1
    %p548 = por %p546, %p547
    %p549 = scmp.ne.s32.totalorder %s540, %s541
    %p550 = scmp.eq.s32.totalorder %s35, 0
    %p551 = por %p549, %p550
    %p552 = scmp.ne.s32.totalorder %s540, %s541
    %p553 = scmp.eq.s32.totalorder %s36, 1
    %p554 = por %p552, %p553
    %p556 = scmp.ne.s32.totalorder %s541, %s555
    %p557 = scmp.eq.s32.totalorder %s36, 0
    %p558 = por %p556, %p557
    %s560 = sadd.s32 %s559, 1
    %p563 = scmp.eq.s32.totalorder %s30, 1
    %p564 = scmp.ne.s32.totalorder %s559, %s561
    %p565 = scmp.eq.s32.totalorder %s30, 0
    %p566 = por %p564, %p565
    %p567 = scmp.ne.s32.totalorder %s559, %s561
    %p568 = scmp.eq.s32.totalorder %s35, 1
    %p569 = por %p567, %p568
    %p570 = scmp.ne.s32.totalorder %s561, %s562
    %p571 = scmp.eq.s32.totalorder %s35, 0
    %p572 = por %p570, %p571
    %p573 = scmp.ne.s32.totalorder %s561, %s562
    %p574 = scmp.eq.s32.totalorder %s36, 1
    %p575 = por %p573, %p574
    %p577 = scmp.ne.s32.totalorder %s562, %s576
    %p578 = scmp.eq.s32.totalorder %s36, 0
    %p579 = por %p577, %p578
    %s581 = sadd.s32 %s580, 1
    %p584 = scmp.eq.s32.totalorder %s30, 1
    %p585 = scmp.ne.s32.totalorder %s580, %s582
    %p586 = scmp.eq.s32.totalorder %s30, 0
    %p587 = por %p585, %p586
    %p588 = scmp.ne.s32.totalorder %s580, %s582
    %p589 = scmp.eq.s32.totalorder %s35, 1
    %p590 = por %p588, %p589
    %p591 = scmp.ne.s32.totalorder %s582, %s583
    %p592 = scmp.eq.s32.totalorder %s35, 0
    %p593 = por %p591, %p592
    %p594 = scmp.ne.s32.totalorder %s582, %s583
    %p595 = scmp.eq.s32.totalorder %s36, 1
    %p596 = por %p594, %p595
    %p598 = scmp.ne.s32.totalorder %s583, %s597
    %p599 = scmp.eq.s32.totalorder %s36, 0
    %p600 = por %p598, %p599
    %p601 = scmp.le.s32.totalorder 1, %s30
    %p602 = scmp.lt.s32.totalorder %s30, 3
    %p603 = pnand %p601, %p602
    %p604 = pneg %p603
    // Predicated region
    $region9: #{tpu_custom_call.1} parent=5 // pred_check
      _
    $region10: #{tpu_custom_call.1} parent=5 // pred_check_branch
      %606 = sbr.rel (%p603) target = $region12
    $region11: #{tpu_custom_call.1} parent=5 // pred_region
      %s607 = ssub.s32 %s30, 1
      // Predicated region
      $region13: #{tpu_custom_call.1} parent=11 // pred_check
        %p608 = pneg %p51
      $region14: #{tpu_custom_call.1} parent=11 // pred_check_branch
        %610 = sbr.rel (%p608) target = $region16
      $region15: #{tpu_custom_call.1} parent=11 // pred_region
        _
      $region16: #{tpu_custom_call.1} parent=11 // pred_fallthru
        _
      // Predicated region
      $region17: #{tpu_custom_call.1} parent=11 // pred_check
        %p611 = pneg %p72
      $region18: #{tpu_custom_call.1} parent=11 // pred_check_branch
        %613 = sbr.rel (%p611) target = $region20
      $region19: #{tpu_custom_call.1} parent=11 // pred_region
        _
      $region20: #{tpu_custom_call.1} parent=11 // pred_fallthru
        _
      // Predicated region
      $region21: #{tpu_custom_call.1} parent=11 // pred_check
        %p614 = pneg %p93
      $region22: #{tpu_custom_call.1} parent=11 // pred_check_branch
        %616 = sbr.rel (%p614) target = $region24
      $region23: #{tpu_custom_call.1} parent=11 // pred_region
        _
      $region24: #{tpu_custom_call.1} parent=11 // pred_fallthru
        _
      // Predicated region
      $region25: #{tpu_custom_call.1} parent=11 // pred_check
        %p617 = pneg %p114
      $region26: #{tpu_custom_call.1} parent=11 // pred_check_branch
        %619 = sbr.rel (%p617) target = $region28
      $region27: #{tpu_custom_call.1} parent=11 // pred_region
        _
      $region28: #{tpu_custom_call.1} parent=11 // pred_fallthru
        _
      // Predicated region
      $region29: #{tpu_custom_call.1} parent=11 // pred_check
        %p620 = pneg %p551
      $region30: #{tpu_custom_call.1} parent=11 // pred_check_branch
        %622 = sbr.rel (%p620) target = $region32
      $region31: #{tpu_custom_call.1} parent=11 // pred_region
        _
      $region32: #{tpu_custom_call.1} parent=11 // pred_fallthru
        _
      // Predicated region
      $region33: #{tpu_custom_call.1} parent=11 // pred_check
        %p623 = pneg %p572
      $region34: #{tpu_custom_call.1} parent=11 // pred_check_branch
        %625 = sbr.rel (%p623) target = $region36
      $region35: #{tpu_custom_call.1} parent=11 // pred_region
        _
      $region36: #{tpu_custom_call.1} parent=11 // pred_fallthru
        _
    $region12: #{tpu_custom_call.1} parent=5 // pred_fallthru
      _
    %p626 = scmp.lt.s32.totalorder %s30, 2
    // Predicated region
    $region37: #{tpu_custom_call.1} parent=5 // pred_check
      %p627 = pneg %p626
    $region38: #{tpu_custom_call.1} parent=5 // pred_check_branch
      %629 = sbr.rel (%p627) target = $region40
    $region39: #{tpu_custom_call.1} parent=5 // pred_region
      // Predicated region
      $region41: #{tpu_custom_call.1} parent=39 // pred_check
        %p630 = pneg %p134
      $region42: #{tpu_custom_call.1} parent=39 // pred_check_branch
        %632 = sbr.rel (%p630) target = $region44
      $region43: #{tpu_custom_call.1} parent=39 // pred_region
        %p633 = scmp.lt.s32.totalorder %s30, 1
        %s634 = scalar_select %p633, %s30, 1
        %s635 = smul.addr %s634, 16
        %s636 = smul.addr %s635, 8
        %s637 = scalar_lea.vmem %s4, %s636
      $region44: #{tpu_custom_call.1} parent=39 // pred_fallthru
        _
      // Predicated region
      $region45: #{tpu_custom_call.1} parent=39 // pred_check
        %p638 = pneg %p160
      $region46: #{tpu_custom_call.1} parent=39 // pred_check_branch
        %640 = sbr.rel (%p638) target = $region48
      $region47: #{tpu_custom_call.1} parent=39 // pred_region
        %p641 = scmp.lt.s32.totalorder %s30, 1
        %s642 = scalar_select %p641, %s30, 1
        %s643 = smul.addr %s642, 4
        %s644 = scalar_lea.vmem %s5, %s643
      $region48: #{tpu_custom_call.1} parent=39 // pred_fallthru
        _
      // Predicated region
      $region49: #{tpu_custom_call.1} parent=39 // pred_check
        %p645 = pneg %p186
      $region50: #{tpu_custom_call.1} parent=39 // pred_check_branch
        %647 = sbr.rel (%p645) target = $region52
      $region51: #{tpu_custom_call.1} parent=39 // pred_region
        %p648 = scmp.lt.s32.totalorder %s30, 1
        %s649 = scalar_select %p648, %s30, 1
        %s650 = smul.addr %s649, 16
        %s651 = smul.addr %s650, 8
        %s652 = scalar_lea.vmem %s6, %s651
      $region52: #{tpu_custom_call.1} parent=39 // pred_fallthru
        _
      // Predicated region
      $region53: #{tpu_custom_call.1} parent=39 // pred_check
        %p653 = pneg %p212
      $region54: #{tpu_custom_call.1} parent=39 // pred_check_branch
        %655 = sbr.rel (%p653) target = $region56
      $region55: #{tpu_custom_call.1} parent=39 // pred_region
        %p656 = scmp.lt.s32.totalorder %s30, 1
        %s657 = scalar_select %p656, %s30, 1
        %s658 = smul.addr %s657, 4
        %s659 = scalar_lea.vmem %s7, %s658
      $region56: #{tpu_custom_call.1} parent=39 // pred_fallthru
        _
      // Predicated region
      $region57: #{tpu_custom_call.1} parent=39 // pred_check
        %p660 = pneg %p238
      $region58: #{tpu_custom_call.1} parent=39 // pred_check_branch
        %662 = sbr.rel (%p660) target = $region60
      $region59: #{tpu_custom_call.1} parent=39 // pred_region
        %p663 = scmp.lt.s32.totalorder %s30, 1
        %s664 = scalar_select %p663, %s30, 1
        %s665 = smul.addr %s664, 16
        %s666 = smul.addr %s665, 8
        %s667 = scalar_lea.vmem %s8, %s666
      $region60: #{tpu_custom_call.1} parent=39 // pred_fallthru
        _
      // Predicated region
      $region61: #{tpu_custom_call.1} parent=39 // pred_check
        %p668 = pneg %p264
      $region62: #{tpu_custom_call.1} parent=39 // pred_check_branch
        %670 = sbr.rel (%p668) target = $region64
      $region63: #{tpu_custom_call.1} parent=39 // pred_region
        %p671 = scmp.lt.s32.totalorder %s30, 1
        %s672 = scalar_select %p671, %s30, 1
        %s673 = smul.addr %s672, 4
        %s674 = scalar_lea.vmem %s9, %s673
      $region64: #{tpu_custom_call.1} parent=39 // pred_fallthru
        _
      // Predicated region
      $region65: #{tpu_custom_call.1} parent=39 // pred_check
        %p675 = pneg %p290
      $region66: #{tpu_custom_call.1} parent=39 // pred_check_branch
        %677 = sbr.rel (%p675) target = $region68
      $region67: #{tpu_custom_call.1} parent=39 // pred_region
        %p678 = scmp.lt.s32.totalorder %s30, 1
        %s679 = scalar_select %p678, %s30, 1
        %s680 = smul.addr %s679, 4
        %s681 = smul.addr %s680, 8
        %s682 = scalar_lea.vmem %s10, %s681
      $region68: #{tpu_custom_call.1} parent=39 // pred_fallthru
        _
      // Predicated region
      $region69: #{tpu_custom_call.1} parent=39 // pred_check
        %p683 = pneg %p316
      $region70: #{tpu_custom_call.1} parent=39 // pred_check_branch
        %685 = sbr.rel (%p683) target = $region72
      $region71: #{tpu_custom_call.1} parent=39 // pred_region
        %p686 = scmp.lt.s32.totalorder %s30, 1
        %s687 = scalar_select %p686, %s30, 1
        %s688 = scalar_lea.vmem %s11, %s687
      $region72: #{tpu_custom_call.1} parent=39 // pred_fallthru
        _
      // Predicated region
      $region73: #{tpu_custom_call.1} parent=39 // pred_check
        %p689 = pneg %p342
      $region74: #{tpu_custom_call.1} parent=39 // pred_check_branch
        %691 = sbr.rel (%p689) target = $region76
      $region75: #{tpu_custom_call.1} parent=39 // pred_region
        %p692 = scmp.lt.s32.totalorder %s30, 1
        %s693 = scalar_select %p692, %s30, 1
        %s694 = scalar_lea.vmem %s12, %s693
      $region76: #{tpu_custom_call.1} parent=39 // pred_fallthru
        _
      // Predicated region
      $region77: #{tpu_custom_call.1} parent=39 // pred_check
        %p695 = pneg %p368
      $region78: #{tpu_custom_call.1} parent=39 // pred_check_branch
        %697 = sbr.rel (%p695) target = $region80
      $region79: #{tpu_custom_call.1} parent=39 // pred_region
        %p698 = scmp.lt.s32.totalorder %s30, 1
        %s699 = scalar_select %p698, %s30, 1
        %s700 = scalar_lea.vmem %s13, %s699
      $region80: #{tpu_custom_call.1} parent=39 // pred_fallthru
        _
      // Predicated region
      $region81: #{tpu_custom_call.1} parent=39 // pred_check
        %p701 = pneg %p394
      $region82: #{tpu_custom_call.1} parent=39 // pred_check_branch
        %703 = sbr.rel (%p701) target = $region84
      $region83: #{tpu_custom_call.1} parent=39 // pred_region
        %p704 = scmp.lt.s32.totalorder %s30, 1
        %s705 = scalar_select %p704, %s30, 1
        %s706 = smul.addr %s705, 64
        %s707 = smul.addr %s706, 8
        %s708 = scalar_lea.vmem %s14, %s707
      $region84: #{tpu_custom_call.1} parent=39 // pred_fallthru
        _
      // Predicated region
      $region85: #{tpu_custom_call.1} parent=39 // pred_check
        %p709 = pneg %p420
      $region86: #{tpu_custom_call.1} parent=39 // pred_check_branch
        %711 = sbr.rel (%p709) target = $region88
      $region87: #{tpu_custom_call.1} parent=39 // pred_region
        %p712 = scmp.lt.s32.totalorder %s30, 1
        %s713 = scalar_select %p712, %s30, 1
        %s714 = smul.addr %s713, 16
        %s715 = scalar_lea.vmem %s15, %s714
      $region88: #{tpu_custom_call.1} parent=39 // pred_fallthru
        _
      // Predicated region
      $region89: #{tpu_custom_call.1} parent=39 // pred_check
        %p716 = pneg %p446
      $region90: #{tpu_custom_call.1} parent=39 // pred_check_branch
        %718 = sbr.rel (%p716) target = $region92
      $region91: #{tpu_custom_call.1} parent=39 // pred_region
        %p719 = scmp.lt.s32.totalorder %s30, 1
        %s720 = scalar_select %p719, %s30, 1
        %s721 = smul.addr %s720, 256
        %s722 = smul.addr %s721, 8
        %s723 = scalar_lea.vmem %s16, %s722
      $region92: #{tpu_custom_call.1} parent=39 // pred_fallthru
        _
      // Predicated region
      $region93: #{tpu_custom_call.1} parent=39 // pred_check
        %p724 = pneg %p472
      $region94: #{tpu_custom_call.1} parent=39 // pred_check_branch
        %726 = sbr.rel (%p724) target = $region96
      $region95: #{tpu_custom_call.1} parent=39 // pred_region
        %p727 = scmp.lt.s32.totalorder %s30, 1
        %s728 = scalar_select %p727, %s30, 1
        %s729 = scalar_lea.vmem %s17, %s728
      $region96: #{tpu_custom_call.1} parent=39 // pred_fallthru
        _
      // Predicated region
      $region97: #{tpu_custom_call.1} parent=39 // pred_check
        %p730 = pneg %p498
      $region98: #{tpu_custom_call.1} parent=39 // pred_check_branch
        %732 = sbr.rel (%p730) target = $region100
      $region99: #{tpu_custom_call.1} parent=39 // pred_region
        %p733 = scmp.lt.s32.totalorder %s30, 1
        %s734 = scalar_select %p733, %s30, 1
        %s735 = scalar_lea.vmem %s18, %s734
      $region100: #{tpu_custom_call.1} parent=39 // pred_fallthru
        _
      // Predicated region
      $region101: #{tpu_custom_call.1} parent=39 // pred_check
        %p736 = pneg %p524
      $region102: #{tpu_custom_call.1} parent=39 // pred_check_branch
        %738 = sbr.rel (%p736) target = $region104
      $region103: #{tpu_custom_call.1} parent=39 // pred_region
        %p739 = scmp.lt.s32.totalorder %s30, 1
        %s740 = scalar_select %p739, %s30, 1
        %s741 = scalar_lea.vmem %s19, %s740
      $region104: #{tpu_custom_call.1} parent=39 // pred_fallthru
        _
    $region40: #{tpu_custom_call.1} parent=5 // pred_fallthru
      _
    %p742 = scmp.le.s32.totalorder 1, %s30
    %p743 = scmp.lt.s32.totalorder %s30, 3
    %p744 = pnand %p742, %p743
    %p745 = pneg %p744
    // Predicated region
    $region105: #{tpu_custom_call.1} parent=5 // pred_check
      _
    $region106: #{tpu_custom_call.1} parent=5 // pred_check_branch
      %747 = sbr.rel (%p744) target = $region108
    $region107: #{tpu_custom_call.1} parent=5 // pred_region
      %s748 = ssub.s32 %s30, 1
      %p749 = pneg %p51
      %p750 = pneg %p48
      %p751 = pneg %p72
      %p752 = pneg %p69
      %p753 = pneg %p93
      %p754 = pneg %p90
      %p755 = pneg %p114
      %p756 = pneg %p111
      %p757 = scmp.lt.s32.totalorder %s35, 1
      %s758 = scalar_select %p757, %s35, 1
      %s759 = smul.addr %s758, 16
      %s760 = smul.addr %s759, 8
      %s761 = scalar_lea.vmem %s4, %s760
      %p762 = pneg %p140
      %p763 = pneg %p137
      %p764 = scmp.lt.s32.totalorder %s35, 1
      %s765 = scalar_select %p764, %s35, 1
      %s766 = smul.addr %s765, 4
      %s767 = scalar_lea.vmem %s5, %s766
      %p768 = pneg %p166
      %p769 = pneg %p163
      %p770 = scmp.lt.s32.totalorder %s35, 1
      %s771 = scalar_select %p770, %s35, 1
      %s772 = smul.addr %s771, 16
      %s773 = smul.addr %s772, 8
      %s774 = scalar_lea.vmem %s6, %s773
      %p775 = pneg %p192
      %p776 = pneg %p189
      %p777 = scmp.lt.s32.totalorder %s35, 1
      %s778 = scalar_select %p777, %s35, 1
      %s779 = smul.addr %s778, 4
      %s780 = scalar_lea.vmem %s7, %s779
      %p781 = pneg %p218
      %p782 = pneg %p215
      %p783 = scmp.lt.s32.totalorder %s35, 1
      %s784 = scalar_select %p783, %s35, 1
      %s785 = smul.addr %s784, 16
      %s786 = smul.addr %s785, 8
      %s787 = scalar_lea.vmem %s8, %s786
      %p788 = pneg %p244
      %p789 = pneg %p241
      %p790 = scmp.lt.s32.totalorder %s35, 1
      %s791 = scalar_select %p790, %s35, 1
      %s792 = smul.addr %s791, 4
      %s793 = scalar_lea.vmem %s9, %s792
      %p794 = pneg %p270
      %p795 = pneg %p267
      %p796 = scmp.lt.s32.totalorder %s35, 1
      %s797 = scalar_select %p796, %s35, 1
      %s798 = smul.addr %s797, 4
      %s799 = smul.addr %s798, 8
      %s800 = scalar_lea.vmem %s10, %s799
      %p801 = pneg %p296
      %p802 = pneg %p293
      %p803 = scmp.lt.s32.totalorder %s35, 1
      %s804 = scalar_select %p803, %s35, 1
      %s805 = scalar_lea.vmem %s11, %s804
      %p806 = pneg %p322
      %p807 = pneg %p319
      %p808 = scmp.lt.s32.totalorder %s35, 1
      %s809 = scalar_select %p808, %s35, 1
      %s810 = scalar_lea.vmem %s12, %s809
      %p811 = pneg %p348
      %p812 = pneg %p345
      %p813 = scmp.lt.s32.totalorder %s35, 1
      %s814 = scalar_select %p813, %s35, 1
      %s815 = scalar_lea.vmem %s13, %s814
      %p816 = pneg %p374
      %p817 = pneg %p371
      %p818 = scmp.lt.s32.totalorder %s35, 1
      %s819 = scalar_select %p818, %s35, 1
      %s820 = smul.addr %s819, 64
      %s821 = smul.addr %s820, 8
      %s822 = scalar_lea.vmem %s14, %s821
      %p823 = pneg %p400
      %p824 = pneg %p397
      %p825 = scmp.lt.s32.totalorder %s35, 1
      %s826 = scalar_select %p825, %s35, 1
      %s827 = smul.addr %s826, 16
      %s828 = scalar_lea.vmem %s15, %s827
      %p829 = pneg %p426
      %p830 = pneg %p423
      %p831 = scmp.lt.s32.totalorder %s35, 1
      %s832 = scalar_select %p831, %s35, 1
      %s833 = smul.addr %s832, 256
      %s834 = smul.addr %s833, 8
      %s835 = scalar_lea.vmem %s16, %s834
      %p836 = pneg %p452
      %p837 = pneg %p449
      %p838 = scmp.lt.s32.totalorder %s35, 1
      %s839 = scalar_select %p838, %s35, 1
      %s840 = scalar_lea.vmem %s17, %s839
      %p841 = pneg %p478
      %p842 = pneg %p475
      %p843 = scmp.lt.s32.totalorder %s35, 1
      %s844 = scalar_select %p843, %s35, 1
      %s845 = scalar_lea.vmem %s18, %s844
      %p846 = pneg %p504
      %p847 = pneg %p501
      %p848 = scmp.lt.s32.totalorder %s35, 1
      %s849 = scalar_select %p848, %s35, 1
      %s850 = scalar_lea.vmem %s19, %s849
      %p851 = pneg %p530
      %p852 = pneg %p527
      %p853 = pneg %p551
      %p854 = pneg %p548
      %p855 = pneg %p572
      %p856 = pneg %p569
      %p857 = pneg %p593
      %p858 = pneg %p590
      %p859 = scmp.lt.s32.totalorder %s35, 1
      %s860 = scalar_select %p859, %s35, 1
      %s861 = smul.addr %s860, 16
      %s862 = smul.addr %s861, 8
      %s863 = scalar_lea.vmem %s4, %s862
      %p864 = scmp.lt.s32.totalorder %s35, 1
      %s865 = scalar_select %p864, %s35, 1
      %s866 = smul.addr %s865, 4
      %s867 = scalar_lea.vmem %s5, %s866
      %p868 = scmp.lt.s32.totalorder %s35, 1
      %s869 = scalar_select %p868, %s35, 1
      %s870 = smul.addr %s869, 16
      %s871 = smul.addr %s870, 8
      %s872 = scalar_lea.vmem %s6, %s871
      %p873 = scmp.lt.s32.totalorder %s35, 1
      %s874 = scalar_select %p873, %s35, 1
      %s875 = smul.addr %s874, 4
      %s876 = scalar_lea.vmem %s7, %s875
      %p877 = scmp.lt.s32.totalorder %s35, 1
      %s878 = scalar_select %p877, %s35, 1
      %s879 = smul.addr %s878, 16
      %s880 = smul.addr %s879, 8
      %s881 = scalar_lea.vmem %s8, %s880
      %p882 = scmp.lt.s32.totalorder %s35, 1
      %s883 = scalar_select %p882, %s35, 1
      %s884 = smul.addr %s883, 4
      %s885 = scalar_lea.vmem %s9, %s884
      %p886 = scmp.lt.s32.totalorder %s35, 1
      %s887 = scalar_select %p886, %s35, 1
      %s888 = smul.addr %s887, 4
      %s889 = smul.addr %s888, 8
      %s890 = scalar_lea.vmem %s10, %s889
      %p891 = scmp.lt.s32.totalorder %s35, 1
      %s892 = scalar_select %p891, %s35, 1
      %s893 = scalar_lea.vmem %s11, %s892
      %p894 = scmp.lt.s32.totalorder %s35, 1
      %s895 = scalar_select %p894, %s35, 1
      %s896 = scalar_lea.vmem %s12, %s895
      %p897 = scmp.lt.s32.totalorder %s35, 1
      %s898 = scalar_select %p897, %s35, 1
      %s899 = scalar_lea.vmem %s13, %s898
      %p900 = scmp.lt.s32.totalorder %s35, 1
      %s901 = scalar_select %p900, %s35, 1
      %s902 = smul.addr %s901, 64
      %s903 = smul.addr %s902, 8
      %s904 = scalar_lea.vmem %s14, %s903
      %p905 = scmp.lt.s32.totalorder %s35, 1
      %s906 = scalar_select %p905, %s35, 1
      %s907 = smul.addr %s906, 16
      %s908 = scalar_lea.vmem %s15, %s907
      %p909 = scmp.lt.s32.totalorder %s35, 1
      %s910 = scalar_select %p909, %s35, 1
      %s911 = smul.addr %s910, 256
      %s912 = smul.addr %s911, 8
      %s913 = scalar_lea.vmem %s16, %s912
      %p914 = scmp.lt.s32.totalorder %s35, 1
      %s915 = scalar_select %p914, %s35, 1
      %s916 = scalar_lea.vmem %s17, %s915
      %p917 = scmp.lt.s32.totalorder %s35, 1
      %s918 = scalar_select %p917, %s35, 1
      %s919 = scalar_lea.vmem %s18, %s918
      %p920 = scmp.lt.s32.totalorder %s35, 1
      %s921 = scalar_select %p920, %s35, 1
      %s922 = scalar_lea.vmem %s19, %s921
      %p923 = scmp.eq.s32.totalorder %s35, 0
      // Predicated region
      $region109: #{tpu_custom_call.1} parent=107 // pred_check
        %p924 = pneg %p923
      $region110: #{tpu_custom_call.1} parent=107 // pred_check_branch
        %926 = sbr.rel (%p924) target = $region112
      $region111: #{tpu_custom_call.1} parent=107 // pred_region
        %v927 = vld [vmem:[%s0] sm:$0xff]
        %v928 = vld [vmem:[%s0 + $0x8] sm:$0xff]
        %v929 = vld [vmem:[%s1] sm:$0xf]
        %v930 = vld [vmem:[%s2] sm:$0x1]
        %v932 = vlaneseq
        %v933 = vshrl.u32 %v932, 7
        %v934 = vsub.s32 0, %v933
        %v935 = vrot.slane %v930, %v934
        %vm937 = vcmask 31744
        %v939 = vsel %vm937, %v927, 0
        %v942 = vsel %vm937, %v928, 0
        %vm944 = vcmask 1043456
        %v946 = vsel %vm944, %v929, 0
        %948 = vmatprep.subr.mxu0 0.0
        %949 = vmatpush1.msra.mxu0 0.0
        %950 = vmatprep.subr.mxu0 0.0
        %951 = vmatpush1.msra.mxu0 0.0
        %952 = vmatprep.subr.mxu0 0.0
        %953 = vmatpush1.msra.mxu0 0.0
        %954 = vmatprep.subr.mxu0 0.0
        %955 = vmatpush1.msra.mxu0 0.0
        %956 = vmatprep.subr.mxu0 0.0
        %957 = vmatpush1.msra.mxu0 0.0
        %958 = vmatprep.subr.mxu0 0.0
        %959 = vmatpush1.msra.mxu0 0.0
        %960 = vmatprep.subr.mxu0 0.0
        %961 = vmatpush1.msra.mxu0 0.0
        %962 = vmatprep.subr.mxu0 0.0
        %963 = vmatpush1.msra.mxu0 0.0
        %964 = vmatprep.subr.mxu0 0.0
        %965 = vmatpush1.msra.mxu0 0.0
        %966 = vmatprep.subr.mxu0 0.0
        %967 = vmatpush1.msra.mxu0 0.0
        %968 = vmatprep.subr.mxu0 0.0
        %969 = vmatpush1.msra.mxu0 0.0
        %970 = vmatprep.subr.mxu0 0.0
        %971 = vmatpush1.msra.mxu0 0.0
        %972 = vmatprep.subr.mxu0 0.0
        %973 = vmatpush1.msra.mxu0 0.0
        %974 = vmatprep.subr.mxu0 0.0
        %975 = vmatpush1.msra.mxu0 0.0
        %976 = vmatprep.subr.mxu0 0.0
        %977 = vmatpush1.msra.mxu0 0.0
        %978 = vmatprep.subr.mxu0 0.0
        %979 = vmatpush1.msra.mxu0 %v946
        %980 = vmatprep.subr.mxu0 0.0
        %981 = vmatpush2.msra.mxu0 0.0
        %982 = vmatprep.subr.mxu0 0.0
        %983 = vmatpush2.msra.mxu0 0.0
        %984 = vmatprep.subr.mxu0 0.0
        %985 = vmatpush2.msra.mxu0 0.0
        %986 = vmatprep.subr.mxu0 0.0
        %987 = vmatpush2.msra.mxu0 0.0
        %988 = vmatprep.subr.mxu0 0.0
        %989 = vmatpush2.msra.mxu0 0.0
        %990 = vmatprep.subr.mxu0 0.0
        %991 = vmatpush2.msra.mxu0 0.0
        %992 = vmatprep.subr.mxu0 0.0
        %993 = vmatpush2.msra.mxu0 0.0
        %994 = vmatprep.subr.mxu0 0.0
        %995 = vmatpush2.msra.mxu0 0.0
        %996 = vmatprep.subr.mxu0 0.0
        %997 = vmatpush2.msra.mxu0 0.0
        %998 = vmatprep.subr.mxu0 0.0
        %999 = vmatpush2.msra.mxu0 0.0
        %1000 = vmatprep.subr.mxu0 0.0
        %1001 = vmatpush2.msra.mxu0 0.0
        %1002 = vmatprep.subr.mxu0 0.0
        %1003 = vmatpush2.msra.mxu0 0.0
        %1004 = vmatprep.subr.mxu0 0.0
        %1005 = vmatpush2.msra.mxu0 0.0
        %1006 = vmatprep.subr.mxu0 0.0
        %1007 = vmatpush2.msra.mxu0 0.0
        %1008 = vmatprep.subr.mxu0 0.0
        %1009 = vmatpush2.msra.mxu0 0.0
        %1010 = vmatprep.subr.mxu0 0.0
        %1011 = vmatpush2.msra.mxu0 0.0
        %1012 = vmatprep.mubr.f32.mxu0 0.0
        %1013 = vmatmul.mubr.f32.gmra.mxu0 %v939
        %v1014 = vpop.f32.mrf.mxu0
        %v1015 = vadd.f32 %v935, %v1014
        %v1016 = vpop.f32.mrf.mxu0
        %1017 = vmatprep.mubr.f32.mxu0 0.0
        %1018 = vmatmul.mubr.f32.gmra.mxu0 %v942
        %v1019 = vpop.f32.mrf.mxu0
        %v1020 = vadd.f32 %v935, %v1019
        %v1021 = vpop.f32.mrf.mxu0
        %1022 = vdwg.mxu0
        %v1023 = vld [vmem:[%s3] sm:$0xff]
        %v1024 = vadd.f32 %v1015, %v1023
        %v1025 = vadd.f32 %v1020, %v1023
        %vm1026 = vcmask 261120
        %1027 = vst.msk [vmem:[#allocation2] sm:$0xff] %vm1026, %v1024
        %1028 = vst.msk [vmem:[#allocation2 + $0x8] sm:$0xff] %vm1026, %v1025
      $region112: #{tpu_custom_call.1} parent=107 // pred_fallthru
        _
      %v1029 = vld [vmem:[#allocation2] sm:$0xff]
      %v1030 = vld [vmem:[#allocation2 + $0x8] sm:$0xff]
      %v1031 = vld [vmem:[%s863] sm:$0xff]
      %v1032 = vld [vmem:[%s863 + $0x8] sm:$0xff]
      %v1033 = vld [vmem:[%s863 + $0x10] sm:$0xff]
      %v1034 = vld [vmem:[%s863 + $0x18] sm:$0xff]
      %v1035 = vld [vmem:[%s867] sm:$0x1]
      %v1037 = vlaneseq
      %v1038 = vshrl.u32 %v1037, 7
      %v1039 = vsub.s32 0, %v1038
      %v1040 = vrot.slane %v1035, %v1039
      %vm1042 = vcmask 261120
      %v1044 = vsel %vm1042, %v1029, 0
      %v1047 = vsel %vm1042, %v1030, 0
      %1049 = vmatprep.subr.mxu0 0.0
      %1050 = vmatpush1.msra.mxu0 0.0
      %1051 = vmatprep.subr.mxu0 0.0
      %1052 = vmatpush1.msra.mxu0 0.0
      %1053 = vmatprep.subr.mxu0 0.0
      %1054 = vmatpush1.msra.mxu0 0.0
      %1055 = vmatprep.subr.mxu0 0.0
      %1056 = vmatpush1.msra.mxu0 0.0
      %1057 = vmatprep.subr.mxu0 0.0
      %1058 = vmatpush1.msra.mxu0 0.0
      %1059 = vmatprep.subr.mxu0 0.0
      %1060 = vmatpush1.msra.mxu0 0.0
      %1061 = vmatprep.subr.mxu0 0.0
      %1062 = vmatpush1.msra.mxu0 0.0
      %1063 = vmatprep.subr.mxu0 0.0
      %1064 = vmatpush1.msra.mxu0 0.0
      %1065 = vmatprep.subr.mxu0 0.0
      %1066 = vmatpush1.msra.mxu0 0.0
      %1067 = vmatprep.subr.mxu0 0.0
      %1068 = vmatpush1.msra.mxu0 0.0
      %1069 = vmatprep.subr.mxu0 0.0
      %1070 = vmatpush1.msra.mxu0 0.0
      %1071 = vmatprep.subr.mxu0 0.0
      %1072 = vmatpush1.msra.mxu0 0.0
      %1073 = vmatprep.subr.mxu0 0.0
      %1074 = vmatpush1.msra.mxu0 %v1034
      %1075 = vmatprep.subr.mxu0 0.0
      %1076 = vmatpush1.msra.mxu0 %v1033
      %1077 = vmatprep.subr.mxu0 0.0
      %1078 = vmatpush1.msra.mxu0 %v1032
      %1079 = vmatprep.subr.mxu0 0.0
      %1080 = vmatpush1.msra.mxu0 %v1031
      %1081 = vmatprep.subr.mxu0 0.0
      %1082 = vmatpush2.msra.mxu0 0.0
      %1083 = vmatprep.subr.mxu0 0.0
      %1084 = vmatpush2.msra.mxu0 0.0
      %1085 = vmatprep.subr.mxu0 0.0
      %1086 = vmatpush2.msra.mxu0 0.0
      %1087 = vmatprep.subr.mxu0 0.0
      %1088 = vmatpush2.msra.mxu0 0.0
      %1089 = vmatprep.subr.mxu0 0.0
      %1090 = vmatpush2.msra.mxu0 0.0
      %1091 = vmatprep.subr.mxu0 0.0
      %1092 = vmatpush2.msra.mxu0 0.0
      %1093 = vmatprep.subr.mxu0 0.0
      %1094 = vmatpush2.msra.mxu0 0.0
      %1095 = vmatprep.subr.mxu0 0.0
      %1096 = vmatpush2.msra.mxu0 0.0
      %1097 = vmatprep.subr.mxu0 0.0
      %1098 = vmatpush2.msra.mxu0 0.0
      %1099 = vmatprep.subr.mxu0 0.0
      %1100 = vmatpush2.msra.mxu0 0.0
      %1101 = vmatprep.subr.mxu0 0.0
      %1102 = vmatpush2.msra.mxu0 0.0
      %1103 = vmatprep.subr.mxu0 0.0
      %1104 = vmatpush2.msra.mxu0 0.0
      %1105 = vmatprep.subr.mxu0 0.0
      %1106 = vmatpush2.msra.mxu0 0.0
      %1107 = vmatprep.subr.mxu0 0.0
      %1108 = vmatpush2.msra.mxu0 0.0
      %1109 = vmatprep.subr.mxu0 0.0
      %1110 = vmatpush2.msra.mxu0 0.0
      %1111 = vmatprep.subr.mxu0 0.0
      %1112 = vmatpush2.msra.mxu0 0.0
      %1113 = vmatprep.mubr.f32.mxu0 0.0
      %1114 = vmatmul.mubr.f32.gmra.mxu0 %v1044
      %v1115 = vpop.f32.mrf.mxu0
      %v1116 = vadd.f32 %v1040, %v1115
      %v1117 = vpop.f32.mrf.mxu0
      %1118 = vmatprep.mubr.f32.mxu0 0.0
      %1119 = vmatmul.mubr.f32.gmra.mxu0 %v1047
      %v1120 = vpop.f32.mrf.mxu0
      %v1121 = vadd.f32 %v1040, %v1120
      %v1122 = vpop.f32.mrf.mxu0
      %1123 = vdwg.mxu0
      %v1124 = vld [vmem:[%s872] sm:$0xff]
      %v1125 = vld [vmem:[%s872 + $0x8] sm:$0xff]
      %v1126 = vld [vmem:[%s872 + $0x10] sm:$0xff]
      %v1127 = vld [vmem:[%s872 + $0x18] sm:$0xff]
      %v1128 = vld [vmem:[%s876] sm:$0x1]
      %v1130 = vlaneseq
      %v1131 = vshrl.u32 %v1130, 7
      %v1132 = vsub.s32 0, %v1131
      %v1133 = vrot.slane %v1128, %v1132
      %1135 = vmatprep.subr.mxu0 0.0
      %1136 = vmatpush1.msra.mxu0 0.0
      %1137 = vmatprep.subr.mxu0 0.0
      %1138 = vmatpush1.msra.mxu0 0.0
      %1139 = vmatprep.subr.mxu0 0.0
      %1140 = vmatpush1.msra.mxu0 0.0
      %1141 = vmatprep.subr.mxu0 0.0
      %1142 = vmatpush1.msra.mxu0 0.0
      %1143 = vmatprep.subr.mxu0 0.0
      %1144 = vmatpush1.msra.mxu0 0.0
      %1145 = vmatprep.subr.mxu0 0.0
      %1146 = vmatpush1.msra.mxu0 0.0
      %1147 = vmatprep.subr.mxu0 0.0
      %1148 = vmatpush1.msra.mxu0 0.0
      %1149 = vmatprep.subr.mxu0 0.0
      %1150 = vmatpush1.msra.mxu0 0.0
      %1151 = vmatprep.subr.mxu0 0.0
      %1152 = vmatpush1.msra.mxu0 0.0
      %1153 = vmatprep.subr.mxu0 0.0
      %1154 = vmatpush1.msra.mxu0 0.0
      %1155 = vmatprep.subr.mxu0 0.0
      %1156 = vmatpush1.msra.mxu0 0.0
      %1157 = vmatprep.subr.mxu0 0.0
      %1158 = vmatpush1.msra.mxu0 0.0
      %1159 = vmatprep.subr.mxu0 0.0
      %1160 = vmatpush1.msra.mxu0 %v1127
      %1161 = vmatprep.subr.mxu0 0.0
      %1162 = vmatpush1.msra.mxu0 %v1126
      %1163 = vmatprep.subr.mxu0 0.0
      %1164 = vmatpush1.msra.mxu0 %v1125
      %1165 = vmatprep.subr.mxu0 0.0
      %1166 = vmatpush1.msra.mxu0 %v1124
      %1167 = vmatprep.subr.mxu0 0.0
      %1168 = vmatpush2.msra.mxu0 0.0
      %1169 = vmatprep.subr.mxu0 0.0
      %1170 = vmatpush2.msra.mxu0 0.0
      %1171 = vmatprep.subr.mxu0 0.0
      %1172 = vmatpush2.msra.mxu0 0.0
      %1173 = vmatprep.subr.mxu0 0.0
      %1174 = vmatpush2.msra.mxu0 0.0
      %1175 = vmatprep.subr.mxu0 0.0
      %1176 = vmatpush2.msra.mxu0 0.0
      %1177 = vmatprep.subr.mxu0 0.0
      %1178 = vmatpush2.msra.mxu0 0.0
      %1179 = vmatprep.subr.mxu0 0.0
      %1180 = vmatpush2.msra.mxu0 0.0
      %1181 = vmatprep.subr.mxu0 0.0
      %1182 = vmatpush2.msra.mxu0 0.0
      %1183 = vmatprep.subr.mxu0 0.0
      %1184 = vmatpush2.msra.mxu0 0.0
      %1185 = vmatprep.subr.mxu0 0.0
      %1186 = vmatpush2.msra.mxu0 0.0
      %1187 = vmatprep.subr.mxu0 0.0
      %1188 = vmatpush2.msra.mxu0 0.0
      %1189 = vmatprep.subr.mxu0 0.0
      %1190 = vmatpush2.msra.mxu0 0.0
      %1191 = vmatprep.subr.mxu0 0.0
      %1192 = vmatpush2.msra.mxu0 0.0
      %1193 = vmatprep.subr.mxu0 0.0
      %1194 = vmatpush2.msra.mxu0 0.0
      %1195 = vmatprep.subr.mxu0 0.0
      %1196 = vmatpush2.msra.mxu0 0.0
      %1197 = vmatprep.subr.mxu0 0.0
      %1198 = vmatpush2.msra.mxu0 0.0
      %1199 = vmatprep.mubr.f32.mxu0 0.0
      %1200 = vmatmul.mubr.f32.gmra.mxu0 %v1044
      %v1201 = vpop.f32.mrf.mxu0
      %v1202 = vadd.f32 %v1133, %v1201
      %v1203 = vpop.f32.mrf.mxu0
      %1204 = vmatprep.mubr.f32.mxu0 0.0
      %1205 = vmatmul.mubr.f32.gmra.mxu0 %v1047
      %v1206 = vpop.f32.mrf.mxu0
      %v1207 = vadd.f32 %v1133, %v1206
      %v1208 = vpop.f32.mrf.mxu0
      %1209 = vdwg.mxu0
      %v1210 = vld [vmem:[%s881] sm:$0xff]
      %v1211 = vld [vmem:[%s881 + $0x8] sm:$0xff]
      %v1212 = vld [vmem:[%s881 + $0x10] sm:$0xff]
      %v1213 = vld [vmem:[%s881 + $0x18] sm:$0xff]
      %v1214 = vld [vmem:[%s885] sm:$0x1]
      %v1216 = vlaneseq
      %v1217 = vshrl.u32 %v1216, 7
      %v1218 = vsub.s32 0, %v1217
      %v1219 = vrot.slane %v1214, %v1218
      %1221 = vmatprep.subr.mxu0 0.0
      %1222 = vmatpush1.msra.mxu0 0.0
      %1223 = vmatprep.subr.mxu0 0.0
      %1224 = vmatpush1.msra.mxu0 0.0
      %1225 = vmatprep.subr.mxu0 0.0
      %1226 = vmatpush1.msra.mxu0 0.0
      %1227 = vmatprep.subr.mxu0 0.0
      %1228 = vmatpush1.msra.mxu0 0.0
      %1229 = vmatprep.subr.mxu0 0.0
      %1230 = vmatpush1.msra.mxu0 0.0
      %1231 = vmatprep.subr.mxu0 0.0
      %1232 = vmatpush1.msra.mxu0 0.0
      %1233 = vmatprep.subr.mxu0 0.0
      %1234 = vmatpush1.msra.mxu0 0.0
      %1235 = vmatprep.subr.mxu0 0.0
      %1236 = vmatpush1.msra.mxu0 0.0
      %1237 = vmatprep.subr.mxu0 0.0
      %1238 = vmatpush1.msra.mxu0 0.0
      %1239 = vmatprep.subr.mxu0 0.0
      %1240 = vmatpush1.msra.mxu0 0.0
      %1241 = vmatprep.subr.mxu0 0.0
      %1242 = vmatpush1.msra.mxu0 0.0
      %1243 = vmatprep.subr.mxu0 0.0
      %1244 = vmatpush1.msra.mxu0 0.0
      %1245 = vmatprep.subr.mxu0 0.0
      %1246 = vmatpush1.msra.mxu0 %v1213
      %1247 = vmatprep.subr.mxu0 0.0
      %1248 = vmatpush1.msra.mxu0 %v1212
      %1249 = vmatprep.subr.mxu0 0.0
      %1250 = vmatpush1.msra.mxu0 %v1211
      %1251 = vmatprep.subr.mxu0 0.0
      %1252 = vmatpush1.msra.mxu0 %v1210
      %1253 = vmatprep.subr.mxu0 0.0
      %1254 = vmatpush2.msra.mxu0 0.0
      %1255 = vmatprep.subr.mxu0 0.0
      %1256 = vmatpush2.msra.mxu0 0.0
      %1257 = vmatprep.subr.mxu0 0.0
      %1258 = vmatpush2.msra.mxu0 0.0
      %1259 = vmatprep.subr.mxu0 0.0
      %1260 = vmatpush2.msra.mxu0 0.0
      %1261 = vmatprep.subr.mxu0 0.0
      %1262 = vmatpush2.msra.mxu0 0.0
      %1263 = vmatprep.subr.mxu0 0.0
      %1264 = vmatpush2.msra.mxu0 0.0
      %1265 = vmatprep.subr.mxu0 0.0
      %1266 = vmatpush2.msra.mxu0 0.0
      %1267 = vmatprep.subr.mxu0 0.0
      %1268 = vmatpush2.msra.mxu0 0.0
      %1269 = vmatprep.subr.mxu0 0.0
      %1270 = vmatpush2.msra.mxu0 0.0
      %1271 = vmatprep.subr.mxu0 0.0
      %1272 = vmatpush2.msra.mxu0 0.0
      %1273 = vmatprep.subr.mxu0 0.0
      %1274 = vmatpush2.msra.mxu0 0.0
      %1275 = vmatprep.subr.mxu0 0.0
      %1276 = vmatpush2.msra.mxu0 0.0
      %1277 = vmatprep.subr.mxu0 0.0
      %1278 = vmatpush2.msra.mxu0 0.0
      %1279 = vmatprep.subr.mxu0 0.0
      %1280 = vmatpush2.msra.mxu0 0.0
      %1281 = vmatprep.subr.mxu0 0.0
      %1282 = vmatpush2.msra.mxu0 0.0
      %1283 = vmatprep.subr.mxu0 0.0
      %1284 = vmatpush2.msra.mxu0 0.0
      %1285 = vmatprep.mubr.f32.mxu0 0.0
      %1286 = vmatmul.mubr.f32.gmra.mxu0 %v1044
      %v1287 = vpop.f32.mrf.mxu0
      %v1288 = vadd.f32 %v1219, %v1287
      %v1289 = vpop.f32.mrf.mxu0
      %1290 = vmatprep.mubr.f32.mxu0 0.0
      %1291 = vmatmul.mubr.f32.gmra.mxu0 %v1047
      %v1292 = vpop.f32.mrf.mxu0
      %v1293 = vadd.f32 %v1219, %v1292
      %v1294 = vpop.f32.mrf.mxu0
      %1295 = vdwg.mxu0
      %vm1296 = vcmask 64512
      %v1298 = vsel %vm1296, %v1116, 0
      %v1301 = vsel %vm1296, %v1202, 0
      %1303 = vmatprep.subr.mxu0 0.0
      %1304 = vmatpush1.xpose.msra.mxu0 0.0
      %1305 = vmatprep.subr.mxu0 0.0
      %1306 = vmatpush1.xpose.msra.mxu0 0.0
      %1307 = vmatprep.subr.mxu0 0.0
      %1308 = vmatpush1.xpose.msra.mxu0 0.0
      %1309 = vmatprep.subr.mxu0 0.0
      %1310 = vmatpush1.xpose.msra.mxu0 0.0
      %1311 = vmatprep.subr.mxu0 0.0
      %1312 = vmatpush1.xpose.msra.mxu0 0.0
      %1313 = vmatprep.subr.mxu0 0.0
      %1314 = vmatpush1.xpose.msra.mxu0 0.0
      %1315 = vmatprep.subr.mxu0 0.0
      %1316 = vmatpush1.xpose.msra.mxu0 0.0
      %1317 = vmatprep.subr.mxu0 0.0
      %1318 = vmatpush1.xpose.msra.mxu0 0.0
      %1319 = vmatprep.subr.mxu0 0.0
      %1320 = vmatpush1.xpose.msra.mxu0 0.0
      %1321 = vmatprep.subr.mxu0 0.0
      %1322 = vmatpush1.xpose.msra.mxu0 0.0
      %1323 = vmatprep.subr.mxu0 0.0
      %1324 = vmatpush1.xpose.msra.mxu0 0.0
      %1325 = vmatprep.subr.mxu0 0.0
      %1326 = vmatpush1.xpose.msra.mxu0 0.0
      %1327 = vmatprep.subr.mxu0 0.0
      %1328 = vmatpush1.xpose.msra.mxu0 0.0
      %1329 = vmatprep.subr.mxu0 0.0
      %1330 = vmatpush1.xpose.msra.mxu0 0.0
      %1331 = vmatprep.subr.mxu0 0.0
      %1332 = vmatpush1.xpose.msra.mxu0 0.0
      %1333 = vmatprep.subr.mxu0 0.0
      %1334 = vmatpush1.xpose.msra.mxu0 %v1301
      %1335 = vmatprep.subr.mxu0 0.0
      %1336 = vmatpush2.xpose.msra.mxu0 0.0
      %1337 = vmatprep.subr.mxu0 0.0
      %1338 = vmatpush2.xpose.msra.mxu0 0.0
      %1339 = vmatprep.subr.mxu0 0.0
      %1340 = vmatpush2.xpose.msra.mxu0 0.0
      %1341 = vmatprep.subr.mxu0 0.0
      %1342 = vmatpush2.xpose.msra.mxu0 0.0
      %1343 = vmatprep.subr.mxu0 0.0
      %1344 = vmatpush2.xpose.msra.mxu0 0.0
      %1345 = vmatprep.subr.mxu0 0.0
      %1346 = vmatpush2.xpose.msra.mxu0 0.0
      %1347 = vmatprep.subr.mxu0 0.0
      %1348 = vmatpush2.xpose.msra.mxu0 0.0
      %1349 = vmatprep.subr.mxu0 0.0
      %1350 = vmatpush2.xpose.msra.mxu0 0.0
      %1351 = vmatprep.subr.mxu0 0.0
      %1352 = vmatpush2.xpose.msra.mxu0 0.0
      %1353 = vmatprep.subr.mxu0 0.0
      %1354 = vmatpush2.xpose.msra.mxu0 0.0
      %1355 = vmatprep.subr.mxu0 0.0
      %1356 = vmatpush2.xpose.msra.mxu0 0.0
      %1357 = vmatprep.subr.mxu0 0.0
      %1358 = vmatpush2.xpose.msra.mxu0 0.0
      %1359 = vmatprep.subr.mxu0 0.0
      %1360 = vmatpush2.xpose.msra.mxu0 0.0
      %1361 = vmatprep.subr.mxu0 0.0
      %1362 = vmatpush2.xpose.msra.mxu0 0.0
      %1363 = vmatprep.subr.mxu0 0.0
      %1364 = vmatpush2.xpose.msra.mxu0 0.0
      %1365 = vmatprep.subr.mxu0 0.0
      %1366 = vmatpush2.xpose.msra.mxu0 0.0
      %1367 = vmatprep.mubr.f32.mxu0 0.0
      %1368 = vmatmul.mubr.f32.gmra.mxu0 %v1298
      %v1369 = vpop.f32.mrf.mxu0
      %v1370 = vadd.f32 0.0, %v1369
      %v1371 = vpop.f32.mrf.mxu0
      %1372 = vdwg.mxu0
      %v1374 = vsel %vm1296, %v1121, 0
      %v1377 = vsel %vm1296, %v1207, 0
      %1379 = vmatprep.subr.mxu0 0.0
      %1380 = vmatpush1.xpose.msra.mxu0 0.0
      %1381 = vmatprep.subr.mxu0 0.0
      %1382 = vmatpush1.xpose.msra.mxu0 0.0
      %1383 = vmatprep.subr.mxu0 0.0
      %1384 = vmatpush1.xpose.msra.mxu0 0.0
      %1385 = vmatprep.subr.mxu0 0.0
      %1386 = vmatpush1.xpose.msra.mxu0 0.0
      %1387 = vmatprep.subr.mxu0 0.0
      %1388 = vmatpush1.xpose.msra.mxu0 0.0
      %1389 = vmatprep.subr.mxu0 0.0
      %1390 = vmatpush1.xpose.msra.mxu0 0.0
      %1391 = vmatprep.subr.mxu0 0.0
      %1392 = vmatpush1.xpose.msra.mxu0 0.0
      %1393 = vmatprep.subr.mxu0 0.0
      %1394 = vmatpush1.xpose.msra.mxu0 0.0
      %1395 = vmatprep.subr.mxu0 0.0
      %1396 = vmatpush1.xpose.msra.mxu0 0.0
      %1397 = vmatprep.subr.mxu0 0.0
      %1398 = vmatpush1.xpose.msra.mxu0 0.0
      %1399 = vmatprep.subr.mxu0 0.0
      %1400 = vmatpush1.xpose.msra.mxu0 0.0
      %1401 = vmatprep.subr.mxu0 0.0
      %1402 = vmatpush1.xpose.msra.mxu0 0.0
      %1403 = vmatprep.subr.mxu0 0.0
      %1404 = vmatpush1.xpose.msra.mxu0 0.0
      %1405 = vmatprep.subr.mxu0 0.0
      %1406 = vmatpush1.xpose.msra.mxu0 0.0
      %1407 = vmatprep.subr.mxu0 0.0
      %1408 = vmatpush1.xpose.msra.mxu0 0.0
      %1409 = vmatprep.subr.mxu0 0.0
      %1410 = vmatpush1.xpose.msra.mxu0 %v1377
      %1411 = vmatprep.subr.mxu0 0.0
      %1412 = vmatpush2.xpose.msra.mxu0 0.0
      %1413 = vmatprep.subr.mxu0 0.0
      %1414 = vmatpush2.xpose.msra.mxu0 0.0
      %1415 = vmatprep.subr.mxu0 0.0
      %1416 = vmatpush2.xpose.msra.mxu0 0.0
      %1417 = vmatprep.subr.mxu0 0.0
      %1418 = vmatpush2.xpose.msra.mxu0 0.0
      %1419 = vmatprep.subr.mxu0 0.0
      %1420 = vmatpush2.xpose.msra.mxu0 0.0
      %1421 = vmatprep.subr.mxu0 0.0
      %1422 = vmatpush2.xpose.msra.mxu0 0.0
      %1423 = vmatprep.subr.mxu0 0.0
      %1424 = vmatpush2.xpose.msra.mxu0 0.0
      %1425 = vmatprep.subr.mxu0 0.0
      %1426 = vmatpush2.xpose.msra.mxu0 0.0
      %1427 = vmatprep.subr.mxu0 0.0
      %1428 = vmatpush2.xpose.msra.mxu0 0.0
      %1429 = vmatprep.subr.mxu0 0.0
      %1430 = vmatpush2.xpose.msra.mxu0 0.0
      %1431 = vmatprep.subr.mxu0 0.0
      %1432 = vmatpush2.xpose.msra.mxu0 0.0
      %1433 = vmatprep.subr.mxu0 0.0
      %1434 = vmatpush2.xpose.msra.mxu0 0.0
      %1435 = vmatprep.subr.mxu0 0.0
      %1436 = vmatpush2.xpose.msra.mxu0 0.0
      %1437 = vmatprep.subr.mxu0 0.0
      %1438 = vmatpush2.xpose.msra.mxu0 0.0
      %1439 = vmatprep.subr.mxu0 0.0
      %1440 = vmatpush2.xpose.msra.mxu0 0.0
      %1441 = vmatprep.subr.mxu0 0.0
      %1442 = vmatpush2.xpose.msra.mxu0 0.0
      %1443 = vmatprep.mubr.f32.mxu0 0.0
      %1444 = vmatmul.mubr.f32.gmra.mxu0 %v1374
      %v1445 = vpop.f32.mrf.mxu0
      %v1446 = vadd.f32 0.0, %v1445
      %v1447 = vpop.f32.mrf.mxu0
      %1448 = vdwg.mxu0
      %v1449 = vsel %vm1296, %v1370, -inf
      %1450 = vmax.xlane.f32.xlu0 %v1449
      %v1451 = vpop.xlane.xlu0 %1450
      %v1452 = vsel %vm1296, %v1446, -inf
      %1453 = vmax.xlane.f32.xlu0 %v1452
      %v1454 = vpop.xlane.xlu0 %1453
      %v1455 = vsub.f32 %v1370, %v1451
      %v1456 = vsub.f32 %v1446, %v1454
      %v1457 = vmul.f32 %v1455, 1.442695
      %v1458 = vpow.pop %v1457
      %v1459 = vmul.f32 %v1456, 1.442695
      %v1460 = vpow.pop %v1459
      %v1461 = vsel %vm1296, %v1458, 0.0
      %1462 = vadd.xlane.f32.xlu0 %v1461
      %v1463 = vpop.xlane.xlu0 %1462
      %v1464 = vsel %vm1296, %v1460, 0.0
      %1465 = vadd.xlane.f32.xlu0 %v1464
      %v1466 = vpop.xlane.xlu0 %1465
      %v1467 = vrcp.pop %v1463
      %v1468 = vrcp.pop %v1466
      %v1469 = vmul.f32 %v1458, %v1467
      %v1470 = vmul.f32 %v1460, %v1468
      %v1472 = vsel %vm1296, %v1469, 0
      %1474 = vmatprep.subr.mxu0 0.0
      %1475 = vmatpush1.msra.mxu0 0.0
      %1476 = vmatprep.subr.mxu0 0.0
      %1477 = vmatpush1.msra.mxu0 0.0
      %1478 = vmatprep.subr.mxu0 0.0
      %1479 = vmatpush1.msra.mxu0 0.0
      %1480 = vmatprep.subr.mxu0 0.0
      %1481 = vmatpush1.msra.mxu0 0.0
      %1482 = vmatprep.subr.mxu0 0.0
      %1483 = vmatpush1.msra.mxu0 0.0
      %1484 = vmatprep.subr.mxu0 0.0
      %1485 = vmatpush1.msra.mxu0 0.0
      %1486 = vmatprep.subr.mxu0 0.0
      %1487 = vmatpush1.msra.mxu0 0.0
      %1488 = vmatprep.subr.mxu0 0.0
      %1489 = vmatpush1.msra.mxu0 0.0
      %1490 = vmatprep.subr.mxu0 0.0
      %1491 = vmatpush1.msra.mxu0 0.0
      %1492 = vmatprep.subr.mxu0 0.0
      %1493 = vmatpush1.msra.mxu0 0.0
      %1494 = vmatprep.subr.mxu0 0.0
      %1495 = vmatpush1.msra.mxu0 0.0
      %1496 = vmatprep.subr.mxu0 0.0
      %1497 = vmatpush1.msra.mxu0 0.0
      %1498 = vmatprep.subr.mxu0 0.0
      %1499 = vmatpush1.msra.mxu0 0.0
      %1500 = vmatprep.subr.mxu0 0.0
      %1501 = vmatpush1.msra.mxu0 0.0
      %1502 = vmatprep.subr.mxu0 0.0
      %1503 = vmatpush1.msra.mxu0 0.0
      %1504 = vmatprep.subr.mxu0 0.0
      %1505 = vmatpush1.msra.mxu0 %v1288
      %1506 = vmatprep.subr.mxu0 0.0
      %1507 = vmatpush2.msra.mxu0 0.0
      %1508 = vmatprep.subr.mxu0 0.0
      %1509 = vmatpush2.msra.mxu0 0.0
      %1510 = vmatprep.subr.mxu0 0.0
      %1511 = vmatpush2.msra.mxu0 0.0
      %1512 = vmatprep.subr.mxu0 0.0
      %1513 = vmatpush2.msra.mxu0 0.0
      %1514 = vmatprep.subr.mxu0 0.0
      %1515 = vmatpush2.msra.mxu0 0.0
      %1516 = vmatprep.subr.mxu0 0.0
      %1517 = vmatpush2.msra.mxu0 0.0
      %1518 = vmatprep.subr.mxu0 0.0
      %1519 = vmatpush2.msra.mxu0 0.0
      %1520 = vmatprep.subr.mxu0 0.0
      %1521 = vmatpush2.msra.mxu0 0.0
      %1522 = vmatprep.subr.mxu0 0.0
      %1523 = vmatpush2.msra.mxu0 0.0
      %1524 = vmatprep.subr.mxu0 0.0
      %1525 = vmatpush2.msra.mxu0 0.0
      %1526 = vmatprep.subr.mxu0 0.0
      %1527 = vmatpush2.msra.mxu0 0.0
      %1528 = vmatprep.subr.mxu0 0.0
      %1529 = vmatpush2.msra.mxu0 0.0
      %1530 = vmatprep.subr.mxu0 0.0
      %1531 = vmatpush2.msra.mxu0 0.0
      %1532 = vmatprep.subr.mxu0 0.0
      %1533 = vmatpush2.msra.mxu0 0.0
      %1534 = vmatprep.subr.mxu0 0.0
      %1535 = vmatpush2.msra.mxu0 0.0
      %1536 = vmatprep.subr.mxu0 0.0
      %1537 = vmatpush2.msra.mxu0 0.0
      %1538 = vmatprep.mubr.f32.mxu0 0.0
      %1539 = vmatmul.mubr.f32.gmra.mxu0 %v1472
      %v1540 = vpop.f32.mrf.mxu0
      %v1541 = vadd.f32 0.0, %v1540
      %v1542 = vpop.f32.mrf.mxu0
      %1543 = vdwg.mxu0
      %v1545 = vsel %vm1296, %v1470, 0
      %1547 = vmatprep.subr.mxu0 0.0
      %1548 = vmatpush1.msra.mxu0 0.0
      %1549 = vmatprep.subr.mxu0 0.0
      %1550 = vmatpush1.msra.mxu0 0.0
      %1551 = vmatprep.subr.mxu0 0.0
      %1552 = vmatpush1.msra.mxu0 0.0
      %1553 = vmatprep.subr.mxu0 0.0
      %1554 = vmatpush1.msra.mxu0 0.0
      %1555 = vmatprep.subr.mxu0 0.0
      %1556 = vmatpush1.msra.mxu0 0.0
      %1557 = vmatprep.subr.mxu0 0.0
      %1558 = vmatpush1.msra.mxu0 0.0
      %1559 = vmatprep.subr.mxu0 0.0
      %1560 = vmatpush1.msra.mxu0 0.0
      %1561 = vmatprep.subr.mxu0 0.0
      %1562 = vmatpush1.msra.mxu0 0.0
      %1563 = vmatprep.subr.mxu0 0.0
      %1564 = vmatpush1.msra.mxu0 0.0
      %1565 = vmatprep.subr.mxu0 0.0
      %1566 = vmatpush1.msra.mxu0 0.0
      %1567 = vmatprep.subr.mxu0 0.0
      %1568 = vmatpush1.msra.mxu0 0.0
      %1569 = vmatprep.subr.mxu0 0.0
      %1570 = vmatpush1.msra.mxu0 0.0
      %1571 = vmatprep.subr.mxu0 0.0
      %1572 = vmatpush1.msra.mxu0 0.0
      %1573 = vmatprep.subr.mxu0 0.0
      %1574 = vmatpush1.msra.mxu0 0.0
      %1575 = vmatprep.subr.mxu0 0.0
      %1576 = vmatpush1.msra.mxu0 0.0
      %1577 = vmatprep.subr.mxu0 0.0
      %1578 = vmatpush1.msra.mxu0 %v1293
      %1579 = vmatprep.subr.mxu0 0.0
      %1580 = vmatpush2.msra.mxu0 0.0
      %1581 = vmatprep.subr.mxu0 0.0
      %1582 = vmatpush2.msra.mxu0 0.0
      %1583 = vmatprep.subr.mxu0 0.0
      %1584 = vmatpush2.msra.mxu0 0.0
      %1585 = vmatprep.subr.mxu0 0.0
      %1586 = vmatpush2.msra.mxu0 0.0
      %1587 = vmatprep.subr.mxu0 0.0
      %1588 = vmatpush2.msra.mxu0 0.0
      %1589 = vmatprep.subr.mxu0 0.0
      %1590 = vmatpush2.msra.mxu0 0.0
      %1591 = vmatprep.subr.mxu0 0.0
      %1592 = vmatpush2.msra.mxu0 0.0
      %1593 = vmatprep.subr.mxu0 0.0
      %1594 = vmatpush2.msra.mxu0 0.0
      %1595 = vmatprep.subr.mxu0 0.0
      %1596 = vmatpush2.msra.mxu0 0.0
      %1597 = vmatprep.subr.mxu0 0.0
      %1598 = vmatpush2.msra.mxu0 0.0
      %1599 = vmatprep.subr.mxu0 0.0
      %1600 = vmatpush2.msra.mxu0 0.0
      %1601 = vmatprep.subr.mxu0 0.0
      %1602 = vmatpush2.msra.mxu0 0.0
      %1603 = vmatprep.subr.mxu0 0.0
      %1604 = vmatpush2.msra.mxu0 0.0
      %1605 = vmatprep.subr.mxu0 0.0
      %1606 = vmatpush2.msra.mxu0 0.0
      %1607 = vmatprep.subr.mxu0 0.0
      %1608 = vmatpush2.msra.mxu0 0.0
      %1609 = vmatprep.subr.mxu0 0.0
      %1610 = vmatpush2.msra.mxu0 0.0
      %1611 = vmatprep.mubr.f32.mxu0 0.0
      %1612 = vmatmul.mubr.f32.gmra.mxu0 %v1545
      %v1613 = vpop.f32.mrf.mxu0
      %v1614 = vadd.f32 0.0, %v1613
      %v1615 = vpop.f32.mrf.mxu0
      %1616 = vdwg.mxu0
      %v1617 = vld [vmem:[%s890] sm:$0xff]
      %s1618 = scalar_lea.vmem %s863, 32
      %v1619 = vld [vmem:[%s1618] sm:$0xff]
      %v1620 = vld [vmem:[%s1618 + $0x8] sm:$0xff]
      %v1621 = vld [vmem:[%s1618 + $0x10] sm:$0xff]
      %v1622 = vld [vmem:[%s1618 + $0x18] sm:$0xff]
      %s1623 = scalar_lea.vmem %s867, 1
      %v1624 = vld [vmem:[%s1623] sm:$0x1]
      %v1626 = vlaneseq
      %v1627 = vshrl.u32 %v1626, 7
      %v1628 = vsub.s32 0, %v1627
      %v1629 = vrot.slane %v1624, %v1628
      %1631 = vmatprep.subr.mxu0 0.0
      %1632 = vmatpush1.msra.mxu0 0.0
      %1633 = vmatprep.subr.mxu0 0.0
      %1634 = vmatpush1.msra.mxu0 0.0
      %1635 = vmatprep.subr.mxu0 0.0
      %1636 = vmatpush1.msra.mxu0 0.0
      %1637 = vmatprep.subr.mxu0 0.0
      %1638 = vmatpush1.msra.mxu0 0.0
      %1639 = vmatprep.subr.mxu0 0.0
      %1640 = vmatpush1.msra.mxu0 0.0
      %1641 = vmatprep.subr.mxu0 0.0
      %1642 = vmatpush1.msra.mxu0 0.0
      %1643 = vmatprep.subr.mxu0 0.0
      %1644 = vmatpush1.msra.mxu0 0.0
      %1645 = vmatprep.subr.mxu0 0.0
      %1646 = vmatpush1.msra.mxu0 0.0
      %1647 = vmatprep.subr.mxu0 0.0
      %1648 = vmatpush1.msra.mxu0 0.0
      %1649 = vmatprep.subr.mxu0 0.0
      %1650 = vmatpush1.msra.mxu0 0.0
      %1651 = vmatprep.subr.mxu0 0.0
      %1652 = vmatpush1.msra.mxu0 0.0
      %1653 = vmatprep.subr.mxu0 0.0
      %1654 = vmatpush1.msra.mxu0 0.0
      %1655 = vmatprep.subr.mxu0 0.0
      %1656 = vmatpush1.msra.mxu0 %v1622
      %1657 = vmatprep.subr.mxu0 0.0
      %1658 = vmatpush1.msra.mxu0 %v1621
      %1659 = vmatprep.subr.mxu0 0.0
      %1660 = vmatpush1.msra.mxu0 %v1620
      %1661 = vmatprep.subr.mxu0 0.0
      %1662 = vmatpush1.msra.mxu0 %v1619
      %1663 = vmatprep.subr.mxu0 0.0
      %1664 = vmatpush2.msra.mxu0 0.0
      %1665 = vmatprep.subr.mxu0 0.0
      %1666 = vmatpush2.msra.mxu0 0.0
      %1667 = vmatprep.subr.mxu0 0.0
      %1668 = vmatpush2.msra.mxu0 0.0
      %1669 = vmatprep.subr.mxu0 0.0
      %1670 = vmatpush2.msra.mxu0 0.0
      %1671 = vmatprep.subr.mxu0 0.0
      %1672 = vmatpush2.msra.mxu0 0.0
      %1673 = vmatprep.subr.mxu0 0.0
      %1674 = vmatpush2.msra.mxu0 0.0
      %1675 = vmatprep.subr.mxu0 0.0
      %1676 = vmatpush2.msra.mxu0 0.0
      %1677 = vmatprep.subr.mxu0 0.0
      %1678 = vmatpush2.msra.mxu0 0.0
      %1679 = vmatprep.subr.mxu0 0.0
      %1680 = vmatpush2.msra.mxu0 0.0
      %1681 = vmatprep.subr.mxu0 0.0
      %1682 = vmatpush2.msra.mxu0 0.0
      %1683 = vmatprep.subr.mxu0 0.0
      %1684 = vmatpush2.msra.mxu0 0.0
      %1685 = vmatprep.subr.mxu0 0.0
      %1686 = vmatpush2.msra.mxu0 0.0
      %1687 = vmatprep.subr.mxu0 0.0
      %1688 = vmatpush2.msra.mxu0 0.0
      %1689 = vmatprep.subr.mxu0 0.0
      %1690 = vmatpush2.msra.mxu0 0.0
      %1691 = vmatprep.subr.mxu0 0.0
      %1692 = vmatpush2.msra.mxu0 0.0
      %1693 = vmatprep.subr.mxu0 0.0
      %1694 = vmatpush2.msra.mxu0 0.0
      %1695 = vmatprep.mubr.f32.mxu0 0.0
      %1696 = vmatmul.mubr.f32.gmra.mxu0 %v1044
      %v1697 = vpop.f32.mrf.mxu0
      %v1698 = vadd.f32 %v1629, %v1697
      %v1699 = vpop.f32.mrf.mxu0
      %1700 = vmatprep.mubr.f32.mxu0 0.0
      %1701 = vmatmul.mubr.f32.gmra.mxu0 %v1047
      %v1702 = vpop.f32.mrf.mxu0
      %v1703 = vadd.f32 %v1629, %v1702
      %v1704 = vpop.f32.mrf.mxu0
      %1705 = vdwg.mxu0
      %s1706 = scalar_lea.vmem %s872, 32
      %v1707 = vld [vmem:[%s1706] sm:$0xff]
      %v1708 = vld [vmem:[%s1706 + $0x8] sm:$0xff]
      %v1709 = vld [vmem:[%s1706 + $0x10] sm:$0xff]
      %v1710 = vld [vmem:[%s1706 + $0x18] sm:$0xff]
      %s1711 = scalar_lea.vmem %s876, 1
      %v1712 = vld [vmem:[%s1711] sm:$0x1]
      %v1714 = vlaneseq
      %v1715 = vshrl.u32 %v1714, 7
      %v1716 = vsub.s32 0, %v1715
      %v1717 = vrot.slane %v1712, %v1716
      %1719 = vmatprep.subr.mxu0 0.0
      %1720 = vmatpush1.msra.mxu0 0.0
      %1721 = vmatprep.subr.mxu0 0.0
      %1722 = vmatpush1.msra.mxu0 0.0
      %1723 = vmatprep.subr.mxu0 0.0
      %1724 = vmatpush1.msra.mxu0 0.0
      %1725 = vmatprep.subr.mxu0 0.0
      %1726 = vmatpush1.msra.mxu0 0.0
      %1727 = vmatprep.subr.mxu0 0.0
      %1728 = vmatpush1.msra.mxu0 0.0
      %1729 = vmatprep.subr.mxu0 0.0
      %1730 = vmatpush1.msra.mxu0 0.0
      %1731 = vmatprep.subr.mxu0 0.0
      %1732 = vmatpush1.msra.mxu0 0.0
      %1733 = vmatprep.subr.mxu0 0.0
      %1734 = vmatpush1.msra.mxu0 0.0
      %1735 = vmatprep.subr.mxu0 0.0
      %1736 = vmatpush1.msra.mxu0 0.0
      %1737 = vmatprep.subr.mxu0 0.0
      %1738 = vmatpush1.msra.mxu0 0.0
      %1739 = vmatprep.subr.mxu0 0.0
      %1740 = vmatpush1.msra.mxu0 0.0
      %1741 = vmatprep.subr.mxu0 0.0
      %1742 = vmatpush1.msra.mxu0 0.0
      %1743 = vmatprep.subr.mxu0 0.0
      %1744 = vmatpush1.msra.mxu0 %v1710
      %1745 = vmatprep.subr.mxu0 0.0
      %1746 = vmatpush1.msra.mxu0 %v1709
      %1747 = vmatprep.subr.mxu0 0.0
      %1748 = vmatpush1.msra.mxu0 %v1708
      %1749 = vmatprep.subr.mxu0 0.0
      %1750 = vmatpush1.msra.mxu0 %v1707
      %1751 = vmatprep.subr.mxu0 0.0
      %1752 = vmatpush2.msra.mxu0 0.0
      %1753 = vmatprep.subr.mxu0 0.0
      %1754 = vmatpush2.msra.mxu0 0.0
      %1755 = vmatprep.subr.mxu0 0.0
      %1756 = vmatpush2.msra.mxu0 0.0
      %1757 = vmatprep.subr.mxu0 0.0
      %1758 = vmatpush2.msra.mxu0 0.0
      %1759 = vmatprep.subr.mxu0 0.0
      %1760 = vmatpush2.msra.mxu0 0.0
      %1761 = vmatprep.subr.mxu0 0.0
      %1762 = vmatpush2.msra.mxu0 0.0
      %1763 = vmatprep.subr.mxu0 0.0
      %1764 = vmatpush2.msra.mxu0 0.0
      %1765 = vmatprep.subr.mxu0 0.0
      %1766 = vmatpush2.msra.mxu0 0.0
      %1767 = vmatprep.subr.mxu0 0.0
      %1768 = vmatpush2.msra.mxu0 0.0
      %1769 = vmatprep.subr.mxu0 0.0
      %1770 = vmatpush2.msra.mxu0 0.0
      %1771 = vmatprep.subr.mxu0 0.0
      %1772 = vmatpush2.msra.mxu0 0.0
      %1773 = vmatprep.subr.mxu0 0.0
      %1774 = vmatpush2.msra.mxu0 0.0
      %1775 = vmatprep.subr.mxu0 0.0
      %1776 = vmatpush2.msra.mxu0 0.0
      %1777 = vmatprep.subr.mxu0 0.0
      %1778 = vmatpush2.msra.mxu0 0.0
      %1779 = vmatprep.subr.mxu0 0.0
      %1780 = vmatpush2.msra.mxu0 0.0
      %1781 = vmatprep.subr.mxu0 0.0
      %1782 = vmatpush2.msra.mxu0 0.0
      %1783 = vmatprep.mubr.f32.mxu0 0.0
      %1784 = vmatmul.mubr.f32.gmra.mxu0 %v1044
      %v1785 = vpop.f32.mrf.mxu0
      %v1786 = vadd.f32 %v1717, %v1785
      %v1787 = vpop.f32.mrf.mxu0
      %1788 = vmatprep.mubr.f32.mxu0 0.0
      %1789 = vmatmul.mubr.f32.gmra.mxu0 %v1047
      %v1790 = vpop.f32.mrf.mxu0
      %v1791 = vadd.f32 %v1717, %v1790
      %v1792 = vpop.f32.mrf.mxu0
      %1793 = vdwg.mxu0
      %s1794 = scalar_lea.vmem %s881, 32
      %v1795 = vld [vmem:[%s1794] sm:$0xff]
      %v1796 = vld [vmem:[%s1794 + $0x8] sm:$0xff]
      %v1797 = vld [vmem:[%s1794 + $0x10] sm:$0xff]
      %v1798 = vld [vmem:[%s1794 + $0x18] sm:$0xff]
      %s1799 = scalar_lea.vmem %s885, 1
      %v1800 = vld [vmem:[%s1799] sm:$0x1]
      %v1802 = vlaneseq
      %v1803 = vshrl.u32 %v1802, 7
      %v1804 = vsub.s32 0, %v1803
      %v1805 = vrot.slane %v1800, %v1804
      %1807 = vmatprep.subr.mxu0 0.0
      %1808 = vmatpush1.msra.mxu0 0.0
      %1809 = vmatprep.subr.mxu0 0.0
      %1810 = vmatpush1.msra.mxu0 0.0
      %1811 = vmatprep.subr.mxu0 0.0
      %1812 = vmatpush1.msra.mxu0 0.0
      %1813 = vmatprep.subr.mxu0 0.0
      %1814 = vmatpush1.msra.mxu0 0.0
      %1815 = vmatprep.subr.mxu0 0.0
      %1816 = vmatpush1.msra.mxu0 0.0
      %1817 = vmatprep.subr.mxu0 0.0
      %1818 = vmatpush1.msra.mxu0 0.0
      %1819 = vmatprep.subr.mxu0 0.0
      %1820 = vmatpush1.msra.mxu0 0.0
      %1821 = vmatprep.subr.mxu0 0.0
      %1822 = vmatpush1.msra.mxu0 0.0
      %1823 = vmatprep.subr.mxu0 0.0
      %1824 = vmatpush1.msra.mxu0 0.0
      %1825 = vmatprep.subr.mxu0 0.0
      %1826 = vmatpush1.msra.mxu0 0.0
      %1827 = vmatprep.subr.mxu0 0.0
      %1828 = vmatpush1.msra.mxu0 0.0
      %1829 = vmatprep.subr.mxu0 0.0
      %1830 = vmatpush1.msra.mxu0 0.0
      %1831 = vmatprep.subr.mxu0 0.0
      %1832 = vmatpush1.msra.mxu0 %v1798
      %1833 = vmatprep.subr.mxu0 0.0
      %1834 = vmatpush1.msra.mxu0 %v1797
      %1835 = vmatprep.subr.mxu0 0.0
      %1836 = vmatpush1.msra.mxu0 %v1796
      %1837 = vmatprep.subr.mxu0 0.0
      %1838 = vmatpush1.msra.mxu0 %v1795
      %1839 = vmatprep.subr.mxu0 0.0
      %1840 = vmatpush2.msra.mxu0 0.0
      %1841 = vmatprep.subr.mxu0 0.0
      %1842 = vmatpush2.msra.mxu0 0.0
      %1843 = vmatprep.subr.mxu0 0.0
      %1844 = vmatpush2.msra.mxu0 0.0
      %1845 = vmatprep.subr.mxu0 0.0
      %1846 = vmatpush2.msra.mxu0 0.0
      %1847 = vmatprep.subr.mxu0 0.0
      %1848 = vmatpush2.msra.mxu0 0.0
      %1849 = vmatprep.subr.mxu0 0.0
      %1850 = vmatpush2.msra.mxu0 0.0
      %1851 = vmatprep.subr.mxu0 0.0
      %1852 = vmatpush2.msra.mxu0 0.0
      %1853 = vmatprep.subr.mxu0 0.0
      %1854 = vmatpush2.msra.mxu0 0.0
      %1855 = vmatprep.subr.mxu0 0.0
      %1856 = vmatpush2.msra.mxu0 0.0
      %1857 = vmatprep.subr.mxu0 0.0
      %1858 = vmatpush2.msra.mxu0 0.0
      %1859 = vmatprep.subr.mxu0 0.0
      %1860 = vmatpush2.msra.mxu0 0.0
      %1861 = vmatprep.subr.mxu0 0.0
      %1862 = vmatpush2.msra.mxu0 0.0
      %1863 = vmatprep.subr.mxu0 0.0
      %1864 = vmatpush2.msra.mxu0 0.0
      %1865 = vmatprep.subr.mxu0 0.0
      %1866 = vmatpush2.msra.mxu0 0.0
      %1867 = vmatprep.subr.mxu0 0.0
      %1868 = vmatpush2.msra.mxu0 0.0
      %1869 = vmatprep.subr.mxu0 0.0
      %1870 = vmatpush2.msra.mxu0 0.0
      %1871 = vmatprep.mubr.f32.mxu0 0.0
      %1872 = vmatmul.mubr.f32.gmra.mxu0 %v1044
      %v1873 = vpop.f32.mrf.mxu0
      %v1874 = vadd.f32 %v1805, %v1873
      %v1875 = vpop.f32.mrf.mxu0
      %1876 = vmatprep.mubr.f32.mxu0 0.0
      %1877 = vmatmul.mubr.f32.gmra.mxu0 %v1047
      %v1878 = vpop.f32.mrf.mxu0
      %v1879 = vadd.f32 %v1805, %v1878
      %v1880 = vpop.f32.mrf.mxu0
      %1881 = vdwg.mxu0
      %v1883 = vsel %vm1296, %v1698, 0
      %v1886 = vsel %vm1296, %v1786, 0
      %1888 = vmatprep.subr.mxu0 0.0
      %1889 = vmatpush1.xpose.msra.mxu0 0.0
      %1890 = vmatprep.subr.mxu0 0.0
      %1891 = vmatpush1.xpose.msra.mxu0 0.0
      %1892 = vmatprep.subr.mxu0 0.0
      %1893 = vmatpush1.xpose.msra.mxu0 0.0
      %1894 = vmatprep.subr.mxu0 0.0
      %1895 = vmatpush1.xpose.msra.mxu0 0.0
      %1896 = vmatprep.subr.mxu0 0.0
      %1897 = vmatpush1.xpose.msra.mxu0 0.0
      %1898 = vmatprep.subr.mxu0 0.0
      %1899 = vmatpush1.xpose.msra.mxu0 0.0
      %1900 = vmatprep.subr.mxu0 0.0
      %1901 = vmatpush1.xpose.msra.mxu0 0.0
      %1902 = vmatprep.subr.mxu0 0.0
      %1903 = vmatpush1.xpose.msra.mxu0 0.0
      %1904 = vmatprep.subr.mxu0 0.0
      %1905 = vmatpush1.xpose.msra.mxu0 0.0
      %1906 = vmatprep.subr.mxu0 0.0
      %1907 = vmatpush1.xpose.msra.mxu0 0.0
      %1908 = vmatprep.subr.mxu0 0.0
      %1909 = vmatpush1.xpose.msra.mxu0 0.0
      %1910 = vmatprep.subr.mxu0 0.0
      %1911 = vmatpush1.xpose.msra.mxu0 0.0
      %1912 = vmatprep.subr.mxu0 0.0
      %1913 = vmatpush1.xpose.msra.mxu0 0.0
      %1914 = vmatprep.subr.mxu0 0.0
      %1915 = vmatpush1.xpose.msra.mxu0 0.0
      %1916 = vmatprep.subr.mxu0 0.0
      %1917 = vmatpush1.xpose.msra.mxu0 0.0
      %1918 = vmatprep.subr.mxu0 0.0
      %1919 = vmatpush1.xpose.msra.mxu0 %v1886
      %1920 = vmatprep.subr.mxu0 0.0
      %1921 = vmatpush2.xpose.msra.mxu0 0.0
      %1922 = vmatprep.subr.mxu0 0.0
      %1923 = vmatpush2.xpose.msra.mxu0 0.0
      %1924 = vmatprep.subr.mxu0 0.0
      %1925 = vmatpush2.xpose.msra.mxu0 0.0
      %1926 = vmatprep.subr.mxu0 0.0
      %1927 = vmatpush2.xpose.msra.mxu0 0.0
      %1928 = vmatprep.subr.mxu0 0.0
      %1929 = vmatpush2.xpose.msra.mxu0 0.0
      %1930 = vmatprep.subr.mxu0 0.0
      %1931 = vmatpush2.xpose.msra.mxu0 0.0
      %1932 = vmatprep.subr.mxu0 0.0
      %1933 = vmatpush2.xpose.msra.mxu0 0.0
      %1934 = vmatprep.subr.mxu0 0.0
      %1935 = vmatpush2.xpose.msra.mxu0 0.0
      %1936 = vmatprep.subr.mxu0 0.0
      %1937 = vmatpush2.xpose.msra.mxu0 0.0
      %1938 = vmatprep.subr.mxu0 0.0
      %1939 = vmatpush2.xpose.msra.mxu0 0.0
      %1940 = vmatprep.subr.mxu0 0.0
      %1941 = vmatpush2.xpose.msra.mxu0 0.0
      %1942 = vmatprep.subr.mxu0 0.0
      %1943 = vmatpush2.xpose.msra.mxu0 0.0
      %1944 = vmatprep.subr.mxu0 0.0
      %1945 = vmatpush2.xpose.msra.mxu0 0.0
      %1946 = vmatprep.subr.mxu0 0.0
      %1947 = vmatpush2.xpose.msra.mxu0 0.0
      %1948 = vmatprep.subr.mxu0 0.0
      %1949 = vmatpush2.xpose.msra.mxu0 0.0
      %1950 = vmatprep.subr.mxu0 0.0
      %1951 = vmatpush2.xpose.msra.mxu0 0.0
      %1952 = vmatprep.mubr.f32.mxu0 0.0
      %1953 = vmatmul.mubr.f32.gmra.mxu0 %v1883
      %v1954 = vpop.f32.mrf.mxu0
      %v1955 = vadd.f32 0.0, %v1954
      %v1956 = vpop.f32.mrf.mxu0
      %1957 = vdwg.mxu0
      %v1959 = vsel %vm1296, %v1703, 0
      %v1962 = vsel %vm1296, %v1791, 0
      %1964 = vmatprep.subr.mxu0 0.0
      %1965 = vmatpush1.xpose.msra.mxu0 0.0
      %1966 = vmatprep.subr.mxu0 0.0
      %1967 = vmatpush1.xpose.msra.mxu0 0.0
      %1968 = vmatprep.subr.mxu0 0.0
      %1969 = vmatpush1.xpose.msra.mxu0 0.0
      %1970 = vmatprep.subr.mxu0 0.0
      %1971 = vmatpush1.xpose.msra.mxu0 0.0
      %1972 = vmatprep.subr.mxu0 0.0
      %1973 = vmatpush1.xpose.msra.mxu0 0.0
      %1974 = vmatprep.subr.mxu0 0.0
      %1975 = vmatpush1.xpose.msra.mxu0 0.0
      %1976 = vmatprep.subr.mxu0 0.0
      %1977 = vmatpush1.xpose.msra.mxu0 0.0
      %1978 = vmatprep.subr.mxu0 0.0
      %1979 = vmatpush1.xpose.msra.mxu0 0.0
      %1980 = vmatprep.subr.mxu0 0.0
      %1981 = vmatpush1.xpose.msra.mxu0 0.0
      %1982 = vmatprep.subr.mxu0 0.0
      %1983 = vmatpush1.xpose.msra.mxu0 0.0
      %1984 = vmatprep.subr.mxu0 0.0
      %1985 = vmatpush1.xpose.msra.mxu0 0.0
      %1986 = vmatprep.subr.mxu0 0.0
      %1987 = vmatpush1.xpose.msra.mxu0 0.0
      %1988 = vmatprep.subr.mxu0 0.0
      %1989 = vmatpush1.xpose.msra.mxu0 0.0
      %1990 = vmatprep.subr.mxu0 0.0
      %1991 = vmatpush1.xpose.msra.mxu0 0.0
      %1992 = vmatprep.subr.mxu0 0.0
      %1993 = vmatpush1.xpose.msra.mxu0 0.0
      %1994 = vmatprep.subr.mxu0 0.0
      %1995 = vmatpush1.xpose.msra.mxu0 %v1962
      %1996 = vmatprep.subr.mxu0 0.0
      %1997 = vmatpush2.xpose.msra.mxu0 0.0
      %1998 = vmatprep.subr.mxu0 0.0
      %1999 = vmatpush2.xpose.msra.mxu0 0.0
      %2000 = vmatprep.subr.mxu0 0.0
      %2001 = vmatpush2.xpose.msra.mxu0 0.0
      %2002 = vmatprep.subr.mxu0 0.0
      %2003 = vmatpush2.xpose.msra.mxu0 0.0
      %2004 = vmatprep.subr.mxu0 0.0
      %2005 = vmatpush2.xpose.msra.mxu0 0.0
      %2006 = vmatprep.subr.mxu0 0.0
      %2007 = vmatpush2.xpose.msra.mxu0 0.0
      %2008 = vmatprep.subr.mxu0 0.0
      %2009 = vmatpush2.xpose.msra.mxu0 0.0
      %2010 = vmatprep.subr.mxu0 0.0
      %2011 = vmatpush2.xpose.msra.mxu0 0.0
      %2012 = vmatprep.subr.mxu0 0.0
      %2013 = vmatpush2.xpose.msra.mxu0 0.0
      %2014 = vmatprep.subr.mxu0 0.0
      %2015 = vmatpush2.xpose.msra.mxu0 0.0
      %2016 = vmatprep.subr.mxu0 0.0
      %2017 = vmatpush2.xpose.msra.mxu0 0.0
      %2018 = vmatprep.subr.mxu0 0.0
      %2019 = vmatpush2.xpose.msra.mxu0 0.0
      %2020 = vmatprep.subr.mxu0 0.0
      %2021 = vmatpush2.xpose.msra.mxu0 0.0
      %2022 = vmatprep.subr.mxu0 0.0
      %2023 = vmatpush2.xpose.msra.mxu0 0.0
      %2024 = vmatprep.subr.mxu0 0.0
      %2025 = vmatpush2.xpose.msra.mxu0 0.0
      %2026 = vmatprep.subr.mxu0 0.0
      %2027 = vmatpush2.xpose.msra.mxu0 0.0
      %2028 = vmatprep.mubr.f32.mxu0 0.0
      %2029 = vmatmul.mubr.f32.gmra.mxu0 %v1959
      %v2030 = vpop.f32.mrf.mxu0
      %v2031 = vadd.f32 0.0, %v2030
      %v2032 = vpop.f32.mrf.mxu0
      %2033 = vdwg.mxu0
      %v2034 = vsel %vm1296, %v1955, -inf
      %2035 = vmax.xlane.f32.xlu0 %v2034
      %v2036 = vpop.xlane.xlu0 %2035
      %v2037 = vsel %vm1296, %v2031, -inf
      %2038 = vmax.xlane.f32.xlu0 %v2037
      %v2039 = vpop.xlane.xlu0 %2038
      %v2040 = vsub.f32 %v1955, %v2036
      %v2041 = vsub.f32 %v2031, %v2039
      %v2042 = vmul.f32 %v2040, 1.442695
      %v2043 = vpow.pop %v2042
      %v2044 = vmul.f32 %v2041, 1.442695
      %v2045 = vpow.pop %v2044
      %v2046 = vsel %vm1296, %v2043, 0.0
      %2047 = vadd.xlane.f32.xlu0 %v2046
      %v2048 = vpop.xlane.xlu0 %2047
      %v2049 = vsel %vm1296, %v2045, 0.0
      %2050 = vadd.xlane.f32.xlu0 %v2049
      %v2051 = vpop.xlane.xlu0 %2050
      %v2052 = vrcp.pop %v2048
      %v2053 = vrcp.pop %v2051
      %v2054 = vmul.f32 %v2043, %v2052
      %v2055 = vmul.f32 %v2045, %v2053
      %v2057 = vsel %vm1296, %v2054, 0
      %2059 = vmatprep.subr.mxu0 0.0
      %2060 = vmatpush1.msra.mxu0 0.0
      %2061 = vmatprep.subr.mxu0 0.0
      %2062 = vmatpush1.msra.mxu0 0.0
      %2063 = vmatprep.subr.mxu0 0.0
      %2064 = vmatpush1.msra.mxu0 0.0
      %2065 = vmatprep.subr.mxu0 0.0
      %2066 = vmatpush1.msra.mxu0 0.0
      %2067 = vmatprep.subr.mxu0 0.0
      %2068 = vmatpush1.msra.mxu0 0.0
      %2069 = vmatprep.subr.mxu0 0.0
      %2070 = vmatpush1.msra.mxu0 0.0
      %2071 = vmatprep.subr.mxu0 0.0
      %2072 = vmatpush1.msra.mxu0 0.0
      %2073 = vmatprep.subr.mxu0 0.0
      %2074 = vmatpush1.msra.mxu0 0.0
      %2075 = vmatprep.subr.mxu0 0.0
      %2076 = vmatpush1.msra.mxu0 0.0
      %2077 = vmatprep.subr.mxu0 0.0
      %2078 = vmatpush1.msra.mxu0 0.0
      %2079 = vmatprep.subr.mxu0 0.0
      %2080 = vmatpush1.msra.mxu0 0.0
      %2081 = vmatprep.subr.mxu0 0.0
      %2082 = vmatpush1.msra.mxu0 0.0
      %2083 = vmatprep.subr.mxu0 0.0
      %2084 = vmatpush1.msra.mxu0 0.0
      %2085 = vmatprep.subr.mxu0 0.0
      %2086 = vmatpush1.msra.mxu0 0.0
      %2087 = vmatprep.subr.mxu0 0.0
      %2088 = vmatpush1.msra.mxu0 0.0
      %2089 = vmatprep.subr.mxu0 0.0
      %2090 = vmatpush1.msra.mxu0 %v1874
      %2091 = vmatprep.subr.mxu0 0.0
      %2092 = vmatpush2.msra.mxu0 0.0
      %2093 = vmatprep.subr.mxu0 0.0
      %2094 = vmatpush2.msra.mxu0 0.0
      %2095 = vmatprep.subr.mxu0 0.0
      %2096 = vmatpush2.msra.mxu0 0.0
      %2097 = vmatprep.subr.mxu0 0.0
      %2098 = vmatpush2.msra.mxu0 0.0
      %2099 = vmatprep.subr.mxu0 0.0
      %2100 = vmatpush2.msra.mxu0 0.0
      %2101 = vmatprep.subr.mxu0 0.0
      %2102 = vmatpush2.msra.mxu0 0.0
      %2103 = vmatprep.subr.mxu0 0.0
      %2104 = vmatpush2.msra.mxu0 0.0
      %2105 = vmatprep.subr.mxu0 0.0
      %2106 = vmatpush2.msra.mxu0 0.0
      %2107 = vmatprep.subr.mxu0 0.0
      %2108 = vmatpush2.msra.mxu0 0.0
      %2109 = vmatprep.subr.mxu0 0.0
      %2110 = vmatpush2.msra.mxu0 0.0
      %2111 = vmatprep.subr.mxu0 0.0
      %2112 = vmatpush2.msra.mxu0 0.0
      %2113 = vmatprep.subr.mxu0 0.0
      %2114 = vmatpush2.msra.mxu0 0.0
      %2115 = vmatprep.subr.mxu0 0.0
      %2116 = vmatpush2.msra.mxu0 0.0
      %2117 = vmatprep.subr.mxu0 0.0
      %2118 = vmatpush2.msra.mxu0 0.0
      %2119 = vmatprep.subr.mxu0 0.0
      %2120 = vmatpush2.msra.mxu0 0.0
      %2121 = vmatprep.subr.mxu0 0.0
      %2122 = vmatpush2.msra.mxu0 0.0
      %2123 = vmatprep.mubr.f32.mxu0 0.0
      %2124 = vmatmul.mubr.f32.gmra.mxu0 %v2057
      %v2125 = vpop.f32.mrf.mxu0
      %v2126 = vadd.f32 0.0, %v2125
      %v2127 = vpop.f32.mrf.mxu0
      %2128 = vdwg.mxu0
      %v2130 = vsel %vm1296, %v2055, 0
      %2132 = vmatprep.subr.mxu0 0.0
      %2133 = vmatpush1.msra.mxu0 0.0
      %2134 = vmatprep.subr.mxu0 0.0
      %2135 = vmatpush1.msra.mxu0 0.0
      %2136 = vmatprep.subr.mxu0 0.0
      %2137 = vmatpush1.msra.mxu0 0.0
      %2138 = vmatprep.subr.mxu0 0.0
      %2139 = vmatpush1.msra.mxu0 0.0
      %2140 = vmatprep.subr.mxu0 0.0
      %2141 = vmatpush1.msra.mxu0 0.0
      %2142 = vmatprep.subr.mxu0 0.0
      %2143 = vmatpush1.msra.mxu0 0.0
      %2144 = vmatprep.subr.mxu0 0.0
      %2145 = vmatpush1.msra.mxu0 0.0
      %2146 = vmatprep.subr.mxu0 0.0
      %2147 = vmatpush1.msra.mxu0 0.0
      %2148 = vmatprep.subr.mxu0 0.0
      %2149 = vmatpush1.msra.mxu0 0.0
      %2150 = vmatprep.subr.mxu0 0.0
      %2151 = vmatpush1.msra.mxu0 0.0
      %2152 = vmatprep.subr.mxu0 0.0
      %2153 = vmatpush1.msra.mxu0 0.0
      %2154 = vmatprep.subr.mxu0 0.0
      %2155 = vmatpush1.msra.mxu0 0.0
      %2156 = vmatprep.subr.mxu0 0.0
      %2157 = vmatpush1.msra.mxu0 0.0
      %2158 = vmatprep.subr.mxu0 0.0
      %2159 = vmatpush1.msra.mxu0 0.0
      %2160 = vmatprep.subr.mxu0 0.0
      %2161 = vmatpush1.msra.mxu0 0.0
      %2162 = vmatprep.subr.mxu0 0.0
      %2163 = vmatpush1.msra.mxu0 %v1879
      %2164 = vmatprep.subr.mxu0 0.0
      %2165 = vmatpush2.msra.mxu0 0.0
      %2166 = vmatprep.subr.mxu0 0.0
      %2167 = vmatpush2.msra.mxu0 0.0
      %2168 = vmatprep.subr.mxu0 0.0
      %2169 = vmatpush2.msra.mxu0 0.0
      %2170 = vmatprep.subr.mxu0 0.0
      %2171 = vmatpush2.msra.mxu0 0.0
      %2172 = vmatprep.subr.mxu0 0.0
      %2173 = vmatpush2.msra.mxu0 0.0
      %2174 = vmatprep.subr.mxu0 0.0
      %2175 = vmatpush2.msra.mxu0 0.0
      %2176 = vmatprep.subr.mxu0 0.0
      %2177 = vmatpush2.msra.mxu0 0.0
      %2178 = vmatprep.subr.mxu0 0.0
      %2179 = vmatpush2.msra.mxu0 0.0
      %2180 = vmatprep.subr.mxu0 0.0
      %2181 = vmatpush2.msra.mxu0 0.0
      %2182 = vmatprep.subr.mxu0 0.0
      %2183 = vmatpush2.msra.mxu0 0.0
      %2184 = vmatprep.subr.mxu0 0.0
      %2185 = vmatpush2.msra.mxu0 0.0
      %2186 = vmatprep.subr.mxu0 0.0
      %2187 = vmatpush2.msra.mxu0 0.0
      %2188 = vmatprep.subr.mxu0 0.0
      %2189 = vmatpush2.msra.mxu0 0.0
      %2190 = vmatprep.subr.mxu0 0.0
      %2191 = vmatpush2.msra.mxu0 0.0
      %2192 = vmatprep.subr.mxu0 0.0
      %2193 = vmatpush2.msra.mxu0 0.0
      %2194 = vmatprep.subr.mxu0 0.0
      %2195 = vmatpush2.msra.mxu0 0.0
      %2196 = vmatprep.mubr.f32.mxu0 0.0
      %2197 = vmatmul.mubr.f32.gmra.mxu0 %v2130
      %v2198 = vpop.f32.mrf.mxu0
      %v2199 = vadd.f32 0.0, %v2198
      %v2200 = vpop.f32.mrf.mxu0
      %2201 = vdwg.mxu0
      %s2202 = scalar_lea.vmem %s890, 8
      %v2203 = vld [vmem:[%s2202] sm:$0xff]
      %v2205 = vsel %vm1296, %v2126, 0
      %v2208 = vsel %vm1296, %v2199, 0
      %2210 = vmatprep.subr.mxu0 0.0
      %2211 = vmatpush1.msra.mxu0 0.0
      %2212 = vmatprep.subr.mxu0 0.0
      %2213 = vmatpush1.msra.mxu0 0.0
      %2214 = vmatprep.subr.mxu0 0.0
      %2215 = vmatpush1.msra.mxu0 0.0
      %2216 = vmatprep.subr.mxu0 0.0
      %2217 = vmatpush1.msra.mxu0 0.0
      %2218 = vmatprep.subr.mxu0 0.0
      %2219 = vmatpush1.msra.mxu0 0.0
      %2220 = vmatprep.subr.mxu0 0.0
      %2221 = vmatpush1.msra.mxu0 0.0
      %2222 = vmatprep.subr.mxu0 0.0
      %2223 = vmatpush1.msra.mxu0 0.0
      %2224 = vmatprep.subr.mxu0 0.0
      %2225 = vmatpush1.msra.mxu0 0.0
      %2226 = vmatprep.subr.mxu0 0.0
      %2227 = vmatpush1.msra.mxu0 0.0
      %2228 = vmatprep.subr.mxu0 0.0
      %2229 = vmatpush1.msra.mxu0 0.0
      %2230 = vmatprep.subr.mxu0 0.0
      %2231 = vmatpush1.msra.mxu0 0.0
      %2232 = vmatprep.subr.mxu0 0.0
      %2233 = vmatpush1.msra.mxu0 0.0
      %2234 = vmatprep.subr.mxu0 0.0
      %2235 = vmatpush1.msra.mxu0 0.0
      %2236 = vmatprep.subr.mxu0 0.0
      %2237 = vmatpush1.msra.mxu0 0.0
      %2238 = vmatprep.subr.mxu0 0.0
      %2239 = vmatpush1.msra.mxu0 0.0
      %2240 = vmatprep.subr.mxu0 0.0
      %2241 = vmatpush1.msra.mxu0 %v2203
      %2242 = vmatprep.subr.mxu0 0.0
      %2243 = vmatpush2.msra.mxu0 0.0
      %2244 = vmatprep.subr.mxu0 0.0
      %2245 = vmatpush2.msra.mxu0 0.0
      %2246 = vmatprep.subr.mxu0 0.0
      %2247 = vmatpush2.msra.mxu0 0.0
      %2248 = vmatprep.subr.mxu0 0.0
      %2249 = vmatpush2.msra.mxu0 0.0
      %2250 = vmatprep.subr.mxu0 0.0
      %2251 = vmatpush2.msra.mxu0 0.0
      %2252 = vmatprep.subr.mxu0 0.0
      %2253 = vmatpush2.msra.mxu0 0.0
      %2254 = vmatprep.subr.mxu0 0.0
      %2255 = vmatpush2.msra.mxu0 0.0
      %2256 = vmatprep.subr.mxu0 0.0
      %2257 = vmatpush2.msra.mxu0 0.0
      %2258 = vmatprep.subr.mxu0 0.0
      %2259 = vmatpush2.msra.mxu0 0.0
      %2260 = vmatprep.subr.mxu0 0.0
      %2261 = vmatpush2.msra.mxu0 0.0
      %2262 = vmatprep.subr.mxu0 0.0
      %2263 = vmatpush2.msra.mxu0 0.0
      %2264 = vmatprep.subr.mxu0 0.0
      %2265 = vmatpush2.msra.mxu0 0.0
      %2266 = vmatprep.subr.mxu0 0.0
      %2267 = vmatpush2.msra.mxu0 0.0
      %2268 = vmatprep.subr.mxu0 0.0
      %2269 = vmatpush2.msra.mxu0 0.0
      %2270 = vmatprep.subr.mxu0 0.0
      %2271 = vmatpush2.msra.mxu0 0.0
      %2272 = vmatprep.subr.mxu0 0.0
      %2273 = vmatpush2.msra.mxu0 0.0
      %2274 = vmatprep.mubr.f32.mxu0 0.0
      %2275 = vmatmul.mubr.f32.gmra.mxu0 %v2205
      %v2276 = vpop.f32.mrf.mxu0
      %v2277 = vadd.f32 0.0, %v2276
      %v2278 = vpop.f32.mrf.mxu0
      %2279 = vmatprep.mubr.f32.mxu0 0.0
      %2280 = vmatmul.mubr.f32.gmra.mxu0 %v2208
      %v2281 = vpop.f32.mrf.mxu0
      %v2282 = vadd.f32 0.0, %v2281
      %v2283 = vpop.f32.mrf.mxu0
      %2284 = vdwg.mxu0
      %v2286 = vsel %vm1296, %v1541, 0
      %v2289 = vsel %vm1296, %v1614, 0
      %2291 = vmatprep.subr.mxu0 0.0
      %2292 = vmatpush1.msra.mxu0 0.0
      %2293 = vmatprep.subr.mxu0 0.0
      %2294 = vmatpush1.msra.mxu0 0.0
      %2295 = vmatprep.subr.mxu0 0.0
      %2296 = vmatpush1.msra.mxu0 0.0
      %2297 = vmatprep.subr.mxu0 0.0
      %2298 = vmatpush1.msra.mxu0 0.0
      %2299 = vmatprep.subr.mxu0 0.0
      %2300 = vmatpush1.msra.mxu0 0.0
      %2301 = vmatprep.subr.mxu0 0.0
      %2302 = vmatpush1.msra.mxu0 0.0
      %2303 = vmatprep.subr.mxu0 0.0
      %2304 = vmatpush1.msra.mxu0 0.0
      %2305 = vmatprep.subr.mxu0 0.0
      %2306 = vmatpush1.msra.mxu0 0.0
      %2307 = vmatprep.subr.mxu0 0.0
      %2308 = vmatpush1.msra.mxu0 0.0
      %2309 = vmatprep.subr.mxu0 0.0
      %2310 = vmatpush1.msra.mxu0 0.0
      %2311 = vmatprep.subr.mxu0 0.0
      %2312 = vmatpush1.msra.mxu0 0.0
      %2313 = vmatprep.subr.mxu0 0.0
      %2314 = vmatpush1.msra.mxu0 0.0
      %2315 = vmatprep.subr.mxu0 0.0
      %2316 = vmatpush1.msra.mxu0 0.0
      %2317 = vmatprep.subr.mxu0 0.0
      %2318 = vmatpush1.msra.mxu0 0.0
      %2319 = vmatprep.subr.mxu0 0.0
      %2320 = vmatpush1.msra.mxu0 0.0
      %2321 = vmatprep.subr.mxu0 0.0
      %2322 = vmatpush1.msra.mxu0 %v1617
      %2323 = vmatprep.subr.mxu0 0.0
      %2324 = vmatpush2.msra.mxu0 0.0
      %2325 = vmatprep.subr.mxu0 0.0
      %2326 = vmatpush2.msra.mxu0 0.0
      %2327 = vmatprep.subr.mxu0 0.0
      %2328 = vmatpush2.msra.mxu0 0.0
      %2329 = vmatprep.subr.mxu0 0.0
      %2330 = vmatpush2.msra.mxu0 0.0
      %2331 = vmatprep.subr.mxu0 0.0
      %2332 = vmatpush2.msra.mxu0 0.0
      %2333 = vmatprep.subr.mxu0 0.0
      %2334 = vmatpush2.msra.mxu0 0.0
      %2335 = vmatprep.subr.mxu0 0.0
      %2336 = vmatpush2.msra.mxu0 0.0
      %2337 = vmatprep.subr.mxu0 0.0
      %2338 = vmatpush2.msra.mxu0 0.0
      %2339 = vmatprep.subr.mxu0 0.0
      %2340 = vmatpush2.msra.mxu0 0.0
      %2341 = vmatprep.subr.mxu0 0.0
      %2342 = vmatpush2.msra.mxu0 0.0
      %2343 = vmatprep.subr.mxu0 0.0
      %2344 = vmatpush2.msra.mxu0 0.0
      %2345 = vmatprep.subr.mxu0 0.0
      %2346 = vmatpush2.msra.mxu0 0.0
      %2347 = vmatprep.subr.mxu0 0.0
      %2348 = vmatpush2.msra.mxu0 0.0
      %2349 = vmatprep.subr.mxu0 0.0
      %2350 = vmatpush2.msra.mxu0 0.0
      %2351 = vmatprep.subr.mxu0 0.0
      %2352 = vmatpush2.msra.mxu0 0.0
      %2353 = vmatprep.subr.mxu0 0.0
      %2354 = vmatpush2.msra.mxu0 0.0
      %2355 = vmatprep.mubr.f32.mxu0 0.0
      %2356 = vmatmul.mubr.f32.gmra.mxu0 %v2286
      %v2357 = vpop.f32.mrf.mxu0
      %v2358 = vadd.f32 %v2277, %v2357
      %v2359 = vpop.f32.mrf.mxu0
      %2360 = vmatprep.mubr.f32.mxu0 0.0
      %2361 = vmatmul.mubr.f32.gmra.mxu0 %v2289
      %v2362 = vpop.f32.mrf.mxu0
      %v2363 = vadd.f32 %v2282, %v2362
      %v2364 = vpop.f32.mrf.mxu0
      %2365 = vdwg.mxu0
      %s2366 = scalar_lea.vmem %s863, 64
      %v2367 = vld [vmem:[%s2366] sm:$0xff]
      %v2368 = vld [vmem:[%s2366 + $0x8] sm:$0xff]
      %v2369 = vld [vmem:[%s2366 + $0x10] sm:$0xff]
      %v2370 = vld [vmem:[%s2366 + $0x18] sm:$0xff]
      %s2371 = scalar_lea.vmem %s867, 2
      %v2372 = vld [vmem:[%s2371] sm:$0x1]
      %v2374 = vlaneseq
      %v2375 = vshrl.u32 %v2374, 7
      %v2376 = vsub.s32 0, %v2375
      %v2377 = vrot.slane %v2372, %v2376
      %2379 = vmatprep.subr.mxu0 0.0
      %2380 = vmatpush1.msra.mxu0 0.0
      %2381 = vmatprep.subr.mxu0 0.0
      %2382 = vmatpush1.msra.mxu0 0.0
      %2383 = vmatprep.subr.mxu0 0.0
      %2384 = vmatpush1.msra.mxu0 0.0
      %2385 = vmatprep.subr.mxu0 0.0
      %2386 = vmatpush1.msra.mxu0 0.0
      %2387 = vmatprep.subr.mxu0 0.0
      %2388 = vmatpush1.msra.mxu0 0.0
      %2389 = vmatprep.subr.mxu0 0.0
      %2390 = vmatpush1.msra.mxu0 0.0
      %2391 = vmatprep.subr.mxu0 0.0
      %2392 = vmatpush1.msra.mxu0 0.0
      %2393 = vmatprep.subr.mxu0 0.0
      %2394 = vmatpush1.msra.mxu0 0.0
      %2395 = vmatprep.subr.mxu0 0.0
      %2396 = vmatpush1.msra.mxu0 0.0
      %2397 = vmatprep.subr.mxu0 0.0
      %2398 = vmatpush1.msra.mxu0 0.0
      %2399 = vmatprep.subr.mxu0 0.0
      %2400 = vmatpush1.msra.mxu0 0.0
      %2401 = vmatprep.subr.mxu0 0.0
      %2402 = vmatpush1.msra.mxu0 0.0
      %2403 = vmatprep.subr.mxu0 0.0
      %2404 = vmatpush1.msra.mxu0 %v2370
      %2405 = vmatprep.subr.mxu0 0.0
      %2406 = vmatpush1.msra.mxu0 %v2369
      %2407 = vmatprep.subr.mxu0 0.0
      %2408 = vmatpush1.msra.mxu0 %v2368
      %2409 = vmatprep.subr.mxu0 0.0
      %2410 = vmatpush1.msra.mxu0 %v2367
      %2411 = vmatprep.subr.mxu0 0.0
      %2412 = vmatpush2.msra.mxu0 0.0
      %2413 = vmatprep.subr.mxu0 0.0
      %2414 = vmatpush2.msra.mxu0 0.0
      %2415 = vmatprep.subr.mxu0 0.0
      %2416 = vmatpush2.msra.mxu0 0.0
      %2417 = vmatprep.subr.mxu0 0.0
      %2418 = vmatpush2.msra.mxu0 0.0
      %2419 = vmatprep.subr.mxu0 0.0
      %2420 = vmatpush2.msra.mxu0 0.0
      %2421 = vmatprep.subr.mxu0 0.0
      %2422 = vmatpush2.msra.mxu0 0.0
      %2423 = vmatprep.subr.mxu0 0.0
      %2424 = vmatpush2.msra.mxu0 0.0
      %2425 = vmatprep.subr.mxu0 0.0
      %2426 = vmatpush2.msra.mxu0 0.0
      %2427 = vmatprep.subr.mxu0 0.0
      %2428 = vmatpush2.msra.mxu0 0.0
      %2429 = vmatprep.subr.mxu0 0.0
      %2430 = vmatpush2.msra.mxu0 0.0
      %2431 = vmatprep.subr.mxu0 0.0
      %2432 = vmatpush2.msra.mxu0 0.0
      %2433 = vmatprep.subr.mxu0 0.0
      %2434 = vmatpush2.msra.mxu0 0.0
      %2435 = vmatprep.subr.mxu0 0.0
      %2436 = vmatpush2.msra.mxu0 0.0
      %2437 = vmatprep.subr.mxu0 0.0
      %2438 = vmatpush2.msra.mxu0 0.0
      %2439 = vmatprep.subr.mxu0 0.0
      %2440 = vmatpush2.msra.mxu0 0.0
      %2441 = vmatprep.subr.mxu0 0.0
      %2442 = vmatpush2.msra.mxu0 0.0
      %2443 = vmatprep.mubr.f32.mxu0 0.0
      %2444 = vmatmul.mubr.f32.gmra.mxu0 %v1044
      %v2445 = vpop.f32.mrf.mxu0
      %v2446 = vadd.f32 %v2377, %v2445
      %v2447 = vpop.f32.mrf.mxu0
      %2448 = vmatprep.mubr.f32.mxu0 0.0
      %2449 = vmatmul.mubr.f32.gmra.mxu0 %v1047
      %v2450 = vpop.f32.mrf.mxu0
      %v2451 = vadd.f32 %v2377, %v2450
      %v2452 = vpop.f32.mrf.mxu0
      %2453 = vdwg.mxu0
      %s2454 = scalar_lea.vmem %s872, 64
      %v2455 = vld [vmem:[%s2454] sm:$0xff]
      %v2456 = vld [vmem:[%s2454 + $0x8] sm:$0xff]
      %v2457 = vld [vmem:[%s2454 + $0x10] sm:$0xff]
      %v2458 = vld [vmem:[%s2454 + $0x18] sm:$0xff]
      %s2459 = scalar_lea.vmem %s876, 2
      %v2460 = vld [vmem:[%s2459] sm:$0x1]
      %v2462 = vlaneseq
      %v2463 = vshrl.u32 %v2462, 7
      %v2464 = vsub.s32 0, %v2463
      %v2465 = vrot.slane %v2460, %v2464
      %2467 = vmatprep.subr.mxu0 0.0
      %2468 = vmatpush1.msra.mxu0 0.0
      %2469 = vmatprep.subr.mxu0 0.0
      %2470 = vmatpush1.msra.mxu0 0.0
      %2471 = vmatprep.subr.mxu0 0.0
      %2472 = vmatpush1.msra.mxu0 0.0
      %2473 = vmatprep.subr.mxu0 0.0
      %2474 = vmatpush1.msra.mxu0 0.0
      %2475 = vmatprep.subr.mxu0 0.0
      %2476 = vmatpush1.msra.mxu0 0.0
      %2477 = vmatprep.subr.mxu0 0.0
      %2478 = vmatpush1.msra.mxu0 0.0
      %2479 = vmatprep.subr.mxu0 0.0
      %2480 = vmatpush1.msra.mxu0 0.0
      %2481 = vmatprep.subr.mxu0 0.0
      %2482 = vmatpush1.msra.mxu0 0.0
      %2483 = vmatprep.subr.mxu0 0.0
      %2484 = vmatpush1.msra.mxu0 0.0
      %2485 = vmatprep.subr.mxu0 0.0
      %2486 = vmatpush1.msra.mxu0 0.0
      %2487 = vmatprep.subr.mxu0 0.0
      %2488 = vmatpush1.msra.mxu0 0.0
      %2489 = vmatprep.subr.mxu0 0.0
      %2490 = vmatpush1.msra.mxu0 0.0
      %2491 = vmatprep.subr.mxu0 0.0
      %2492 = vmatpush1.msra.mxu0 %v2458
      %2493 = vmatprep.subr.mxu0 0.0
      %2494 = vmatpush1.msra.mxu0 %v2457
      %2495 = vmatprep.subr.mxu0 0.0
      %2496 = vmatpush1.msra.mxu0 %v2456
      %2497 = vmatprep.subr.mxu0 0.0
      %2498 = vmatpush1.msra.mxu0 %v2455
      %2499 = vmatprep.subr.mxu0 0.0
      %2500 = vmatpush2.msra.mxu0 0.0
      %2501 = vmatprep.subr.mxu0 0.0
      %2502 = vmatpush2.msra.mxu0 0.0
      %2503 = vmatprep.subr.mxu0 0.0
      %2504 = vmatpush2.msra.mxu0 0.0
      %2505 = vmatprep.subr.mxu0 0.0
      %2506 = vmatpush2.msra.mxu0 0.0
      %2507 = vmatprep.subr.mxu0 0.0
      %2508 = vmatpush2.msra.mxu0 0.0
      %2509 = vmatprep.subr.mxu0 0.0
      %2510 = vmatpush2.msra.mxu0 0.0
      %2511 = vmatprep.subr.mxu0 0.0
      %2512 = vmatpush2.msra.mxu0 0.0
      %2513 = vmatprep.subr.mxu0 0.0
      %2514 = vmatpush2.msra.mxu0 0.0
      %2515 = vmatprep.subr.mxu0 0.0
      %2516 = vmatpush2.msra.mxu0 0.0
      %2517 = vmatprep.subr.mxu0 0.0
      %2518 = vmatpush2.msra.mxu0 0.0
      %2519 = vmatprep.subr.mxu0 0.0
      %2520 = vmatpush2.msra.mxu0 0.0
      %2521 = vmatprep.subr.mxu0 0.0
      %2522 = vmatpush2.msra.mxu0 0.0
      %2523 = vmatprep.subr.mxu0 0.0
      %2524 = vmatpush2.msra.mxu0 0.0
      %2525 = vmatprep.subr.mxu0 0.0
      %2526 = vmatpush2.msra.mxu0 0.0
      %2527 = vmatprep.subr.mxu0 0.0
      %2528 = vmatpush2.msra.mxu0 0.0
      %2529 = vmatprep.subr.mxu0 0.0
      %2530 = vmatpush2.msra.mxu0 0.0
      %2531 = vmatprep.mubr.f32.mxu0 0.0
      %2532 = vmatmul.mubr.f32.gmra.mxu0 %v1044
      %v2533 = vpop.f32.mrf.mxu0
      %v2534 = vadd.f32 %v2465, %v2533
      %v2535 = vpop.f32.mrf.mxu0
      %2536 = vmatprep.mubr.f32.mxu0 0.0
      %2537 = vmatmul.mubr.f32.gmra.mxu0 %v1047
      %v2538 = vpop.f32.mrf.mxu0
      %v2539 = vadd.f32 %v2465, %v2538
      %v2540 = vpop.f32.mrf.mxu0
      %2541 = vdwg.mxu0
      %s2542 = scalar_lea.vmem %s881, 64
      %v2543 = vld [vmem:[%s2542] sm:$0xff]
      %v2544 = vld [vmem:[%s2542 + $0x8] sm:$0xff]
      %v2545 = vld [vmem:[%s2542 + $0x10] sm:$0xff]
      %v2546 = vld [vmem:[%s2542 + $0x18] sm:$0xff]
      %s2547 = scalar_lea.vmem %s885, 2
      %v2548 = vld [vmem:[%s2547] sm:$0x1]
      %v2550 = vlaneseq
      %v2551 = vshrl.u32 %v2550, 7
      %v2552 = vsub.s32 0, %v2551
      %v2553 = vrot.slane %v2548, %v2552
      %2555 = vmatprep.subr.mxu0 0.0
      %2556 = vmatpush1.msra.mxu0 0.0
      %2557 = vmatprep.subr.mxu0 0.0
      %2558 = vmatpush1.msra.mxu0 0.0
      %2559 = vmatprep.subr.mxu0 0.0
      %2560 = vmatpush1.msra.mxu0 0.0
      %2561 = vmatprep.subr.mxu0 0.0
      %2562 = vmatpush1.msra.mxu0 0.0
      %2563 = vmatprep.subr.mxu0 0.0
      %2564 = vmatpush1.msra.mxu0 0.0
      %2565 = vmatprep.subr.mxu0 0.0
      %2566 = vmatpush1.msra.mxu0 0.0
      %2567 = vmatprep.subr.mxu0 0.0
      %2568 = vmatpush1.msra.mxu0 0.0
      %2569 = vmatprep.subr.mxu0 0.0
      %2570 = vmatpush1.msra.mxu0 0.0
      %2571 = vmatprep.subr.mxu0 0.0
      %2572 = vmatpush1.msra.mxu0 0.0
      %2573 = vmatprep.subr.mxu0 0.0
      %2574 = vmatpush1.msra.mxu0 0.0
      %2575 = vmatprep.subr.mxu0 0.0
      %2576 = vmatpush1.msra.mxu0 0.0
      %2577 = vmatprep.subr.mxu0 0.0
      %2578 = vmatpush1.msra.mxu0 0.0
      %2579 = vmatprep.subr.mxu0 0.0
      %2580 = vmatpush1.msra.mxu0 %v2546
      %2581 = vmatprep.subr.mxu0 0.0
      %2582 = vmatpush1.msra.mxu0 %v2545
      %2583 = vmatprep.subr.mxu0 0.0
      %2584 = vmatpush1.msra.mxu0 %v2544
      %2585 = vmatprep.subr.mxu0 0.0
      %2586 = vmatpush1.msra.mxu0 %v2543
      %2587 = vmatprep.subr.mxu0 0.0
      %2588 = vmatpush2.msra.mxu0 0.0
      %2589 = vmatprep.subr.mxu0 0.0
      %2590 = vmatpush2.msra.mxu0 0.0
      %2591 = vmatprep.subr.mxu0 0.0
      %2592 = vmatpush2.msra.mxu0 0.0
      %2593 = vmatprep.subr.mxu0 0.0
      %2594 = vmatpush2.msra.mxu0 0.0
      %2595 = vmatprep.subr.mxu0 0.0
      %2596 = vmatpush2.msra.mxu0 0.0
      %2597 = vmatprep.subr.mxu0 0.0
      %2598 = vmatpush2.msra.mxu0 0.0
      %2599 = vmatprep.subr.mxu0 0.0
      %2600 = vmatpush2.msra.mxu0 0.0
      %2601 = vmatprep.subr.mxu0 0.0
      %2602 = vmatpush2.msra.mxu0 0.0
      %2603 = vmatprep.subr.mxu0 0.0
      %2604 = vmatpush2.msra.mxu0 0.0
      %2605 = vmatprep.subr.mxu0 0.0
      %2606 = vmatpush2.msra.mxu0 0.0
      %2607 = vmatprep.subr.mxu0 0.0
      %2608 = vmatpush2.msra.mxu0 0.0
      %2609 = vmatprep.subr.mxu0 0.0
      %2610 = vmatpush2.msra.mxu0 0.0
      %2611 = vmatprep.subr.mxu0 0.0
      %2612 = vmatpush2.msra.mxu0 0.0
      %2613 = vmatprep.subr.mxu0 0.0
      %2614 = vmatpush2.msra.mxu0 0.0
      %2615 = vmatprep.subr.mxu0 0.0
      %2616 = vmatpush2.msra.mxu0 0.0
      %2617 = vmatprep.subr.mxu0 0.0
      %2618 = vmatpush2.msra.mxu0 0.0
      %2619 = vmatprep.mubr.f32.mxu0 0.0
      %2620 = vmatmul.mubr.f32.gmra.mxu0 %v1044
      %v2621 = vpop.f32.mrf.mxu0
      %v2622 = vadd.f32 %v2553, %v2621
      %v2623 = vpop.f32.mrf.mxu0
      %2624 = vmatprep.mubr.f32.mxu0 0.0
      %2625 = vmatmul.mubr.f32.gmra.mxu0 %v1047
      %v2626 = vpop.f32.mrf.mxu0
      %v2627 = vadd.f32 %v2553, %v2626
      %v2628 = vpop.f32.mrf.mxu0
      %2629 = vdwg.mxu0
      %v2631 = vsel %vm1296, %v2446, 0
      %v2634 = vsel %vm1296, %v2534, 0
      %2636 = vmatprep.subr.mxu0 0.0
      %2637 = vmatpush1.xpose.msra.mxu0 0.0
      %2638 = vmatprep.subr.mxu0 0.0
      %2639 = vmatpush1.xpose.msra.mxu0 0.0
      %2640 = vmatprep.subr.mxu0 0.0
      %2641 = vmatpush1.xpose.msra.mxu0 0.0
      %2642 = vmatprep.subr.mxu0 0.0
      %2643 = vmatpush1.xpose.msra.mxu0 0.0
      %2644 = vmatprep.subr.mxu0 0.0
      %2645 = vmatpush1.xpose.msra.mxu0 0.0
      %2646 = vmatprep.subr.mxu0 0.0
      %2647 = vmatpush1.xpose.msra.mxu0 0.0
      %2648 = vmatprep.subr.mxu0 0.0
      %2649 = vmatpush1.xpose.msra.mxu0 0.0
      %2650 = vmatprep.subr.mxu0 0.0
      %2651 = vmatpush1.xpose.msra.mxu0 0.0
      %2652 = vmatprep.subr.mxu0 0.0
      %2653 = vmatpush1.xpose.msra.mxu0 0.0
      %2654 = vmatprep.subr.mxu0 0.0
      %2655 = vmatpush1.xpose.msra.mxu0 0.0
      %2656 = vmatprep.subr.mxu0 0.0
      %2657 = vmatpush1.xpose.msra.mxu0 0.0
      %2658 = vmatprep.subr.mxu0 0.0
      %2659 = vmatpush1.xpose.msra.mxu0 0.0
      %2660 = vmatprep.subr.mxu0 0.0
      %2661 = vmatpush1.xpose.msra.mxu0 0.0
      %2662 = vmatprep.subr.mxu0 0.0
      %2663 = vmatpush1.xpose.msra.mxu0 0.0
      %2664 = vmatprep.subr.mxu0 0.0
      %2665 = vmatpush1.xpose.msra.mxu0 0.0
      %2666 = vmatprep.subr.mxu0 0.0
      %2667 = vmatpush1.xpose.msra.mxu0 %v2634
      %2668 = vmatprep.subr.mxu0 0.0
      %2669 = vmatpush2.xpose.msra.mxu0 0.0
      %2670 = vmatprep.subr.mxu0 0.0
      %2671 = vmatpush2.xpose.msra.mxu0 0.0
      %2672 = vmatprep.subr.mxu0 0.0
      %2673 = vmatpush2.xpose.msra.mxu0 0.0
      %2674 = vmatprep.subr.mxu0 0.0
      %2675 = vmatpush2.xpose.msra.mxu0 0.0
      %2676 = vmatprep.subr.mxu0 0.0
      %2677 = vmatpush2.xpose.msra.mxu0 0.0
      %2678 = vmatprep.subr.mxu0 0.0
      %2679 = vmatpush2.xpose.msra.mxu0 0.0
      %2680 = vmatprep.subr.mxu0 0.0
      %2681 = vmatpush2.xpose.msra.mxu0 0.0
      %2682 = vmatprep.subr.mxu0 0.0
      %2683 = vmatpush2.xpose.msra.mxu0 0.0
      %2684 = vmatprep.subr.mxu0 0.0
      %2685 = vmatpush2.xpose.msra.mxu0 0.0
      %2686 = vmatprep.subr.mxu0 0.0
      %2687 = vmatpush2.xpose.msra.mxu0 0.0
      %2688 = vmatprep.subr.mxu0 0.0
      %2689 = vmatpush2.xpose.msra.mxu0 0.0
      %2690 = vmatprep.subr.mxu0 0.0
      %2691 = vmatpush2.xpose.msra.mxu0 0.0
      %2692 = vmatprep.subr.mxu0 0.0
      %2693 = vmatpush2.xpose.msra.mxu0 0.0
      %2694 = vmatprep.subr.mxu0 0.0
      %2695 = vmatpush2.xpose.msra.mxu0 0.0
      %2696 = vmatprep.subr.mxu0 0.0
      %2697 = vmatpush2.xpose.msra.mxu0 0.0
      %2698 = vmatprep.subr.mxu0 0.0
      %2699 = vmatpush2.xpose.msra.mxu0 0.0
      %2700 = vmatprep.mubr.f32.mxu0 0.0
      %2701 = vmatmul.mubr.f32.gmra.mxu0 %v2631
      %v2702 = vpop.f32.mrf.mxu0
      %v2703 = vadd.f32 0.0, %v2702
      %v2704 = vpop.f32.mrf.mxu0
      %2705 = vdwg.mxu0
      %v2707 = vsel %vm1296, %v2451, 0
      %v2710 = vsel %vm1296, %v2539, 0
      %2712 = vmatprep.subr.mxu0 0.0
      %2713 = vmatpush1.xpose.msra.mxu0 0.0
      %2714 = vmatprep.subr.mxu0 0.0
      %2715 = vmatpush1.xpose.msra.mxu0 0.0
      %2716 = vmatprep.subr.mxu0 0.0
      %2717 = vmatpush1.xpose.msra.mxu0 0.0
      %2718 = vmatprep.subr.mxu0 0.0
      %2719 = vmatpush1.xpose.msra.mxu0 0.0
      %2720 = vmatprep.subr.mxu0 0.0
      %2721 = vmatpush1.xpose.msra.mxu0 0.0
      %2722 = vmatprep.subr.mxu0 0.0
      %2723 = vmatpush1.xpose.msra.mxu0 0.0
      %2724 = vmatprep.subr.mxu0 0.0
      %2725 = vmatpush1.xpose.msra.mxu0 0.0
      %2726 = vmatprep.subr.mxu0 0.0
      %2727 = vmatpush1.xpose.msra.mxu0 0.0
      %2728 = vmatprep.subr.mxu0 0.0
      %2729 = vmatpush1.xpose.msra.mxu0 0.0
      %2730 = vmatprep.subr.mxu0 0.0
      %2731 = vmatpush1.xpose.msra.mxu0 0.0
      %2732 = vmatprep.subr.mxu0 0.0
      %2733 = vmatpush1.xpose.msra.mxu0 0.0
      %2734 = vmatprep.subr.mxu0 0.0
      %2735 = vmatpush1.xpose.msra.mxu0 0.0
      %2736 = vmatprep.subr.mxu0 0.0
      %2737 = vmatpush1.xpose.msra.mxu0 0.0
      %2738 = vmatprep.subr.mxu0 0.0
      %2739 = vmatpush1.xpose.msra.mxu0 0.0
      %2740 = vmatprep.subr.mxu0 0.0
      %2741 = vmatpush1.xpose.msra.mxu0 0.0
      %2742 = vmatprep.subr.mxu0 0.0
      %2743 = vmatpush1.xpose.msra.mxu0 %v2710
      %2744 = vmatprep.subr.mxu0 0.0
      %2745 = vmatpush2.xpose.msra.mxu0 0.0
      %2746 = vmatprep.subr.mxu0 0.0
      %2747 = vmatpush2.xpose.msra.mxu0 0.0
      %2748 = vmatprep.subr.mxu0 0.0
      %2749 = vmatpush2.xpose.msra.mxu0 0.0
      %2750 = vmatprep.subr.mxu0 0.0
      %2751 = vmatpush2.xpose.msra.mxu0 0.0
      %2752 = vmatprep.subr.mxu0 0.0
      %2753 = vmatpush2.xpose.msra.mxu0 0.0
      %2754 = vmatprep.subr.mxu0 0.0
      %2755 = vmatpush2.xpose.msra.mxu0 0.0
      %2756 = vmatprep.subr.mxu0 0.0
      %2757 = vmatpush2.xpose.msra.mxu0 0.0
      %2758 = vmatprep.subr.mxu0 0.0
      %2759 = vmatpush2.xpose.msra.mxu0 0.0
      %2760 = vmatprep.subr.mxu0 0.0
      %2761 = vmatpush2.xpose.msra.mxu0 0.0
      %2762 = vmatprep.subr.mxu0 0.0
      %2763 = vmatpush2.xpose.msra.mxu0 0.0
      %2764 = vmatprep.subr.mxu0 0.0
      %2765 = vmatpush2.xpose.msra.mxu0 0.0
      %2766 = vmatprep.subr.mxu0 0.0
      %2767 = vmatpush2.xpose.msra.mxu0 0.0
      %2768 = vmatprep.subr.mxu0 0.0
      %2769 = vmatpush2.xpose.msra.mxu0 0.0
      %2770 = vmatprep.subr.mxu0 0.0
      %2771 = vmatpush2.xpose.msra.mxu0 0.0
      %2772 = vmatprep.subr.mxu0 0.0
      %2773 = vmatpush2.xpose.msra.mxu0 0.0
      %2774 = vmatprep.subr.mxu0 0.0
      %2775 = vmatpush2.xpose.msra.mxu0 0.0
      %2776 = vmatprep.mubr.f32.mxu0 0.0
      %2777 = vmatmul.mubr.f32.gmra.mxu0 %v2707
      %v2778 = vpop.f32.mrf.mxu0
      %v2779 = vadd.f32 0.0, %v2778
      %v2780 = vpop.f32.mrf.mxu0
      %2781 = vdwg.mxu0
      %v2782 = vsel %vm1296, %v2703, -inf
      %2783 = vmax.xlane.f32.xlu0 %v2782
      %v2784 = vpop.xlane.xlu0 %2783
      %v2785 = vsel %vm1296, %v2779, -inf
      %2786 = vmax.xlane.f32.xlu0 %v2785
      %v2787 = vpop.xlane.xlu0 %2786
      %v2788 = vsub.f32 %v2703, %v2784
      %v2789 = vsub.f32 %v2779, %v2787
      %v2790 = vmul.f32 %v2788, 1.442695
      %v2791 = vpow.pop %v2790
      %v2792 = vmul.f32 %v2789, 1.442695
      %v2793 = vpow.pop %v2792
      %v2794 = vsel %vm1296, %v2791, 0.0
      %2795 = vadd.xlane.f32.xlu0 %v2794
      %v2796 = vpop.xlane.xlu0 %2795
      %v2797 = vsel %vm1296, %v2793, 0.0
      %2798 = vadd.xlane.f32.xlu0 %v2797
      %v2799 = vpop.xlane.xlu0 %2798
      %v2800 = vrcp.pop %v2796
      %v2801 = vrcp.pop %v2799
      %v2802 = vmul.f32 %v2791, %v2800
      %v2803 = vmul.f32 %v2793, %v2801
      %v2805 = vsel %vm1296, %v2802, 0
      %2807 = vmatprep.subr.mxu0 0.0
      %2808 = vmatpush1.msra.mxu0 0.0
      %2809 = vmatprep.subr.mxu0 0.0
      %2810 = vmatpush1.msra.mxu0 0.0
      %2811 = vmatprep.subr.mxu0 0.0
      %2812 = vmatpush1.msra.mxu0 0.0
      %2813 = vmatprep.subr.mxu0 0.0
      %2814 = vmatpush1.msra.mxu0 0.0
      %2815 = vmatprep.subr.mxu0 0.0
      %2816 = vmatpush1.msra.mxu0 0.0
      %2817 = vmatprep.subr.mxu0 0.0
      %2818 = vmatpush1.msra.mxu0 0.0
      %2819 = vmatprep.subr.mxu0 0.0
      %2820 = vmatpush1.msra.mxu0 0.0
      %2821 = vmatprep.subr.mxu0 0.0
      %2822 = vmatpush1.msra.mxu0 0.0
      %2823 = vmatprep.subr.mxu0 0.0
      %2824 = vmatpush1.msra.mxu0 0.0
      %2825 = vmatprep.subr.mxu0 0.0
      %2826 = vmatpush1.msra.mxu0 0.0
      %2827 = vmatprep.subr.mxu0 0.0
      %2828 = vmatpush1.msra.mxu0 0.0
      %2829 = vmatprep.subr.mxu0 0.0
      %2830 = vmatpush1.msra.mxu0 0.0
      %2831 = vmatprep.subr.mxu0 0.0
      %2832 = vmatpush1.msra.mxu0 0.0
      %2833 = vmatprep.subr.mxu0 0.0
      %2834 = vmatpush1.msra.mxu0 0.0
      %2835 = vmatprep.subr.mxu0 0.0
      %2836 = vmatpush1.msra.mxu0 0.0
      %2837 = vmatprep.subr.mxu0 0.0
      %2838 = vmatpush1.msra.mxu0 %v2622
      %2839 = vmatprep.subr.mxu0 0.0
      %2840 = vmatpush2.msra.mxu0 0.0
      %2841 = vmatprep.subr.mxu0 0.0
      %2842 = vmatpush2.msra.mxu0 0.0
      %2843 = vmatprep.subr.mxu0 0.0
      %2844 = vmatpush2.msra.mxu0 0.0
      %2845 = vmatprep.subr.mxu0 0.0
      %2846 = vmatpush2.msra.mxu0 0.0
      %2847 = vmatprep.subr.mxu0 0.0
      %2848 = vmatpush2.msra.mxu0 0.0
      %2849 = vmatprep.subr.mxu0 0.0
      %2850 = vmatpush2.msra.mxu0 0.0
      %2851 = vmatprep.subr.mxu0 0.0
      %2852 = vmatpush2.msra.mxu0 0.0
      %2853 = vmatprep.subr.mxu0 0.0
      %2854 = vmatpush2.msra.mxu0 0.0
      %2855 = vmatprep.subr.mxu0 0.0
      %2856 = vmatpush2.msra.mxu0 0.0
      %2857 = vmatprep.subr.mxu0 0.0
      %2858 = vmatpush2.msra.mxu0 0.0
      %2859 = vmatprep.subr.mxu0 0.0
      %2860 = vmatpush2.msra.mxu0 0.0
      %2861 = vmatprep.subr.mxu0 0.0
      %2862 = vmatpush2.msra.mxu0 0.0
      %2863 = vmatprep.subr.mxu0 0.0
      %2864 = vmatpush2.msra.mxu0 0.0
      %2865 = vmatprep.subr.mxu0 0.0
      %2866 = vmatpush2.msra.mxu0 0.0
      %2867 = vmatprep.subr.mxu0 0.0
      %2868 = vmatpush2.msra.mxu0 0.0
      %2869 = vmatprep.subr.mxu0 0.0
      %2870 = vmatpush2.msra.mxu0 0.0
      %2871 = vmatprep.mubr.f32.mxu0 0.0
      %2872 = vmatmul.mubr.f32.gmra.mxu0 %v2805
      %v2873 = vpop.f32.mrf.mxu0
      %v2874 = vadd.f32 0.0, %v2873
      %v2875 = vpop.f32.mrf.mxu0
      %2876 = vdwg.mxu0
      %v2878 = vsel %vm1296, %v2803, 0
      %2880 = vmatprep.subr.mxu0 0.0
      %2881 = vmatpush1.msra.mxu0 0.0
      %2882 = vmatprep.subr.mxu0 0.0
      %2883 = vmatpush1.msra.mxu0 0.0
      %2884 = vmatprep.subr.mxu0 0.0
      %2885 = vmatpush1.msra.mxu0 0.0
      %2886 = vmatprep.subr.mxu0 0.0
      %2887 = vmatpush1.msra.mxu0 0.0
      %2888 = vmatprep.subr.mxu0 0.0
      %2889 = vmatpush1.msra.mxu0 0.0
      %2890 = vmatprep.subr.mxu0 0.0
      %2891 = vmatpush1.msra.mxu0 0.0
      %2892 = vmatprep.subr.mxu0 0.0
      %2893 = vmatpush1.msra.mxu0 0.0
      %2894 = vmatprep.subr.mxu0 0.0
      %2895 = vmatpush1.msra.mxu0 0.0
      %2896 = vmatprep.subr.mxu0 0.0
      %2897 = vmatpush1.msra.mxu0 0.0
      %2898 = vmatprep.subr.mxu0 0.0
      %2899 = vmatpush1.msra.mxu0 0.0
      %2900 = vmatprep.subr.mxu0 0.0
      %2901 = vmatpush1.msra.mxu0 0.0
      %2902 = vmatprep.subr.mxu0 0.0
      %2903 = vmatpush1.msra.mxu0 0.0
      %2904 = vmatprep.subr.mxu0 0.0
      %2905 = vmatpush1.msra.mxu0 0.0
      %2906 = vmatprep.subr.mxu0 0.0
      %2907 = vmatpush1.msra.mxu0 0.0
      %2908 = vmatprep.subr.mxu0 0.0
      %2909 = vmatpush1.msra.mxu0 0.0
      %2910 = vmatprep.subr.mxu0 0.0
      %2911 = vmatpush1.msra.mxu0 %v2627
      %2912 = vmatprep.subr.mxu0 0.0
      %2913 = vmatpush2.msra.mxu0 0.0
      %2914 = vmatprep.subr.mxu0 0.0
      %2915 = vmatpush2.msra.mxu0 0.0
      %2916 = vmatprep.subr.mxu0 0.0
      %2917 = vmatpush2.msra.mxu0 0.0
      %2918 = vmatprep.subr.mxu0 0.0
      %2919 = vmatpush2.msra.mxu0 0.0
      %2920 = vmatprep.subr.mxu0 0.0
      %2921 = vmatpush2.msra.mxu0 0.0
      %2922 = vmatprep.subr.mxu0 0.0
      %2923 = vmatpush2.msra.mxu0 0.0
      %2924 = vmatprep.subr.mxu0 0.0
      %2925 = vmatpush2.msra.mxu0 0.0
      %2926 = vmatprep.subr.mxu0 0.0
      %2927 = vmatpush2.msra.mxu0 0.0
      %2928 = vmatprep.subr.mxu0 0.0
      %2929 = vmatpush2.msra.mxu0 0.0
      %2930 = vmatprep.subr.mxu0 0.0
      %2931 = vmatpush2.msra.mxu0 0.0
      %2932 = vmatprep.subr.mxu0 0.0
      %2933 = vmatpush2.msra.mxu0 0.0
      %2934 = vmatprep.subr.mxu0 0.0
      %2935 = vmatpush2.msra.mxu0 0.0
      %2936 = vmatprep.subr.mxu0 0.0
      %2937 = vmatpush2.msra.mxu0 0.0
      %2938 = vmatprep.subr.mxu0 0.0
      %2939 = vmatpush2.msra.mxu0 0.0
      %2940 = vmatprep.subr.mxu0 0.0
      %2941 = vmatpush2.msra.mxu0 0.0
      %2942 = vmatprep.subr.mxu0 0.0
      %2943 = vmatpush2.msra.mxu0 0.0
      %2944 = vmatprep.mubr.f32.mxu0 0.0
      %2945 = vmatmul.mubr.f32.gmra.mxu0 %v2878
      %v2946 = vpop.f32.mrf.mxu0
      %v2947 = vadd.f32 0.0, %v2946
      %v2948 = vpop.f32.mrf.mxu0
      %2949 = vdwg.mxu0
      %s2950 = scalar_lea.vmem %s890, 16
      %v2951 = vld [vmem:[%s2950] sm:$0xff]
      %v2953 = vsel %vm1296, %v2874, 0
      %v2956 = vsel %vm1296, %v2947, 0
      %2958 = vmatprep.subr.mxu0 0.0
      %2959 = vmatpush1.msra.mxu0 0.0
      %2960 = vmatprep.subr.mxu0 0.0
      %2961 = vmatpush1.msra.mxu0 0.0
      %2962 = vmatprep.subr.mxu0 0.0
      %2963 = vmatpush1.msra.mxu0 0.0
      %2964 = vmatprep.subr.mxu0 0.0
      %2965 = vmatpush1.msra.mxu0 0.0
      %2966 = vmatprep.subr.mxu0 0.0
      %2967 = vmatpush1.msra.mxu0 0.0
      %2968 = vmatprep.subr.mxu0 0.0
      %2969 = vmatpush1.msra.mxu0 0.0
      %2970 = vmatprep.subr.mxu0 0.0
      %2971 = vmatpush1.msra.mxu0 0.0
      %2972 = vmatprep.subr.mxu0 0.0
      %2973 = vmatpush1.msra.mxu0 0.0
      %2974 = vmatprep.subr.mxu0 0.0
      %2975 = vmatpush1.msra.mxu0 0.0
      %2976 = vmatprep.subr.mxu0 0.0
      %2977 = vmatpush1.msra.mxu0 0.0
      %2978 = vmatprep.subr.mxu0 0.0
      %2979 = vmatpush1.msra.mxu0 0.0
      %2980 = vmatprep.subr.mxu0 0.0
      %2981 = vmatpush1.msra.mxu0 0.0
      %2982 = vmatprep.subr.mxu0 0.0
      %2983 = vmatpush1.msra.mxu0 0.0
      %2984 = vmatprep.subr.mxu0 0.0
      %2985 = vmatpush1.msra.mxu0 0.0
      %2986 = vmatprep.subr.mxu0 0.0
      %2987 = vmatpush1.msra.mxu0 0.0
      %2988 = vmatprep.subr.mxu0 0.0
      %2989 = vmatpush1.msra.mxu0 %v2951
      %2990 = vmatprep.subr.mxu0 0.0
      %2991 = vmatpush2.msra.mxu0 0.0
      %2992 = vmatprep.subr.mxu0 0.0
      %2993 = vmatpush2.msra.mxu0 0.0
      %2994 = vmatprep.subr.mxu0 0.0
      %2995 = vmatpush2.msra.mxu0 0.0
      %2996 = vmatprep.subr.mxu0 0.0
      %2997 = vmatpush2.msra.mxu0 0.0
      %2998 = vmatprep.subr.mxu0 0.0
      %2999 = vmatpush2.msra.mxu0 0.0
      %3000 = vmatprep.subr.mxu0 0.0
      %3001 = vmatpush2.msra.mxu0 0.0
      %3002 = vmatprep.subr.mxu0 0.0
      %3003 = vmatpush2.msra.mxu0 0.0
      %3004 = vmatprep.subr.mxu0 0.0
      %3005 = vmatpush2.msra.mxu0 0.0
      %3006 = vmatprep.subr.mxu0 0.0
      %3007 = vmatpush2.msra.mxu0 0.0
      %3008 = vmatprep.subr.mxu0 0.0
      %3009 = vmatpush2.msra.mxu0 0.0
      %3010 = vmatprep.subr.mxu0 0.0
      %3011 = vmatpush2.msra.mxu0 0.0
      %3012 = vmatprep.subr.mxu0 0.0
      %3013 = vmatpush2.msra.mxu0 0.0
      %3014 = vmatprep.subr.mxu0 0.0
      %3015 = vmatpush2.msra.mxu0 0.0
      %3016 = vmatprep.subr.mxu0 0.0
      %3017 = vmatpush2.msra.mxu0 0.0
      %3018 = vmatprep.subr.mxu0 0.0
      %3019 = vmatpush2.msra.mxu0 0.0
      %3020 = vmatprep.subr.mxu0 0.0
      %3021 = vmatpush2.msra.mxu0 0.0
      %3022 = vmatprep.mubr.f32.mxu0 0.0
      %3023 = vmatmul.mubr.f32.gmra.mxu0 %v2953
      %v3024 = vpop.f32.mrf.mxu0
      %v3025 = vadd.f32 0.0, %v3024
      %v3026 = vpop.f32.mrf.mxu0
      %3027 = vmatprep.mubr.f32.mxu0 0.0
      %3028 = vmatmul.mubr.f32.gmra.mxu0 %v2956
      %v3029 = vpop.f32.mrf.mxu0
      %v3030 = vadd.f32 0.0, %v3029
      %v3031 = vpop.f32.mrf.mxu0
      %3032 = vdwg.mxu0
      %v3033 = vadd.f32 %v2358, %v3025
      %v3034 = vadd.f32 %v2363, %v3030
      %s3035 = scalar_lea.vmem %s863, 96
      %v3036 = vld [vmem:[%s3035] sm:$0xff]
      %v3037 = vld [vmem:[%s3035 + $0x8] sm:$0xff]
      %v3038 = vld [vmem:[%s3035 + $0x10] sm:$0xff]
      %v3039 = vld [vmem:[%s3035 + $0x18] sm:$0xff]
      %s3040 = scalar_lea.vmem %s867, 3
      %v3041 = vld [vmem:[%s3040] sm:$0x1]
      %v3043 = vlaneseq
      %v3044 = vshrl.u32 %v3043, 7
      %v3045 = vsub.s32 0, %v3044
      %v3046 = vrot.slane %v3041, %v3045
      %3048 = vmatprep.subr.mxu0 0.0
      %3049 = vmatpush1.msra.mxu0 0.0
      %3050 = vmatprep.subr.mxu0 0.0
      %3051 = vmatpush1.msra.mxu0 0.0
      %3052 = vmatprep.subr.mxu0 0.0
      %3053 = vmatpush1.msra.mxu0 0.0
      %3054 = vmatprep.subr.mxu0 0.0
      %3055 = vmatpush1.msra.mxu0 0.0
      %3056 = vmatprep.subr.mxu0 0.0
      %3057 = vmatpush1.msra.mxu0 0.0
      %3058 = vmatprep.subr.mxu0 0.0
      %3059 = vmatpush1.msra.mxu0 0.0
      %3060 = vmatprep.subr.mxu0 0.0
      %3061 = vmatpush1.msra.mxu0 0.0
      %3062 = vmatprep.subr.mxu0 0.0
      %3063 = vmatpush1.msra.mxu0 0.0
      %3064 = vmatprep.subr.mxu0 0.0
      %3065 = vmatpush1.msra.mxu0 0.0
      %3066 = vmatprep.subr.mxu0 0.0
      %3067 = vmatpush1.msra.mxu0 0.0
      %3068 = vmatprep.subr.mxu0 0.0
      %3069 = vmatpush1.msra.mxu0 0.0
      %3070 = vmatprep.subr.mxu0 0.0
      %3071 = vmatpush1.msra.mxu0 0.0
      %3072 = vmatprep.subr.mxu0 0.0
      %3073 = vmatpush1.msra.mxu0 %v3039
      %3074 = vmatprep.subr.mxu0 0.0
      %3075 = vmatpush1.msra.mxu0 %v3038
      %3076 = vmatprep.subr.mxu0 0.0
      %3077 = vmatpush1.msra.mxu0 %v3037
      %3078 = vmatprep.subr.mxu0 0.0
      %3079 = vmatpush1.msra.mxu0 %v3036
      %3080 = vmatprep.subr.mxu0 0.0
      %3081 = vmatpush2.msra.mxu0 0.0
      %3082 = vmatprep.subr.mxu0 0.0
      %3083 = vmatpush2.msra.mxu0 0.0
      %3084 = vmatprep.subr.mxu0 0.0
      %3085 = vmatpush2.msra.mxu0 0.0
      %3086 = vmatprep.subr.mxu0 0.0
      %3087 = vmatpush2.msra.mxu0 0.0
      %3088 = vmatprep.subr.mxu0 0.0
      %3089 = vmatpush2.msra.mxu0 0.0
      %3090 = vmatprep.subr.mxu0 0.0
      %3091 = vmatpush2.msra.mxu0 0.0
      %3092 = vmatprep.subr.mxu0 0.0
      %3093 = vmatpush2.msra.mxu0 0.0
      %3094 = vmatprep.subr.mxu0 0.0
      %3095 = vmatpush2.msra.mxu0 0.0
      %3096 = vmatprep.subr.mxu0 0.0
      %3097 = vmatpush2.msra.mxu0 0.0
      %3098 = vmatprep.subr.mxu0 0.0
      %3099 = vmatpush2.msra.mxu0 0.0
      %3100 = vmatprep.subr.mxu0 0.0
      %3101 = vmatpush2.msra.mxu0 0.0
      %3102 = vmatprep.subr.mxu0 0.0
      %3103 = vmatpush2.msra.mxu0 0.0
      %3104 = vmatprep.subr.mxu0 0.0
      %3105 = vmatpush2.msra.mxu0 0.0
      %3106 = vmatprep.subr.mxu0 0.0
      %3107 = vmatpush2.msra.mxu0 0.0
      %3108 = vmatprep.subr.mxu0 0.0
      %3109 = vmatpush2.msra.mxu0 0.0
      %3110 = vmatprep.subr.mxu0 0.0
      %3111 = vmatpush2.msra.mxu0 0.0
      %3112 = vmatprep.mubr.f32.mxu0 0.0
      %3113 = vmatmul.mubr.f32.gmra.mxu0 %v1044
      %v3114 = vpop.f32.mrf.mxu0
      %v3115 = vadd.f32 %v3046, %v3114
      %v3116 = vpop.f32.mrf.mxu0
      %3117 = vmatprep.mubr.f32.mxu0 0.0
      %3118 = vmatmul.mubr.f32.gmra.mxu0 %v1047
      %v3119 = vpop.f32.mrf.mxu0
      %v3120 = vadd.f32 %v3046, %v3119
      %v3121 = vpop.f32.mrf.mxu0
      %3122 = vdwg.mxu0
      %s3123 = scalar_lea.vmem %s872, 96
      %v3124 = vld [vmem:[%s3123] sm:$0xff]
      %v3125 = vld [vmem:[%s3123 + $0x8] sm:$0xff]
      %v3126 = vld [vmem:[%s3123 + $0x10] sm:$0xff]
      %v3127 = vld [vmem:[%s3123 + $0x18] sm:$0xff]
      %s3128 = scalar_lea.vmem %s876, 3
      %v3129 = vld [vmem:[%s3128] sm:$0x1]
      %v3131 = vlaneseq
      %v3132 = vshrl.u32 %v3131, 7
      %v3133 = vsub.s32 0, %v3132
      %v3134 = vrot.slane %v3129, %v3133
      %3136 = vmatprep.subr.mxu0 0.0
      %3137 = vmatpush1.msra.mxu0 0.0
      %3138 = vmatprep.subr.mxu0 0.0
      %3139 = vmatpush1.msra.mxu0 0.0
      %3140 = vmatprep.subr.mxu0 0.0
      %3141 = vmatpush1.msra.mxu0 0.0
      %3142 = vmatprep.subr.mxu0 0.0
      %3143 = vmatpush1.msra.mxu0 0.0
      %3144 = vmatprep.subr.mxu0 0.0
      %3145 = vmatpush1.msra.mxu0 0.0
      %3146 = vmatprep.subr.mxu0 0.0
      %3147 = vmatpush1.msra.mxu0 0.0
      %3148 = vmatprep.subr.mxu0 0.0
      %3149 = vmatpush1.msra.mxu0 0.0
      %3150 = vmatprep.subr.mxu0 0.0
      %3151 = vmatpush1.msra.mxu0 0.0
      %3152 = vmatprep.subr.mxu0 0.0
      %3153 = vmatpush1.msra.mxu0 0.0
      %3154 = vmatprep.subr.mxu0 0.0
      %3155 = vmatpush1.msra.mxu0 0.0
      %3156 = vmatprep.subr.mxu0 0.0
      %3157 = vmatpush1.msra.mxu0 0.0
      %3158 = vmatprep.subr.mxu0 0.0
      %3159 = vmatpush1.msra.mxu0 0.0
      %3160 = vmatprep.subr.mxu0 0.0
      %3161 = vmatpush1.msra.mxu0 %v3127
      %3162 = vmatprep.subr.mxu0 0.0
      %3163 = vmatpush1.msra.mxu0 %v3126
      %3164 = vmatprep.subr.mxu0 0.0
      %3165 = vmatpush1.msra.mxu0 %v3125
      %3166 = vmatprep.subr.mxu0 0.0
      %3167 = vmatpush1.msra.mxu0 %v3124
      %3168 = vmatprep.subr.mxu0 0.0
      %3169 = vmatpush2.msra.mxu0 0.0
      %3170 = vmatprep.subr.mxu0 0.0
      %3171 = vmatpush2.msra.mxu0 0.0
      %3172 = vmatprep.subr.mxu0 0.0
      %3173 = vmatpush2.msra.mxu0 0.0
      %3174 = vmatprep.subr.mxu0 0.0
      %3175 = vmatpush2.msra.mxu0 0.0
      %3176 = vmatprep.subr.mxu0 0.0
      %3177 = vmatpush2.msra.mxu0 0.0
      %3178 = vmatprep.subr.mxu0 0.0
      %3179 = vmatpush2.msra.mxu0 0.0
      %3180 = vmatprep.subr.mxu0 0.0
      %3181 = vmatpush2.msra.mxu0 0.0
      %3182 = vmatprep.subr.mxu0 0.0
      %3183 = vmatpush2.msra.mxu0 0.0
      %3184 = vmatprep.subr.mxu0 0.0
      %3185 = vmatpush2.msra.mxu0 0.0
      %3186 = vmatprep.subr.mxu0 0.0
      %3187 = vmatpush2.msra.mxu0 0.0
      %3188 = vmatprep.subr.mxu0 0.0
      %3189 = vmatpush2.msra.mxu0 0.0
      %3190 = vmatprep.subr.mxu0 0.0
      %3191 = vmatpush2.msra.mxu0 0.0
      %3192 = vmatprep.subr.mxu0 0.0
      %3193 = vmatpush2.msra.mxu0 0.0
      %3194 = vmatprep.subr.mxu0 0.0
      %3195 = vmatpush2.msra.mxu0 0.0
      %3196 = vmatprep.subr.mxu0 0.0
      %3197 = vmatpush2.msra.mxu0 0.0
      %3198 = vmatprep.subr.mxu0 0.0
      %3199 = vmatpush2.msra.mxu0 0.0
      %3200 = vmatprep.mubr.f32.mxu0 0.0
      %3201 = vmatmul.mubr.f32.gmra.mxu0 %v1044
      %v3202 = vpop.f32.mrf.mxu0
      %v3203 = vadd.f32 %v3134, %v3202
      %v3204 = vpop.f32.mrf.mxu0
      %3205 = vmatprep.mubr.f32.mxu0 0.0
      %3206 = vmatmul.mubr.f32.gmra.mxu0 %v1047
      %v3207 = vpop.f32.mrf.mxu0
      %v3208 = vadd.f32 %v3134, %v3207
      %v3209 = vpop.f32.mrf.mxu0
      %3210 = vdwg.mxu0
      %s3211 = scalar_lea.vmem %s881, 96
      %v3212 = vld [vmem:[%s3211] sm:$0xff]
      %v3213 = vld [vmem:[%s3211 + $0x8] sm:$0xff]
      %v3214 = vld [vmem:[%s3211 + $0x10] sm:$0xff]
      %v3215 = vld [vmem:[%s3211 + $0x18] sm:$0xff]
      %s3216 = scalar_lea.vmem %s885, 3
      %v3217 = vld [vmem:[%s3216] sm:$0x1]
      %v3219 = vlaneseq
      %v3220 = vshrl.u32 %v3219, 7
      %v3221 = vsub.s32 0, %v3220
      %v3222 = vrot.slane %v3217, %v3221
      %3224 = vmatprep.subr.mxu0 0.0
      %3225 = vmatpush1.msra.mxu0 0.0
      %3226 = vmatprep.subr.mxu0 0.0
      %3227 = vmatpush1.msra.mxu0 0.0
      %3228 = vmatprep.subr.mxu0 0.0
      %3229 = vmatpush1.msra.mxu0 0.0
      %3230 = vmatprep.subr.mxu0 0.0
      %3231 = vmatpush1.msra.mxu0 0.0
      %3232 = vmatprep.subr.mxu0 0.0
      %3233 = vmatpush1.msra.mxu0 0.0
      %3234 = vmatprep.subr.mxu0 0.0
      %3235 = vmatpush1.msra.mxu0 0.0
      %3236 = vmatprep.subr.mxu0 0.0
      %3237 = vmatpush1.msra.mxu0 0.0
      %3238 = vmatprep.subr.mxu0 0.0
      %3239 = vmatpush1.msra.mxu0 0.0
      %3240 = vmatprep.subr.mxu0 0.0
      %3241 = vmatpush1.msra.mxu0 0.0
      %3242 = vmatprep.subr.mxu0 0.0
      %3243 = vmatpush1.msra.mxu0 0.0
      %3244 = vmatprep.subr.mxu0 0.0
      %3245 = vmatpush1.msra.mxu0 0.0
      %3246 = vmatprep.subr.mxu0 0.0
      %3247 = vmatpush1.msra.mxu0 0.0
      %3248 = vmatprep.subr.mxu0 0.0
      %3249 = vmatpush1.msra.mxu0 %v3215
      %3250 = vmatprep.subr.mxu0 0.0
      %3251 = vmatpush1.msra.mxu0 %v3214
      %3252 = vmatprep.subr.mxu0 0.0
      %3253 = vmatpush1.msra.mxu0 %v3213
      %3254 = vmatprep.subr.mxu0 0.0
      %3255 = vmatpush1.msra.mxu0 %v3212
      %3256 = vmatprep.subr.mxu0 0.0
      %3257 = vmatpush2.msra.mxu0 0.0
      %3258 = vmatprep.subr.mxu0 0.0
      %3259 = vmatpush2.msra.mxu0 0.0
      %3260 = vmatprep.subr.mxu0 0.0
      %3261 = vmatpush2.msra.mxu0 0.0
      %3262 = vmatprep.subr.mxu0 0.0
      %3263 = vmatpush2.msra.mxu0 0.0
      %3264 = vmatprep.subr.mxu0 0.0
      %3265 = vmatpush2.msra.mxu0 0.0
      %3266 = vmatprep.subr.mxu0 0.0
      %3267 = vmatpush2.msra.mxu0 0.0
      %3268 = vmatprep.subr.mxu0 0.0
      %3269 = vmatpush2.msra.mxu0 0.0
      %3270 = vmatprep.subr.mxu0 0.0
      %3271 = vmatpush2.msra.mxu0 0.0
      %3272 = vmatprep.subr.mxu0 0.0
      %3273 = vmatpush2.msra.mxu0 0.0
      %3274 = vmatprep.subr.mxu0 0.0
      %3275 = vmatpush2.msra.mxu0 0.0
      %3276 = vmatprep.subr.mxu0 0.0
      %3277 = vmatpush2.msra.mxu0 0.0
      %3278 = vmatprep.subr.mxu0 0.0
      %3279 = vmatpush2.msra.mxu0 0.0
      %3280 = vmatprep.subr.mxu0 0.0
      %3281 = vmatpush2.msra.mxu0 0.0
      %3282 = vmatprep.subr.mxu0 0.0
      %3283 = vmatpush2.msra.mxu0 0.0
      %3284 = vmatprep.subr.mxu0 0.0
      %3285 = vmatpush2.msra.mxu0 0.0
      %3286 = vmatprep.subr.mxu0 0.0
      %3287 = vmatpush2.msra.mxu0 0.0
      %3288 = vmatprep.mubr.f32.mxu0 0.0
      %3289 = vmatmul.mubr.f32.gmra.mxu0 %v1044
      %v3290 = vpop.f32.mrf.mxu0
      %v3291 = vadd.f32 %v3222, %v3290
      %v3292 = vpop.f32.mrf.mxu0
      %3293 = vmatprep.mubr.f32.mxu0 0.0
      %3294 = vmatmul.mubr.f32.gmra.mxu0 %v1047
      %v3295 = vpop.f32.mrf.mxu0
      %v3296 = vadd.f32 %v3222, %v3295
      %v3297 = vpop.f32.mrf.mxu0
      %3298 = vdwg.mxu0
      %v3300 = vsel %vm1296, %v3115, 0
      %v3303 = vsel %vm1296, %v3203, 0
      %3305 = vmatprep.subr.mxu0 0.0
      %3306 = vmatpush1.xpose.msra.mxu0 0.0
      %3307 = vmatprep.subr.mxu0 0.0
      %3308 = vmatpush1.xpose.msra.mxu0 0.0
      %3309 = vmatprep.subr.mxu0 0.0
      %3310 = vmatpush1.xpose.msra.mxu0 0.0
      %3311 = vmatprep.subr.mxu0 0.0
      %3312 = vmatpush1.xpose.msra.mxu0 0.0
      %3313 = vmatprep.subr.mxu0 0.0
      %3314 = vmatpush1.xpose.msra.mxu0 0.0
      %3315 = vmatprep.subr.mxu0 0.0
      %3316 = vmatpush1.xpose.msra.mxu0 0.0
      %3317 = vmatprep.subr.mxu0 0.0
      %3318 = vmatpush1.xpose.msra.mxu0 0.0
      %3319 = vmatprep.subr.mxu0 0.0
      %3320 = vmatpush1.xpose.msra.mxu0 0.0
      %3321 = vmatprep.subr.mxu0 0.0
      %3322 = vmatpush1.xpose.msra.mxu0 0.0
      %3323 = vmatprep.subr.mxu0 0.0
      %3324 = vmatpush1.xpose.msra.mxu0 0.0
      %3325 = vmatprep.subr.mxu0 0.0
      %3326 = vmatpush1.xpose.msra.mxu0 0.0
      %3327 = vmatprep.subr.mxu0 0.0
      %3328 = vmatpush1.xpose.msra.mxu0 0.0
      %3329 = vmatprep.subr.mxu0 0.0
      %3330 = vmatpush1.xpose.msra.mxu0 0.0
      %3331 = vmatprep.subr.mxu0 0.0
      %3332 = vmatpush1.xpose.msra.mxu0 0.0
      %3333 = vmatprep.subr.mxu0 0.0
      %3334 = vmatpush1.xpose.msra.mxu0 0.0
      %3335 = vmatprep.subr.mxu0 0.0
      %3336 = vmatpush1.xpose.msra.mxu0 %v3303
      %3337 = vmatprep.subr.mxu0 0.0
      %3338 = vmatpush2.xpose.msra.mxu0 0.0
      %3339 = vmatprep.subr.mxu0 0.0
      %3340 = vmatpush2.xpose.msra.mxu0 0.0
      %3341 = vmatprep.subr.mxu0 0.0
      %3342 = vmatpush2.xpose.msra.mxu0 0.0
      %3343 = vmatprep.subr.mxu0 0.0
      %3344 = vmatpush2.xpose.msra.mxu0 0.0
      %3345 = vmatprep.subr.mxu0 0.0
      %3346 = vmatpush2.xpose.msra.mxu0 0.0
      %3347 = vmatprep.subr.mxu0 0.0
      %3348 = vmatpush2.xpose.msra.mxu0 0.0
      %3349 = vmatprep.subr.mxu0 0.0
      %3350 = vmatpush2.xpose.msra.mxu0 0.0
      %3351 = vmatprep.subr.mxu0 0.0
      %3352 = vmatpush2.xpose.msra.mxu0 0.0
      %3353 = vmatprep.subr.mxu0 0.0
      %3354 = vmatpush2.xpose.msra.mxu0 0.0
      %3355 = vmatprep.subr.mxu0 0.0
      %3356 = vmatpush2.xpose.msra.mxu0 0.0
      %3357 = vmatprep.subr.mxu0 0.0
      %3358 = vmatpush2.xpose.msra.mxu0 0.0
      %3359 = vmatprep.subr.mxu0 0.0
      %3360 = vmatpush2.xpose.msra.mxu0 0.0
      %3361 = vmatprep.subr.mxu0 0.0
      %3362 = vmatpush2.xpose.msra.mxu0 0.0
      %3363 = vmatprep.subr.mxu0 0.0
      %3364 = vmatpush2.xpose.msra.mxu0 0.0
      %3365 = vmatprep.subr.mxu0 0.0
      %3366 = vmatpush2.xpose.msra.mxu0 0.0
      %3367 = vmatprep.subr.mxu0 0.0
      %3368 = vmatpush2.xpose.msra.mxu0 0.0
      %3369 = vmatprep.mubr.f32.mxu0 0.0
      %3370 = vmatmul.mubr.f32.gmra.mxu0 %v3300
      %v3371 = vpop.f32.mrf.mxu0
      %v3372 = vadd.f32 0.0, %v3371
      %v3373 = vpop.f32.mrf.mxu0
      %3374 = vdwg.mxu0
      %v3376 = vsel %vm1296, %v3120, 0
      %v3379 = vsel %vm1296, %v3208, 0
      %3381 = vmatprep.subr.mxu0 0.0
      %3382 = vmatpush1.xpose.msra.mxu0 0.0
      %3383 = vmatprep.subr.mxu0 0.0
      %3384 = vmatpush1.xpose.msra.mxu0 0.0
      %3385 = vmatprep.subr.mxu0 0.0
      %3386 = vmatpush1.xpose.msra.mxu0 0.0
      %3387 = vmatprep.subr.mxu0 0.0
      %3388 = vmatpush1.xpose.msra.mxu0 0.0
      %3389 = vmatprep.subr.mxu0 0.0
      %3390 = vmatpush1.xpose.msra.mxu0 0.0
      %3391 = vmatprep.subr.mxu0 0.0
      %3392 = vmatpush1.xpose.msra.mxu0 0.0
      %3393 = vmatprep.subr.mxu0 0.0
      %3394 = vmatpush1.xpose.msra.mxu0 0.0
      %3395 = vmatprep.subr.mxu0 0.0
      %3396 = vmatpush1.xpose.msra.mxu0 0.0
      %3397 = vmatprep.subr.mxu0 0.0
      %3398 = vmatpush1.xpose.msra.mxu0 0.0
      %3399 = vmatprep.subr.mxu0 0.0
      %3400 = vmatpush1.xpose.msra.mxu0 0.0
      %3401 = vmatprep.subr.mxu0 0.0
      %3402 = vmatpush1.xpose.msra.mxu0 0.0
      %3403 = vmatprep.subr.mxu0 0.0
      %3404 = vmatpush1.xpose.msra.mxu0 0.0
      %3405 = vmatprep.subr.mxu0 0.0
      %3406 = vmatpush1.xpose.msra.mxu0 0.0
      %3407 = vmatprep.subr.mxu0 0.0
      %3408 = vmatpush1.xpose.msra.mxu0 0.0
      %3409 = vmatprep.subr.mxu0 0.0
      %3410 = vmatpush1.xpose.msra.mxu0 0.0
      %3411 = vmatprep.subr.mxu0 0.0
      %3412 = vmatpush1.xpose.msra.mxu0 %v3379
      %3413 = vmatprep.subr.mxu0 0.0
      %3414 = vmatpush2.xpose.msra.mxu0 0.0
      %3415 = vmatprep.subr.mxu0 0.0
      %3416 = vmatpush2.xpose.msra.mxu0 0.0
      %3417 = vmatprep.subr.mxu0 0.0
      %3418 = vmatpush2.xpose.msra.mxu0 0.0
      %3419 = vmatprep.subr.mxu0 0.0
      %3420 = vmatpush2.xpose.msra.mxu0 0.0
      %3421 = vmatprep.subr.mxu0 0.0
      %3422 = vmatpush2.xpose.msra.mxu0 0.0
      %3423 = vmatprep.subr.mxu0 0.0
      %3424 = vmatpush2.xpose.msra.mxu0 0.0
      %3425 = vmatprep.subr.mxu0 0.0
      %3426 = vmatpush2.xpose.msra.mxu0 0.0
      %3427 = vmatprep.subr.mxu0 0.0
      %3428 = vmatpush2.xpose.msra.mxu0 0.0
      %3429 = vmatprep.subr.mxu0 0.0
      %3430 = vmatpush2.xpose.msra.mxu0 0.0
      %3431 = vmatprep.subr.mxu0 0.0
      %3432 = vmatpush2.xpose.msra.mxu0 0.0
      %3433 = vmatprep.subr.mxu0 0.0
      %3434 = vmatpush2.xpose.msra.mxu0 0.0
      %3435 = vmatprep.subr.mxu0 0.0
      %3436 = vmatpush2.xpose.msra.mxu0 0.0
      %3437 = vmatprep.subr.mxu0 0.0
      %3438 = vmatpush2.xpose.msra.mxu0 0.0
      %3439 = vmatprep.subr.mxu0 0.0
      %3440 = vmatpush2.xpose.msra.mxu0 0.0
      %3441 = vmatprep.subr.mxu0 0.0
      %3442 = vmatpush2.xpose.msra.mxu0 0.0
      %3443 = vmatprep.subr.mxu0 0.0
      %3444 = vmatpush2.xpose.msra.mxu0 0.0
      %3445 = vmatprep.mubr.f32.mxu0 0.0
      %3446 = vmatmul.mubr.f32.gmra.mxu0 %v3376
      %v3447 = vpop.f32.mrf.mxu0
      %v3448 = vadd.f32 0.0, %v3447
      %v3449 = vpop.f32.mrf.mxu0
      %3450 = vdwg.mxu0
      %v3451 = vsel %vm1296, %v3372, -inf
      %3452 = vmax.xlane.f32.xlu0 %v3451
      %v3453 = vpop.xlane.xlu0 %3452
      %v3454 = vsel %vm1296, %v3448, -inf
      %3455 = vmax.xlane.f32.xlu0 %v3454
      %v3456 = vpop.xlane.xlu0 %3455
      %v3457 = vsub.f32 %v3372, %v3453
      %v3458 = vsub.f32 %v3448, %v3456
      %v3459 = vmul.f32 %v3457, 1.442695
      %v3460 = vpow.pop %v3459
      %v3461 = vmul.f32 %v3458, 1.442695
      %v3462 = vpow.pop %v3461
      %v3463 = vsel %vm1296, %v3460, 0.0
      %3464 = vadd.xlane.f32.xlu0 %v3463
      %v3465 = vpop.xlane.xlu0 %3464
      %v3466 = vsel %vm1296, %v3462, 0.0
      %3467 = vadd.xlane.f32.xlu0 %v3466
      %v3468 = vpop.xlane.xlu0 %3467
      %v3469 = vrcp.pop %v3465
      %v3470 = vrcp.pop %v3468
      %v3471 = vmul.f32 %v3460, %v3469
      %v3472 = vmul.f32 %v3462, %v3470
      %v3474 = vsel %vm1296, %v3471, 0
      %3476 = vmatprep.subr.mxu0 0.0
      %3477 = vmatpush1.msra.mxu0 0.0
      %3478 = vmatprep.subr.mxu0 0.0
      %3479 = vmatpush1.msra.mxu0 0.0
      %3480 = vmatprep.subr.mxu0 0.0
      %3481 = vmatpush1.msra.mxu0 0.0
      %3482 = vmatprep.subr.mxu0 0.0
      %3483 = vmatpush1.msra.mxu0 0.0
      %3484 = vmatprep.subr.mxu0 0.0
      %3485 = vmatpush1.msra.mxu0 0.0
      %3486 = vmatprep.subr.mxu0 0.0
      %3487 = vmatpush1.msra.mxu0 0.0
      %3488 = vmatprep.subr.mxu0 0.0
      %3489 = vmatpush1.msra.mxu0 0.0
      %3490 = vmatprep.subr.mxu0 0.0
      %3491 = vmatpush1.msra.mxu0 0.0
      %3492 = vmatprep.subr.mxu0 0.0
      %3493 = vmatpush1.msra.mxu0 0.0
      %3494 = vmatprep.subr.mxu0 0.0
      %3495 = vmatpush1.msra.mxu0 0.0
      %3496 = vmatprep.subr.mxu0 0.0
      %3497 = vmatpush1.msra.mxu0 0.0
      %3498 = vmatprep.subr.mxu0 0.0
      %3499 = vmatpush1.msra.mxu0 0.0
      %3500 = vmatprep.subr.mxu0 0.0
      %3501 = vmatpush1.msra.mxu0 0.0
      %3502 = vmatprep.subr.mxu0 0.0
      %3503 = vmatpush1.msra.mxu0 0.0
      %3504 = vmatprep.subr.mxu0 0.0
      %3505 = vmatpush1.msra.mxu0 0.0
      %3506 = vmatprep.subr.mxu0 0.0
      %3507 = vmatpush1.msra.mxu0 %v3291
      %3508 = vmatprep.subr.mxu0 0.0
      %3509 = vmatpush2.msra.mxu0 0.0
      %3510 = vmatprep.subr.mxu0 0.0
      %3511 = vmatpush2.msra.mxu0 0.0
      %3512 = vmatprep.subr.mxu0 0.0
      %3513 = vmatpush2.msra.mxu0 0.0
      %3514 = vmatprep.subr.mxu0 0.0
      %3515 = vmatpush2.msra.mxu0 0.0
      %3516 = vmatprep.subr.mxu0 0.0
      %3517 = vmatpush2.msra.mxu0 0.0
      %3518 = vmatprep.subr.mxu0 0.0
      %3519 = vmatpush2.msra.mxu0 0.0
      %3520 = vmatprep.subr.mxu0 0.0
      %3521 = vmatpush2.msra.mxu0 0.0
      %3522 = vmatprep.subr.mxu0 0.0
      %3523 = vmatpush2.msra.mxu0 0.0
      %3524 = vmatprep.subr.mxu0 0.0
      %3525 = vmatpush2.msra.mxu0 0.0
      %3526 = vmatprep.subr.mxu0 0.0
      %3527 = vmatpush2.msra.mxu0 0.0
      %3528 = vmatprep.subr.mxu0 0.0
      %3529 = vmatpush2.msra.mxu0 0.0
      %3530 = vmatprep.subr.mxu0 0.0
      %3531 = vmatpush2.msra.mxu0 0.0
      %3532 = vmatprep.subr.mxu0 0.0
      %3533 = vmatpush2.msra.mxu0 0.0
      %3534 = vmatprep.subr.mxu0 0.0
      %3535 = vmatpush2.msra.mxu0 0.0
      %3536 = vmatprep.subr.mxu0 0.0
      %3537 = vmatpush2.msra.mxu0 0.0
      %3538 = vmatprep.subr.mxu0 0.0
      %3539 = vmatpush2.msra.mxu0 0.0
      %3540 = vmatprep.mubr.f32.mxu0 0.0
      %3541 = vmatmul.mubr.f32.gmra.mxu0 %v3474
      %v3542 = vpop.f32.mrf.mxu0
      %v3543 = vadd.f32 0.0, %v3542
      %v3544 = vpop.f32.mrf.mxu0
      %3545 = vdwg.mxu0
      %v3547 = vsel %vm1296, %v3472, 0
      %3549 = vmatprep.subr.mxu0 0.0
      %3550 = vmatpush1.msra.mxu0 0.0
      %3551 = vmatprep.subr.mxu0 0.0
      %3552 = vmatpush1.msra.mxu0 0.0
      %3553 = vmatprep.subr.mxu0 0.0
      %3554 = vmatpush1.msra.mxu0 0.0
      %3555 = vmatprep.subr.mxu0 0.0
      %3556 = vmatpush1.msra.mxu0 0.0
      %3557 = vmatprep.subr.mxu0 0.0
      %3558 = vmatpush1.msra.mxu0 0.0
      %3559 = vmatprep.subr.mxu0 0.0
      %3560 = vmatpush1.msra.mxu0 0.0
      %3561 = vmatprep.subr.mxu0 0.0
      %3562 = vmatpush1.msra.mxu0 0.0
      %3563 = vmatprep.subr.mxu0 0.0
      %3564 = vmatpush1.msra.mxu0 0.0
      %3565 = vmatprep.subr.mxu0 0.0
      %3566 = vmatpush1.msra.mxu0 0.0
      %3567 = vmatprep.subr.mxu0 0.0
      %3568 = vmatpush1.msra.mxu0 0.0
      %3569 = vmatprep.subr.mxu0 0.0
      %3570 = vmatpush1.msra.mxu0 0.0
      %3571 = vmatprep.subr.mxu0 0.0
      %3572 = vmatpush1.msra.mxu0 0.0
      %3573 = vmatprep.subr.mxu0 0.0
      %3574 = vmatpush1.msra.mxu0 0.0
      %3575 = vmatprep.subr.mxu0 0.0
      %3576 = vmatpush1.msra.mxu0 0.0
      %3577 = vmatprep.subr.mxu0 0.0
      %3578 = vmatpush1.msra.mxu0 0.0
      %3579 = vmatprep.subr.mxu0 0.0
      %3580 = vmatpush1.msra.mxu0 %v3296
      %3581 = vmatprep.subr.mxu0 0.0
      %3582 = vmatpush2.msra.mxu0 0.0
      %3583 = vmatprep.subr.mxu0 0.0
      %3584 = vmatpush2.msra.mxu0 0.0
      %3585 = vmatprep.subr.mxu0 0.0
      %3586 = vmatpush2.msra.mxu0 0.0
      %3587 = vmatprep.subr.mxu0 0.0
      %3588 = vmatpush2.msra.mxu0 0.0
      %3589 = vmatprep.subr.mxu0 0.0
      %3590 = vmatpush2.msra.mxu0 0.0
      %3591 = vmatprep.subr.mxu0 0.0
      %3592 = vmatpush2.msra.mxu0 0.0
      %3593 = vmatprep.subr.mxu0 0.0
      %3594 = vmatpush2.msra.mxu0 0.0
      %3595 = vmatprep.subr.mxu0 0.0
      %3596 = vmatpush2.msra.mxu0 0.0
      %3597 = vmatprep.subr.mxu0 0.0
      %3598 = vmatpush2.msra.mxu0 0.0
      %3599 = vmatprep.subr.mxu0 0.0
      %3600 = vmatpush2.msra.mxu0 0.0
      %3601 = vmatprep.subr.mxu0 0.0
      %3602 = vmatpush2.msra.mxu0 0.0
      %3603 = vmatprep.subr.mxu0 0.0
      %3604 = vmatpush2.msra.mxu0 0.0
      %3605 = vmatprep.subr.mxu0 0.0
      %3606 = vmatpush2.msra.mxu0 0.0
      %3607 = vmatprep.subr.mxu0 0.0
      %3608 = vmatpush2.msra.mxu0 0.0
      %3609 = vmatprep.subr.mxu0 0.0
      %3610 = vmatpush2.msra.mxu0 0.0
      %3611 = vmatprep.subr.mxu0 0.0
      %3612 = vmatpush2.msra.mxu0 0.0
      %3613 = vmatprep.mubr.f32.mxu0 0.0
      %3614 = vmatmul.mubr.f32.gmra.mxu0 %v3547
      %v3615 = vpop.f32.mrf.mxu0
      %v3616 = vadd.f32 0.0, %v3615
      %v3617 = vpop.f32.mrf.mxu0
      %3618 = vdwg.mxu0
      %s3619 = scalar_lea.vmem %s890, 24
      %v3620 = vld [vmem:[%s3619] sm:$0xff]
      %v3622 = vsel %vm1296, %v3543, 0
      %v3625 = vsel %vm1296, %v3616, 0
      %3627 = vmatprep.subr.mxu0 0.0
      %3628 = vmatpush1.msra.mxu0 0.0
      %3629 = vmatprep.subr.mxu0 0.0
      %3630 = vmatpush1.msra.mxu0 0.0
      %3631 = vmatprep.subr.mxu0 0.0
      %3632 = vmatpush1.msra.mxu0 0.0
      %3633 = vmatprep.subr.mxu0 0.0
      %3634 = vmatpush1.msra.mxu0 0.0
      %3635 = vmatprep.subr.mxu0 0.0
      %3636 = vmatpush1.msra.mxu0 0.0
      %3637 = vmatprep.subr.mxu0 0.0
      %3638 = vmatpush1.msra.mxu0 0.0
      %3639 = vmatprep.subr.mxu0 0.0
      %3640 = vmatpush1.msra.mxu0 0.0
      %3641 = vmatprep.subr.mxu0 0.0
      %3642 = vmatpush1.msra.mxu0 0.0
      %3643 = vmatprep.subr.mxu0 0.0
      %3644 = vmatpush1.msra.mxu0 0.0
      %3645 = vmatprep.subr.mxu0 0.0
      %3646 = vmatpush1.msra.mxu0 0.0
      %3647 = vmatprep.subr.mxu0 0.0
      %3648 = vmatpush1.msra.mxu0 0.0
      %3649 = vmatprep.subr.mxu0 0.0
      %3650 = vmatpush1.msra.mxu0 0.0
      %3651 = vmatprep.subr.mxu0 0.0
      %3652 = vmatpush1.msra.mxu0 0.0
      %3653 = vmatprep.subr.mxu0 0.0
      %3654 = vmatpush1.msra.mxu0 0.0
      %3655 = vmatprep.subr.mxu0 0.0
      %3656 = vmatpush1.msra.mxu0 0.0
      %3657 = vmatprep.subr.mxu0 0.0
      %3658 = vmatpush1.msra.mxu0 %v3620
      %3659 = vmatprep.subr.mxu0 0.0
      %3660 = vmatpush2.msra.mxu0 0.0
      %3661 = vmatprep.subr.mxu0 0.0
      %3662 = vmatpush2.msra.mxu0 0.0
      %3663 = vmatprep.subr.mxu0 0.0
      %3664 = vmatpush2.msra.mxu0 0.0
      %3665 = vmatprep.subr.mxu0 0.0
      %3666 = vmatpush2.msra.mxu0 0.0
      %3667 = vmatprep.subr.mxu0 0.0
      %3668 = vmatpush2.msra.mxu0 0.0
      %3669 = vmatprep.subr.mxu0 0.0
      %3670 = vmatpush2.msra.mxu0 0.0
      %3671 = vmatprep.subr.mxu0 0.0
      %3672 = vmatpush2.msra.mxu0 0.0
      %3673 = vmatprep.subr.mxu0 0.0
      %3674 = vmatpush2.msra.mxu0 0.0
      %3675 = vmatprep.subr.mxu0 0.0
      %3676 = vmatpush2.msra.mxu0 0.0
      %3677 = vmatprep.subr.mxu0 0.0
      %3678 = vmatpush2.msra.mxu0 0.0
      %3679 = vmatprep.subr.mxu0 0.0
      %3680 = vmatpush2.msra.mxu0 0.0
      %3681 = vmatprep.subr.mxu0 0.0
      %3682 = vmatpush2.msra.mxu0 0.0
      %3683 = vmatprep.subr.mxu0 0.0
      %3684 = vmatpush2.msra.mxu0 0.0
      %3685 = vmatprep.subr.mxu0 0.0
      %3686 = vmatpush2.msra.mxu0 0.0
      %3687 = vmatprep.subr.mxu0 0.0
      %3688 = vmatpush2.msra.mxu0 0.0
      %3689 = vmatprep.subr.mxu0 0.0
      %3690 = vmatpush2.msra.mxu0 0.0
      %3691 = vmatprep.mubr.f32.mxu0 0.0
      %3692 = vmatmul.mubr.f32.gmra.mxu0 %v3622
      %v3693 = vpop.f32.mrf.mxu0
      %v3694 = vadd.f32 0.0, %v3693
      %v3695 = vpop.f32.mrf.mxu0
      %3696 = vmatprep.mubr.f32.mxu0 0.0
      %3697 = vmatmul.mubr.f32.gmra.mxu0 %v3625
      %v3698 = vpop.f32.mrf.mxu0
      %v3699 = vadd.f32 0.0, %v3698
      %v3700 = vpop.f32.mrf.mxu0
      %3701 = vdwg.mxu0
      %v3702 = vadd.f32 %v3033, %v3694
      %v3703 = vadd.f32 %v3034, %v3699
      %v3704 = vld [vmem:[%s893] sm:$0x1]
      %v3706 = vlaneseq
      %v3707 = vshrl.u32 %v3706, 7
      %v3708 = vsub.s32 0, %v3707
      %v3709 = vrot.slane %v3704, %v3708
      %v3711 = vadd.f32 %v3702, %v3709
      %v3712 = vadd.f32 %v3703, %v3709
      %v3713 = vadd.f32 %v1029, %v3711
      %v3714 = vadd.f32 %v1030, %v3712
      %v3715 = vsel %vm1042, %v3713, 0.0
      %3716 = vadd.xlane.f32.xlu0 %v3715
      %v3717 = vpop.xlane.xlu0 %3716
      %v3718 = vsel %vm1042, %v3714, 0.0
      %3719 = vadd.xlane.f32.xlu0 %v3718
      %v3720 = vpop.xlane.xlu0 %3719
      %v3721 = vrcp.pop 32.0
      %v3722 = vmul.f32 %v3717, %v3721
      %v3723 = vmul.f32 %v3720, %v3721
      %v3724 = vmul.f32 %v3713, %v3713
      %v3725 = vmul.f32 %v3714, %v3714
      %v3726 = vsel %vm1042, %v3724, 0.0
      %3727 = vadd.xlane.f32.xlu0 %v3726
      %v3728 = vpop.xlane.xlu0 %3727
      %v3729 = vsel %vm1042, %v3725, 0.0
      %3730 = vadd.xlane.f32.xlu0 %v3729
      %v3731 = vpop.xlane.xlu0 %3730
      %v3732 = vmul.f32 %v3728, %v3721
      %v3733 = vmul.f32 %v3731, %v3721
      %v3734 = vmul.f32 %v3722, %v3722
      %v3735 = vmul.f32 %v3723, %v3723
      %v3736 = vsub.f32 %v3732, %v3734
      %v3737 = vsub.f32 %v3733, %v3735
      %v3738 = vsub.f32 %v3713, %v3722
      %v3739 = vsub.f32 %v3714, %v3723
      %v3740 = vadd.f32 %v3736, 1e-05
      %v3741 = vadd.f32 %v3737, 1e-05
      %v3742 = vrsqrt.pop %v3740
      %v3743 = vrsqrt.pop %v3741
      %v3744 = vmul.f32 %v3738, %v3742
      %v3745 = vmul.f32 %v3739, %v3743
      %v3746 = vld [vmem:[%s896] sm:$0x1]
      %v3748 = vlaneseq
      %v3749 = vshrl.u32 %v3748, 7
      %v3750 = vsub.s32 0, %v3749
      %v3751 = vrot.slane %v3746, %v3750
      %v3753 = vmul.f32 %v3744, %v3751
      %v3754 = vmul.f32 %v3745, %v3751
      %v3755 = vld [vmem:[%s899] sm:$0x1]
      %v3757 = vlaneseq
      %v3758 = vshrl.u32 %v3757, 7
      %v3759 = vsub.s32 0, %v3758
      %v3760 = vrot.slane %v3755, %v3759
      %v3762 = vadd.f32 %v3753, %v3760
      %v3763 = vadd.f32 %v3754, %v3760
      %v3764 = vld [vmem:[%s904] sm:$0xff]
      %v3765 = vld [vmem:[%s904 + $0x8] sm:$0xff]
      %v3766 = vld [vmem:[%s904 + $0x10] sm:$0xff]
      %v3767 = vld [vmem:[%s904 + $0x18] sm:$0xff]
      %v3768 = vld [vmem:[%s904 + $0x20] sm:$0xff]
      %v3769 = vld [vmem:[%s904 + $0x28] sm:$0xff]
      %v3770 = vld [vmem:[%s904 + $0x30] sm:$0xff]
      %v3771 = vld [vmem:[%s904 + $0x38] sm:$0xff]
      %v3772 = vld [vmem:[%s904 + $0x40] sm:$0xff]
      %v3773 = vld [vmem:[%s904 + $0x48] sm:$0xff]
      %v3774 = vld [vmem:[%s904 + $0x50] sm:$0xff]
      %v3775 = vld [vmem:[%s904 + $0x58] sm:$0xff]
      %v3776 = vld [vmem:[%s904 + $0x60] sm:$0xff]
      %v3777 = vld [vmem:[%s904 + $0x68] sm:$0xff]
      %v3778 = vld [vmem:[%s904 + $0x70] sm:$0xff]
      %v3779 = vld [vmem:[%s904 + $0x78] sm:$0xff]
      %v3780 = vld [vmem:[%s904 + $0x80] sm:$0xff]
      %v3781 = vld [vmem:[%s904 + $0x88] sm:$0xff]
      %v3782 = vld [vmem:[%s904 + $0x90] sm:$0xff]
      %v3783 = vld [vmem:[%s904 + $0x98] sm:$0xff]
      %v3784 = vld [vmem:[%s904 + $0xa0] sm:$0xff]
      %v3785 = vld [vmem:[%s904 + $0xa8] sm:$0xff]
      %v3786 = vld [vmem:[%s904 + $0xb0] sm:$0xff]
      %v3787 = vld [vmem:[%s904 + $0xb8] sm:$0xff]
      %v3788 = vld [vmem:[%s904 + $0xc0] sm:$0xff]
      %v3789 = vld [vmem:[%s904 + $0xc8] sm:$0xff]
      %v3790 = vld [vmem:[%s904 + $0xd0] sm:$0xff]
      %v3791 = vld [vmem:[%s904 + $0xd8] sm:$0xff]
      %v3792 = vld [vmem:[%s904 + $0xe0] sm:$0xff]
      %v3793 = vld [vmem:[%s904 + $0xe8] sm:$0xff]
      %v3794 = vld [vmem:[%s904 + $0xf0] sm:$0xff]
      %v3795 = vld [vmem:[%s904 + $0xf8] sm:$0xff]
      %v3796 = vld [vmem:[%s904 + $0x100] sm:$0xff]
      %v3797 = vld [vmem:[%s904 + $0x108] sm:$0xff]
      %v3798 = vld [vmem:[%s904 + $0x110] sm:$0xff]
      %v3799 = vld [vmem:[%s904 + $0x118] sm:$0xff]
      %v3800 = vld [vmem:[%s904 + $0x120] sm:$0xff]
      %v3801 = vld [vmem:[%s904 + $0x128] sm:$0xff]
      %v3802 = vld [vmem:[%s904 + $0x130] sm:$0xff]
      %v3803 = vld [vmem:[%s904 + $0x138] sm:$0xff]
      %v3804 = vld [vmem:[%s904 + $0x140] sm:$0xff]
      %v3805 = vld [vmem:[%s904 + $0x148] sm:$0xff]
      %v3806 = vld [vmem:[%s904 + $0x150] sm:$0xff]
      %v3807 = vld [vmem:[%s904 + $0x158] sm:$0xff]
      %v3808 = vld [vmem:[%s904 + $0x160] sm:$0xff]
      %v3809 = vld [vmem:[%s904 + $0x168] sm:$0xff]
      %v3810 = vld [vmem:[%s904 + $0x170] sm:$0xff]
      %v3811 = vld [vmem:[%s904 + $0x178] sm:$0xff]
      %v3812 = vld [vmem:[%s904 + $0x180] sm:$0xff]
      %v3813 = vld [vmem:[%s904 + $0x188] sm:$0xff]
      %v3814 = vld [vmem:[%s904 + $0x190] sm:$0xff]
      %v3815 = vld [vmem:[%s904 + $0x198] sm:$0xff]
      %v3816 = vld [vmem:[%s904 + $0x1a0] sm:$0xff]
      %v3817 = vld [vmem:[%s904 + $0x1a8] sm:$0xff]
      %v3818 = vld [vmem:[%s904 + $0x1b0] sm:$0xff]
      %v3819 = vld [vmem:[%s904 + $0x1b8] sm:$0xff]
      %v3820 = vld [vmem:[%s904 + $0x1c0] sm:$0xff]
      %v3821 = vld [vmem:[%s904 + $0x1c8] sm:$0xff]
      %v3822 = vld [vmem:[%s904 + $0x1d0] sm:$0xff]
      %v3823 = vld [vmem:[%s904 + $0x1d8] sm:$0xff]
      %v3824 = vld [vmem:[%s904 + $0x1e0] sm:$0xff]
      %v3825 = vld [vmem:[%s904 + $0x1e8] sm:$0xff]
      %v3826 = vld [vmem:[%s904 + $0x1f0] sm:$0xff]
      %v3827 = vld [vmem:[%s904 + $0x1f8] sm:$0xff]
      %v3828 = vld [vmem:[%s908] sm:$0xff]
      %v3829 = vld [vmem:[%s908 + $0x8] sm:$0xff]
      %v3832 = vlaneseq
      %v3833 = vshrl.u32 %v3832, 7
      %v3834 = vsub.s32 0, %v3833
      %v3835 = vrot.slane %v3828, %v3834
      %v3836 = vlaneseq
      %v3837 = vshrl.u32 %v3836, 7
      %v3838 = vsub.s32 1, %v3837
      %v3839 = vrot.slane %v3828, %v3838
      %v3840 = vlaneseq
      %v3841 = vshrl.u32 %v3840, 7
      %v3842 = vsub.s32 2, %v3841
      %v3843 = vrot.slane %v3828, %v3842
      %v3844 = vlaneseq
      %v3845 = vshrl.u32 %v3844, 7
      %v3846 = vsub.s32 3, %v3845
      %v3847 = vrot.slane %v3828, %v3846
      %v3848 = vlaneseq
      %v3849 = vshrl.u32 %v3848, 7
      %v3850 = vsub.s32 4, %v3849
      %v3851 = vrot.slane %v3828, %v3850
      %v3852 = vlaneseq
      %v3853 = vshrl.u32 %v3852, 7
      %v3854 = vsub.s32 5, %v3853
      %v3855 = vrot.slane %v3828, %v3854
      %v3856 = vlaneseq
      %v3857 = vshrl.u32 %v3856, 7
      %v3858 = vsub.s32 6, %v3857
      %v3859 = vrot.slane %v3828, %v3858
      %v3860 = vlaneseq
      %v3861 = vshrl.u32 %v3860, 7
      %v3862 = vsub.s32 7, %v3861
      %v3863 = vrot.slane %v3828, %v3862
      %v3864 = vlaneseq
      %v3865 = vshrl.u32 %v3864, 7
      %v3866 = vsub.s32 0, %v3865
      %v3867 = vrot.slane %v3829, %v3866
      %v3868 = vlaneseq
      %v3869 = vshrl.u32 %v3868, 7
      %v3870 = vsub.s32 1, %v3869
      %v3871 = vrot.slane %v3829, %v3870
      %v3872 = vlaneseq
      %v3873 = vshrl.u32 %v3872, 7
      %v3874 = vsub.s32 2, %v3873
      %v3875 = vrot.slane %v3829, %v3874
      %v3876 = vlaneseq
      %v3877 = vshrl.u32 %v3876, 7
      %v3878 = vsub.s32 3, %v3877
      %v3879 = vrot.slane %v3829, %v3878
      %v3880 = vlaneseq
      %v3881 = vshrl.u32 %v3880, 7
      %v3882 = vsub.s32 4, %v3881
      %v3883 = vrot.slane %v3829, %v3882
      %v3884 = vlaneseq
      %v3885 = vshrl.u32 %v3884, 7
      %v3886 = vsub.s32 5, %v3885
      %v3887 = vrot.slane %v3829, %v3886
      %v3888 = vlaneseq
      %v3889 = vshrl.u32 %v3888, 7
      %v3890 = vsub.s32 6, %v3889
      %v3891 = vrot.slane %v3829, %v3890
      %v3892 = vlaneseq
      %v3893 = vshrl.u32 %v3892, 7
      %v3894 = vsub.s32 7, %v3893
      %v3895 = vrot.slane %v3829, %v3894
      %v3913 = vsel %vm1042, %v3762, 0
      %v3916 = vsel %vm1042, %v3763, 0
      %3918 = vmatprep.subr.mxu0 0.0
      %3919 = vmatpush1.msra.mxu0 0.0
      %3920 = vmatprep.subr.mxu0 0.0
      %3921 = vmatpush1.msra.mxu0 0.0
      %3922 = vmatprep.subr.mxu0 0.0
      %3923 = vmatpush1.msra.mxu0 0.0
      %3924 = vmatprep.subr.mxu0 0.0
      %3925 = vmatpush1.msra.mxu0 0.0
      %3926 = vmatprep.subr.mxu0 0.0
      %3927 = vmatpush1.msra.mxu0 0.0
      %3928 = vmatprep.subr.mxu0 0.0
      %3929 = vmatpush1.msra.mxu0 0.0
      %3930 = vmatprep.subr.mxu0 0.0
      %3931 = vmatpush1.msra.mxu0 0.0
      %3932 = vmatprep.subr.mxu0 0.0
      %3933 = vmatpush1.msra.mxu0 0.0
      %3934 = vmatprep.subr.mxu0 0.0
      %3935 = vmatpush1.msra.mxu0 0.0
      %3936 = vmatprep.subr.mxu0 0.0
      %3937 = vmatpush1.msra.mxu0 0.0
      %3938 = vmatprep.subr.mxu0 0.0
      %3939 = vmatpush1.msra.mxu0 0.0
      %3940 = vmatprep.subr.mxu0 0.0
      %3941 = vmatpush1.msra.mxu0 0.0
      %3942 = vmatprep.subr.mxu0 %v3813
      %3943 = vmatpush1.msra.mxu0 %v3812
      %3944 = vmatprep.subr.mxu0 %v3797
      %3945 = vmatpush1.msra.mxu0 %v3796
      %3946 = vmatprep.subr.mxu0 %v3781
      %3947 = vmatpush1.msra.mxu0 %v3780
      %3948 = vmatprep.subr.mxu0 %v3765
      %3949 = vmatpush1.msra.mxu0 %v3764
      %3950 = vmatprep.subr.mxu0 0.0
      %3951 = vmatpush2.msra.mxu0 0.0
      %3952 = vmatprep.subr.mxu0 0.0
      %3953 = vmatpush2.msra.mxu0 0.0
      %3954 = vmatprep.subr.mxu0 0.0
      %3955 = vmatpush2.msra.mxu0 0.0
      %3956 = vmatprep.subr.mxu0 0.0
      %3957 = vmatpush2.msra.mxu0 0.0
      %3958 = vmatprep.subr.mxu0 0.0
      %3959 = vmatpush2.msra.mxu0 0.0
      %3960 = vmatprep.subr.mxu0 0.0
      %3961 = vmatpush2.msra.mxu0 0.0
      %3962 = vmatprep.subr.mxu0 0.0
      %3963 = vmatpush2.msra.mxu0 0.0
      %3964 = vmatprep.subr.mxu0 0.0
      %3965 = vmatpush2.msra.mxu0 0.0
      %3966 = vmatprep.subr.mxu0 0.0
      %3967 = vmatpush2.msra.mxu0 0.0
      %3968 = vmatprep.subr.mxu0 0.0
      %3969 = vmatpush2.msra.mxu0 0.0
      %3970 = vmatprep.subr.mxu0 0.0
      %3971 = vmatpush2.msra.mxu0 0.0
      %3972 = vmatprep.subr.mxu0 0.0
      %3973 = vmatpush2.msra.mxu0 0.0
      %3974 = vmatprep.subr.mxu0 0.0
      %3975 = vmatpush2.msra.mxu0 0.0
      %3976 = vmatprep.subr.mxu0 0.0
      %3977 = vmatpush2.msra.mxu0 0.0
      %3978 = vmatprep.subr.mxu0 0.0
      %3979 = vmatpush2.msra.mxu0 0.0
      %3980 = vmatprep.subr.mxu0 0.0
      %3981 = vmatpush2.msra.mxu0 0.0
      %3982 = vmatprep.mubr.f32.mxu0 0.0
      %3983 = vmatmul.mubr.f32.gmra.mxu0 %v3913
      %v3984 = vpop.f32.mrf.mxu0
      %v3985 = vadd.f32 %v3835, %v3984
      %v3986 = vpop.f32.mrf.mxu0
      %v3987 = vadd.f32 %v3839, %v3986
      %3988 = vmatprep.mubr.f32.mxu0 0.0
      %3989 = vmatmul.mubr.f32.gmra.mxu0 %v3916
      %v3990 = vpop.f32.mrf.mxu0
      %v3991 = vadd.f32 %v3835, %v3990
      %v3992 = vpop.f32.mrf.mxu0
      %v3993 = vadd.f32 %v3839, %v3992
      %3994 = vdwg.mxu0
      %3995 = vmatprep.subr.mxu0 0.0
      %3996 = vmatpush1.msra.mxu0 0.0
      %3997 = vmatprep.subr.mxu0 0.0
      %3998 = vmatpush1.msra.mxu0 0.0
      %3999 = vmatprep.subr.mxu0 0.0
      %4000 = vmatpush1.msra.mxu0 0.0
      %4001 = vmatprep.subr.mxu0 0.0
      %4002 = vmatpush1.msra.mxu0 0.0
      %4003 = vmatprep.subr.mxu0 0.0
      %4004 = vmatpush1.msra.mxu0 0.0
      %4005 = vmatprep.subr.mxu0 0.0
      %4006 = vmatpush1.msra.mxu0 0.0
      %4007 = vmatprep.subr.mxu0 0.0
      %4008 = vmatpush1.msra.mxu0 0.0
      %4009 = vmatprep.subr.mxu0 0.0
      %4010 = vmatpush1.msra.mxu0 0.0
      %4011 = vmatprep.subr.mxu0 0.0
      %4012 = vmatpush1.msra.mxu0 0.0
      %4013 = vmatprep.subr.mxu0 0.0
      %4014 = vmatpush1.msra.mxu0 0.0
      %4015 = vmatprep.subr.mxu0 0.0
      %4016 = vmatpush1.msra.mxu0 0.0
      %4017 = vmatprep.subr.mxu0 0.0
      %4018 = vmatpush1.msra.mxu0 0.0
      %4019 = vmatprep.subr.mxu0 %v3815
      %4020 = vmatpush1.msra.mxu0 %v3814
      %4021 = vmatprep.subr.mxu0 %v3799
      %4022 = vmatpush1.msra.mxu0 %v3798
      %4023 = vmatprep.subr.mxu0 %v3783
      %4024 = vmatpush1.msra.mxu0 %v3782
      %4025 = vmatprep.subr.mxu0 %v3767
      %4026 = vmatpush1.msra.mxu0 %v3766
      %4027 = vmatprep.subr.mxu0 0.0
      %4028 = vmatpush2.msra.mxu0 0.0
      %4029 = vmatprep.subr.mxu0 0.0
      %4030 = vmatpush2.msra.mxu0 0.0
      %4031 = vmatprep.subr.mxu0 0.0
      %4032 = vmatpush2.msra.mxu0 0.0
      %4033 = vmatprep.subr.mxu0 0.0
      %4034 = vmatpush2.msra.mxu0 0.0
      %4035 = vmatprep.subr.mxu0 0.0
      %4036 = vmatpush2.msra.mxu0 0.0
      %4037 = vmatprep.subr.mxu0 0.0
      %4038 = vmatpush2.msra.mxu0 0.0
      %4039 = vmatprep.subr.mxu0 0.0
      %4040 = vmatpush2.msra.mxu0 0.0
      %4041 = vmatprep.subr.mxu0 0.0
      %4042 = vmatpush2.msra.mxu0 0.0
      %4043 = vmatprep.subr.mxu0 0.0
      %4044 = vmatpush2.msra.mxu0 0.0
      %4045 = vmatprep.subr.mxu0 0.0
      %4046 = vmatpush2.msra.mxu0 0.0
      %4047 = vmatprep.subr.mxu0 0.0
      %4048 = vmatpush2.msra.mxu0 0.0
      %4049 = vmatprep.subr.mxu0 0.0
      %4050 = vmatpush2.msra.mxu0 0.0
      %4051 = vmatprep.subr.mxu0 0.0
      %4052 = vmatpush2.msra.mxu0 0.0
      %4053 = vmatprep.subr.mxu0 0.0
      %4054 = vmatpush2.msra.mxu0 0.0
      %4055 = vmatprep.subr.mxu0 0.0
      %4056 = vmatpush2.msra.mxu0 0.0
      %4057 = vmatprep.subr.mxu0 0.0
      %4058 = vmatpush2.msra.mxu0 0.0
      %4059 = vmatprep.mubr.f32.mxu0 0.0
      %4060 = vmatmul.mubr.f32.gmra.mxu0 %v3913
      %v4061 = vpop.f32.mrf.mxu0
      %v4062 = vadd.f32 %v3843, %v4061
      %v4063 = vpop.f32.mrf.mxu0
      %v4064 = vadd.f32 %v3847, %v4063
      %4065 = vmatprep.mubr.f32.mxu0 0.0
      %4066 = vmatmul.mubr.f32.gmra.mxu0 %v3916
      %v4067 = vpop.f32.mrf.mxu0
      %v4068 = vadd.f32 %v3843, %v4067
      %v4069 = vpop.f32.mrf.mxu0
      %v4070 = vadd.f32 %v3847, %v4069
      %4071 = vdwg.mxu0
      %4072 = vmatprep.subr.mxu0 0.0
      %4073 = vmatpush1.msra.mxu0 0.0
      %4074 = vmatprep.subr.mxu0 0.0
      %4075 = vmatpush1.msra.mxu0 0.0
      %4076 = vmatprep.subr.mxu0 0.0
      %4077 = vmatpush1.msra.mxu0 0.0
      %4078 = vmatprep.subr.mxu0 0.0
      %4079 = vmatpush1.msra.mxu0 0.0
      %4080 = vmatprep.subr.mxu0 0.0
      %4081 = vmatpush1.msra.mxu0 0.0
      %4082 = vmatprep.subr.mxu0 0.0
      %4083 = vmatpush1.msra.mxu0 0.0
      %4084 = vmatprep.subr.mxu0 0.0
      %4085 = vmatpush1.msra.mxu0 0.0
      %4086 = vmatprep.subr.mxu0 0.0
      %4087 = vmatpush1.msra.mxu0 0.0
      %4088 = vmatprep.subr.mxu0 0.0
      %4089 = vmatpush1.msra.mxu0 0.0
      %4090 = vmatprep.subr.mxu0 0.0
      %4091 = vmatpush1.msra.mxu0 0.0
      %4092 = vmatprep.subr.mxu0 0.0
      %4093 = vmatpush1.msra.mxu0 0.0
      %4094 = vmatprep.subr.mxu0 0.0
      %4095 = vmatpush1.msra.mxu0 0.0
      %4096 = vmatprep.subr.mxu0 %v3817
      %4097 = vmatpush1.msra.mxu0 %v3816
      %4098 = vmatprep.subr.mxu0 %v3801
      %4099 = vmatpush1.msra.mxu0 %v3800
      %4100 = vmatprep.subr.mxu0 %v3785
      %4101 = vmatpush1.msra.mxu0 %v3784
      %4102 = vmatprep.subr.mxu0 %v3769
      %4103 = vmatpush1.msra.mxu0 %v3768
      %4104 = vmatprep.subr.mxu0 0.0
      %4105 = vmatpush2.msra.mxu0 0.0
      %4106 = vmatprep.subr.mxu0 0.0
      %4107 = vmatpush2.msra.mxu0 0.0
      %4108 = vmatprep.subr.mxu0 0.0
      %4109 = vmatpush2.msra.mxu0 0.0
      %4110 = vmatprep.subr.mxu0 0.0
      %4111 = vmatpush2.msra.mxu0 0.0
      %4112 = vmatprep.subr.mxu0 0.0
      %4113 = vmatpush2.msra.mxu0 0.0
      %4114 = vmatprep.subr.mxu0 0.0
      %4115 = vmatpush2.msra.mxu0 0.0
      %4116 = vmatprep.subr.mxu0 0.0
      %4117 = vmatpush2.msra.mxu0 0.0
      %4118 = vmatprep.subr.mxu0 0.0
      %4119 = vmatpush2.msra.mxu0 0.0
      %4120 = vmatprep.subr.mxu0 0.0
      %4121 = vmatpush2.msra.mxu0 0.0
      %4122 = vmatprep.subr.mxu0 0.0
      %4123 = vmatpush2.msra.mxu0 0.0
      %4124 = vmatprep.subr.mxu0 0.0
      %4125 = vmatpush2.msra.mxu0 0.0
      %4126 = vmatprep.subr.mxu0 0.0
      %4127 = vmatpush2.msra.mxu0 0.0
      %4128 = vmatprep.subr.mxu0 0.0
      %4129 = vmatpush2.msra.mxu0 0.0
      %4130 = vmatprep.subr.mxu0 0.0
      %4131 = vmatpush2.msra.mxu0 0.0
      %4132 = vmatprep.subr.mxu0 0.0
      %4133 = vmatpush2.msra.mxu0 0.0
      %4134 = vmatprep.subr.mxu0 0.0
      %4135 = vmatpush2.msra.mxu0 0.0
      %4136 = vmatprep.mubr.f32.mxu0 0.0
      %4137 = vmatmul.mubr.f32.gmra.mxu0 %v3913
      %v4138 = vpop.f32.mrf.mxu0
      %v4139 = vadd.f32 %v3851, %v4138
      %v4140 = vpop.f32.mrf.mxu0
      %v4141 = vadd.f32 %v3855, %v4140
      %4142 = vmatprep.mubr.f32.mxu0 0.0
      %4143 = vmatmul.mubr.f32.gmra.mxu0 %v3916
      %v4144 = vpop.f32.mrf.mxu0
      %v4145 = vadd.f32 %v3851, %v4144
      %v4146 = vpop.f32.mrf.mxu0
      %v4147 = vadd.f32 %v3855, %v4146
      %4148 = vdwg.mxu0
      %4149 = vmatprep.subr.mxu0 0.0
      %4150 = vmatpush1.msra.mxu0 0.0
      %4151 = vmatprep.subr.mxu0 0.0
      %4152 = vmatpush1.msra.mxu0 0.0
      %4153 = vmatprep.subr.mxu0 0.0
      %4154 = vmatpush1.msra.mxu0 0.0
      %4155 = vmatprep.subr.mxu0 0.0
      %4156 = vmatpush1.msra.mxu0 0.0
      %4157 = vmatprep.subr.mxu0 0.0
      %4158 = vmatpush1.msra.mxu0 0.0
      %4159 = vmatprep.subr.mxu0 0.0
      %4160 = vmatpush1.msra.mxu0 0.0
      %4161 = vmatprep.subr.mxu0 0.0
      %4162 = vmatpush1.msra.mxu0 0.0
      %4163 = vmatprep.subr.mxu0 0.0
      %4164 = vmatpush1.msra.mxu0 0.0
      %4165 = vmatprep.subr.mxu0 0.0
      %4166 = vmatpush1.msra.mxu0 0.0
      %4167 = vmatprep.subr.mxu0 0.0
      %4168 = vmatpush1.msra.mxu0 0.0
      %4169 = vmatprep.subr.mxu0 0.0
      %4170 = vmatpush1.msra.mxu0 0.0
      %4171 = vmatprep.subr.mxu0 0.0
      %4172 = vmatpush1.msra.mxu0 0.0
      %4173 = vmatprep.subr.mxu0 %v3819
      %4174 = vmatpush1.msra.mxu0 %v3818
      %4175 = vmatprep.subr.mxu0 %v3803
      %4176 = vmatpush1.msra.mxu0 %v3802
      %4177 = vmatprep.subr.mxu0 %v3787
      %4178 = vmatpush1.msra.mxu0 %v3786
      %4179 = vmatprep.subr.mxu0 %v3771
      %4180 = vmatpush1.msra.mxu0 %v3770
      %4181 = vmatprep.subr.mxu0 0.0
      %4182 = vmatpush2.msra.mxu0 0.0
      %4183 = vmatprep.subr.mxu0 0.0
      %4184 = vmatpush2.msra.mxu0 0.0
      %4185 = vmatprep.subr.mxu0 0.0
      %4186 = vmatpush2.msra.mxu0 0.0
      %4187 = vmatprep.subr.mxu0 0.0
      %4188 = vmatpush2.msra.mxu0 0.0
      %4189 = vmatprep.subr.mxu0 0.0
      %4190 = vmatpush2.msra.mxu0 0.0
      %4191 = vmatprep.subr.mxu0 0.0
      %4192 = vmatpush2.msra.mxu0 0.0
      %4193 = vmatprep.subr.mxu0 0.0
      %4194 = vmatpush2.msra.mxu0 0.0
      %4195 = vmatprep.subr.mxu0 0.0
      %4196 = vmatpush2.msra.mxu0 0.0
      %4197 = vmatprep.subr.mxu0 0.0
      %4198 = vmatpush2.msra.mxu0 0.0
      %4199 = vmatprep.subr.mxu0 0.0
      %4200 = vmatpush2.msra.mxu0 0.0
      %4201 = vmatprep.subr.mxu0 0.0
      %4202 = vmatpush2.msra.mxu0 0.0
      %4203 = vmatprep.subr.mxu0 0.0
      %4204 = vmatpush2.msra.mxu0 0.0
      %4205 = vmatprep.subr.mxu0 0.0
      %4206 = vmatpush2.msra.mxu0 0.0
      %4207 = vmatprep.subr.mxu0 0.0
      %4208 = vmatpush2.msra.mxu0 0.0
      %4209 = vmatprep.subr.mxu0 0.0
      %4210 = vmatpush2.msra.mxu0 0.0
      %4211 = vmatprep.subr.mxu0 0.0
      %4212 = vmatpush2.msra.mxu0 0.0
      %4213 = vmatprep.mubr.f32.mxu0 0.0
      %4214 = vmatmul.mubr.f32.gmra.mxu0 %v3913
      %v4215 = vpop.f32.mrf.mxu0
      %v4216 = vadd.f32 %v3859, %v4215
      %v4217 = vpop.f32.mrf.mxu0
      %v4218 = vadd.f32 %v3863, %v4217
      %4219 = vmatprep.mubr.f32.mxu0 0.0
      %4220 = vmatmul.mubr.f32.gmra.mxu0 %v3916
      %v4221 = vpop.f32.mrf.mxu0
      %v4222 = vadd.f32 %v3859, %v4221
      %v4223 = vpop.f32.mrf.mxu0
      %v4224 = vadd.f32 %v3863, %v4223
      %4225 = vdwg.mxu0
      %4226 = vmatprep.subr.mxu0 0.0
      %4227 = vmatpush1.msra.mxu0 0.0
      %4228 = vmatprep.subr.mxu0 0.0
      %4229 = vmatpush1.msra.mxu0 0.0
      %4230 = vmatprep.subr.mxu0 0.0
      %4231 = vmatpush1.msra.mxu0 0.0
      %4232 = vmatprep.subr.mxu0 0.0
      %4233 = vmatpush1.msra.mxu0 0.0
      %4234 = vmatprep.subr.mxu0 0.0
      %4235 = vmatpush1.msra.mxu0 0.0
      %4236 = vmatprep.subr.mxu0 0.0
      %4237 = vmatpush1.msra.mxu0 0.0
      %4238 = vmatprep.subr.mxu0 0.0
      %4239 = vmatpush1.msra.mxu0 0.0
      %4240 = vmatprep.subr.mxu0 0.0
      %4241 = vmatpush1.msra.mxu0 0.0
      %4242 = vmatprep.subr.mxu0 0.0
      %4243 = vmatpush1.msra.mxu0 0.0
      %4244 = vmatprep.subr.mxu0 0.0
      %4245 = vmatpush1.msra.mxu0 0.0
      %4246 = vmatprep.subr.mxu0 0.0
      %4247 = vmatpush1.msra.mxu0 0.0
      %4248 = vmatprep.subr.mxu0 0.0
      %4249 = vmatpush1.msra.mxu0 0.0
      %4250 = vmatprep.subr.mxu0 %v3821
      %4251 = vmatpush1.msra.mxu0 %v3820
      %4252 = vmatprep.subr.mxu0 %v3805
      %4253 = vmatpush1.msra.mxu0 %v3804
      %4254 = vmatprep.subr.mxu0 %v3789
      %4255 = vmatpush1.msra.mxu0 %v3788
      %4256 = vmatprep.subr.mxu0 %v3773
      %4257 = vmatpush1.msra.mxu0 %v3772
      %4258 = vmatprep.subr.mxu0 0.0
      %4259 = vmatpush2.msra.mxu0 0.0
      %4260 = vmatprep.subr.mxu0 0.0
      %4261 = vmatpush2.msra.mxu0 0.0
      %4262 = vmatprep.subr.mxu0 0.0
      %4263 = vmatpush2.msra.mxu0 0.0
      %4264 = vmatprep.subr.mxu0 0.0
      %4265 = vmatpush2.msra.mxu0 0.0
      %4266 = vmatprep.subr.mxu0 0.0
      %4267 = vmatpush2.msra.mxu0 0.0
      %4268 = vmatprep.subr.mxu0 0.0
      %4269 = vmatpush2.msra.mxu0 0.0
      %4270 = vmatprep.subr.mxu0 0.0
      %4271 = vmatpush2.msra.mxu0 0.0
      %4272 = vmatprep.subr.mxu0 0.0
      %4273 = vmatpush2.msra.mxu0 0.0
      %4274 = vmatprep.subr.mxu0 0.0
      %4275 = vmatpush2.msra.mxu0 0.0
      %4276 = vmatprep.subr.mxu0 0.0
      %4277 = vmatpush2.msra.mxu0 0.0
      %4278 = vmatprep.subr.mxu0 0.0
      %4279 = vmatpush2.msra.mxu0 0.0
      %4280 = vmatprep.subr.mxu0 0.0
      %4281 = vmatpush2.msra.mxu0 0.0
      %4282 = vmatprep.subr.mxu0 0.0
      %4283 = vmatpush2.msra.mxu0 0.0
      %4284 = vmatprep.subr.mxu0 0.0
      %4285 = vmatpush2.msra.mxu0 0.0
      %4286 = vmatprep.subr.mxu0 0.0
      %4287 = vmatpush2.msra.mxu0 0.0
      %4288 = vmatprep.subr.mxu0 0.0
      %4289 = vmatpush2.msra.mxu0 0.0
      %4290 = vmatprep.mubr.f32.mxu0 0.0
      %4291 = vmatmul.mubr.f32.gmra.mxu0 %v3913
      %v4292 = vpop.f32.mrf.mxu0
      %v4293 = vadd.f32 %v3867, %v4292
      %v4294 = vpop.f32.mrf.mxu0
      %v4295 = vadd.f32 %v3871, %v4294
      %4296 = vmatprep.mubr.f32.mxu0 0.0
      %4297 = vmatmul.mubr.f32.gmra.mxu0 %v3916
      %v4298 = vpop.f32.mrf.mxu0
      %v4299 = vadd.f32 %v3867, %v4298
      %v4300 = vpop.f32.mrf.mxu0
      %v4301 = vadd.f32 %v3871, %v4300
      %4302 = vdwg.mxu0
      %4303 = vmatprep.subr.mxu0 0.0
      %4304 = vmatpush1.msra.mxu0 0.0
      %4305 = vmatprep.subr.mxu0 0.0
      %4306 = vmatpush1.msra.mxu0 0.0
      %4307 = vmatprep.subr.mxu0 0.0
      %4308 = vmatpush1.msra.mxu0 0.0
      %4309 = vmatprep.subr.mxu0 0.0
      %4310 = vmatpush1.msra.mxu0 0.0
      %4311 = vmatprep.subr.mxu0 0.0
      %4312 = vmatpush1.msra.mxu0 0.0
      %4313 = vmatprep.subr.mxu0 0.0
      %4314 = vmatpush1.msra.mxu0 0.0
      %4315 = vmatprep.subr.mxu0 0.0
      %4316 = vmatpush1.msra.mxu0 0.0
      %4317 = vmatprep.subr.mxu0 0.0
      %4318 = vmatpush1.msra.mxu0 0.0
      %4319 = vmatprep.subr.mxu0 0.0
      %4320 = vmatpush1.msra.mxu0 0.0
      %4321 = vmatprep.subr.mxu0 0.0
      %4322 = vmatpush1.msra.mxu0 0.0
      %4323 = vmatprep.subr.mxu0 0.0
      %4324 = vmatpush1.msra.mxu0 0.0
      %4325 = vmatprep.subr.mxu0 0.0
      %4326 = vmatpush1.msra.mxu0 0.0
      %4327 = vmatprep.subr.mxu0 %v3823
      %4328 = vmatpush1.msra.mxu0 %v3822
      %4329 = vmatprep.subr.mxu0 %v3807
      %4330 = vmatpush1.msra.mxu0 %v3806
      %4331 = vmatprep.subr.mxu0 %v3791
      %4332 = vmatpush1.msra.mxu0 %v3790
      %4333 = vmatprep.subr.mxu0 %v3775
      %4334 = vmatpush1.msra.mxu0 %v3774
      %4335 = vmatprep.subr.mxu0 0.0
      %4336 = vmatpush2.msra.mxu0 0.0
      %4337 = vmatprep.subr.mxu0 0.0
      %4338 = vmatpush2.msra.mxu0 0.0
      %4339 = vmatprep.subr.mxu0 0.0
      %4340 = vmatpush2.msra.mxu0 0.0
      %4341 = vmatprep.subr.mxu0 0.0
      %4342 = vmatpush2.msra.mxu0 0.0
      %4343 = vmatprep.subr.mxu0 0.0
      %4344 = vmatpush2.msra.mxu0 0.0
      %4345 = vmatprep.subr.mxu0 0.0
      %4346 = vmatpush2.msra.mxu0 0.0
      %4347 = vmatprep.subr.mxu0 0.0
      %4348 = vmatpush2.msra.mxu0 0.0
      %4349 = vmatprep.subr.mxu0 0.0
      %4350 = vmatpush2.msra.mxu0 0.0
      %4351 = vmatprep.subr.mxu0 0.0
      %4352 = vmatpush2.msra.mxu0 0.0
      %4353 = vmatprep.subr.mxu0 0.0
      %4354 = vmatpush2.msra.mxu0 0.0
      %4355 = vmatprep.subr.mxu0 0.0
      %4356 = vmatpush2.msra.mxu0 0.0
      %4357 = vmatprep.subr.mxu0 0.0
      %4358 = vmatpush2.msra.mxu0 0.0
      %4359 = vmatprep.subr.mxu0 0.0
      %4360 = vmatpush2.msra.mxu0 0.0
      %4361 = vmatprep.subr.mxu0 0.0
      %4362 = vmatpush2.msra.mxu0 0.0
      %4363 = vmatprep.subr.mxu0 0.0
      %4364 = vmatpush2.msra.mxu0 0.0
      %4365 = vmatprep.subr.mxu0 0.0
      %4366 = vmatpush2.msra.mxu0 0.0
      %4367 = vmatprep.mubr.f32.mxu0 0.0
      %4368 = vmatmul.mubr.f32.gmra.mxu0 %v3913
      %v4369 = vpop.f32.mrf.mxu0
      %v4370 = vadd.f32 %v3875, %v4369
      %v4371 = vpop.f32.mrf.mxu0
      %v4372 = vadd.f32 %v3879, %v4371
      %4373 = vmatprep.mubr.f32.mxu0 0.0
      %4374 = vmatmul.mubr.f32.gmra.mxu0 %v3916
      %v4375 = vpop.f32.mrf.mxu0
      %v4376 = vadd.f32 %v3875, %v4375
      %v4377 = vpop.f32.mrf.mxu0
      %v4378 = vadd.f32 %v3879, %v4377
      %4379 = vdwg.mxu0
      %4380 = vmatprep.subr.mxu0 0.0
      %4381 = vmatpush1.msra.mxu0 0.0
      %4382 = vmatprep.subr.mxu0 0.0
      %4383 = vmatpush1.msra.mxu0 0.0
      %4384 = vmatprep.subr.mxu0 0.0
      %4385 = vmatpush1.msra.mxu0 0.0
      %4386 = vmatprep.subr.mxu0 0.0
      %4387 = vmatpush1.msra.mxu0 0.0
      %4388 = vmatprep.subr.mxu0 0.0
      %4389 = vmatpush1.msra.mxu0 0.0
      %4390 = vmatprep.subr.mxu0 0.0
      %4391 = vmatpush1.msra.mxu0 0.0
      %4392 = vmatprep.subr.mxu0 0.0
      %4393 = vmatpush1.msra.mxu0 0.0
      %4394 = vmatprep.subr.mxu0 0.0
      %4395 = vmatpush1.msra.mxu0 0.0
      %4396 = vmatprep.subr.mxu0 0.0
      %4397 = vmatpush1.msra.mxu0 0.0
      %4398 = vmatprep.subr.mxu0 0.0
      %4399 = vmatpush1.msra.mxu0 0.0
      %4400 = vmatprep.subr.mxu0 0.0
      %4401 = vmatpush1.msra.mxu0 0.0
      %4402 = vmatprep.subr.mxu0 0.0
      %4403 = vmatpush1.msra.mxu0 0.0
      %4404 = vmatprep.subr.mxu0 %v3825
      %4405 = vmatpush1.msra.mxu0 %v3824
      %4406 = vmatprep.subr.mxu0 %v3809
      %4407 = vmatpush1.msra.mxu0 %v3808
      %4408 = vmatprep.subr.mxu0 %v3793
      %4409 = vmatpush1.msra.mxu0 %v3792
      %4410 = vmatprep.subr.mxu0 %v3777
      %4411 = vmatpush1.msra.mxu0 %v3776
      %4412 = vmatprep.subr.mxu0 0.0
      %4413 = vmatpush2.msra.mxu0 0.0
      %4414 = vmatprep.subr.mxu0 0.0
      %4415 = vmatpush2.msra.mxu0 0.0
      %4416 = vmatprep.subr.mxu0 0.0
      %4417 = vmatpush2.msra.mxu0 0.0
      %4418 = vmatprep.subr.mxu0 0.0
      %4419 = vmatpush2.msra.mxu0 0.0
      %4420 = vmatprep.subr.mxu0 0.0
      %4421 = vmatpush2.msra.mxu0 0.0
      %4422 = vmatprep.subr.mxu0 0.0
      %4423 = vmatpush2.msra.mxu0 0.0
      %4424 = vmatprep.subr.mxu0 0.0
      %4425 = vmatpush2.msra.mxu0 0.0
      %4426 = vmatprep.subr.mxu0 0.0
      %4427 = vmatpush2.msra.mxu0 0.0
      %4428 = vmatprep.subr.mxu0 0.0
      %4429 = vmatpush2.msra.mxu0 0.0
      %4430 = vmatprep.subr.mxu0 0.0
      %4431 = vmatpush2.msra.mxu0 0.0
      %4432 = vmatprep.subr.mxu0 0.0
      %4433 = vmatpush2.msra.mxu0 0.0
      %4434 = vmatprep.subr.mxu0 0.0
      %4435 = vmatpush2.msra.mxu0 0.0
      %4436 = vmatprep.subr.mxu0 0.0
      %4437 = vmatpush2.msra.mxu0 0.0
      %4438 = vmatprep.subr.mxu0 0.0
      %4439 = vmatpush2.msra.mxu0 0.0
      %4440 = vmatprep.subr.mxu0 0.0
      %4441 = vmatpush2.msra.mxu0 0.0
      %4442 = vmatprep.subr.mxu0 0.0
      %4443 = vmatpush2.msra.mxu0 0.0
      %4444 = vmatprep.mubr.f32.mxu0 0.0
      %4445 = vmatmul.mubr.f32.gmra.mxu0 %v3913
      %v4446 = vpop.f32.mrf.mxu0
      %v4447 = vadd.f32 %v3883, %v4446
      %v4448 = vpop.f32.mrf.mxu0
      %v4449 = vadd.f32 %v3887, %v4448
      %4450 = vmatprep.mubr.f32.mxu0 0.0
      %4451 = vmatmul.mubr.f32.gmra.mxu0 %v3916
      %v4452 = vpop.f32.mrf.mxu0
      %v4453 = vadd.f32 %v3883, %v4452
      %v4454 = vpop.f32.mrf.mxu0
      %v4455 = vadd.f32 %v3887, %v4454
      %4456 = vdwg.mxu0
      %4457 = vmatprep.subr.mxu0 0.0
      %4458 = vmatpush1.msra.mxu0 0.0
      %4459 = vmatprep.subr.mxu0 0.0
      %4460 = vmatpush1.msra.mxu0 0.0
      %4461 = vmatprep.subr.mxu0 0.0
      %4462 = vmatpush1.msra.mxu0 0.0
      %4463 = vmatprep.subr.mxu0 0.0
      %4464 = vmatpush1.msra.mxu0 0.0
      %4465 = vmatprep.subr.mxu0 0.0
      %4466 = vmatpush1.msra.mxu0 0.0
      %4467 = vmatprep.subr.mxu0 0.0
      %4468 = vmatpush1.msra.mxu0 0.0
      %4469 = vmatprep.subr.mxu0 0.0
      %4470 = vmatpush1.msra.mxu0 0.0
      %4471 = vmatprep.subr.mxu0 0.0
      %4472 = vmatpush1.msra.mxu0 0.0
      %4473 = vmatprep.subr.mxu0 0.0
      %4474 = vmatpush1.msra.mxu0 0.0
      %4475 = vmatprep.subr.mxu0 0.0
      %4476 = vmatpush1.msra.mxu0 0.0
      %4477 = vmatprep.subr.mxu0 0.0
      %4478 = vmatpush1.msra.mxu0 0.0
      %4479 = vmatprep.subr.mxu0 0.0
      %4480 = vmatpush1.msra.mxu0 0.0
      %4481 = vmatprep.subr.mxu0 %v3827
      %4482 = vmatpush1.msra.mxu0 %v3826
      %4483 = vmatprep.subr.mxu0 %v3811
      %4484 = vmatpush1.msra.mxu0 %v3810
      %4485 = vmatprep.subr.mxu0 %v3795
      %4486 = vmatpush1.msra.mxu0 %v3794
      %4487 = vmatprep.subr.mxu0 %v3779
      %4488 = vmatpush1.msra.mxu0 %v3778
      %4489 = vmatprep.subr.mxu0 0.0
      %4490 = vmatpush2.msra.mxu0 0.0
      %4491 = vmatprep.subr.mxu0 0.0
      %4492 = vmatpush2.msra.mxu0 0.0
      %4493 = vmatprep.subr.mxu0 0.0
      %4494 = vmatpush2.msra.mxu0 0.0
      %4495 = vmatprep.subr.mxu0 0.0
      %4496 = vmatpush2.msra.mxu0 0.0
      %4497 = vmatprep.subr.mxu0 0.0
      %4498 = vmatpush2.msra.mxu0 0.0
      %4499 = vmatprep.subr.mxu0 0.0
      %4500 = vmatpush2.msra.mxu0 0.0
      %4501 = vmatprep.subr.mxu0 0.0
      %4502 = vmatpush2.msra.mxu0 0.0
      %4503 = vmatprep.subr.mxu0 0.0
      %4504 = vmatpush2.msra.mxu0 0.0
      %4505 = vmatprep.subr.mxu0 0.0
      %4506 = vmatpush2.msra.mxu0 0.0
      %4507 = vmatprep.subr.mxu0 0.0
      %4508 = vmatpush2.msra.mxu0 0.0
      %4509 = vmatprep.subr.mxu0 0.0
      %4510 = vmatpush2.msra.mxu0 0.0
      %4511 = vmatprep.subr.mxu0 0.0
      %4512 = vmatpush2.msra.mxu0 0.0
      %4513 = vmatprep.subr.mxu0 0.0
      %4514 = vmatpush2.msra.mxu0 0.0
      %4515 = vmatprep.subr.mxu0 0.0
      %4516 = vmatpush2.msra.mxu0 0.0
      %4517 = vmatprep.subr.mxu0 0.0
      %4518 = vmatpush2.msra.mxu0 0.0
      %4519 = vmatprep.subr.mxu0 0.0
      %4520 = vmatpush2.msra.mxu0 0.0
      %4521 = vmatprep.mubr.f32.mxu0 0.0
      %4522 = vmatmul.mubr.f32.gmra.mxu0 %v3913
      %v4523 = vpop.f32.mrf.mxu0
      %v4524 = vadd.f32 %v3891, %v4523
      %v4525 = vpop.f32.mrf.mxu0
      %v4526 = vadd.f32 %v3895, %v4525
      %4527 = vmatprep.mubr.f32.mxu0 0.0
      %4528 = vmatmul.mubr.f32.gmra.mxu0 %v3916
      %v4529 = vpop.f32.mrf.mxu0
      %v4530 = vadd.f32 %v3891, %v4529
      %v4531 = vpop.f32.mrf.mxu0
      %v4532 = vadd.f32 %v3895, %v4531
      %4533 = vdwg.mxu0
      %v4534 = vmax.f32 %v3985, 0.0
      %v4535 = vmax.f32 %v3987, 0.0
      %v4536 = vmax.f32 %v4062, 0.0
      %v4537 = vmax.f32 %v4064, 0.0
      %v4538 = vmax.f32 %v4139, 0.0
      %v4539 = vmax.f32 %v4141, 0.0
      %v4540 = vmax.f32 %v4216, 0.0
      %v4541 = vmax.f32 %v4218, 0.0
      %v4542 = vmax.f32 %v4293, 0.0
      %v4543 = vmax.f32 %v4295, 0.0
      %v4544 = vmax.f32 %v4370, 0.0
      %v4545 = vmax.f32 %v4372, 0.0
      %v4546 = vmax.f32 %v4447, 0.0
      %v4547 = vmax.f32 %v4449, 0.0
      %v4548 = vmax.f32 %v4524, 0.0
      %v4549 = vmax.f32 %v4526, 0.0
      %v4550 = vmax.f32 %v3991, 0.0
      %v4551 = vmax.f32 %v3993, 0.0
      %v4552 = vmax.f32 %v4068, 0.0
      %v4553 = vmax.f32 %v4070, 0.0
      %v4554 = vmax.f32 %v4145, 0.0
      %v4555 = vmax.f32 %v4147, 0.0
      %v4556 = vmax.f32 %v4222, 0.0
      %v4557 = vmax.f32 %v4224, 0.0
      %v4558 = vmax.f32 %v4299, 0.0
      %v4559 = vmax.f32 %v4301, 0.0
      %v4560 = vmax.f32 %v4376, 0.0
      %v4561 = vmax.f32 %v4378, 0.0
      %v4562 = vmax.f32 %v4453, 0.0
      %v4563 = vmax.f32 %v4455, 0.0
      %v4564 = vmax.f32 %v4530, 0.0
      %v4565 = vmax.f32 %v4532, 0.0
      %v4566 = vld [vmem:[%s913] sm:$0xff]
      %v4567 = vld [vmem:[%s913 + $0x8] sm:$0xff]
      %v4568 = vld [vmem:[%s913 + $0x10] sm:$0xff]
      %v4569 = vld [vmem:[%s913 + $0x18] sm:$0xff]
      %v4570 = vld [vmem:[%s913 + $0x20] sm:$0xff]
      %v4571 = vld [vmem:[%s913 + $0x28] sm:$0xff]
      %v4572 = vld [vmem:[%s913 + $0x30] sm:$0xff]
      %v4573 = vld [vmem:[%s913 + $0x38] sm:$0xff]
      %v4574 = vld [vmem:[%s913 + $0x40] sm:$0xff]
      %v4575 = vld [vmem:[%s913 + $0x48] sm:$0xff]
      %v4576 = vld [vmem:[%s913 + $0x50] sm:$0xff]
      %v4577 = vld [vmem:[%s913 + $0x58] sm:$0xff]
      %v4578 = vld [vmem:[%s913 + $0x60] sm:$0xff]
      %v4579 = vld [vmem:[%s913 + $0x68] sm:$0xff]
      %v4580 = vld [vmem:[%s913 + $0x70] sm:$0xff]
      %v4581 = vld [vmem:[%s913 + $0x78] sm:$0xff]
      %v4582 = vld [vmem:[%s913 + $0x80] sm:$0xff]
      %v4583 = vld [vmem:[%s913 + $0x88] sm:$0xff]
      %v4584 = vld [vmem:[%s913 + $0x90] sm:$0xff]
      %v4585 = vld [vmem:[%s913 + $0x98] sm:$0xff]
      %v4586 = vld [vmem:[%s913 + $0xa0] sm:$0xff]
      %v4587 = vld [vmem:[%s913 + $0xa8] sm:$0xff]
      %v4588 = vld [vmem:[%s913 + $0xb0] sm:$0xff]
      %v4589 = vld [vmem:[%s913 + $0xb8] sm:$0xff]
      %v4590 = vld [vmem:[%s913 + $0xc0] sm:$0xff]
      %v4591 = vld [vmem:[%s913 + $0xc8] sm:$0xff]
      %v4592 = vld [vmem:[%s913 + $0xd0] sm:$0xff]
      %v4593 = vld [vmem:[%s913 + $0xd8] sm:$0xff]
      %v4594 = vld [vmem:[%s913 + $0xe0] sm:$0xff]
      %v4595 = vld [vmem:[%s913 + $0xe8] sm:$0xff]
      %v4596 = vld [vmem:[%s913 + $0xf0] sm:$0xff]
      %v4597 = vld [vmem:[%s913 + $0xf8] sm:$0xff]
      %v4598 = vld [vmem:[%s913 + $0x100] sm:$0xff]
      %v4599 = vld [vmem:[%s913 + $0x108] sm:$0xff]
      %v4600 = vld [vmem:[%s913 + $0x110] sm:$0xff]
      %v4601 = vld [vmem:[%s913 + $0x118] sm:$0xff]
      %v4602 = vld [vmem:[%s913 + $0x120] sm:$0xff]
      %v4603 = vld [vmem:[%s913 + $0x128] sm:$0xff]
      %v4604 = vld [vmem:[%s913 + $0x130] sm:$0xff]
      %v4605 = vld [vmem:[%s913 + $0x138] sm:$0xff]
      %v4606 = vld [vmem:[%s913 + $0x140] sm:$0xff]
      %v4607 = vld [vmem:[%s913 + $0x148] sm:$0xff]
      %v4608 = vld [vmem:[%s913 + $0x150] sm:$0xff]
      %v4609 = vld [vmem:[%s913 + $0x158] sm:$0xff]
      %v4610 = vld [vmem:[%s913 + $0x160] sm:$0xff]
      %v4611 = vld [vmem:[%s913 + $0x168] sm:$0xff]
      %v4612 = vld [vmem:[%s913 + $0x170] sm:$0xff]
      %v4613 = vld [vmem:[%s913 + $0x178] sm:$0xff]
      %v4614 = vld [vmem:[%s913 + $0x180] sm:$0xff]
      %v4615 = vld [vmem:[%s913 + $0x188] sm:$0xff]
      %v4616 = vld [vmem:[%s913 + $0x190] sm:$0xff]
      %v4617 = vld [vmem:[%s913 + $0x198] sm:$0xff]
      %v4618 = vld [vmem:[%s913 + $0x1a0] sm:$0xff]
      %v4619 = vld [vmem:[%s913 + $0x1a8] sm:$0xff]
      %v4620 = vld [vmem:[%s913 + $0x1b0] sm:$0xff]
      %v4621 = vld [vmem:[%s913 + $0x1b8] sm:$0xff]
      %v4622 = vld [vmem:[%s913 + $0x1c0] sm:$0xff]
      %v4623 = vld [vmem:[%s913 + $0x1c8] sm:$0xff]
      %v4624 = vld [vmem:[%s913 + $0x1d0] sm:$0xff]
      %v4625 = vld [vmem:[%s913 + $0x1d8] sm:$0xff]
      %v4626 = vld [vmem:[%s913 + $0x1e0] sm:$0xff]
      %v4627 = vld [vmem:[%s913 + $0x1e8] sm:$0xff]
      %v4628 = vld [vmem:[%s913 + $0x1f0] sm:$0xff]
      %v4629 = vld [vmem:[%s913 + $0x1f8] sm:$0xff]
      %v4630 = vld [vmem:[%s913 + $0x200] sm:$0xff]
      %v4631 = vld [vmem:[%s913 + $0x208] sm:$0xff]
      %v4632 = vld [vmem:[%s913 + $0x210] sm:$0xff]
      %v4633 = vld [vmem:[%s913 + $0x218] sm:$0xff]
      %v4634 = vld [vmem:[%s913 + $0x220] sm:$0xff]
      %v4635 = vld [vmem:[%s913 + $0x228] sm:$0xff]
      %v4636 = vld [vmem:[%s913 + $0x230] sm:$0xff]
      %v4637 = vld [vmem:[%s913 + $0x238] sm:$0xff]
      %v4638 = vld [vmem:[%s913 + $0x240] sm:$0xff]
      %v4639 = vld [vmem:[%s913 + $0x248] sm:$0xff]
      %v4640 = vld [vmem:[%s913 + $0x250] sm:$0xff]
      %v4641 = vld [vmem:[%s913 + $0x258] sm:$0xff]
      %v4642 = vld [vmem:[%s913 + $0x260] sm:$0xff]
      %v4643 = vld [vmem:[%s913 + $0x268] sm:$0xff]
      %v4644 = vld [vmem:[%s913 + $0x270] sm:$0xff]
      %v4645 = vld [vmem:[%s913 + $0x278] sm:$0xff]
      %v4646 = vld [vmem:[%s913 + $0x280] sm:$0xff]
      %v4647 = vld [vmem:[%s913 + $0x288] sm:$0xff]
      %v4648 = vld [vmem:[%s913 + $0x290] sm:$0xff]
      %v4649 = vld [vmem:[%s913 + $0x298] sm:$0xff]
      %v4650 = vld [vmem:[%s913 + $0x2a0] sm:$0xff]
      %v4651 = vld [vmem:[%s913 + $0x2a8] sm:$0xff]
      %v4652 = vld [vmem:[%s913 + $0x2b0] sm:$0xff]
      %v4653 = vld [vmem:[%s913 + $0x2b8] sm:$0xff]
      %v4654 = vld [vmem:[%s913 + $0x2c0] sm:$0xff]
      %v4655 = vld [vmem:[%s913 + $0x2c8] sm:$0xff]
      %v4656 = vld [vmem:[%s913 + $0x2d0] sm:$0xff]
      %v4657 = vld [vmem:[%s913 + $0x2d8] sm:$0xff]
      %v4658 = vld [vmem:[%s913 + $0x2e0] sm:$0xff]
      %v4659 = vld [vmem:[%s913 + $0x2e8] sm:$0xff]
      %v4660 = vld [vmem:[%s913 + $0x2f0] sm:$0xff]
      %v4661 = vld [vmem:[%s913 + $0x2f8] sm:$0xff]
      %v4662 = vld [vmem:[%s913 + $0x300] sm:$0xff]
      %v4663 = vld [vmem:[%s913 + $0x308] sm:$0xff]
      %v4664 = vld [vmem:[%s913 + $0x310] sm:$0xff]
      %v4665 = vld [vmem:[%s913 + $0x318] sm:$0xff]
      %v4666 = vld [vmem:[%s913 + $0x320] sm:$0xff]
      %v4667 = vld [vmem:[%s913 + $0x328] sm:$0xff]
      %v4668 = vld [vmem:[%s913 + $0x330] sm:$0xff]
      %v4669 = vld [vmem:[%s913 + $0x338] sm:$0xff]
      %v4670 = vld [vmem:[%s913 + $0x340] sm:$0xff]
      %v4671 = vld [vmem:[%s913 + $0x348] sm:$0xff]
      %v4672 = vld [vmem:[%s913 + $0x350] sm:$0xff]
      %v4673 = vld [vmem:[%s913 + $0x358] sm:$0xff]
      %v4674 = vld [vmem:[%s913 + $0x360] sm:$0xff]
      %v4675 = vld [vmem:[%s913 + $0x368] sm:$0xff]
      %v4676 = vld [vmem:[%s913 + $0x370] sm:$0xff]
      %v4677 = vld [vmem:[%s913 + $0x378] sm:$0xff]
      %v4678 = vld [vmem:[%s913 + $0x380] sm:$0xff]
      %v4679 = vld [vmem:[%s913 + $0x388] sm:$0xff]
      %v4680 = vld [vmem:[%s913 + $0x390] sm:$0xff]
      %v4681 = vld [vmem:[%s913 + $0x398] sm:$0xff]
      %v4682 = vld [vmem:[%s913 + $0x3a0] sm:$0xff]
      %v4683 = vld [vmem:[%s913 + $0x3a8] sm:$0xff]
      %v4684 = vld [vmem:[%s913 + $0x3b0] sm:$0xff]
      %v4685 = vld [vmem:[%s913 + $0x3b8] sm:$0xff]
      %v4686 = vld [vmem:[%s913 + $0x3c0] sm:$0xff]
      %v4687 = vld [vmem:[%s913 + $0x3c8] sm:$0xff]
      %v4688 = vld [vmem:[%s913 + $0x3d0] sm:$0xff]
      %v4689 = vld [vmem:[%s913 + $0x3d8] sm:$0xff]
      %v4690 = vld [vmem:[%s913 + $0x3e0] sm:$0xff]
      %v4691 = vld [vmem:[%s913 + $0x3e8] sm:$0xff]
      %v4692 = vld [vmem:[%s913 + $0x3f0] sm:$0xff]
      %v4693 = vld [vmem:[%s913 + $0x3f8] sm:$0xff]
      %v4694 = vld [vmem:[%s913 + $0x400] sm:$0xff]
      %v4695 = vld [vmem:[%s913 + $0x408] sm:$0xff]
      %v4696 = vld [vmem:[%s913 + $0x410] sm:$0xff]
      %v4697 = vld [vmem:[%s913 + $0x418] sm:$0xff]
      %v4698 = vld [vmem:[%s913 + $0x420] sm:$0xff]
      %v4699 = vld [vmem:[%s913 + $0x428] sm:$0xff]
      %v4700 = vld [vmem:[%s913 + $0x430] sm:$0xff]
      %v4701 = vld [vmem:[%s913 + $0x438] sm:$0xff]
      %v4702 = vld [vmem:[%s913 + $0x440] sm:$0xff]
      %v4703 = vld [vmem:[%s913 + $0x448] sm:$0xff]
      %v4704 = vld [vmem:[%s913 + $0x450] sm:$0xff]
      %v4705 = vld [vmem:[%s913 + $0x458] sm:$0xff]
      %v4706 = vld [vmem:[%s913 + $0x460] sm:$0xff]
      %v4707 = vld [vmem:[%s913 + $0x468] sm:$0xff]
      %v4708 = vld [vmem:[%s913 + $0x470] sm:$0xff]
      %v4709 = vld [vmem:[%s913 + $0x478] sm:$0xff]
      %v4710 = vld [vmem:[%s913 + $0x480] sm:$0xff]
      %v4711 = vld [vmem:[%s913 + $0x488] sm:$0xff]
      %v4712 = vld [vmem:[%s913 + $0x490] sm:$0xff]
      %v4713 = vld [vmem:[%s913 + $0x498] sm:$0xff]
      %v4714 = vld [vmem:[%s913 + $0x4a0] sm:$0xff]
      %v4715 = vld [vmem:[%s913 + $0x4a8] sm:$0xff]
      %v4716 = vld [vmem:[%s913 + $0x4b0] sm:$0xff]
      %v4717 = vld [vmem:[%s913 + $0x4b8] sm:$0xff]
      %v4718 = vld [vmem:[%s913 + $0x4c0] sm:$0xff]
      %v4719 = vld [vmem:[%s913 + $0x4c8] sm:$0xff]
      %v4720 = vld [vmem:[%s913 + $0x4d0] sm:$0xff]
      %v4721 = vld [vmem:[%s913 + $0x4d8] sm:$0xff]
      %v4722 = vld [vmem:[%s913 + $0x4e0] sm:$0xff]
      %v4723 = vld [vmem:[%s913 + $0x4e8] sm:$0xff]
      %v4724 = vld [vmem:[%s913 + $0x4f0] sm:$0xff]
      %v4725 = vld [vmem:[%s913 + $0x4f8] sm:$0xff]
      %v4726 = vld [vmem:[%s913 + $0x500] sm:$0xff]
      %v4727 = vld [vmem:[%s913 + $0x508] sm:$0xff]
      %v4728 = vld [vmem:[%s913 + $0x510] sm:$0xff]
      %v4729 = vld [vmem:[%s913 + $0x518] sm:$0xff]
      %v4730 = vld [vmem:[%s913 + $0x520] sm:$0xff]
      %v4731 = vld [vmem:[%s913 + $0x528] sm:$0xff]
      %v4732 = vld [vmem:[%s913 + $0x530] sm:$0xff]
      %v4733 = vld [vmem:[%s913 + $0x538] sm:$0xff]
      %v4734 = vld [vmem:[%s913 + $0x540] sm:$0xff]
      %v4735 = vld [vmem:[%s913 + $0x548] sm:$0xff]
      %v4736 = vld [vmem:[%s913 + $0x550] sm:$0xff]
      %v4737 = vld [vmem:[%s913 + $0x558] sm:$0xff]
      %v4738 = vld [vmem:[%s913 + $0x560] sm:$0xff]
      %v4739 = vld [vmem:[%s913 + $0x568] sm:$0xff]
      %v4740 = vld [vmem:[%s913 + $0x570] sm:$0xff]
      %v4741 = vld [vmem:[%s913 + $0x578] sm:$0xff]
      %v4742 = vld [vmem:[%s913 + $0x580] sm:$0xff]
      %v4743 = vld [vmem:[%s913 + $0x588] sm:$0xff]
      %v4744 = vld [vmem:[%s913 + $0x590] sm:$0xff]
      %v4745 = vld [vmem:[%s913 + $0x598] sm:$0xff]
      %v4746 = vld [vmem:[%s913 + $0x5a0] sm:$0xff]
      %v4747 = vld [vmem:[%s913 + $0x5a8] sm:$0xff]
      %v4748 = vld [vmem:[%s913 + $0x5b0] sm:$0xff]
      %v4749 = vld [vmem:[%s913 + $0x5b8] sm:$0xff]
      %v4750 = vld [vmem:[%s913 + $0x5c0] sm:$0xff]
      %v4751 = vld [vmem:[%s913 + $0x5c8] sm:$0xff]
      %v4752 = vld [vmem:[%s913 + $0x5d0] sm:$0xff]
      %v4753 = vld [vmem:[%s913 + $0x5d8] sm:$0xff]
      %v4754 = vld [vmem:[%s913 + $0x5e0] sm:$0xff]
      %v4755 = vld [vmem:[%s913 + $0x5e8] sm:$0xff]
      %v4756 = vld [vmem:[%s913 + $0x5f0] sm:$0xff]
      %v4757 = vld [vmem:[%s913 + $0x5f8] sm:$0xff]
      %v4758 = vld [vmem:[%s913 + $0x600] sm:$0xff]
      %v4759 = vld [vmem:[%s913 + $0x608] sm:$0xff]
      %v4760 = vld [vmem:[%s913 + $0x610] sm:$0xff]
      %v4761 = vld [vmem:[%s913 + $0x618] sm:$0xff]
      %v4762 = vld [vmem:[%s913 + $0x620] sm:$0xff]
      %v4763 = vld [vmem:[%s913 + $0x628] sm:$0xff]
      %v4764 = vld [vmem:[%s913 + $0x630] sm:$0xff]
      %v4765 = vld [vmem:[%s913 + $0x638] sm:$0xff]
      %v4766 = vld [vmem:[%s913 + $0x640] sm:$0xff]
      %v4767 = vld [vmem:[%s913 + $0x648] sm:$0xff]
      %v4768 = vld [vmem:[%s913 + $0x650] sm:$0xff]
      %v4769 = vld [vmem:[%s913 + $0x658] sm:$0xff]
      %v4770 = vld [vmem:[%s913 + $0x660] sm:$0xff]
      %v4771 = vld [vmem:[%s913 + $0x668] sm:$0xff]
      %v4772 = vld [vmem:[%s913 + $0x670] sm:$0xff]
      %v4773 = vld [vmem:[%s913 + $0x678] sm:$0xff]
      %v4774 = vld [vmem:[%s913 + $0x680] sm:$0xff]
      %v4775 = vld [vmem:[%s913 + $0x688] sm:$0xff]
      %v4776 = vld [vmem:[%s913 + $0x690] sm:$0xff]
      %v4777 = vld [vmem:[%s913 + $0x698] sm:$0xff]
      %v4778 = vld [vmem:[%s913 + $0x6a0] sm:$0xff]
      %v4779 = vld [vmem:[%s913 + $0x6a8] sm:$0xff]
      %v4780 = vld [vmem:[%s913 + $0x6b0] sm:$0xff]
      %v4781 = vld [vmem:[%s913 + $0x6b8] sm:$0xff]
      %v4782 = vld [vmem:[%s913 + $0x6c0] sm:$0xff]
      %v4783 = vld [vmem:[%s913 + $0x6c8] sm:$0xff]
      %v4784 = vld [vmem:[%s913 + $0x6d0] sm:$0xff]
      %v4785 = vld [vmem:[%s913 + $0x6d8] sm:$0xff]
      %v4786 = vld [vmem:[%s913 + $0x6e0] sm:$0xff]
      %v4787 = vld [vmem:[%s913 + $0x6e8] sm:$0xff]
      %v4788 = vld [vmem:[%s913 + $0x6f0] sm:$0xff]
      %v4789 = vld [vmem:[%s913 + $0x6f8] sm:$0xff]
      %v4790 = vld [vmem:[%s913 + $0x700] sm:$0xff]
      %v4791 = vld [vmem:[%s913 + $0x708] sm:$0xff]
      %v4792 = vld [vmem:[%s913 + $0x710] sm:$0xff]
      %v4793 = vld [vmem:[%s913 + $0x718] sm:$0xff]
      %v4794 = vld [vmem:[%s913 + $0x720] sm:$0xff]
      %v4795 = vld [vmem:[%s913 + $0x728] sm:$0xff]
      %v4796 = vld [vmem:[%s913 + $0x730] sm:$0xff]
      %v4797 = vld [vmem:[%s913 + $0x738] sm:$0xff]
      %v4798 = vld [vmem:[%s913 + $0x740] sm:$0xff]
      %v4799 = vld [vmem:[%s913 + $0x748] sm:$0xff]
      %v4800 = vld [vmem:[%s913 + $0x750] sm:$0xff]
      %v4801 = vld [vmem:[%s913 + $0x758] sm:$0xff]
      %v4802 = vld [vmem:[%s913 + $0x760] sm:$0xff]
      %v4803 = vld [vmem:[%s913 + $0x768] sm:$0xff]
      %v4804 = vld [vmem:[%s913 + $0x770] sm:$0xff]
      %v4805 = vld [vmem:[%s913 + $0x778] sm:$0xff]
      %v4806 = vld [vmem:[%s913 + $0x780] sm:$0xff]
      %v4807 = vld [vmem:[%s913 + $0x788] sm:$0xff]
      %v4808 = vld [vmem:[%s913 + $0x790] sm:$0xff]
      %v4809 = vld [vmem:[%s913 + $0x798] sm:$0xff]
      %v4810 = vld [vmem:[%s913 + $0x7a0] sm:$0xff]
      %v4811 = vld [vmem:[%s913 + $0x7a8] sm:$0xff]
      %v4812 = vld [vmem:[%s913 + $0x7b0] sm:$0xff]
      %v4813 = vld [vmem:[%s913 + $0x7b8] sm:$0xff]
      %v4814 = vld [vmem:[%s913 + $0x7c0] sm:$0xff]
      %v4815 = vld [vmem:[%s913 + $0x7c8] sm:$0xff]
      %v4816 = vld [vmem:[%s913 + $0x7d0] sm:$0xff]
      %v4817 = vld [vmem:[%s913 + $0x7d8] sm:$0xff]
      %v4818 = vld [vmem:[%s913 + $0x7e0] sm:$0xff]
      %v4819 = vld [vmem:[%s913 + $0x7e8] sm:$0xff]
      %v4820 = vld [vmem:[%s913 + $0x7f0] sm:$0xff]
      %v4821 = vld [vmem:[%s913 + $0x7f8] sm:$0xff]
      %v4822 = vld [vmem:[%s916] sm:$0x1]
      %v4824 = vlaneseq
      %v4825 = vshrl.u32 %v4824, 7
      %v4826 = vsub.s32 0, %v4825
      %v4827 = vrot.slane %v4822, %v4826
      %4829 = vmatprep.subr.mxu0 0.0
      %4830 = vmatpush1.msra.mxu0 %v4581
      %4831 = vmatprep.subr.mxu0 0.0
      %4832 = vmatpush1.msra.mxu0 %v4580
      %4833 = vmatprep.subr.mxu0 0.0
      %4834 = vmatpush1.msra.mxu0 %v4579
      %4835 = vmatprep.subr.mxu0 0.0
      %4836 = vmatpush1.msra.mxu0 %v4578
      %4837 = vmatprep.subr.mxu0 0.0
      %4838 = vmatpush1.msra.mxu0 %v4577
      %4839 = vmatprep.subr.mxu0 0.0
      %4840 = vmatpush1.msra.mxu0 %v4576
      %4841 = vmatprep.subr.mxu0 0.0
      %4842 = vmatpush1.msra.mxu0 %v4575
      %4843 = vmatprep.subr.mxu0 0.0
      %4844 = vmatpush1.msra.mxu0 %v4574
      %4845 = vmatprep.subr.mxu0 0.0
      %4846 = vmatpush1.msra.mxu0 %v4573
      %4847 = vmatprep.subr.mxu0 0.0
      %4848 = vmatpush1.msra.mxu0 %v4572
      %4849 = vmatprep.subr.mxu0 0.0
      %4850 = vmatpush1.msra.mxu0 %v4571
      %4851 = vmatprep.subr.mxu0 0.0
      %4852 = vmatpush1.msra.mxu0 %v4570
      %4853 = vmatprep.subr.mxu0 0.0
      %4854 = vmatpush1.msra.mxu0 %v4569
      %4855 = vmatprep.subr.mxu0 0.0
      %4856 = vmatpush1.msra.mxu0 %v4568
      %4857 = vmatprep.subr.mxu0 0.0
      %4858 = vmatpush1.msra.mxu0 %v4567
      %4859 = vmatprep.subr.mxu0 0.0
      %4860 = vmatpush1.msra.mxu0 %v4566
      %4861 = vmatprep.subr.mxu0 0.0
      %4862 = vmatpush2.msra.mxu0 %v4597
      %4863 = vmatprep.subr.mxu0 0.0
      %4864 = vmatpush2.msra.mxu0 %v4596
      %4865 = vmatprep.subr.mxu0 0.0
      %4866 = vmatpush2.msra.mxu0 %v4595
      %4867 = vmatprep.subr.mxu0 0.0
      %4868 = vmatpush2.msra.mxu0 %v4594
      %4869 = vmatprep.subr.mxu0 0.0
      %4870 = vmatpush2.msra.mxu0 %v4593
      %4871 = vmatprep.subr.mxu0 0.0
      %4872 = vmatpush2.msra.mxu0 %v4592
      %4873 = vmatprep.subr.mxu0 0.0
      %4874 = vmatpush2.msra.mxu0 %v4591
      %4875 = vmatprep.subr.mxu0 0.0
      %4876 = vmatpush2.msra.mxu0 %v4590
      %4877 = vmatprep.subr.mxu0 0.0
      %4878 = vmatpush2.msra.mxu0 %v4589
      %4879 = vmatprep.subr.mxu0 0.0
      %4880 = vmatpush2.msra.mxu0 %v4588
      %4881 = vmatprep.subr.mxu0 0.0
      %4882 = vmatpush2.msra.mxu0 %v4587
      %4883 = vmatprep.subr.mxu0 0.0
      %4884 = vmatpush2.msra.mxu0 %v4586
      %4885 = vmatprep.subr.mxu0 0.0
      %4886 = vmatpush2.msra.mxu0 %v4585
      %4887 = vmatprep.subr.mxu0 0.0
      %4888 = vmatpush2.msra.mxu0 %v4584
      %4889 = vmatprep.subr.mxu0 0.0
      %4890 = vmatpush2.msra.mxu0 %v4583
      %4891 = vmatprep.subr.mxu0 0.0
      %4892 = vmatpush2.msra.mxu0 %v4582
      %4893 = vmatprep.mubr.f32.mxu0 %v4535
      %4894 = vmatmul.mubr.f32.gmra.mxu0 %v4534
      %v4895 = vpop.f32.mrf.mxu0
      %v4896 = vadd.f32 %v4827, %v4895
      %v4897 = vpop.f32.mrf.mxu0
      %4898 = vmatprep.mubr.f32.mxu0 %v4551
      %4899 = vmatmul.mubr.f32.gmra.mxu0 %v4550
      %v4900 = vpop.f32.mrf.mxu0
      %v4901 = vadd.f32 %v4827, %v4900
      %v4902 = vpop.f32.mrf.mxu0
      %4903 = vdwg.mxu0
      %4904 = vmatprep.subr.mxu0 0.0
      %4905 = vmatpush1.msra.mxu0 %v4613
      %4906 = vmatprep.subr.mxu0 0.0
      %4907 = vmatpush1.msra.mxu0 %v4612
      %4908 = vmatprep.subr.mxu0 0.0
      %4909 = vmatpush1.msra.mxu0 %v4611
      %4910 = vmatprep.subr.mxu0 0.0
      %4911 = vmatpush1.msra.mxu0 %v4610
      %4912 = vmatprep.subr.mxu0 0.0
      %4913 = vmatpush1.msra.mxu0 %v4609
      %4914 = vmatprep.subr.mxu0 0.0
      %4915 = vmatpush1.msra.mxu0 %v4608
      %4916 = vmatprep.subr.mxu0 0.0
      %4917 = vmatpush1.msra.mxu0 %v4607
      %4918 = vmatprep.subr.mxu0 0.0
      %4919 = vmatpush1.msra.mxu0 %v4606
      %4920 = vmatprep.subr.mxu0 0.0
      %4921 = vmatpush1.msra.mxu0 %v4605
      %4922 = vmatprep.subr.mxu0 0.0
      %4923 = vmatpush1.msra.mxu0 %v4604
      %4924 = vmatprep.subr.mxu0 0.0
      %4925 = vmatpush1.msra.mxu0 %v4603
      %4926 = vmatprep.subr.mxu0 0.0
      %4927 = vmatpush1.msra.mxu0 %v4602
      %4928 = vmatprep.subr.mxu0 0.0
      %4929 = vmatpush1.msra.mxu0 %v4601
      %4930 = vmatprep.subr.mxu0 0.0
      %4931 = vmatpush1.msra.mxu0 %v4600
      %4932 = vmatprep.subr.mxu0 0.0
      %4933 = vmatpush1.msra.mxu0 %v4599
      %4934 = vmatprep.subr.mxu0 0.0
      %4935 = vmatpush1.msra.mxu0 %v4598
      %4936 = vmatprep.subr.mxu0 0.0
      %4937 = vmatpush2.msra.mxu0 %v4629
      %4938 = vmatprep.subr.mxu0 0.0
      %4939 = vmatpush2.msra.mxu0 %v4628
      %4940 = vmatprep.subr.mxu0 0.0
      %4941 = vmatpush2.msra.mxu0 %v4627
      %4942 = vmatprep.subr.mxu0 0.0
      %4943 = vmatpush2.msra.mxu0 %v4626
      %4944 = vmatprep.subr.mxu0 0.0
      %4945 = vmatpush2.msra.mxu0 %v4625
      %4946 = vmatprep.subr.mxu0 0.0
      %4947 = vmatpush2.msra.mxu0 %v4624
      %4948 = vmatprep.subr.mxu0 0.0
      %4949 = vmatpush2.msra.mxu0 %v4623
      %4950 = vmatprep.subr.mxu0 0.0
      %4951 = vmatpush2.msra.mxu0 %v4622
      %4952 = vmatprep.subr.mxu0 0.0
      %4953 = vmatpush2.msra.mxu0 %v4621
      %4954 = vmatprep.subr.mxu0 0.0
      %4955 = vmatpush2.msra.mxu0 %v4620
      %4956 = vmatprep.subr.mxu0 0.0
      %4957 = vmatpush2.msra.mxu0 %v4619
      %4958 = vmatprep.subr.mxu0 0.0
      %4959 = vmatpush2.msra.mxu0 %v4618
      %4960 = vmatprep.subr.mxu0 0.0
      %4961 = vmatpush2.msra.mxu0 %v4617
      %4962 = vmatprep.subr.mxu0 0.0
      %4963 = vmatpush2.msra.mxu0 %v4616
      %4964 = vmatprep.subr.mxu0 0.0
      %4965 = vmatpush2.msra.mxu0 %v4615
      %4966 = vmatprep.subr.mxu0 0.0
      %4967 = vmatpush2.msra.mxu0 %v4614
      %4968 = vmatprep.mubr.f32.mxu0 %v4537
      %4969 = vmatmul.mubr.f32.gmra.mxu0 %v4536
      %v4970 = vpop.f32.mrf.mxu0
      %v4971 = vadd.f32 %v4896, %v4970
      %v4972 = vpop.f32.mrf.mxu0
      %4973 = vmatprep.mubr.f32.mxu0 %v4553
      %4974 = vmatmul.mubr.f32.gmra.mxu0 %v4552
      %v4975 = vpop.f32.mrf.mxu0
      %v4976 = vadd.f32 %v4901, %v4975
      %v4977 = vpop.f32.mrf.mxu0
      %4978 = vdwg.mxu0
      %4979 = vmatprep.subr.mxu0 0.0
      %4980 = vmatpush1.msra.mxu0 %v4645
      %4981 = vmatprep.subr.mxu0 0.0
      %4982 = vmatpush1.msra.mxu0 %v4644
      %4983 = vmatprep.subr.mxu0 0.0
      %4984 = vmatpush1.msra.mxu0 %v4643
      %4985 = vmatprep.subr.mxu0 0.0
      %4986 = vmatpush1.msra.mxu0 %v4642
      %4987 = vmatprep.subr.mxu0 0.0
      %4988 = vmatpush1.msra.mxu0 %v4641
      %4989 = vmatprep.subr.mxu0 0.0
      %4990 = vmatpush1.msra.mxu0 %v4640
      %4991 = vmatprep.subr.mxu0 0.0
      %4992 = vmatpush1.msra.mxu0 %v4639
      %4993 = vmatprep.subr.mxu0 0.0
      %4994 = vmatpush1.msra.mxu0 %v4638
      %4995 = vmatprep.subr.mxu0 0.0
      %4996 = vmatpush1.msra.mxu0 %v4637
      %4997 = vmatprep.subr.mxu0 0.0
      %4998 = vmatpush1.msra.mxu0 %v4636
      %4999 = vmatprep.subr.mxu0 0.0
      %5000 = vmatpush1.msra.mxu0 %v4635
      %5001 = vmatprep.subr.mxu0 0.0
      %5002 = vmatpush1.msra.mxu0 %v4634
      %5003 = vmatprep.subr.mxu0 0.0
      %5004 = vmatpush1.msra.mxu0 %v4633
      %5005 = vmatprep.subr.mxu0 0.0
      %5006 = vmatpush1.msra.mxu0 %v4632
      %5007 = vmatprep.subr.mxu0 0.0
      %5008 = vmatpush1.msra.mxu0 %v4631
      %5009 = vmatprep.subr.mxu0 0.0
      %5010 = vmatpush1.msra.mxu0 %v4630
      %5011 = vmatprep.subr.mxu0 0.0
      %5012 = vmatpush2.msra.mxu0 %v4661
      %5013 = vmatprep.subr.mxu0 0.0
      %5014 = vmatpush2.msra.mxu0 %v4660
      %5015 = vmatprep.subr.mxu0 0.0
      %5016 = vmatpush2.msra.mxu0 %v4659
      %5017 = vmatprep.subr.mxu0 0.0
      %5018 = vmatpush2.msra.mxu0 %v4658
      %5019 = vmatprep.subr.mxu0 0.0
      %5020 = vmatpush2.msra.mxu0 %v4657
      %5021 = vmatprep.subr.mxu0 0.0
      %5022 = vmatpush2.msra.mxu0 %v4656
      %5023 = vmatprep.subr.mxu0 0.0
      %5024 = vmatpush2.msra.mxu0 %v4655
      %5025 = vmatprep.subr.mxu0 0.0
      %5026 = vmatpush2.msra.mxu0 %v4654
      %5027 = vmatprep.subr.mxu0 0.0
      %5028 = vmatpush2.msra.mxu0 %v4653
      %5029 = vmatprep.subr.mxu0 0.0
      %5030 = vmatpush2.msra.mxu0 %v4652
      %5031 = vmatprep.subr.mxu0 0.0
      %5032 = vmatpush2.msra.mxu0 %v4651
      %5033 = vmatprep.subr.mxu0 0.0
      %5034 = vmatpush2.msra.mxu0 %v4650
      %5035 = vmatprep.subr.mxu0 0.0
      %5036 = vmatpush2.msra.mxu0 %v4649
      %5037 = vmatprep.subr.mxu0 0.0
      %5038 = vmatpush2.msra.mxu0 %v4648
      %5039 = vmatprep.subr.mxu0 0.0
      %5040 = vmatpush2.msra.mxu0 %v4647
      %5041 = vmatprep.subr.mxu0 0.0
      %5042 = vmatpush2.msra.mxu0 %v4646
      %5043 = vmatprep.mubr.f32.mxu0 %v4539
      %5044 = vmatmul.mubr.f32.gmra.mxu0 %v4538
      %v5045 = vpop.f32.mrf.mxu0
      %v5046 = vadd.f32 %v4971, %v5045
      %v5047 = vpop.f32.mrf.mxu0
      %5048 = vmatprep.mubr.f32.mxu0 %v4555
      %5049 = vmatmul.mubr.f32.gmra.mxu0 %v4554
      %v5050 = vpop.f32.mrf.mxu0
      %v5051 = vadd.f32 %v4976, %v5050
      %v5052 = vpop.f32.mrf.mxu0
      %5053 = vdwg.mxu0
      %5054 = vmatprep.subr.mxu0 0.0
      %5055 = vmatpush1.msra.mxu0 %v4677
      %5056 = vmatprep.subr.mxu0 0.0
      %5057 = vmatpush1.msra.mxu0 %v4676
      %5058 = vmatprep.subr.mxu0 0.0
      %5059 = vmatpush1.msra.mxu0 %v4675
      %5060 = vmatprep.subr.mxu0 0.0
      %5061 = vmatpush1.msra.mxu0 %v4674
      %5062 = vmatprep.subr.mxu0 0.0
      %5063 = vmatpush1.msra.mxu0 %v4673
      %5064 = vmatprep.subr.mxu0 0.0
      %5065 = vmatpush1.msra.mxu0 %v4672
      %5066 = vmatprep.subr.mxu0 0.0
      %5067 = vmatpush1.msra.mxu0 %v4671
      %5068 = vmatprep.subr.mxu0 0.0
      %5069 = vmatpush1.msra.mxu0 %v4670
      %5070 = vmatprep.subr.mxu0 0.0
      %5071 = vmatpush1.msra.mxu0 %v4669
      %5072 = vmatprep.subr.mxu0 0.0
      %5073 = vmatpush1.msra.mxu0 %v4668
      %5074 = vmatprep.subr.mxu0 0.0
      %5075 = vmatpush1.msra.mxu0 %v4667
      %5076 = vmatprep.subr.mxu0 0.0
      %5077 = vmatpush1.msra.mxu0 %v4666
      %5078 = vmatprep.subr.mxu0 0.0
      %5079 = vmatpush1.msra.mxu0 %v4665
      %5080 = vmatprep.subr.mxu0 0.0
      %5081 = vmatpush1.msra.mxu0 %v4664
      %5082 = vmatprep.subr.mxu0 0.0
      %5083 = vmatpush1.msra.mxu0 %v4663
      %5084 = vmatprep.subr.mxu0 0.0
      %5085 = vmatpush1.msra.mxu0 %v4662
      %5086 = vmatprep.subr.mxu0 0.0
      %5087 = vmatpush2.msra.mxu0 %v4693
      %5088 = vmatprep.subr.mxu0 0.0
      %5089 = vmatpush2.msra.mxu0 %v4692
      %5090 = vmatprep.subr.mxu0 0.0
      %5091 = vmatpush2.msra.mxu0 %v4691
      %5092 = vmatprep.subr.mxu0 0.0
      %5093 = vmatpush2.msra.mxu0 %v4690
      %5094 = vmatprep.subr.mxu0 0.0
      %5095 = vmatpush2.msra.mxu0 %v4689
      %5096 = vmatprep.subr.mxu0 0.0
      %5097 = vmatpush2.msra.mxu0 %v4688
      %5098 = vmatprep.subr.mxu0 0.0
      %5099 = vmatpush2.msra.mxu0 %v4687
      %5100 = vmatprep.subr.mxu0 0.0
      %5101 = vmatpush2.msra.mxu0 %v4686
      %5102 = vmatprep.subr.mxu0 0.0
      %5103 = vmatpush2.msra.mxu0 %v4685
      %5104 = vmatprep.subr.mxu0 0.0
      %5105 = vmatpush2.msra.mxu0 %v4684
      %5106 = vmatprep.subr.mxu0 0.0
      %5107 = vmatpush2.msra.mxu0 %v4683
      %5108 = vmatprep.subr.mxu0 0.0
      %5109 = vmatpush2.msra.mxu0 %v4682
      %5110 = vmatprep.subr.mxu0 0.0
      %5111 = vmatpush2.msra.mxu0 %v4681
      %5112 = vmatprep.subr.mxu0 0.0
      %5113 = vmatpush2.msra.mxu0 %v4680
      %5114 = vmatprep.subr.mxu0 0.0
      %5115 = vmatpush2.msra.mxu0 %v4679
      %5116 = vmatprep.subr.mxu0 0.0
      %5117 = vmatpush2.msra.mxu0 %v4678
      %5118 = vmatprep.mubr.f32.mxu0 %v4541
      %5119 = vmatmul.mubr.f32.gmra.mxu0 %v4540
      %v5120 = vpop.f32.mrf.mxu0
      %v5121 = vadd.f32 %v5046, %v5120
      %v5122 = vpop.f32.mrf.mxu0
      %5123 = vmatprep.mubr.f32.mxu0 %v4557
      %5124 = vmatmul.mubr.f32.gmra.mxu0 %v4556
      %v5125 = vpop.f32.mrf.mxu0
      %v5126 = vadd.f32 %v5051, %v5125
      %v5127 = vpop.f32.mrf.mxu0
      %5128 = vdwg.mxu0
      %5129 = vmatprep.subr.mxu0 0.0
      %5130 = vmatpush1.msra.mxu0 %v4709
      %5131 = vmatprep.subr.mxu0 0.0
      %5132 = vmatpush1.msra.mxu0 %v4708
      %5133 = vmatprep.subr.mxu0 0.0
      %5134 = vmatpush1.msra.mxu0 %v4707
      %5135 = vmatprep.subr.mxu0 0.0
      %5136 = vmatpush1.msra.mxu0 %v4706
      %5137 = vmatprep.subr.mxu0 0.0
      %5138 = vmatpush1.msra.mxu0 %v4705
      %5139 = vmatprep.subr.mxu0 0.0
      %5140 = vmatpush1.msra.mxu0 %v4704
      %5141 = vmatprep.subr.mxu0 0.0
      %5142 = vmatpush1.msra.mxu0 %v4703
      %5143 = vmatprep.subr.mxu0 0.0
      %5144 = vmatpush1.msra.mxu0 %v4702
      %5145 = vmatprep.subr.mxu0 0.0
      %5146 = vmatpush1.msra.mxu0 %v4701
      %5147 = vmatprep.subr.mxu0 0.0
      %5148 = vmatpush1.msra.mxu0 %v4700
      %5149 = vmatprep.subr.mxu0 0.0
      %5150 = vmatpush1.msra.mxu0 %v4699
      %5151 = vmatprep.subr.mxu0 0.0
      %5152 = vmatpush1.msra.mxu0 %v4698
      %5153 = vmatprep.subr.mxu0 0.0
      %5154 = vmatpush1.msra.mxu0 %v4697
      %5155 = vmatprep.subr.mxu0 0.0
      %5156 = vmatpush1.msra.mxu0 %v4696
      %5157 = vmatprep.subr.mxu0 0.0
      %5158 = vmatpush1.msra.mxu0 %v4695
      %5159 = vmatprep.subr.mxu0 0.0
      %5160 = vmatpush1.msra.mxu0 %v4694
      %5161 = vmatprep.subr.mxu0 0.0
      %5162 = vmatpush2.msra.mxu0 %v4725
      %5163 = vmatprep.subr.mxu0 0.0
      %5164 = vmatpush2.msra.mxu0 %v4724
      %5165 = vmatprep.subr.mxu0 0.0
      %5166 = vmatpush2.msra.mxu0 %v4723
      %5167 = vmatprep.subr.mxu0 0.0
      %5168 = vmatpush2.msra.mxu0 %v4722
      %5169 = vmatprep.subr.mxu0 0.0
      %5170 = vmatpush2.msra.mxu0 %v4721
      %5171 = vmatprep.subr.mxu0 0.0
      %5172 = vmatpush2.msra.mxu0 %v4720
      %5173 = vmatprep.subr.mxu0 0.0
      %5174 = vmatpush2.msra.mxu0 %v4719
      %5175 = vmatprep.subr.mxu0 0.0
      %5176 = vmatpush2.msra.mxu0 %v4718
      %5177 = vmatprep.subr.mxu0 0.0
      %5178 = vmatpush2.msra.mxu0 %v4717
      %5179 = vmatprep.subr.mxu0 0.0
      %5180 = vmatpush2.msra.mxu0 %v4716
      %5181 = vmatprep.subr.mxu0 0.0
      %5182 = vmatpush2.msra.mxu0 %v4715
      %5183 = vmatprep.subr.mxu0 0.0
      %5184 = vmatpush2.msra.mxu0 %v4714
      %5185 = vmatprep.subr.mxu0 0.0
      %5186 = vmatpush2.msra.mxu0 %v4713
      %5187 = vmatprep.subr.mxu0 0.0
      %5188 = vmatpush2.msra.mxu0 %v4712
      %5189 = vmatprep.subr.mxu0 0.0
      %5190 = vmatpush2.msra.mxu0 %v4711
      %5191 = vmatprep.subr.mxu0 0.0
      %5192 = vmatpush2.msra.mxu0 %v4710
      %5193 = vmatprep.mubr.f32.mxu0 %v4543
      %5194 = vmatmul.mubr.f32.gmra.mxu0 %v4542
      %v5195 = vpop.f32.mrf.mxu0
      %v5196 = vadd.f32 %v5121, %v5195
      %v5197 = vpop.f32.mrf.mxu0
      %5198 = vmatprep.mubr.f32.mxu0 %v4559
      %5199 = vmatmul.mubr.f32.gmra.mxu0 %v4558
      %v5200 = vpop.f32.mrf.mxu0
      %v5201 = vadd.f32 %v5126, %v5200
      %v5202 = vpop.f32.mrf.mxu0
      %5203 = vdwg.mxu0
      %5204 = vmatprep.subr.mxu0 0.0
      %5205 = vmatpush1.msra.mxu0 %v4741
      %5206 = vmatprep.subr.mxu0 0.0
      %5207 = vmatpush1.msra.mxu0 %v4740
      %5208 = vmatprep.subr.mxu0 0.0
      %5209 = vmatpush1.msra.mxu0 %v4739
      %5210 = vmatprep.subr.mxu0 0.0
      %5211 = vmatpush1.msra.mxu0 %v4738
      %5212 = vmatprep.subr.mxu0 0.0
      %5213 = vmatpush1.msra.mxu0 %v4737
      %5214 = vmatprep.subr.mxu0 0.0
      %5215 = vmatpush1.msra.mxu0 %v4736
      %5216 = vmatprep.subr.mxu0 0.0
      %5217 = vmatpush1.msra.mxu0 %v4735
      %5218 = vmatprep.subr.mxu0 0.0
      %5219 = vmatpush1.msra.mxu0 %v4734
      %5220 = vmatprep.subr.mxu0 0.0
      %5221 = vmatpush1.msra.mxu0 %v4733
      %5222 = vmatprep.subr.mxu0 0.0
      %5223 = vmatpush1.msra.mxu0 %v4732
      %5224 = vmatprep.subr.mxu0 0.0
      %5225 = vmatpush1.msra.mxu0 %v4731
      %5226 = vmatprep.subr.mxu0 0.0
      %5227 = vmatpush1.msra.mxu0 %v4730
      %5228 = vmatprep.subr.mxu0 0.0
      %5229 = vmatpush1.msra.mxu0 %v4729
      %5230 = vmatprep.subr.mxu0 0.0
      %5231 = vmatpush1.msra.mxu0 %v4728
      %5232 = vmatprep.subr.mxu0 0.0
      %5233 = vmatpush1.msra.mxu0 %v4727
      %5234 = vmatprep.subr.mxu0 0.0
      %5235 = vmatpush1.msra.mxu0 %v4726
      %5236 = vmatprep.subr.mxu0 0.0
      %5237 = vmatpush2.msra.mxu0 %v4757
      %5238 = vmatprep.subr.mxu0 0.0
      %5239 = vmatpush2.msra.mxu0 %v4756
      %5240 = vmatprep.subr.mxu0 0.0
      %5241 = vmatpush2.msra.mxu0 %v4755
      %5242 = vmatprep.subr.mxu0 0.0
      %5243 = vmatpush2.msra.mxu0 %v4754
      %5244 = vmatprep.subr.mxu0 0.0
      %5245 = vmatpush2.msra.mxu0 %v4753
      %5246 = vmatprep.subr.mxu0 0.0
      %5247 = vmatpush2.msra.mxu0 %v4752
      %5248 = vmatprep.subr.mxu0 0.0
      %5249 = vmatpush2.msra.mxu0 %v4751
      %5250 = vmatprep.subr.mxu0 0.0
      %5251 = vmatpush2.msra.mxu0 %v4750
      %5252 = vmatprep.subr.mxu0 0.0
      %5253 = vmatpush2.msra.mxu0 %v4749
      %5254 = vmatprep.subr.mxu0 0.0
      %5255 = vmatpush2.msra.mxu0 %v4748
      %5256 = vmatprep.subr.mxu0 0.0
      %5257 = vmatpush2.msra.mxu0 %v4747
      %5258 = vmatprep.subr.mxu0 0.0
      %5259 = vmatpush2.msra.mxu0 %v4746
      %5260 = vmatprep.subr.mxu0 0.0
      %5261 = vmatpush2.msra.mxu0 %v4745
      %5262 = vmatprep.subr.mxu0 0.0
      %5263 = vmatpush2.msra.mxu0 %v4744
      %5264 = vmatprep.subr.mxu0 0.0
      %5265 = vmatpush2.msra.mxu0 %v4743
      %5266 = vmatprep.subr.mxu0 0.0
      %5267 = vmatpush2.msra.mxu0 %v4742
      %5268 = vmatprep.mubr.f32.mxu0 %v4545
      %5269 = vmatmul.mubr.f32.gmra.mxu0 %v4544
      %v5270 = vpop.f32.mrf.mxu0
      %v5271 = vadd.f32 %v5196, %v5270
      %v5272 = vpop.f32.mrf.mxu0
      %5273 = vmatprep.mubr.f32.mxu0 %v4561
      %5274 = vmatmul.mubr.f32.gmra.mxu0 %v4560
      %v5275 = vpop.f32.mrf.mxu0
      %v5276 = vadd.f32 %v5201, %v5275
      %v5277 = vpop.f32.mrf.mxu0
      %5278 = vdwg.mxu0
      %5279 = vmatprep.subr.mxu0 0.0
      %5280 = vmatpush1.msra.mxu0 %v4773
      %5281 = vmatprep.subr.mxu0 0.0
      %5282 = vmatpush1.msra.mxu0 %v4772
      %5283 = vmatprep.subr.mxu0 0.0
      %5284 = vmatpush1.msra.mxu0 %v4771
      %5285 = vmatprep.subr.mxu0 0.0
      %5286 = vmatpush1.msra.mxu0 %v4770
      %5287 = vmatprep.subr.mxu0 0.0
      %5288 = vmatpush1.msra.mxu0 %v4769
      %5289 = vmatprep.subr.mxu0 0.0
      %5290 = vmatpush1.msra.mxu0 %v4768
      %5291 = vmatprep.subr.mxu0 0.0
      %5292 = vmatpush1.msra.mxu0 %v4767
      %5293 = vmatprep.subr.mxu0 0.0
      %5294 = vmatpush1.msra.mxu0 %v4766
      %5295 = vmatprep.subr.mxu0 0.0
      %5296 = vmatpush1.msra.mxu0 %v4765
      %5297 = vmatprep.subr.mxu0 0.0
      %5298 = vmatpush1.msra.mxu0 %v4764
      %5299 = vmatprep.subr.mxu0 0.0
      %5300 = vmatpush1.msra.mxu0 %v4763
      %5301 = vmatprep.subr.mxu0 0.0
      %5302 = vmatpush1.msra.mxu0 %v4762
      %5303 = vmatprep.subr.mxu0 0.0
      %5304 = vmatpush1.msra.mxu0 %v4761
      %5305 = vmatprep.subr.mxu0 0.0
      %5306 = vmatpush1.msra.mxu0 %v4760
      %5307 = vmatprep.subr.mxu0 0.0
      %5308 = vmatpush1.msra.mxu0 %v4759
      %5309 = vmatprep.subr.mxu0 0.0
      %5310 = vmatpush1.msra.mxu0 %v4758
      %5311 = vmatprep.subr.mxu0 0.0
      %5312 = vmatpush2.msra.mxu0 %v4789
      %5313 = vmatprep.subr.mxu0 0.0
      %5314 = vmatpush2.msra.mxu0 %v4788
      %5315 = vmatprep.subr.mxu0 0.0
      %5316 = vmatpush2.msra.mxu0 %v4787
      %5317 = vmatprep.subr.mxu0 0.0
      %5318 = vmatpush2.msra.mxu0 %v4786
      %5319 = vmatprep.subr.mxu0 0.0
      %5320 = vmatpush2.msra.mxu0 %v4785
      %5321 = vmatprep.subr.mxu0 0.0
      %5322 = vmatpush2.msra.mxu0 %v4784
      %5323 = vmatprep.subr.mxu0 0.0
      %5324 = vmatpush2.msra.mxu0 %v4783
      %5325 = vmatprep.subr.mxu0 0.0
      %5326 = vmatpush2.msra.mxu0 %v4782
      %5327 = vmatprep.subr.mxu0 0.0
      %5328 = vmatpush2.msra.mxu0 %v4781
      %5329 = vmatprep.subr.mxu0 0.0
      %5330 = vmatpush2.msra.mxu0 %v4780
      %5331 = vmatprep.subr.mxu0 0.0
      %5332 = vmatpush2.msra.mxu0 %v4779
      %5333 = vmatprep.subr.mxu0 0.0
      %5334 = vmatpush2.msra.mxu0 %v4778
      %5335 = vmatprep.subr.mxu0 0.0
      %5336 = vmatpush2.msra.mxu0 %v4777
      %5337 = vmatprep.subr.mxu0 0.0
      %5338 = vmatpush2.msra.mxu0 %v4776
      %5339 = vmatprep.subr.mxu0 0.0
      %5340 = vmatpush2.msra.mxu0 %v4775
      %5341 = vmatprep.subr.mxu0 0.0
      %5342 = vmatpush2.msra.mxu0 %v4774
      %5343 = vmatprep.mubr.f32.mxu0 %v4547
      %5344 = vmatmul.mubr.f32.gmra.mxu0 %v4546
      %v5345 = vpop.f32.mrf.mxu0
      %v5346 = vadd.f32 %v5271, %v5345
      %v5347 = vpop.f32.mrf.mxu0
      %5348 = vmatprep.mubr.f32.mxu0 %v4563
      %5349 = vmatmul.mubr.f32.gmra.mxu0 %v4562
      %v5350 = vpop.f32.mrf.mxu0
      %v5351 = vadd.f32 %v5276, %v5350
      %v5352 = vpop.f32.mrf.mxu0
      %5353 = vdwg.mxu0
      %5354 = vmatprep.subr.mxu0 0.0
      %5355 = vmatpush1.msra.mxu0 %v4805
      %5356 = vmatprep.subr.mxu0 0.0
      %5357 = vmatpush1.msra.mxu0 %v4804
      %5358 = vmatprep.subr.mxu0 0.0
      %5359 = vmatpush1.msra.mxu0 %v4803
      %5360 = vmatprep.subr.mxu0 0.0
      %5361 = vmatpush1.msra.mxu0 %v4802
      %5362 = vmatprep.subr.mxu0 0.0
      %5363 = vmatpush1.msra.mxu0 %v4801
      %5364 = vmatprep.subr.mxu0 0.0
      %5365 = vmatpush1.msra.mxu0 %v4800
      %5366 = vmatprep.subr.mxu0 0.0
      %5367 = vmatpush1.msra.mxu0 %v4799
      %5368 = vmatprep.subr.mxu0 0.0
      %5369 = vmatpush1.msra.mxu0 %v4798
      %5370 = vmatprep.subr.mxu0 0.0
      %5371 = vmatpush1.msra.mxu0 %v4797
      %5372 = vmatprep.subr.mxu0 0.0
      %5373 = vmatpush1.msra.mxu0 %v4796
      %5374 = vmatprep.subr.mxu0 0.0
      %5375 = vmatpush1.msra.mxu0 %v4795
      %5376 = vmatprep.subr.mxu0 0.0
      %5377 = vmatpush1.msra.mxu0 %v4794
      %5378 = vmatprep.subr.mxu0 0.0
      %5379 = vmatpush1.msra.mxu0 %v4793
      %5380 = vmatprep.subr.mxu0 0.0
      %5381 = vmatpush1.msra.mxu0 %v4792
      %5382 = vmatprep.subr.mxu0 0.0
      %5383 = vmatpush1.msra.mxu0 %v4791
      %5384 = vmatprep.subr.mxu0 0.0
      %5385 = vmatpush1.msra.mxu0 %v4790
      %5386 = vmatprep.subr.mxu0 0.0
      %5387 = vmatpush2.msra.mxu0 %v4821
      %5388 = vmatprep.subr.mxu0 0.0
      %5389 = vmatpush2.msra.mxu0 %v4820
      %5390 = vmatprep.subr.mxu0 0.0
      %5391 = vmatpush2.msra.mxu0 %v4819
      %5392 = vmatprep.subr.mxu0 0.0
      %5393 = vmatpush2.msra.mxu0 %v4818
      %5394 = vmatprep.subr.mxu0 0.0
      %5395 = vmatpush2.msra.mxu0 %v4817
      %5396 = vmatprep.subr.mxu0 0.0
      %5397 = vmatpush2.msra.mxu0 %v4816
      %5398 = vmatprep.subr.mxu0 0.0
      %5399 = vmatpush2.msra.mxu0 %v4815
      %5400 = vmatprep.subr.mxu0 0.0
      %5401 = vmatpush2.msra.mxu0 %v4814
      %5402 = vmatprep.subr.mxu0 0.0
      %5403 = vmatpush2.msra.mxu0 %v4813
      %5404 = vmatprep.subr.mxu0 0.0
      %5405 = vmatpush2.msra.mxu0 %v4812
      %5406 = vmatprep.subr.mxu0 0.0
      %5407 = vmatpush2.msra.mxu0 %v4811
      %5408 = vmatprep.subr.mxu0 0.0
      %5409 = vmatpush2.msra.mxu0 %v4810
      %5410 = vmatprep.subr.mxu0 0.0
      %5411 = vmatpush2.msra.mxu0 %v4809
      %5412 = vmatprep.subr.mxu0 0.0
      %5413 = vmatpush2.msra.mxu0 %v4808
      %5414 = vmatprep.subr.mxu0 0.0
      %5415 = vmatpush2.msra.mxu0 %v4807
      %5416 = vmatprep.subr.mxu0 0.0
      %5417 = vmatpush2.msra.mxu0 %v4806
      %5418 = vmatprep.mubr.f32.mxu0 %v4549
      %5419 = vmatmul.mubr.f32.gmra.mxu0 %v4548
      %v5420 = vpop.f32.mrf.mxu0
      %v5421 = vadd.f32 %v5346, %v5420
      %v5422 = vpop.f32.mrf.mxu0
      %5423 = vmatprep.mubr.f32.mxu0 %v4565
      %5424 = vmatmul.mubr.f32.gmra.mxu0 %v4564
      %v5425 = vpop.f32.mrf.mxu0
      %v5426 = vadd.f32 %v5351, %v5425
      %v5427 = vpop.f32.mrf.mxu0
      %5428 = vdwg.mxu0
      %v5429 = vadd.f32 %v3762, %v5421
      %v5430 = vadd.f32 %v3763, %v5426
      %v5431 = vsel %vm1042, %v5429, 0.0
      %5432 = vadd.xlane.f32.xlu0 %v5431
      %v5433 = vpop.xlane.xlu0 %5432
      %v5434 = vsel %vm1042, %v5430, 0.0
      %5435 = vadd.xlane.f32.xlu0 %v5434
      %v5436 = vpop.xlane.xlu0 %5435
      %v5437 = vmul.f32 %v5433, %v3721
      %v5438 = vmul.f32 %v5436, %v3721
      %v5439 = vmul.f32 %v5429, %v5429
      %v5440 = vmul.f32 %v5430, %v5430
      %v5441 = vsel %vm1042, %v5439, 0.0
      %5442 = vadd.xlane.f32.xlu0 %v5441
      %v5443 = vpop.xlane.xlu0 %5442
      %v5444 = vsel %vm1042, %v5440, 0.0
      %5445 = vadd.xlane.f32.xlu0 %v5444
      %v5446 = vpop.xlane.xlu0 %5445
      %v5447 = vmul.f32 %v5443, %v3721
      %v5448 = vmul.f32 %v5446, %v3721
      %v5449 = vmul.f32 %v5437, %v5437
      %v5450 = vmul.f32 %v5438, %v5438
      %v5451 = vsub.f32 %v5447, %v5449
      %v5452 = vsub.f32 %v5448, %v5450
      %v5453 = vsub.f32 %v5429, %v5437
      %v5454 = vsub.f32 %v5430, %v5438
      %v5455 = vadd.f32 %v5451, 1e-05
      %v5456 = vadd.f32 %v5452, 1e-05
      %v5457 = vrsqrt.pop %v5455
      %v5458 = vrsqrt.pop %v5456
      %v5459 = vmul.f32 %v5453, %v5457
      %v5460 = vmul.f32 %v5454, %v5458
      %v5461 = vld [vmem:[%s919] sm:$0x1]
      %v5463 = vlaneseq
      %v5464 = vshrl.u32 %v5463, 7
      %v5465 = vsub.s32 0, %v5464
      %v5466 = vrot.slane %v5461, %v5465
      %v5468 = vmul.f32 %v5459, %v5466
      %v5469 = vmul.f32 %v5460, %v5466
      %v5470 = vld [vmem:[%s922] sm:$0x1]
      %v5472 = vlaneseq
      %v5473 = vshrl.u32 %v5472, 7
      %v5474 = vsub.s32 0, %v5473
      %v5475 = vrot.slane %v5470, %v5474
      %v5477 = vadd.f32 %v5468, %v5475
      %v5478 = vadd.f32 %v5469, %v5475
      %5479 = vst.msk [vmem:[#allocation2] sm:$0xff] %vm1042, %v5477
      %5480 = vst.msk [vmem:[#allocation2 + $0x8] sm:$0xff] %vm1042, %v5478
      %p5481 = scmp.eq.s32.totalorder %s35, 1
      // Predicated region
      $region113: #{tpu_custom_call.1} parent=107 // pred_check
        %p5482 = pneg %p5481
      $region114: #{tpu_custom_call.1} parent=107 // pred_check_branch
        %5484 = sbr.rel (%p5482) target = $region116
      $region115: #{tpu_custom_call.1} parent=107 // pred_region
        %v5485 = vld [vmem:[%s20] sm:$0xff]
        %v5486 = vld [vmem:[%s20 + $0x8] sm:$0xff]
        %v5487 = vld [vmem:[%s20 + $0x10] sm:$0xff]
        %v5488 = vld [vmem:[%s20 + $0x18] sm:$0xff]
        %v5489 = vld [vmem:[#allocation3] sm:$0x1]
        %v5491 = vlaneseq
        %v5492 = vshrl.u32 %v5491, 7
        %v5493 = vsub.s32 0, %v5492
        %v5494 = vrot.slane %v5489, %v5493
        %v5498 = vrot.slane %v5477, 7
        %v5499 = vrot.slane %v5478, 6
        %vm5500 = vcmask 1041409
        %v5501 = vsel %vm5500, %v5499, %v5498
        %v5502 = vsel %vm1042, %v5501, 0
        %5504 = vmatprep.subr.mxu0 0.0
        %5505 = vmatpush1.msra.mxu0 0.0
        %5506 = vmatprep.subr.mxu0 0.0
        %5507 = vmatpush1.msra.mxu0 0.0
        %5508 = vmatprep.subr.mxu0 0.0
        %5509 = vmatpush1.msra.mxu0 0.0
        %5510 = vmatprep.subr.mxu0 0.0
        %5511 = vmatpush1.msra.mxu0 0.0
        %5512 = vmatprep.subr.mxu0 0.0
        %5513 = vmatpush1.msra.mxu0 0.0
        %5514 = vmatprep.subr.mxu0 0.0
        %5515 = vmatpush1.msra.mxu0 0.0
        %5516 = vmatprep.subr.mxu0 0.0
        %5517 = vmatpush1.msra.mxu0 0.0
        %5518 = vmatprep.subr.mxu0 0.0
        %5519 = vmatpush1.msra.mxu0 0.0
        %5520 = vmatprep.subr.mxu0 0.0
        %5521 = vmatpush1.msra.mxu0 0.0
        %5522 = vmatprep.subr.mxu0 0.0
        %5523 = vmatpush1.msra.mxu0 0.0
        %5524 = vmatprep.subr.mxu0 0.0
        %5525 = vmatpush1.msra.mxu0 0.0
        %5526 = vmatprep.subr.mxu0 0.0
        %5527 = vmatpush1.msra.mxu0 0.0
        %5528 = vmatprep.subr.mxu0 0.0
        %5529 = vmatpush1.msra.mxu0 %v5488
        %5530 = vmatprep.subr.mxu0 0.0
        %5531 = vmatpush1.msra.mxu0 %v5487
        %5532 = vmatprep.subr.mxu0 0.0
        %5533 = vmatpush1.msra.mxu0 %v5486
        %5534 = vmatprep.subr.mxu0 0.0
        %5535 = vmatpush1.msra.mxu0 %v5485
        %5536 = vmatprep.subr.mxu0 0.0
        %5537 = vmatpush2.msra.mxu0 0.0
        %5538 = vmatprep.subr.mxu0 0.0
        %5539 = vmatpush2.msra.mxu0 0.0
        %5540 = vmatprep.subr.mxu0 0.0
        %5541 = vmatpush2.msra.mxu0 0.0
        %5542 = vmatprep.subr.mxu0 0.0
        %5543 = vmatpush2.msra.mxu0 0.0
        %5544 = vmatprep.subr.mxu0 0.0
        %5545 = vmatpush2.msra.mxu0 0.0
        %5546 = vmatprep.subr.mxu0 0.0
        %5547 = vmatpush2.msra.mxu0 0.0
        %5548 = vmatprep.subr.mxu0 0.0
        %5549 = vmatpush2.msra.mxu0 0.0
        %5550 = vmatprep.subr.mxu0 0.0
        %5551 = vmatpush2.msra.mxu0 0.0
        %5552 = vmatprep.subr.mxu0 0.0
        %5553 = vmatpush2.msra.mxu0 0.0
        %5554 = vmatprep.subr.mxu0 0.0
        %5555 = vmatpush2.msra.mxu0 0.0
        %5556 = vmatprep.subr.mxu0 0.0
        %5557 = vmatpush2.msra.mxu0 0.0
        %5558 = vmatprep.subr.mxu0 0.0
        %5559 = vmatpush2.msra.mxu0 0.0
        %5560 = vmatprep.subr.mxu0 0.0
        %5561 = vmatpush2.msra.mxu0 0.0
        %5562 = vmatprep.subr.mxu0 0.0
        %5563 = vmatpush2.msra.mxu0 0.0
        %5564 = vmatprep.subr.mxu0 0.0
        %5565 = vmatpush2.msra.mxu0 0.0
        %5566 = vmatprep.subr.mxu0 0.0
        %5567 = vmatpush2.msra.mxu0 0.0
        %5568 = vmatprep.mubr.f32.mxu0 0.0
        %5569 = vmatmul.mubr.f32.gmra.mxu0 %v5502
        %v5570 = vpop.f32.mrf.mxu0
        %v5571 = vadd.f32 %v5494, %v5570
        %v5572 = vpop.f32.mrf.mxu0
        %5573 = vdwg.mxu0
        %vm5574 = vcmask 1024
        %5575 = vst.msk [vmem:[%s22] sm:$0x3] %vm5574, %v5571
      $region116: #{tpu_custom_call.1} parent=107 // pred_fallthru
        _
      // Predicated region
      $region117: #{tpu_custom_call.1} parent=107 // pred_check
        %p5576 = pneg %p590
      $region118: #{tpu_custom_call.1} parent=107 // pred_check_branch
        %5578 = sbr.rel (%p5576) target = $region120
      $region119: #{tpu_custom_call.1} parent=107 // pred_region
        _
      $region120: #{tpu_custom_call.1} parent=107 // pred_fallthru
        _
      // Predicated region
      $region121: #{tpu_custom_call.1} parent=107 // pred_check
        %p5579 = pneg %p590
      $region122: #{tpu_custom_call.1} parent=107 // pred_check_branch
        %5581 = sbr.rel (%p5579) target = $region124
      $region123: #{tpu_custom_call.1} parent=107 // pred_region
        _
      $region124: #{tpu_custom_call.1} parent=107 // pred_fallthru
        _
    $region108: #{tpu_custom_call.1} parent=5 // pred_fallthru
      _
    %p5582 = scmp.le.s32.totalorder 2, %s30
    // Predicated region
    $region125: #{tpu_custom_call.1} parent=5 // pred_check
      %p5583 = pneg %p5582
    $region126: #{tpu_custom_call.1} parent=5 // pred_check_branch
      %5585 = sbr.rel (%p5583) target = $region128
    $region127: #{tpu_custom_call.1} parent=5 // pred_region
      %s5586 = ssub.s32 %s30, 2
    $region128: #{tpu_custom_call.1} parent=5 // pred_fallthru
      _
  $region6: #{tpu_custom_call.1} parent=0 // loop_footer
    %s34 = sadd.s32 1, %s30
  $region7: #{tpu_custom_call.1} parent=0 // loop_footer_branch
    %29 = sbr.rel target = $region3
  $region8: #{tpu_custom_call.1} parent=0 // loop_exit
    _

</llo_original>
